<compile_context>
chip_gen: v7x
topology: tpu7x:2x2x1
jax: 0.10.0
libtpu: 0.0.40
codegen_flags: <defaults>
</compile_context>

<pallas_src>
import functools

import jax
import jax.numpy as jnp
from jax.experimental import pallas as pl
from jax.experimental.pallas import tpu as pltpu


_NUM_DECONV = 4


def _round_up(x, m):
    return ((x + m - 1) // m) * m


def _channel_sizes(z_dim, c_out):
    # [z_dim] + [3, 2, 1] * 32 + [C]  (matches the PyTorch module)
    return [z_dim, 96, 64, 32, c_out]


def _fold_last(H, W):
    # Spatial size after the deconv stack is 2 * 2**num_layers; the nearest
    # "upsample" to (H, W) is a pure even-row/col selection iff it is an exact
    # 2x downsample, which lets the last deconv skip 3/4 of its outputs.
    return H == W and 2 * (2 ** _NUM_DECONV) == 2 * H


def _num_tensorcores():
    """Best-effort TensorCores-per-chip (v5e/v6e -> 1, v4/v5p/v7x -> 2)."""
    try:
        info = pltpu.get_tpu_info()
        for name in ("num_cores", "core_count", "num_tensorcores",
                     "tensorcore_count", "cores_per_chip"):
            v = getattr(info, name, None)
            if isinstance(v, int) and 0 < v <= 16:
                return v
    except Exception:
        pass
    try:
        kind = jax.devices()[0].device_kind.lower()
    except Exception:
        return 1
    if "lite" in kind or "v5e" in kind or "v6e" in kind:
        return 1
    if any(tag in kind for tag in ("v4", "v5p", "v7", "7x")):
        return 2
    return 1


_NUM_TC = _num_tensorcores()


# ----------------------------------------------------------------------------
# Pallas matmul kernels: bf16 MXU operands, f32 accumulation, fused epilogue.
# ----------------------------------------------------------------------------
def _mm_kernel(x_ref, w_ref, o_ref):
    o_ref[...] = jnp.dot(x_ref[...], w_ref[...],
                         preferred_element_type=jnp.float32)


def _mm_bias_act_kernel(x_ref, w_ref, b_ref, o_ref, *, activation):
    y = jnp.dot(x_ref[...], w_ref[...], preferred_element_type=jnp.float32)
    y = y + b_ref[...]
    if activation == "relu":
        y = jnp.maximum(y, 0.0)
    elif activation == "sigmoid":
        y = jax.nn.sigmoid(y)
    o_ref[...] = y.astype(o_ref.dtype)


def _pick_tiles(Mp, Kp, Np):
    # Single grid step on 1-TC chips (every extra step is ~0.35us of pure
    # overhead on these us-scale, launch-bound calls); even 2-way split of the
    # widest parallel axis on 2-TC megacore chips so both cores have work.
    tm, tk, tn = Mp, Kp, Np
    if _NUM_TC >= 2:
        if Np >= 256 and Np % 256 == 0:
            tn = Np // 2
        elif Mp >= 16 and Mp % 16 == 0:
            tm = Mp // 2
    return tm, tk, tn


def pallas_matmul(x, w_pad, b_pad=None, n_out=None, activation="none"):
    """act(x @ w [+ b]) with bf16 MXU operands and f32 accumulation.

    x:     (M, K) activations (cast to bf16 here; zero-padded to (Mp, Kp)).
    w_pad: (Kp, Np) bf16, pre-padded / pre-cast / pre-permuted at init.
    b_pad: optional (1, Np) f32 bias (epilogue-fused with `activation`).
    n_out: logical N; the (Mp, Np) f32 result is sliced to (M, n_out).
    """
    M, K = x.shape
    Kp, Np = w_pad.shape
    n_out = Np if n_out is None else n_out
    Mp = _round_up(M, 8)

    xp = x.astype(jnp.bfloat16)
    if (Mp - M) or (Kp - K):
        xp = jnp.pad(xp, ((0, Mp - M), (0, Kp - K)))

    tm, tk, tn = _pick_tiles(Mp, Kp, Np)
    cost = pl.CostEstimate(
        flops=2 * Mp * Kp * Np,
        transcendentals=(Mp * Np if activation == "sigmoid" else 0),
        bytes_accessed=Mp * Kp * 2 + Kp * Np * 2 + Mp * Np * 4
        + (Np * 4 if b_pad is not None else 0),
    )

    if b_pad is None:
        kernel = _mm_kernel
        in_specs = [pl.BlockSpec((tm, tk), lambda i, j: (i, 0)),
                    pl.BlockSpec((tk, tn), lambda i, j: (0, j))]
        args = (xp, w_pad)
    else:
        kernel = functools.partial(_mm_bias_act_kernel, activation=activation)
        in_specs = [pl.BlockSpec((tm, tk), lambda i, j: (i, 0)),
                    pl.BlockSpec((tk, tn), lambda i, j: (0, j)),
                    pl.BlockSpec((1, tn), lambda i, j: (0, j))]
        args = (xp, w_pad, b_pad)

    out = pl.pallas_call(
        kernel,
        out_shape=jax.ShapeDtypeStruct((Mp, Np), jnp.float32),
        grid_spec=pltpu.PrefetchScalarGridSpec(
            num_scalar_prefetch=0,
            grid=(Mp // tm, Np // tn),
            in_specs=in_specs,
            out_specs=pl.BlockSpec((tm, tn), lambda i, j: (i, j)),
        ),
        compiler_params=pltpu.CompilerParams(
            dimension_semantics=("parallel", "parallel")),
        cost_estimate=cost,
    )(*args)

    if (Mp > M) or (Np > n_out):
        out = out[:M, :n_out]
    return out


# ----------------------------------------------------------------------------
# ConvTranspose2d(Cin, Cout, k=4, stride=2, padding=1) + bias + ReLU in NHWC
# via the col2im formulation: one lane-dense bf16 Pallas matmul (K=Cin,
# N=taps*128) followed by a tiny shifted-add (overlap-add) in XLA glue.
# ----------------------------------------------------------------------------
# (kh, dm) taps per output parity: out[2m+py] += Y[m+dm, ..., kh, ...]
_PARITY_TAPS = {0: ((1, 0), (3, -1)), 1: ((2, 0), (0, 1))}


def conv_transpose2d_relu_nhwc(x, w2d, b_pad, cout):
    """x: (B, H, W, Cin) -> (B, 2H, 2W, Cout) bf16 (bias + ReLU applied)."""
    B, H, W, cin = x.shape
    cp = w2d.shape[1] // 16                     # lane-dense channel pad (128)
    y = pallas_matmul(x.reshape(B * H * W, cin), w2d)
    y = y.reshape(B, H, W, 4, 4, cp)            # [..., kh, kw, cp]

    # TODO(synk): the col2im overlap-add (a handful of shifted adds on small
    # lane-dense slabs) stays as XLA glue; no clean single-kernel form.
    yp = jnp.pad(y, ((0, 0), (1, 1), (1, 1), (0, 0), (0, 0), (0, 0)))

    def tap(dm, dn, kh, kw):
        return yp[:, 1 + dm:1 + dm + H, 1 + dn:1 + dn + W, kh, kw, :]

    subs = []
    for py in (0, 1):
        for px in (0, 1):
            s = None
            for kh, dm in _PARITY_TAPS[py]:
                for kw, dn in _PARITY_TAPS[px]:
                    t = tap(dm, dn, kh, kw)
                    s = t if s is None else s + t
            # overlap-add + bias + ReLU in f32; cast to bf16 only afterwards.
            subs.append(jnp.maximum(s + b_pad, 0.0).astype(jnp.bfloat16))

    out = jnp.stack(subs, axis=0).reshape(2, 2, B, H, W, cp)
    out = jnp.transpose(out, (2, 3, 0, 4, 1, 5)).reshape(B, 2 * H, 2 * W, cp)
    return out[..., :cout]


def conv_transpose2d_relu_even_nhwc(x, w2d, b_pad, cout):
    """Final ConvTranspose2d fused with the nearest-neighbour 2x downsample:
    only parity-(0,0) outputs (kernel taps kh,kw in {1,3}) are computed.
    x: (B, H, W, Cin) -> (B, H, W, Cout) bf16 (bias + ReLU applied)."""
    B, H, W, cin = x.shape
    cp = w2d.shape[1] // 4
    y = pallas_matmul(x.reshape(B * H * W, cin), w2d)
    y = y.reshape(B, H, W, 2, 2, cp)            # [..., kh'(1,3), kw'(1,3), cp]
    yp = jnp.pad(y, ((0, 0), (1, 0), (1, 0), (0, 0), (0, 0), (0, 0)))
    s = (yp[:, 1:1 + H, 1:1 + W, 0, 0, :]       # (kh=1, dm=0), (kw=1, dn=0)
         + yp[:, 1:1 + H, 0:W, 0, 1, :]         # (kw=3, dn=-1)
         + yp[:, 0:H, 1:1 + W, 1, 0, :]         # (kh=3, dm=-1)
         + yp[:, 0:H, 0:W, 1, 1, :])            # (kh=3, kw=3), dm=dn=-1
    out = jnp.maximum(s + b_pad, 0.0).astype(jnp.bfloat16)
    return out[..., :cout]


# ----------------------------------------------------------------------------
# Full DecoderConv forward (NHWC internally, NCHW output to match PyTorch)
# ----------------------------------------------------------------------------
def decoder_conv_forward(z, params, *, z_dim, img_dim):
    C, H, W = img_dim
    B = z.shape[0]
    chans = _channel_sizes(z_dim, C)
    fold = _fold_last(H, W)

    # l1 + ReLU: (B, z_dim) @ (z_dim, 4*z_dim) is too small for a Pallas launch.
    x = jnp.maximum(jnp.dot(z, params["w1"]) + params["b1"], 0.0)
    x = x.reshape(B, z_dim, 2, 2).transpose(0, 2, 3, 1).astype(jnp.bfloat16)

    for i, (w2d, b_pad) in enumerate(params["deconvs"]):
        cout = chans[i + 1]
        if fold and i == _NUM_DECONV - 1:
            x = conv_transpose2d_relu_even_nhwc(x, w2d, b_pad, cout)
        else:
            x = conv_transpose2d_relu_nhwc(x, w2d, b_pad, cout)

    if not fold:
        # TODO(synk): general nn.Upsample(nearest) path is a pure index gather
        # kept as XLA glue (not hit for the 4,16,16 configuration).
        sh, sw = x.shape[1], x.shape[2]
        rows = (jnp.arange(H) * sh) // H
        cols = (jnp.arange(W) * sw) // W
        x = x[:, rows][:, :, cols]

    # last_linear + sigmoid (fused epilogue).  w_last rows were permuted at
    # init to NHWC pixel order; columns stay NCHW so the final reshape to
    # (B, C, H, W) is direct.
    x = x.reshape(B, H * W * C)
    x = pallas_matmul(x, params["w_last"], params["b_last"],
                      n_out=C * H * W, activation="sigmoid")
    return x.reshape(B, C, H, W)


# ----------------------------------------------------------------------------
# Parameters: PyTorch-layout synthetic weights + hoisted constant transforms
# ----------------------------------------------------------------------------
def init_params(key, z_dim, img_dim):
    C, H, W = img_dim
    P = C * H * W
    chans = _channel_sizes(z_dim, C)
    keys = jax.random.split(key, 2 + 2 * _NUM_DECONV + 2)
    ki = iter(keys)

    def rnd(k, shape, fan_in):
        return jax.random.normal(k, shape, jnp.float32) / jnp.sqrt(fan_in)

    params = {"w1": rnd(next(ki), (z_dim, 4 * z_dim), z_dim),
              "b1": rnd(next(ki), (4 * z_dim,), z_dim)}
    deconvs = []
    for i in range(_NUM_DECONV):
        cin, cout = chans[i], chans[i + 1]
        deconvs.append((rnd(next(ki), (cin, cout, 4, 4), cin * 4),  # PyTorch ConvT layout
                        rnd(next(ki), (cout,), cin * 4)))
    params["deconvs"] = deconvs
    params["w_last"] = rnd(next(ki), (P, P), P)
    params["b_last"] = rnd(next(ki), (P,), P)
    return params


def prepare_params(params, z_dim, img_dim):
    """Hoist every constant weight transform (transpose / pad / bf16 cast /
    row permutation / last-layer tap selection) out of the forward pass."""
    C, H, W = img_dim
    P = C * H * W
    fold = _fold_last(H, W)
    prep = {"w1": params["w1"], "b1": params["b1"]}

    deconvs = []
    n_layers = len(params["deconvs"])
    for i, (w_t, b_t) in enumerate(params["deconvs"]):
        cin, cout = int(w_t.shape[0]), int(w_t.shape[1])
        kp = _round_up(cin, 16)         # bf16 sublane quantum, NOT 128
        cp = _round_up(cout, 128)       # lane-dense output channel pad
        if fold and i == n_layers - 1:
            w_sel = w_t[:, :, 1::2, 1::2]        # only kh,kw in {1,3} survive
        else:
            w_sel = w_t
        kk = w_sel.shape[2] * w_sel.shape[3]     # 16 (general) or 4 (folded)
        w_sel = jnp.transpose(w_sel, (0, 2, 3, 1))           # (cin, kh, kw, cout)
        w_sel = jnp.pad(w_sel, ((0, kp - cin), (0, 0), (0, 0), (0, cp - cout)))
        w2d = w_sel.reshape(kp, kk * cp).astype(jnp.bfloat16)
        b_pad = jnp.pad(b_t.astype(jnp.float32), (0, cp - cout))
        deconvs.append((w2d, b_pad))
    prep["deconvs"] = deconvs

    # Permute last_linear rows from NCHW pixel order to NHWC pixel order.
    hh = jnp.arange(H).reshape(H, 1, 1)
    ww = jnp.arange(W).reshape(1, W, 1)
    cc = jnp.arange(C).reshape(1, 1, C)
    perm = (cc * H * W + hh * W + ww).reshape(-1)   # perm[nhwc_idx] = nchw_idx
    kp = _round_up(P, 128)
    npad = _round_up(P, 128)
    w_last = jnp.pad(params["w_last"][perm, :], ((0, kp - P), (0, npad - P)))
    # TODO(synk): store w_last as fp8 (v7x) / int8 (v5e, v6e) with per-column
    # scales applied on the f32 accumulator to halve the dominant weight DMA.
    prep["w_last"] = w_last.astype(jnp.bfloat16)
    prep["b_last"] = jnp.pad(
        params["b_last"].astype(jnp.float32).reshape(1, -1),
        ((0, 0), (0, npad - P)))
    return prep


# ----------------------------------------------------------------------------
# Pure-f32 XLA reference of the PyTorch forward (for numerical validation)
# ----------------------------------------------------------------------------
def _ref_deconv_relu(x, w, b):
    """ConvTranspose2d(k=4, s=2, p=1) + bias + ReLU, NCHW, f32 reference."""
    B, Cin, H, W = x.shape
    y = jnp.einsum("bchw,coij->bohwij", x, w)            # (B, Cout, H, W, 4, 4)
    out = jnp.zeros((B, w.shape[1], 2 * H + 2, 2 * W + 2), jnp.float32)
    for kh in range(4):
        for kw in range(4):
            out = out.at[:, :, kh:kh + 2 * H:2, kw:kw + 2 * W:2].add(y[..., kh, kw])
    out = out[:, :, 1:2 * H + 1, 1:2 * W + 1] + b.reshape(1, -1, 1, 1)
    return jnp.maximum(out, 0.0)


def ref_forward(z, raw, *, z_dim, img_dim):
    C, H, W = img_dim
    B = z.shape[0]
    x = jnp.maximum(jnp.dot(z, raw["w1"]) + raw["b1"], 0.0)
    x = x.reshape(B, z_dim, 2, 2)
    for w_t, b_t in raw["deconvs"]:
        x = _ref_deconv_relu(x, w_t, b_t)
    sh, sw = x.shape[2], x.shape[3]
    rows = (jnp.arange(H) * sh) // H                     # nearest-neighbour
    cols = (jnp.arange(W) * sw) // W
    x = x[:, :, rows][:, :, :, cols]
    x = x.reshape(B, C * H * W)
    x = jnp.dot(x, raw["w_last"]) + raw["b_last"]
    return jax.nn.sigmoid(x).reshape(B, C, H, W)


if __name__ == "__main__":
    B, z_dim = 2, 8
    img_dim = (4, 16, 16)   # (C, H, W) of the "dummy_batch"

    root = jax.random.PRNGKey(0)
    k_params, k_z = jax.random.split(root)
    raw_params = init_params(k_params, z_dim, img_dim)
    params = prepare_params(raw_params, z_dim, img_dim)
    z = jax.random.normal(k_z, (B, z_dim), jnp.float32)

    fwd = jax.jit(functools.partial(decoder_conv_forward,
                                    z_dim=z_dim, img_dim=img_dim))
    out = jax.block_until_ready(fwd(z, params))

    assert out.shape == (B,) + img_dim, out.shape
    assert bool(jnp.all((out >= 0.0) & (out <= 1.0)))    # sigmoid range sanity

    # Numerical check vs a pure-f32 XLA reference (bf16 MXU operands ->
    # ~1e-3-level differences expected; generous tolerance).
    ref = ref_forward(z, raw_params, z_dim=z_dim, img_dim=img_dim)
    max_err = float(jnp.max(jnp.abs(out - ref)))
    assert max_err < 2e-2, f"max abs err vs f32 reference: {max_err}"

    print("KERNEL_OK")
</pallas_src>

<mosaic_0001>
module attributes {stable_mosaic.version = 11 : i64} {
  func.func @_mm_kernel(%arg0: i32, %arg1: i32, %arg2: memref<8x16xbf16, #tpu.memory_space<vmem>>, %arg3: memref<16x2048xbf16, #tpu.memory_space<vmem>>, %arg4: memref<8x2048xf32, #tpu.memory_space<vmem>>) attributes {dimension_semantics = [#tpu.dimension_semantics<parallel>, #tpu.dimension_semantics<parallel>], iteration_bounds = array<i64: 1, 1>, scalar_prefetch = 0 : i64, scratch_operands = 0 : i64, tpu.core_type = #tpu.core_type<tc>, window_params = [{transform_indices = @transform_0, window_bounds = array<i64: 8, 16>}, {transform_indices = @transform_1, window_bounds = array<i64: 16, 2048>}, {transform_indices = @transform_2, window_bounds = array<i64: 8, 2048>}]} {
    %c0 = arith.constant 0 : index
    %c0_0 = arith.constant 0 : index
    %0 = vector.load %arg2[%c0, %c0_0] : memref<8x16xbf16, #tpu.memory_space<vmem>>, vector<8x16xbf16>
    %c0_1 = arith.constant 0 : index
    %c0_2 = arith.constant 0 : index
    %1 = vector.load %arg3[%c0_1, %c0_2] : memref<16x2048xbf16, #tpu.memory_space<vmem>>, vector<16x2048xbf16>
    %cst = arith.constant dense<0.000000e+00> : vector<8x2048xf32>
    %2 = tpu.matmul %0, %1, %cst {dimension_numbers = #tpu.dot_dimension_numbers<[1], [0], [0], [1], [0, 0, 1, 1], [], []>} : vector<8x16xbf16>, vector<16x2048xbf16>, vector<8x2048xf32> -> vector<8x2048xf32>
    %c0_3 = arith.constant 0 : index
    %c0_4 = arith.constant 0 : index
    %3 = vector.load %arg4[%c0_3, %c0_4] : memref<8x2048xf32, #tpu.memory_space<vmem>>, vector<8x2048xf32>
    tpu.vector_store %arg4[%c0_3, %c0_4], %2 {strides = array<i32>} : memref<8x2048xf32, #tpu.memory_space<vmem>>, vector<8x2048xf32>,
    return
  }
  func.func @transform_0(%arg0: i32, %arg1: i32) -> (i32, i32) {
    %c0_i32 = arith.constant 0 : i32
    %c0_i32_0 = arith.constant 0 : i32
    return %arg0, %c0_i32 : i32, i32
  }
  func.func @transform_1(%arg0: i32, %arg1: i32) -> (i32, i32) {
    %c0_i32 = arith.constant 0 : i32
    %c0_i32_0 = arith.constant 0 : i32
    return %c0_i32, %arg1 : i32, i32
  }
  func.func @transform_2(%arg0: i32, %arg1: i32) -> (i32, i32) {
    %c0_i32 = arith.constant 0 : i32
    return %arg0, %arg1 : i32, i32
  }
}

module attributes {stable_mosaic.version = 11 : i64} {
  func.func @_mm_kernel(%arg0: i32, %arg1: i32, %arg2: memref<32x96xbf16, #tpu.memory_space<vmem>>, %arg3: memref<96x2048xbf16, #tpu.memory_space<vmem>>, %arg4: memref<32x2048xf32, #tpu.memory_space<vmem>>) attributes {dimension_semantics = [#tpu.dimension_semantics<parallel>, #tpu.dimension_semantics<parallel>], iteration_bounds = array<i64: 1, 1>, scalar_prefetch = 0 : i64, scratch_operands = 0 : i64, tpu.core_type = #tpu.core_type<tc>, window_params = [{transform_indices = @transform_0, window_bounds = array<i64: 32, 96>}, {transform_indices = @transform_1, window_bounds = array<i64: 96, 2048>}, {transform_indices = @transform_2, window_bounds = array<i64: 32, 2048>}]} {
    %c0 = arith.constant 0 : index
    %c0_0 = arith.constant 0 : index
    %0 = vector.load %arg2[%c0, %c0_0] : memref<32x96xbf16, #tpu.memory_space<vmem>>, vector<32x96xbf16>
    %c0_1 = arith.constant 0 : index
    %c0_2 = arith.constant 0 : index
    %1 = vector.load %arg3[%c0_1, %c0_2] : memref<96x2048xbf16, #tpu.memory_space<vmem>>, vector<96x2048xbf16>
    %cst = arith.constant dense<0.000000e+00> : vector<32x2048xf32>
    %2 = tpu.matmul %0, %1, %cst {dimension_numbers = #tpu.dot_dimension_numbers<[1], [0], [0], [1], [0, 0, 1, 1], [], []>} : vector<32x96xbf16>, vector<96x2048xbf16>, vector<32x2048xf32> -> vector<32x2048xf32>
    %c0_3 = arith.constant 0 : index
    %c0_4 = arith.constant 0 : index
    %3 = vector.load %arg4[%c0_3, %c0_4] : memref<32x2048xf32, #tpu.memory_space<vmem>>, vector<32x2048xf32>
    tpu.vector_store %arg4[%c0_3, %c0_4], %2 {strides = array<i32>} : memref<32x2048xf32, #tpu.memory_space<vmem>>, vector<32x2048xf32>,
    return
  }
  func.func @transform_0(%arg0: i32, %arg1: i32) -> (i32, i32) {
    %c0_i32 = arith.constant 0 : i32
    %c0_i32_0 = arith.constant 0 : i32
    return %arg0, %c0_i32 : i32, i32
  }
  func.func @transform_1(%arg0: i32, %arg1: i32) -> (i32, i32) {
    %c0_i32 = arith.constant 0 : i32
    %c0_i32_0 = arith.constant 0 : i32
    return %c0_i32, %arg1 : i32, i32
  }
  func.func @transform_2(%arg0: i32, %arg1: i32) -> (i32, i32) {
    %c0_i32 = arith.constant 0 : i32
    return %arg0, %arg1 : i32, i32
  }
}

module attributes {stable_mosaic.version = 11 : i64} {
  func.func @_mm_kernel(%arg0: i32, %arg1: i32, %arg2: memref<128x64xbf16, #tpu.memory_space<vmem>>, %arg3: memref<64x2048xbf16, #tpu.memory_space<vmem>>, %arg4: memref<128x2048xf32, #tpu.memory_space<vmem>>) attributes {dimension_semantics = [#tpu.dimension_semantics<parallel>, #tpu.dimension_semantics<parallel>], iteration_bounds = array<i64: 1, 1>, scalar_prefetch = 0 : i64, scratch_operands = 0 : i64, tpu.core_type = #tpu.core_type<tc>, window_params = [{transform_indices = @transform_0, window_bounds = array<i64: 128, 64>}, {transform_indices = @transform_1, window_bounds = array<i64: 64, 2048>}, {transform_indices = @transform_2, window_bounds = array<i64: 128, 2048>}]} {
    %c0 = arith.constant 0 : index
    %c0_0 = arith.constant 0 : index
    %0 = vector.load %arg2[%c0, %c0_0] : memref<128x64xbf16, #tpu.memory_space<vmem>>, vector<128x64xbf16>
    %c0_1 = arith.constant 0 : index
    %c0_2 = arith.constant 0 : index
    %1 = vector.load %arg3[%c0_1, %c0_2] : memref<64x2048xbf16, #tpu.memory_space<vmem>>, vector<64x2048xbf16>
    %cst = arith.constant dense<0.000000e+00> : vector<128x2048xf32>
    %2 = tpu.matmul %0, %1, %cst {dimension_numbers = #tpu.dot_dimension_numbers<[1], [0], [0], [1], [0, 0, 1, 1], [], []>} : vector<128x64xbf16>, vector<64x2048xbf16>, vector<128x2048xf32> -> vector<128x2048xf32>
    %c0_3 = arith.constant 0 : index
    %c0_4 = arith.constant 0 : index
    %3 = vector.load %arg4[%c0_3, %c0_4] : memref<128x2048xf32, #tpu.memory_space<vmem>>, vector<128x2048xf32>
    tpu.vector_store %arg4[%c0_3, %c0_4], %2 {strides = array<i32>} : memref<128x2048xf32, #tpu.memory_space<vmem>>, vector<128x2048xf32>,
    return
  }
  func.func @transform_0(%arg0: i32, %arg1: i32) -> (i32, i32) {
    %c0_i32 = arith.constant 0 : i32
    %c0_i32_0 = arith.constant 0 : i32
    return %arg0, %c0_i32 : i32, i32
  }
  func.func @transform_1(%arg0: i32, %arg1: i32) -> (i32, i32) {
    %c0_i32 = arith.constant 0 : i32
    %c0_i32_0 = arith.constant 0 : i32
    return %c0_i32, %arg1 : i32, i32
  }
  func.func @transform_2(%arg0: i32, %arg1: i32) -> (i32, i32) {
    %c0_i32 = arith.constant 0 : i32
    return %arg0, %arg1 : i32, i32
  }
}

module attributes {stable_mosaic.version = 11 : i64} {
  func.func @_mm_kernel(%arg0: i32, %arg1: i32, %arg2: memref<512x32xbf16, #tpu.memory_space<vmem>>, %arg3: memref<32x512xbf16, #tpu.memory_space<vmem>>, %arg4: memref<512x512xf32, #tpu.memory_space<vmem>>) attributes {dimension_semantics = [#tpu.dimension_semantics<parallel>, #tpu.dimension_semantics<parallel>], iteration_bounds = array<i64: 1, 1>, scalar_prefetch = 0 : i64, scratch_operands = 0 : i64, tpu.core_type = #tpu.core_type<tc>, window_params = [{transform_indices = @transform_0, window_bounds = array<i64: 512, 32>}, {transform_indices = @transform_1, window_bounds = array<i64: 32, 512>}, {transform_indices = @transform_2, window_bounds = array<i64: 512, 512>}]} {
    %c0 = arith.constant 0 : index
    %c0_0 = arith.constant 0 : index
    %0 = vector.load %arg2[%c0, %c0_0] : memref<512x32xbf16, #tpu.memory_space<vmem>>, vector<512x32xbf16>
    %c0_1 = arith.constant 0 : index
    %c0_2 = arith.constant 0 : index
    %1 = vector.load %arg3[%c0_1, %c0_2] : memref<32x512xbf16, #tpu.memory_space<vmem>>, vector<32x512xbf16>
    %cst = arith.constant dense<0.000000e+00> : vector<512x512xf32>
    %2 = tpu.matmul %0, %1, %cst {dimension_numbers = #tpu.dot_dimension_numbers<[1], [0], [0], [1], [0, 0, 1, 1], [], []>} : vector<512x32xbf16>, vector<32x512xbf16>, vector<512x512xf32> -> vector<512x512xf32>
    %c0_3 = arith.constant 0 : index
    %c0_4 = arith.constant 0 : index
    %3 = vector.load %arg4[%c0_3, %c0_4] : memref<512x512xf32, #tpu.memory_space<vmem>>, vector<512x512xf32>
    tpu.vector_store %arg4[%c0_3, %c0_4], %2 {strides = array<i32>} : memref<512x512xf32, #tpu.memory_space<vmem>>, vector<512x512xf32>,
    return
  }
  func.func @transform_0(%arg0: i32, %arg1: i32) -> (i32, i32) {
    %c0_i32 = arith.constant 0 : i32
    %c0_i32_0 = arith.constant 0 : i32
    return %arg0, %c0_i32 : i32, i32
  }
  func.func @transform_1(%arg0: i32, %arg1: i32) -> (i32, i32) {
    %c0_i32 = arith.constant 0 : i32
    %c0_i32_0 = arith.constant 0 : i32
    return %c0_i32, %arg1 : i32, i32
  }
  func.func @transform_2(%arg0: i32, %arg1: i32) -> (i32, i32) {
    %c0_i32 = arith.constant 0 : i32
    return %arg0, %arg1 : i32, i32
  }
}

module attributes {stable_mosaic.version = 11 : i64} {
  func.func @_mm_bias_act_kernel(%arg0: i32, %arg1: i32, %arg2: memref<8x1024xbf16, #tpu.memory_space<vmem>>, %arg3: memref<1024x1024xbf16, #tpu.memory_space<vmem>>, %arg4: memref<1x1024xf32, #tpu.memory_space<vmem>>, %arg5: memref<8x1024xf32, #tpu.memory_space<vmem>>) attributes {dimension_semantics = [#tpu.dimension_semantics<parallel>, #tpu.dimension_semantics<parallel>], iteration_bounds = array<i64: 1, 1>, scalar_prefetch = 0 : i64, scratch_operands = 0 : i64, tpu.core_type = #tpu.core_type<tc>, window_params = [{transform_indices = @transform_0, window_bounds = array<i64: 8, 1024>}, {transform_indices = @transform_1, window_bounds = array<i64: 1024, 1024>}, {transform_indices = @transform_2, window_bounds = array<i64: 1, 1024>}, {transform_indices = @transform_3, window_bounds = array<i64: 8, 1024>}]} {
    %c0 = arith.constant 0 : index
    %c0_0 = arith.constant 0 : index
    %0 = vector.load %arg2[%c0, %c0_0] : memref<8x1024xbf16, #tpu.memory_space<vmem>>, vector<8x1024xbf16>
    %c0_1 = arith.constant 0 : index
    %c0_2 = arith.constant 0 : index
    %1 = vector.load %arg3[%c0_1, %c0_2] : memref<1024x1024xbf16, #tpu.memory_space<vmem>>, vector<1024x1024xbf16>
    %cst = arith.constant dense<0.000000e+00> : vector<8x1024xf32>
    %2 = tpu.matmul %0, %1, %cst {dimension_numbers = #tpu.dot_dimension_numbers<[1], [0], [0], [1], [0, 0, 1, 1], [], []>} : vector<8x1024xbf16>, vector<1024x1024xbf16>, vector<8x1024xf32> -> vector<8x1024xf32>
    %c0_3 = arith.constant 0 : index
    %c0_4 = arith.constant 0 : index
    %3 = vector.load %arg4[%c0_3, %c0_4] : memref<1x1024xf32, #tpu.memory_space<vmem>>, vector<1x1024xf32>
    %4 = vector.broadcast %3 : vector<1x1024xf32> to vector<8x1024xf32>
    %5 = arith.addf %2, %4 : vector<8x1024xf32>
    %6 = arith.negf %5 : vector<8x1024xf32>
    %7 = math.exp %6 : vector<8x1024xf32>
    %cst_5 = arith.constant 1.000000e+00 : f32
    %8 = vector.broadcast %cst_5 : f32 to vector<8x1024xf32>
    %9 = arith.addf %8, %7 : vector<8x1024xf32>
    %10 = arith.divf %8, %9 : vector<8x1024xf32>
    %c0_6 = arith.constant 0 : index
    %c0_7 = arith.constant 0 : index
    %11 = vector.load %arg5[%c0_6, %c0_7] : memref<8x1024xf32, #tpu.memory_space<vmem>>, vector<8x1024xf32>
    tpu.vector_store %arg5[%c0_6, %c0_7], %10 {strides = array<i32>} : memref<8x1024xf32, #tpu.memory_space<vmem>>, vector<8x1024xf32>,
    return
  }
  func.func @transform_0(%arg0: i32, %arg1: i32) -> (i32, i32) {
    %c0_i32 = arith.constant 0 : i32
    %c0_i32_0 = arith.constant 0 : i32
    return %arg0, %c0_i32 : i32, i32
  }
  func.func @transform_1(%arg0: i32, %arg1: i32) -> (i32, i32) {
    %c0_i32 = arith.constant 0 : i32
    %c0_i32_0 = arith.constant 0 : i32
    return %c0_i32, %arg1 : i32, i32
  }
  func.func @transform_2(%arg0: i32, %arg1: i32) -> (i32, i32) {
    %c0_i32 = arith.constant 0 : i32
    %c0_i32_0 = arith.constant 0 : i32
    return %c0_i32, %arg1 : i32, i32
  }
  func.func @transform_3(%arg0: i32, %arg1: i32) -> (i32, i32) {
    %c0_i32 = arith.constant 0 : i32
    return %arg0, %arg1 : i32, i32
  }
}

</mosaic_0001>

<llo_original>
// kernel: decoder_conv_forward.5
$region0: #{decoder_conv_forward.5}
  #allocation0 [shape = 'u32[]', space=smem, size = 0x4, offset = 0x4, fixed_abs, tag = 'smem constant byte address 0x4 - core index']
  #allocation1 [shape = 'u32[144,128]{1,0:T(1,128)}', space=vmem, size = 0x12000, scoped, tag = 'internal scratch']
  %s0 = inlined_call_operand.vmem [shape: bf16[8,16], index: 0, kind: input, shape index: {}]
  %s1 = inlined_call_operand.hbm [shape: bf16[16,2048], index: 1, kind: input, shape index: {}]
  %s2 = inlined_call_operand.vmem [shape: f32[8,2048], index: 2, kind: output, shape index: {}]
  %s3 = sld [smem:[#allocation0]]
  $region22: #{decoder_conv_forward.5} parent=0
    _
  %s5 = ssub.s32 1, %s3
  %s6 = scalar_select 0, %s5, %s3
  $region1: #{decoder_conv_forward.5} parent=0
    #allocation2 [shape = 'u8[65536]{0}', space=vmem, size = 0x10000, scoped, tag = 'input window, operand 1, single buffered']
    #allocation3 [shape = 's32[1]{0}', space=sflag, size = 0x4, scoped, tag = 'scoped memory for decoder_conv_forward.5']
    %7 = vsyncpa [#allocation3], 0
    // Predicated region
    $region2: #{decoder_conv_forward.5} parent=1 // pred_check
      _
    $region3: #{decoder_conv_forward.5} parent=1 // pred_check_branch
      %9 = sbr.rel (0) target = $region5
    $region4: #{decoder_conv_forward.5} parent=1 // pred_region
      _
    $region5: #{decoder_conv_forward.5} parent=1 // pred_fallthru
      _
    // Predicated region
    $region6: #{decoder_conv_forward.5} parent=1 // pred_check
      _
    $region7: #{decoder_conv_forward.5} parent=1 // pred_check_branch
      %11 = sbr.rel (0) target = $region9
    $region8: #{decoder_conv_forward.5} parent=1 // pred_region
      %s13 = ssub.s32 2048, 2048
      %14 = vsyncadd [#allocation3], %s13
      %s15 = sshll.u32 [#allocation2], 4
      %s16 = int_to_ptr.vmem [resolvable:$true] %s15
      %21 = dma.hbm_to_vmem [thread:$0]  %s1, 2048, %s16, [#allocation3], 1024, 1024, 64
    $region9: #{decoder_conv_forward.5} parent=1 // pred_fallthru
      _
    // Predicated region
    $region10: #{decoder_conv_forward.5} parent=1 // pred_check
      _
    $region11: #{decoder_conv_forward.5} parent=1 // pred_check_branch
      %23 = sbr.rel (0) target = $region13
    $region12: #{decoder_conv_forward.5} parent=1 // pred_region
      %24 = dma.done [#allocation3], 2048
    $region13: #{decoder_conv_forward.5} parent=1 // pred_fallthru
      _
    %v26 = vld [vmem:[%s0] sm:$0xf]
    %v27 = vld [vmem:[#allocation2] sm:$0xff]
    %v28 = vld [vmem:[#allocation2 + $0x8] sm:$0xff]
    %v29 = vld [vmem:[#allocation2 + $0x10] sm:$0xff]
    %v30 = vld [vmem:[#allocation2 + $0x18] sm:$0xff]
    %v31 = vld [vmem:[#allocation2 + $0x20] sm:$0xff]
    %v32 = vld [vmem:[#allocation2 + $0x28] sm:$0xff]
    %v33 = vld [vmem:[#allocation2 + $0x30] sm:$0xff]
    %v34 = vld [vmem:[#allocation2 + $0x38] sm:$0xff]
    %v35 = vld [vmem:[#allocation2 + $0x40] sm:$0xff]
    %v36 = vld [vmem:[#allocation2 + $0x48] sm:$0xff]
    %v37 = vld [vmem:[#allocation2 + $0x50] sm:$0xff]
    %v38 = vld [vmem:[#allocation2 + $0x58] sm:$0xff]
    %v39 = vld [vmem:[#allocation2 + $0x60] sm:$0xff]
    %v40 = vld [vmem:[#allocation2 + $0x68] sm:$0xff]
    %v41 = vld [vmem:[#allocation2 + $0x70] sm:$0xff]
    %v42 = vld [vmem:[#allocation2 + $0x78] sm:$0xff]
    %v59 = vunpack.c.l.b16 %v27
    %v60 = vunpack.c.h.b16 %v27
    %v61 = vunpack.c.l.b16 %v28
    %v62 = vunpack.c.h.b16 %v28
    %v63 = vunpack.c.l.b16 %v29
    %v64 = vunpack.c.h.b16 %v29
    %v65 = vunpack.c.l.b16 %v30
    %v66 = vunpack.c.h.b16 %v30
    %v67 = vunpack.c.l.b16 %v31
    %v68 = vunpack.c.h.b16 %v31
    %v69 = vunpack.c.l.b16 %v32
    %v70 = vunpack.c.h.b16 %v32
    %v71 = vunpack.c.l.b16 %v33
    %v72 = vunpack.c.h.b16 %v33
    %v73 = vunpack.c.l.b16 %v34
    %v74 = vunpack.c.h.b16 %v34
    %v75 = vunpack.c.l.b16 %v35
    %v76 = vunpack.c.h.b16 %v35
    %v77 = vunpack.c.l.b16 %v36
    %v78 = vunpack.c.h.b16 %v36
    %v79 = vunpack.c.l.b16 %v37
    %v80 = vunpack.c.h.b16 %v37
    %v81 = vunpack.c.l.b16 %v38
    %v82 = vunpack.c.h.b16 %v38
    %v83 = vunpack.c.l.b16 %v39
    %v84 = vunpack.c.h.b16 %v39
    %v85 = vunpack.c.l.b16 %v40
    %v86 = vunpack.c.h.b16 %v40
    %v87 = vunpack.c.l.b16 %v41
    %v88 = vunpack.c.h.b16 %v41
    %v89 = vunpack.c.l.b16 %v42
    %v90 = vunpack.c.h.b16 %v42
    %v91 = vpack.c.b16 %v75, %v59
    %v92 = vpack.c.b16 %v76, %v60
    %v93 = vpack.c.b16 %v77, %v61
    %v94 = vpack.c.b16 %v78, %v62
    %v95 = vpack.c.b16 %v79, %v63
    %v96 = vpack.c.b16 %v80, %v64
    %v97 = vpack.c.b16 %v81, %v65
    %v98 = vpack.c.b16 %v82, %v66
    %v99 = vpack.c.b16 %v83, %v67
    %v100 = vpack.c.b16 %v84, %v68
    %v101 = vpack.c.b16 %v85, %v69
    %v102 = vpack.c.b16 %v86, %v70
    %v103 = vpack.c.b16 %v87, %v71
    %v104 = vpack.c.b16 %v88, %v72
    %v105 = vpack.c.b16 %v89, %v73
    %v106 = vpack.c.b16 %v90, %v74
    %vm123 = vcmask 130048
    %v125 = vsel %vm123, %v26, 0
    %127 = vmatprep.subr.bf16.mxu0 %v92
    %128 = vmatpush1.bf16.msra.mxu0 %v91
    %129 = vmatprep.subr.bf16.mxu0 0
    %130 = vmatpush1.bf16.msra.mxu0 0
    %131 = vmatprep.subr.bf16.mxu0 0
    %132 = vmatpush1.bf16.msra.mxu0 0
    %133 = vmatprep.subr.bf16.mxu0 0
    %134 = vmatpush1.bf16.msra.mxu0 0
    %135 = vmatprep.subr.bf16.mxu0 0
    %136 = vmatpush1.bf16.msra.mxu0 0
    %137 = vmatprep.subr.bf16.mxu0 0
    %138 = vmatpush1.bf16.msra.mxu0 0
    %139 = vmatprep.subr.bf16.mxu0 0
    %140 = vmatpush1.bf16.msra.mxu0 0
    %141 = vmatprep.subr.bf16.mxu0 0
    %142 = vmatpush1.bf16.msra.mxu0 0
    %143 = vmatprep.subr.bf16.mxu0 0
    %144 = vmatpush1.bf16.msra.mxu0 0
    %145 = vmatprep.subr.bf16.mxu0 0
    %146 = vmatpush1.bf16.msra.mxu0 0
    %147 = vmatprep.subr.bf16.mxu0 0
    %148 = vmatpush1.bf16.msra.mxu0 0
    %149 = vmatprep.subr.bf16.mxu0 0
    %150 = vmatpush1.bf16.msra.mxu0 0
    %151 = vmatprep.subr.bf16.mxu0 0
    %152 = vmatpush1.bf16.msra.mxu0 0
    %153 = vmatprep.subr.bf16.mxu0 0
    %154 = vmatpush1.bf16.msra.mxu0 0
    %155 = vmatprep.subr.bf16.mxu0 0
    %156 = vmatpush1.bf16.msra.mxu0 0
    %157 = vmatprep.subr.bf16.mxu0 0
    %158 = vmatpush1.bf16.msra.mxu0 0
    %159 = vmatprep.mubr.bf16.mxu0 0
    %160 = vmatmul.mubr.bf16.gmra.mrb[0].mxu0 %v125
    %v161 = vpop.f32.mrb[0].mxu0
    %v162 = vadd.f32 0.0, %v161
    %v163 = vpop.f32.mrb[0].mxu0
    %v164 = vadd.f32 0.0, %v163
    %v165 = vpop.f32.mrb[0].mxu0
    %v166 = vpop.f32.mrb[0].mxu0
    %167 = vdwg.mxu0
    %168 = vmatprep.subr.bf16.mxu0 %v94
    %169 = vmatpush1.bf16.msra.mxu0 %v93
    %170 = vmatprep.subr.bf16.mxu0 0
    %171 = vmatpush1.bf16.msra.mxu0 0
    %172 = vmatprep.subr.bf16.mxu0 0
    %173 = vmatpush1.bf16.msra.mxu0 0
    %174 = vmatprep.subr.bf16.mxu0 0
    %175 = vmatpush1.bf16.msra.mxu0 0
    %176 = vmatprep.subr.bf16.mxu0 0
    %177 = vmatpush1.bf16.msra.mxu0 0
    %178 = vmatprep.subr.bf16.mxu0 0
    %179 = vmatpush1.bf16.msra.mxu0 0
    %180 = vmatprep.subr.bf16.mxu0 0
    %181 = vmatpush1.bf16.msra.mxu0 0
    %182 = vmatprep.subr.bf16.mxu0 0
    %183 = vmatpush1.bf16.msra.mxu0 0
    %184 = vmatprep.subr.bf16.mxu0 0
    %185 = vmatpush1.bf16.msra.mxu0 0
    %186 = vmatprep.subr.bf16.mxu0 0
    %187 = vmatpush1.bf16.msra.mxu0 0
    %188 = vmatprep.subr.bf16.mxu0 0
    %189 = vmatpush1.bf16.msra.mxu0 0
    %190 = vmatprep.subr.bf16.mxu0 0
    %191 = vmatpush1.bf16.msra.mxu0 0
    %192 = vmatprep.subr.bf16.mxu0 0
    %193 = vmatpush1.bf16.msra.mxu0 0
    %194 = vmatprep.subr.bf16.mxu0 0
    %195 = vmatpush1.bf16.msra.mxu0 0
    %196 = vmatprep.subr.bf16.mxu0 0
    %197 = vmatpush1.bf16.msra.mxu0 0
    %198 = vmatprep.subr.bf16.mxu0 0
    %199 = vmatpush1.bf16.msra.mxu0 0
    %200 = vmatprep.mubr.bf16.mxu0 0
    %201 = vmatmul.mubr.bf16.gmra.mrb[0].mxu0 %v125
    %v202 = vpop.f32.mrb[0].mxu0
    %v203 = vadd.f32 0.0, %v202
    %v204 = vpop.f32.mrb[0].mxu0
    %v205 = vadd.f32 0.0, %v204
    %v206 = vpop.f32.mrb[0].mxu0
    %v207 = vpop.f32.mrb[0].mxu0
    %208 = vdwg.mxu0
    %209 = vmatprep.subr.bf16.mxu0 %v96
    %210 = vmatpush1.bf16.msra.mxu0 %v95
    %211 = vmatprep.subr.bf16.mxu0 0
    %212 = vmatpush1.bf16.msra.mxu0 0
    %213 = vmatprep.subr.bf16.mxu0 0
    %214 = vmatpush1.bf16.msra.mxu0 0
    %215 = vmatprep.subr.bf16.mxu0 0
    %216 = vmatpush1.bf16.msra.mxu0 0
    %217 = vmatprep.subr.bf16.mxu0 0
    %218 = vmatpush1.bf16.msra.mxu0 0
    %219 = vmatprep.subr.bf16.mxu0 0
    %220 = vmatpush1.bf16.msra.mxu0 0
    %221 = vmatprep.subr.bf16.mxu0 0
    %222 = vmatpush1.bf16.msra.mxu0 0
    %223 = vmatprep.subr.bf16.mxu0 0
    %224 = vmatpush1.bf16.msra.mxu0 0
    %225 = vmatprep.subr.bf16.mxu0 0
    %226 = vmatpush1.bf16.msra.mxu0 0
    %227 = vmatprep.subr.bf16.mxu0 0
    %228 = vmatpush1.bf16.msra.mxu0 0
    %229 = vmatprep.subr.bf16.mxu0 0
    %230 = vmatpush1.bf16.msra.mxu0 0
    %231 = vmatprep.subr.bf16.mxu0 0
    %232 = vmatpush1.bf16.msra.mxu0 0
    %233 = vmatprep.subr.bf16.mxu0 0
    %234 = vmatpush1.bf16.msra.mxu0 0
    %235 = vmatprep.subr.bf16.mxu0 0
    %236 = vmatpush1.bf16.msra.mxu0 0
    %237 = vmatprep.subr.bf16.mxu0 0
    %238 = vmatpush1.bf16.msra.mxu0 0
    %239 = vmatprep.subr.bf16.mxu0 0
    %240 = vmatpush1.bf16.msra.mxu0 0
    %241 = vmatprep.mubr.bf16.mxu0 0
    %242 = vmatmul.mubr.bf16.gmra.mrb[0].mxu0 %v125
    %v243 = vpop.f32.mrb[0].mxu0
    %v244 = vadd.f32 0.0, %v243
    %v245 = vpop.f32.mrb[0].mxu0
    %v246 = vadd.f32 0.0, %v245
    %v247 = vpop.f32.mrb[0].mxu0
    %v248 = vpop.f32.mrb[0].mxu0
    %249 = vdwg.mxu0
    %250 = vmatprep.subr.bf16.mxu0 %v98
    %251 = vmatpush1.bf16.msra.mxu0 %v97
    %252 = vmatprep.subr.bf16.mxu0 0
    %253 = vmatpush1.bf16.msra.mxu0 0
    %254 = vmatprep.subr.bf16.mxu0 0
    %255 = vmatpush1.bf16.msra.mxu0 0
    %256 = vmatprep.subr.bf16.mxu0 0
    %257 = vmatpush1.bf16.msra.mxu0 0
    %258 = vmatprep.subr.bf16.mxu0 0
    %259 = vmatpush1.bf16.msra.mxu0 0
    %260 = vmatprep.subr.bf16.mxu0 0
    %261 = vmatpush1.bf16.msra.mxu0 0
    %262 = vmatprep.subr.bf16.mxu0 0
    %263 = vmatpush1.bf16.msra.mxu0 0
    %264 = vmatprep.subr.bf16.mxu0 0
    %265 = vmatpush1.bf16.msra.mxu0 0
    %266 = vmatprep.subr.bf16.mxu0 0
    %267 = vmatpush1.bf16.msra.mxu0 0
    %268 = vmatprep.subr.bf16.mxu0 0
    %269 = vmatpush1.bf16.msra.mxu0 0
    %270 = vmatprep.subr.bf16.mxu0 0
    %271 = vmatpush1.bf16.msra.mxu0 0
    %272 = vmatprep.subr.bf16.mxu0 0
    %273 = vmatpush1.bf16.msra.mxu0 0
    %274 = vmatprep.subr.bf16.mxu0 0
    %275 = vmatpush1.bf16.msra.mxu0 0
    %276 = vmatprep.subr.bf16.mxu0 0
    %277 = vmatpush1.bf16.msra.mxu0 0
    %278 = vmatprep.subr.bf16.mxu0 0
    %279 = vmatpush1.bf16.msra.mxu0 0
    %280 = vmatprep.subr.bf16.mxu0 0
    %281 = vmatpush1.bf16.msra.mxu0 0
    %282 = vmatprep.mubr.bf16.mxu0 0
    %283 = vmatmul.mubr.bf16.gmra.mrb[0].mxu0 %v125
    %v284 = vpop.f32.mrb[0].mxu0
    %v285 = vadd.f32 0.0, %v284
    %v286 = vpop.f32.mrb[0].mxu0
    %v287 = vadd.f32 0.0, %v286
    %v288 = vpop.f32.mrb[0].mxu0
    %v289 = vpop.f32.mrb[0].mxu0
    %290 = vdwg.mxu0
    %291 = vmatprep.subr.bf16.mxu0 %v100
    %292 = vmatpush1.bf16.msra.mxu0 %v99
    %293 = vmatprep.subr.bf16.mxu0 0
    %294 = vmatpush1.bf16.msra.mxu0 0
    %295 = vmatprep.subr.bf16.mxu0 0
    %296 = vmatpush1.bf16.msra.mxu0 0
    %297 = vmatprep.subr.bf16.mxu0 0
    %298 = vmatpush1.bf16.msra.mxu0 0
    %299 = vmatprep.subr.bf16.mxu0 0
    %300 = vmatpush1.bf16.msra.mxu0 0
    %301 = vmatprep.subr.bf16.mxu0 0
    %302 = vmatpush1.bf16.msra.mxu0 0
    %303 = vmatprep.subr.bf16.mxu0 0
    %304 = vmatpush1.bf16.msra.mxu0 0
    %305 = vmatprep.subr.bf16.mxu0 0
    %306 = vmatpush1.bf16.msra.mxu0 0
    %307 = vmatprep.subr.bf16.mxu0 0
    %308 = vmatpush1.bf16.msra.mxu0 0
    %309 = vmatprep.subr.bf16.mxu0 0
    %310 = vmatpush1.bf16.msra.mxu0 0
    %311 = vmatprep.subr.bf16.mxu0 0
    %312 = vmatpush1.bf16.msra.mxu0 0
    %313 = vmatprep.subr.bf16.mxu0 0
    %314 = vmatpush1.bf16.msra.mxu0 0
    %315 = vmatprep.subr.bf16.mxu0 0
    %316 = vmatpush1.bf16.msra.mxu0 0
    %317 = vmatprep.subr.bf16.mxu0 0
    %318 = vmatpush1.bf16.msra.mxu0 0
    %319 = vmatprep.subr.bf16.mxu0 0
    %320 = vmatpush1.bf16.msra.mxu0 0
    %321 = vmatprep.subr.bf16.mxu0 0
    %322 = vmatpush1.bf16.msra.mxu0 0
    %323 = vmatprep.mubr.bf16.mxu0 0
    %324 = vmatmul.mubr.bf16.gmra.mrb[0].mxu0 %v125
    %v325 = vpop.f32.mrb[0].mxu0
    %v326 = vadd.f32 0.0, %v325
    %v327 = vpop.f32.mrb[0].mxu0
    %v328 = vadd.f32 0.0, %v327
    %v329 = vpop.f32.mrb[0].mxu0
    %v330 = vpop.f32.mrb[0].mxu0
    %331 = vdwg.mxu0
    %332 = vmatprep.subr.bf16.mxu0 %v102
    %333 = vmatpush1.bf16.msra.mxu0 %v101
    %334 = vmatprep.subr.bf16.mxu0 0
    %335 = vmatpush1.bf16.msra.mxu0 0
    %336 = vmatprep.subr.bf16.mxu0 0
    %337 = vmatpush1.bf16.msra.mxu0 0
    %338 = vmatprep.subr.bf16.mxu0 0
    %339 = vmatpush1.bf16.msra.mxu0 0
    %340 = vmatprep.subr.bf16.mxu0 0
    %341 = vmatpush1.bf16.msra.mxu0 0
    %342 = vmatprep.subr.bf16.mxu0 0
    %343 = vmatpush1.bf16.msra.mxu0 0
    %344 = vmatprep.subr.bf16.mxu0 0
    %345 = vmatpush1.bf16.msra.mxu0 0
    %346 = vmatprep.subr.bf16.mxu0 0
    %347 = vmatpush1.bf16.msra.mxu0 0
    %348 = vmatprep.subr.bf16.mxu0 0
    %349 = vmatpush1.bf16.msra.mxu0 0
    %350 = vmatprep.subr.bf16.mxu0 0
    %351 = vmatpush1.bf16.msra.mxu0 0
    %352 = vmatprep.subr.bf16.mxu0 0
    %353 = vmatpush1.bf16.msra.mxu0 0
    %354 = vmatprep.subr.bf16.mxu0 0
    %355 = vmatpush1.bf16.msra.mxu0 0
    %356 = vmatprep.subr.bf16.mxu0 0
    %357 = vmatpush1.bf16.msra.mxu0 0
    %358 = vmatprep.subr.bf16.mxu0 0
    %359 = vmatpush1.bf16.msra.mxu0 0
    %360 = vmatprep.subr.bf16.mxu0 0
    %361 = vmatpush1.bf16.msra.mxu0 0
    %362 = vmatprep.subr.bf16.mxu0 0
    %363 = vmatpush1.bf16.msra.mxu0 0
    %364 = vmatprep.mubr.bf16.mxu0 0
    %365 = vmatmul.mubr.bf16.gmra.mrb[0].mxu0 %v125
    %v366 = vpop.f32.mrb[0].mxu0
    %v367 = vadd.f32 0.0, %v366
    %v368 = vpop.f32.mrb[0].mxu0
    %v369 = vadd.f32 0.0, %v368
    %v370 = vpop.f32.mrb[0].mxu0
    %v371 = vpop.f32.mrb[0].mxu0
    %372 = vdwg.mxu0
    %373 = vmatprep.subr.bf16.mxu0 %v104
    %374 = vmatpush1.bf16.msra.mxu0 %v103
    %375 = vmatprep.subr.bf16.mxu0 0
    %376 = vmatpush1.bf16.msra.mxu0 0
    %377 = vmatprep.subr.bf16.mxu0 0
    %378 = vmatpush1.bf16.msra.mxu0 0
    %379 = vmatprep.subr.bf16.mxu0 0
    %380 = vmatpush1.bf16.msra.mxu0 0
    %381 = vmatprep.subr.bf16.mxu0 0
    %382 = vmatpush1.bf16.msra.mxu0 0
    %383 = vmatprep.subr.bf16.mxu0 0
    %384 = vmatpush1.bf16.msra.mxu0 0
    %385 = vmatprep.subr.bf16.mxu0 0
    %386 = vmatpush1.bf16.msra.mxu0 0
    %387 = vmatprep.subr.bf16.mxu0 0
    %388 = vmatpush1.bf16.msra.mxu0 0
    %389 = vmatprep.subr.bf16.mxu0 0
    %390 = vmatpush1.bf16.msra.mxu0 0
    %391 = vmatprep.subr.bf16.mxu0 0
    %392 = vmatpush1.bf16.msra.mxu0 0
    %393 = vmatprep.subr.bf16.mxu0 0
    %394 = vmatpush1.bf16.msra.mxu0 0
    %395 = vmatprep.subr.bf16.mxu0 0
    %396 = vmatpush1.bf16.msra.mxu0 0
    %397 = vmatprep.subr.bf16.mxu0 0
    %398 = vmatpush1.bf16.msra.mxu0 0
    %399 = vmatprep.subr.bf16.mxu0 0
    %400 = vmatpush1.bf16.msra.mxu0 0
    %401 = vmatprep.subr.bf16.mxu0 0
    %402 = vmatpush1.bf16.msra.mxu0 0
    %403 = vmatprep.subr.bf16.mxu0 0
    %404 = vmatpush1.bf16.msra.mxu0 0
    %405 = vmatprep.mubr.bf16.mxu0 0
    %406 = vmatmul.mubr.bf16.gmra.mrb[0].mxu0 %v125
    %v407 = vpop.f32.mrb[0].mxu0
    %v408 = vadd.f32 0.0, %v407
    %v409 = vpop.f32.mrb[0].mxu0
    %v410 = vadd.f32 0.0, %v409
    %v411 = vpop.f32.mrb[0].mxu0
    %v412 = vpop.f32.mrb[0].mxu0
    %413 = vdwg.mxu0
    %414 = vmatprep.subr.bf16.mxu0 %v106
    %415 = vmatpush1.bf16.msra.mxu0 %v105
    %416 = vmatprep.subr.bf16.mxu0 0
    %417 = vmatpush1.bf16.msra.mxu0 0
    %418 = vmatprep.subr.bf16.mxu0 0
    %419 = vmatpush1.bf16.msra.mxu0 0
    %420 = vmatprep.subr.bf16.mxu0 0
    %421 = vmatpush1.bf16.msra.mxu0 0
    %422 = vmatprep.subr.bf16.mxu0 0
    %423 = vmatpush1.bf16.msra.mxu0 0
    %424 = vmatprep.subr.bf16.mxu0 0
    %425 = vmatpush1.bf16.msra.mxu0 0
    %426 = vmatprep.subr.bf16.mxu0 0
    %427 = vmatpush1.bf16.msra.mxu0 0
    %428 = vmatprep.subr.bf16.mxu0 0
    %429 = vmatpush1.bf16.msra.mxu0 0
    %430 = vmatprep.subr.bf16.mxu0 0
    %431 = vmatpush1.bf16.msra.mxu0 0
    %432 = vmatprep.subr.bf16.mxu0 0
    %433 = vmatpush1.bf16.msra.mxu0 0
    %434 = vmatprep.subr.bf16.mxu0 0
    %435 = vmatpush1.bf16.msra.mxu0 0
    %436 = vmatprep.subr.bf16.mxu0 0
    %437 = vmatpush1.bf16.msra.mxu0 0
    %438 = vmatprep.subr.bf16.mxu0 0
    %439 = vmatpush1.bf16.msra.mxu0 0
    %440 = vmatprep.subr.bf16.mxu0 0
    %441 = vmatpush1.bf16.msra.mxu0 0
    %442 = vmatprep.subr.bf16.mxu0 0
    %443 = vmatpush1.bf16.msra.mxu0 0
    %444 = vmatprep.subr.bf16.mxu0 0
    %445 = vmatpush1.bf16.msra.mxu0 0
    %446 = vmatprep.mubr.bf16.mxu0 0
    %447 = vmatmul.mubr.bf16.gmra.mrb[0].mxu0 %v125
    %v448 = vpop.f32.mrb[0].mxu0
    %v449 = vadd.f32 0.0, %v448
    %v450 = vpop.f32.mrb[0].mxu0
    %v451 = vadd.f32 0.0, %v450
    %v452 = vpop.f32.mrb[0].mxu0
    %v453 = vpop.f32.mrb[0].mxu0
    %454 = vdwg.mxu0
    %455 = vst [vmem:[%s2] sm:$0xff] %v162
    %456 = vst [vmem:[%s2 + $0x8] sm:$0xff] %v164
    %457 = vst [vmem:[%s2 + $0x10] sm:$0xff] %v203
    %458 = vst [vmem:[%s2 + $0x18] sm:$0xff] %v205
    %459 = vst [vmem:[%s2 + $0x20] sm:$0xff] %v244
    %460 = vst [vmem:[%s2 + $0x28] sm:$0xff] %v246
    %461 = vst [vmem:[%s2 + $0x30] sm:$0xff] %v285
    %462 = vst [vmem:[%s2 + $0x38] sm:$0xff] %v287
    %463 = vst [vmem:[%s2 + $0x40] sm:$0xff] %v326
    %464 = vst [vmem:[%s2 + $0x48] sm:$0xff] %v328
    %465 = vst [vmem:[%s2 + $0x50] sm:$0xff] %v367
    %466 = vst [vmem:[%s2 + $0x58] sm:$0xff] %v369
    %467 = vst [vmem:[%s2 + $0x60] sm:$0xff] %v408
    %468 = vst [vmem:[%s2 + $0x68] sm:$0xff] %v410
    %469 = vst [vmem:[%s2 + $0x70] sm:$0xff] %v449
    %470 = vst [vmem:[%s2 + $0x78] sm:$0xff] %v451
    // Predicated region
    $region14: #{decoder_conv_forward.5} parent=1 // pred_check
      _
    $region15: #{decoder_conv_forward.5} parent=1 // pred_check_branch
      %472 = sbr.rel (0) target = $region17
    $region16: #{decoder_conv_forward.5} parent=1 // pred_region
      _
    $region17: #{decoder_conv_forward.5} parent=1 // pred_fallthru
      _
    // Predicated region
    $region18: #{decoder_conv_forward.5} parent=1 // pred_check
      _
    $region19: #{decoder_conv_forward.5} parent=1 // pred_check_branch
      %474 = sbr.rel (0) target = $region21
    $region20: #{decoder_conv_forward.5} parent=1 // pred_region
      _
    $region21: #{decoder_conv_forward.5} parent=1 // pred_fallthru
      _
    %475 = vsyncpa [#allocation3], 1

// kernel: decoder_conv_forward.6
$region0: #{decoder_conv_forward.6}
  #allocation0 [shape = 'u32[]', space=smem, size = 0x4, offset = 0x4, fixed_abs, tag = 'smem constant byte address 0x4 - core index']
  #allocation1 [shape = 'u32[144,128]{1,0:T(1,128)}', space=vmem, size = 0x12000, scoped, tag = 'internal scratch']
  %s0 = inlined_call_operand.vmem [shape: bf16[32,96], index: 0, kind: input, shape index: {}]
  %s1 = inlined_call_operand.hbm [shape: bf16[96,2048], index: 1, kind: input, shape index: {}]
  %s2 = inlined_call_operand.vmem [shape: f32[32,2048], index: 2, kind: output, shape index: {}]
  %s3 = sld [smem:[#allocation0]]
  $region22: #{decoder_conv_forward.6} parent=0
    _
  %s5 = ssub.s32 1, %s3
  %s6 = scalar_select 0, %s5, %s3
  $region1: #{decoder_conv_forward.6} parent=0
    #allocation2 [shape = 'u8[393216]{0}', space=vmem, size = 0x60000, scoped, tag = 'input window, operand 1, single buffered']
    #allocation3 [shape = 's32[1]{0}', space=sflag, size = 0x4, scoped, tag = 'scoped memory for decoder_conv_forward.6']
    %7 = vsyncpa [#allocation3], 0
    // Predicated region
    $region2: #{decoder_conv_forward.6} parent=1 // pred_check
      _
    $region3: #{decoder_conv_forward.6} parent=1 // pred_check_branch
      %9 = sbr.rel (0) target = $region5
    $region4: #{decoder_conv_forward.6} parent=1 // pred_region
      _
    $region5: #{decoder_conv_forward.6} parent=1 // pred_fallthru
      _
    // Predicated region
    $region6: #{decoder_conv_forward.6} parent=1 // pred_check
      _
    $region7: #{decoder_conv_forward.6} parent=1 // pred_check_branch
      %11 = sbr.rel (0) target = $region9
    $region8: #{decoder_conv_forward.6} parent=1 // pred_region
      %s13 = ssub.s32 12288, 12288
      %14 = vsyncadd [#allocation3], %s13
      %s15 = sshll.u32 [#allocation2], 4
      %s16 = int_to_ptr.vmem [resolvable:$true] %s15
      %21 = dma.hbm_to_vmem [thread:$0]  %s1, 12288, %s16, [#allocation3], 1024, 1024, 64
    $region9: #{decoder_conv_forward.6} parent=1 // pred_fallthru
      _
    // Predicated region
    $region10: #{decoder_conv_forward.6} parent=1 // pred_check
      _
    $region11: #{decoder_conv_forward.6} parent=1 // pred_check_branch
      %23 = sbr.rel (0) target = $region13
    $region12: #{decoder_conv_forward.6} parent=1 // pred_region
      %24 = dma.done [#allocation3], 12288
    $region13: #{decoder_conv_forward.6} parent=1 // pred_fallthru
      _
    %v26 = vld [vmem:[%s0] sm:$0xf]
    %v27 = vld [vmem:[%s0 + $0x4] sm:$0xf]
    %v28 = vld [vmem:[%s0 + $0x8] sm:$0xf]
    %v29 = vld [vmem:[%s0 + $0xc] sm:$0xf]
    %v30 = vld [vmem:[#allocation2] sm:$0xff]
    %v31 = vld [vmem:[#allocation2 + $0x8] sm:$0xff]
    %v32 = vld [vmem:[#allocation2 + $0x10] sm:$0xff]
    %v33 = vld [vmem:[#allocation2 + $0x18] sm:$0xff]
    %v34 = vld [vmem:[#allocation2 + $0x20] sm:$0xff]
    %v35 = vld [vmem:[#allocation2 + $0x28] sm:$0xff]
    %v36 = vld [vmem:[#allocation2 + $0x30] sm:$0xff]
    %v37 = vld [vmem:[#allocation2 + $0x38] sm:$0xff]
    %v38 = vld [vmem:[#allocation2 + $0x40] sm:$0xff]
    %v39 = vld [vmem:[#allocation2 + $0x48] sm:$0xff]
    %v40 = vld [vmem:[#allocation2 + $0x50] sm:$0xff]
    %v41 = vld [vmem:[#allocation2 + $0x58] sm:$0xff]
    %v42 = vld [vmem:[#allocation2 + $0x60] sm:$0xff]
    %v43 = vld [vmem:[#allocation2 + $0x68] sm:$0xff]
    %v44 = vld [vmem:[#allocation2 + $0x70] sm:$0xff]
    %v45 = vld [vmem:[#allocation2 + $0x78] sm:$0xff]
    %v46 = vld [vmem:[#allocation2 + $0x80] sm:$0xff]
    %v47 = vld [vmem:[#allocation2 + $0x88] sm:$0xff]
    %v48 = vld [vmem:[#allocation2 + $0x90] sm:$0xff]
    %v49 = vld [vmem:[#allocation2 + $0x98] sm:$0xff]
    %v50 = vld [vmem:[#allocation2 + $0xa0] sm:$0xff]
    %v51 = vld [vmem:[#allocation2 + $0xa8] sm:$0xff]
    %v52 = vld [vmem:[#allocation2 + $0xb0] sm:$0xff]
    %v53 = vld [vmem:[#allocation2 + $0xb8] sm:$0xff]
    %v54 = vld [vmem:[#allocation2 + $0xc0] sm:$0xff]
    %v55 = vld [vmem:[#allocation2 + $0xc8] sm:$0xff]
    %v56 = vld [vmem:[#allocation2 + $0xd0] sm:$0xff]
    %v57 = vld [vmem:[#allocation2 + $0xd8] sm:$0xff]
    %v58 = vld [vmem:[#allocation2 + $0xe0] sm:$0xff]
    %v59 = vld [vmem:[#allocation2 + $0xe8] sm:$0xff]
    %v60 = vld [vmem:[#allocation2 + $0xf0] sm:$0xff]
    %v61 = vld [vmem:[#allocation2 + $0xf8] sm:$0xff]
    %v62 = vld [vmem:[#allocation2 + $0x100] sm:$0xff]
    %v63 = vld [vmem:[#allocation2 + $0x108] sm:$0xff]
    %v64 = vld [vmem:[#allocation2 + $0x110] sm:$0xff]
    %v65 = vld [vmem:[#allocation2 + $0x118] sm:$0xff]
    %v66 = vld [vmem:[#allocation2 + $0x120] sm:$0xff]
    %v67 = vld [vmem:[#allocation2 + $0x128] sm:$0xff]
    %v68 = vld [vmem:[#allocation2 + $0x130] sm:$0xff]
    %v69 = vld [vmem:[#allocation2 + $0x138] sm:$0xff]
    %v70 = vld [vmem:[#allocation2 + $0x140] sm:$0xff]
    %v71 = vld [vmem:[#allocation2 + $0x148] sm:$0xff]
    %v72 = vld [vmem:[#allocation2 + $0x150] sm:$0xff]
    %v73 = vld [vmem:[#allocation2 + $0x158] sm:$0xff]
    %v74 = vld [vmem:[#allocation2 + $0x160] sm:$0xff]
    %v75 = vld [vmem:[#allocation2 + $0x168] sm:$0xff]
    %v76 = vld [vmem:[#allocation2 + $0x170] sm:$0xff]
    %v77 = vld [vmem:[#allocation2 + $0x178] sm:$0xff]
    %v78 = vld [vmem:[#allocation2 + $0x180] sm:$0xff]
    %v79 = vld [vmem:[#allocation2 + $0x188] sm:$0xff]
    %v80 = vld [vmem:[#allocation2 + $0x190] sm:$0xff]
    %v81 = vld [vmem:[#allocation2 + $0x198] sm:$0xff]
    %v82 = vld [vmem:[#allocation2 + $0x1a0] sm:$0xff]
    %v83 = vld [vmem:[#allocation2 + $0x1a8] sm:$0xff]
    %v84 = vld [vmem:[#allocation2 + $0x1b0] sm:$0xff]
    %v85 = vld [vmem:[#allocation2 + $0x1b8] sm:$0xff]
    %v86 = vld [vmem:[#allocation2 + $0x1c0] sm:$0xff]
    %v87 = vld [vmem:[#allocation2 + $0x1c8] sm:$0xff]
    %v88 = vld [vmem:[#allocation2 + $0x1d0] sm:$0xff]
    %v89 = vld [vmem:[#allocation2 + $0x1d8] sm:$0xff]
    %v90 = vld [vmem:[#allocation2 + $0x1e0] sm:$0xff]
    %v91 = vld [vmem:[#allocation2 + $0x1e8] sm:$0xff]
    %v92 = vld [vmem:[#allocation2 + $0x1f0] sm:$0xff]
    %v93 = vld [vmem:[#allocation2 + $0x1f8] sm:$0xff]
    %v94 = vld [vmem:[#allocation2 + $0x200] sm:$0xff]
    %v95 = vld [vmem:[#allocation2 + $0x208] sm:$0xff]
    %v96 = vld [vmem:[#allocation2 + $0x210] sm:$0xff]
    %v97 = vld [vmem:[#allocation2 + $0x218] sm:$0xff]
    %v98 = vld [vmem:[#allocation2 + $0x220] sm:$0xff]
    %v99 = vld [vmem:[#allocation2 + $0x228] sm:$0xff]
    %v100 = vld [vmem:[#allocation2 + $0x230] sm:$0xff]
    %v101 = vld [vmem:[#allocation2 + $0x238] sm:$0xff]
    %v102 = vld [vmem:[#allocation2 + $0x240] sm:$0xff]
    %v103 = vld [vmem:[#allocation2 + $0x248] sm:$0xff]
    %v104 = vld [vmem:[#allocation2 + $0x250] sm:$0xff]
    %v105 = vld [vmem:[#allocation2 + $0x258] sm:$0xff]
    %v106 = vld [vmem:[#allocation2 + $0x260] sm:$0xff]
    %v107 = vld [vmem:[#allocation2 + $0x268] sm:$0xff]
    %v108 = vld [vmem:[#allocation2 + $0x270] sm:$0xff]
    %v109 = vld [vmem:[#allocation2 + $0x278] sm:$0xff]
    %v110 = vld [vmem:[#allocation2 + $0x280] sm:$0xff]
    %v111 = vld [vmem:[#allocation2 + $0x288] sm:$0xff]
    %v112 = vld [vmem:[#allocation2 + $0x290] sm:$0xff]
    %v113 = vld [vmem:[#allocation2 + $0x298] sm:$0xff]
    %v114 = vld [vmem:[#allocation2 + $0x2a0] sm:$0xff]
    %v115 = vld [vmem:[#allocation2 + $0x2a8] sm:$0xff]
    %v116 = vld [vmem:[#allocation2 + $0x2b0] sm:$0xff]
    %v117 = vld [vmem:[#allocation2 + $0x2b8] sm:$0xff]
    %v118 = vld [vmem:[#allocation2 + $0x2c0] sm:$0xff]
    %v119 = vld [vmem:[#allocation2 + $0x2c8] sm:$0xff]
    %v120 = vld [vmem:[#allocation2 + $0x2d0] sm:$0xff]
    %v121 = vld [vmem:[#allocation2 + $0x2d8] sm:$0xff]
    %v122 = vld [vmem:[#allocation2 + $0x2e0] sm:$0xff]
    %v123 = vld [vmem:[#allocation2 + $0x2e8] sm:$0xff]
    %v124 = vld [vmem:[#allocation2 + $0x2f0] sm:$0xff]
    %v125 = vld [vmem:[#allocation2 + $0x2f8] sm:$0xff]
    %v130 = vunpack.c.l.b16 %v26
    %v131 = vunpack.c.l.b16 %v27
    %v132 = vunpack.c.l.b16 %v28
    %v133 = vunpack.c.l.b16 %v29
    %v134 = vpack.c.b16 %v131, %v130
    %v135 = vpack.c.b16 %v133, %v132
    %v232 = vunpack.c.l.b16 %v30
    %v233 = vunpack.c.h.b16 %v30
    %v234 = vunpack.c.l.b16 %v31
    %v235 = vunpack.c.h.b16 %v31
    %v236 = vunpack.c.l.b16 %v32
    %v237 = vunpack.c.h.b16 %v32
    %v238 = vunpack.c.l.b16 %v33
    %v239 = vunpack.c.h.b16 %v33
    %v240 = vunpack.c.l.b16 %v34
    %v241 = vunpack.c.h.b16 %v34
    %v242 = vunpack.c.l.b16 %v35
    %v243 = vunpack.c.h.b16 %v35
    %v244 = vunpack.c.l.b16 %v36
    %v245 = vunpack.c.h.b16 %v36
    %v246 = vunpack.c.l.b16 %v37
    %v247 = vunpack.c.h.b16 %v37
    %v248 = vunpack.c.l.b16 %v38
    %v249 = vunpack.c.h.b16 %v38
    %v250 = vunpack.c.l.b16 %v39
    %v251 = vunpack.c.h.b16 %v39
    %v252 = vunpack.c.l.b16 %v40
    %v253 = vunpack.c.h.b16 %v40
    %v254 = vunpack.c.l.b16 %v41
    %v255 = vunpack.c.h.b16 %v41
    %v256 = vunpack.c.l.b16 %v42
    %v257 = vunpack.c.h.b16 %v42
    %v258 = vunpack.c.l.b16 %v43
    %v259 = vunpack.c.h.b16 %v43
    %v260 = vunpack.c.l.b16 %v44
    %v261 = vunpack.c.h.b16 %v44
    %v262 = vunpack.c.l.b16 %v45
    %v263 = vunpack.c.h.b16 %v45
    %v264 = vunpack.c.l.b16 %v46
    %v265 = vunpack.c.h.b16 %v46
    %v266 = vunpack.c.l.b16 %v47
    %v267 = vunpack.c.h.b16 %v47
    %v268 = vunpack.c.l.b16 %v48
    %v269 = vunpack.c.h.b16 %v48
    %v270 = vunpack.c.l.b16 %v49
    %v271 = vunpack.c.h.b16 %v49
    %v272 = vunpack.c.l.b16 %v50
    %v273 = vunpack.c.h.b16 %v50
    %v274 = vunpack.c.l.b16 %v51
    %v275 = vunpack.c.h.b16 %v51
    %v276 = vunpack.c.l.b16 %v52
    %v277 = vunpack.c.h.b16 %v52
    %v278 = vunpack.c.l.b16 %v53
    %v279 = vunpack.c.h.b16 %v53
    %v280 = vunpack.c.l.b16 %v54
    %v281 = vunpack.c.h.b16 %v54
    %v282 = vunpack.c.l.b16 %v55
    %v283 = vunpack.c.h.b16 %v55
    %v284 = vunpack.c.l.b16 %v56
    %v285 = vunpack.c.h.b16 %v56
    %v286 = vunpack.c.l.b16 %v57
    %v287 = vunpack.c.h.b16 %v57
    %v288 = vunpack.c.l.b16 %v58
    %v289 = vunpack.c.h.b16 %v58
    %v290 = vunpack.c.l.b16 %v59
    %v291 = vunpack.c.h.b16 %v59
    %v292 = vunpack.c.l.b16 %v60
    %v293 = vunpack.c.h.b16 %v60
    %v294 = vunpack.c.l.b16 %v61
    %v295 = vunpack.c.h.b16 %v61
    %v296 = vunpack.c.l.b16 %v62
    %v297 = vunpack.c.h.b16 %v62
    %v298 = vunpack.c.l.b16 %v63
    %v299 = vunpack.c.h.b16 %v63
    %v300 = vunpack.c.l.b16 %v64
    %v301 = vunpack.c.h.b16 %v64
    %v302 = vunpack.c.l.b16 %v65
    %v303 = vunpack.c.h.b16 %v65
    %v304 = vunpack.c.l.b16 %v66
    %v305 = vunpack.c.h.b16 %v66
    %v306 = vunpack.c.l.b16 %v67
    %v307 = vunpack.c.h.b16 %v67
    %v308 = vunpack.c.l.b16 %v68
    %v309 = vunpack.c.h.b16 %v68
    %v310 = vunpack.c.l.b16 %v69
    %v311 = vunpack.c.h.b16 %v69
    %v312 = vunpack.c.l.b16 %v70
    %v313 = vunpack.c.h.b16 %v70
    %v314 = vunpack.c.l.b16 %v71
    %v315 = vunpack.c.h.b16 %v71
    %v316 = vunpack.c.l.b16 %v72
    %v317 = vunpack.c.h.b16 %v72
    %v318 = vunpack.c.l.b16 %v73
    %v319 = vunpack.c.h.b16 %v73
    %v320 = vunpack.c.l.b16 %v74
    %v321 = vunpack.c.h.b16 %v74
    %v322 = vunpack.c.l.b16 %v75
    %v323 = vunpack.c.h.b16 %v75
    %v324 = vunpack.c.l.b16 %v76
    %v325 = vunpack.c.h.b16 %v76
    %v326 = vunpack.c.l.b16 %v77
    %v327 = vunpack.c.h.b16 %v77
    %v328 = vunpack.c.l.b16 %v78
    %v329 = vunpack.c.h.b16 %v78
    %v330 = vunpack.c.l.b16 %v79
    %v331 = vunpack.c.h.b16 %v79
    %v332 = vunpack.c.l.b16 %v80
    %v333 = vunpack.c.h.b16 %v80
    %v334 = vunpack.c.l.b16 %v81
    %v335 = vunpack.c.h.b16 %v81
    %v336 = vunpack.c.l.b16 %v82
    %v337 = vunpack.c.h.b16 %v82
    %v338 = vunpack.c.l.b16 %v83
    %v339 = vunpack.c.h.b16 %v83
    %v340 = vunpack.c.l.b16 %v84
    %v341 = vunpack.c.h.b16 %v84
    %v342 = vunpack.c.l.b16 %v85
    %v343 = vunpack.c.h.b16 %v85
    %v344 = vunpack.c.l.b16 %v86
    %v345 = vunpack.c.h.b16 %v86
    %v346 = vunpack.c.l.b16 %v87
    %v347 = vunpack.c.h.b16 %v87
    %v348 = vunpack.c.l.b16 %v88
    %v349 = vunpack.c.h.b16 %v88
    %v350 = vunpack.c.l.b16 %v89
    %v351 = vunpack.c.h.b16 %v89
    %v352 = vunpack.c.l.b16 %v90
    %v353 = vunpack.c.h.b16 %v90
    %v354 = vunpack.c.l.b16 %v91
    %v355 = vunpack.c.h.b16 %v91
    %v356 = vunpack.c.l.b16 %v92
    %v357 = vunpack.c.h.b16 %v92
    %v358 = vunpack.c.l.b16 %v93
    %v359 = vunpack.c.h.b16 %v93
    %v360 = vunpack.c.l.b16 %v94
    %v361 = vunpack.c.h.b16 %v94
    %v362 = vunpack.c.l.b16 %v95
    %v363 = vunpack.c.h.b16 %v95
    %v364 = vunpack.c.l.b16 %v96
    %v365 = vunpack.c.h.b16 %v96
    %v366 = vunpack.c.l.b16 %v97
    %v367 = vunpack.c.h.b16 %v97
    %v368 = vunpack.c.l.b16 %v98
    %v369 = vunpack.c.h.b16 %v98
    %v370 = vunpack.c.l.b16 %v99
    %v371 = vunpack.c.h.b16 %v99
    %v372 = vunpack.c.l.b16 %v100
    %v373 = vunpack.c.h.b16 %v100
    %v374 = vunpack.c.l.b16 %v101
    %v375 = vunpack.c.h.b16 %v101
    %v376 = vunpack.c.l.b16 %v102
    %v377 = vunpack.c.h.b16 %v102
    %v378 = vunpack.c.l.b16 %v103
    %v379 = vunpack.c.h.b16 %v103
    %v380 = vunpack.c.l.b16 %v104
    %v381 = vunpack.c.h.b16 %v104
    %v382 = vunpack.c.l.b16 %v105
    %v383 = vunpack.c.h.b16 %v105
    %v384 = vunpack.c.l.b16 %v106
    %v385 = vunpack.c.h.b16 %v106
    %v386 = vunpack.c.l.b16 %v107
    %v387 = vunpack.c.h.b16 %v107
    %v388 = vunpack.c.l.b16 %v108
    %v389 = vunpack.c.h.b16 %v108
    %v390 = vunpack.c.l.b16 %v109
    %v391 = vunpack.c.h.b16 %v109
    %v392 = vunpack.c.l.b16 %v110
    %v393 = vunpack.c.h.b16 %v110
    %v394 = vunpack.c.l.b16 %v111
    %v395 = vunpack.c.h.b16 %v111
    %v396 = vunpack.c.l.b16 %v112
    %v397 = vunpack.c.h.b16 %v112
    %v398 = vunpack.c.l.b16 %v113
    %v399 = vunpack.c.h.b16 %v113
    %v400 = vunpack.c.l.b16 %v114
    %v401 = vunpack.c.h.b16 %v114
    %v402 = vunpack.c.l.b16 %v115
    %v403 = vunpack.c.h.b16 %v115
    %v404 = vunpack.c.l.b16 %v116
    %v405 = vunpack.c.h.b16 %v116
    %v406 = vunpack.c.l.b16 %v117
    %v407 = vunpack.c.h.b16 %v117
    %v408 = vunpack.c.l.b16 %v118
    %v409 = vunpack.c.h.b16 %v118
    %v410 = vunpack.c.l.b16 %v119
    %v411 = vunpack.c.h.b16 %v119
    %v412 = vunpack.c.l.b16 %v120
    %v413 = vunpack.c.h.b16 %v120
    %v414 = vunpack.c.l.b16 %v121
    %v415 = vunpack.c.h.b16 %v121
    %v416 = vunpack.c.l.b16 %v122
    %v417 = vunpack.c.h.b16 %v122
    %v418 = vunpack.c.l.b16 %v123
    %v419 = vunpack.c.h.b16 %v123
    %v420 = vunpack.c.l.b16 %v124
    %v421 = vunpack.c.h.b16 %v124
    %v422 = vunpack.c.l.b16 %v125
    %v423 = vunpack.c.h.b16 %v125
    %v424 = vpack.c.b16 %v248, %v232
    %v425 = vpack.c.b16 %v249, %v233
    %v426 = vpack.c.b16 %v250, %v234
    %v427 = vpack.c.b16 %v251, %v235
    %v428 = vpack.c.b16 %v252, %v236
    %v429 = vpack.c.b16 %v253, %v237
    %v430 = vpack.c.b16 %v254, %v238
    %v431 = vpack.c.b16 %v255, %v239
    %v432 = vpack.c.b16 %v256, %v240
    %v433 = vpack.c.b16 %v257, %v241
    %v434 = vpack.c.b16 %v258, %v242
    %v435 = vpack.c.b16 %v259, %v243
    %v436 = vpack.c.b16 %v260, %v244
    %v437 = vpack.c.b16 %v261, %v245
    %v438 = vpack.c.b16 %v262, %v246
    %v439 = vpack.c.b16 %v263, %v247
    %v440 = vpack.c.b16 %v280, %v264
    %v441 = vpack.c.b16 %v281, %v265
    %v442 = vpack.c.b16 %v282, %v266
    %v443 = vpack.c.b16 %v283, %v267
    %v444 = vpack.c.b16 %v284, %v268
    %v445 = vpack.c.b16 %v285, %v269
    %v446 = vpack.c.b16 %v286, %v270
    %v447 = vpack.c.b16 %v287, %v271
    %v448 = vpack.c.b16 %v288, %v272
    %v449 = vpack.c.b16 %v289, %v273
    %v450 = vpack.c.b16 %v290, %v274
    %v451 = vpack.c.b16 %v291, %v275
    %v452 = vpack.c.b16 %v292, %v276
    %v453 = vpack.c.b16 %v293, %v277
    %v454 = vpack.c.b16 %v294, %v278
    %v455 = vpack.c.b16 %v295, %v279
    %v456 = vpack.c.b16 %v312, %v296
    %v457 = vpack.c.b16 %v313, %v297
    %v458 = vpack.c.b16 %v314, %v298
    %v459 = vpack.c.b16 %v315, %v299
    %v460 = vpack.c.b16 %v316, %v300
    %v461 = vpack.c.b16 %v317, %v301
    %v462 = vpack.c.b16 %v318, %v302
    %v463 = vpack.c.b16 %v319, %v303
    %v464 = vpack.c.b16 %v320, %v304
    %v465 = vpack.c.b16 %v321, %v305
    %v466 = vpack.c.b16 %v322, %v306
    %v467 = vpack.c.b16 %v323, %v307
    %v468 = vpack.c.b16 %v324, %v308
    %v469 = vpack.c.b16 %v325, %v309
    %v470 = vpack.c.b16 %v326, %v310
    %v471 = vpack.c.b16 %v327, %v311
    %v472 = vpack.c.b16 %v344, %v328
    %v473 = vpack.c.b16 %v345, %v329
    %v474 = vpack.c.b16 %v346, %v330
    %v475 = vpack.c.b16 %v347, %v331
    %v476 = vpack.c.b16 %v348, %v332
    %v477 = vpack.c.b16 %v349, %v333
    %v478 = vpack.c.b16 %v350, %v334
    %v479 = vpack.c.b16 %v351, %v335
    %v480 = vpack.c.b16 %v352, %v336
    %v481 = vpack.c.b16 %v353, %v337
    %v482 = vpack.c.b16 %v354, %v338
    %v483 = vpack.c.b16 %v355, %v339
    %v484 = vpack.c.b16 %v356, %v340
    %v485 = vpack.c.b16 %v357, %v341
    %v486 = vpack.c.b16 %v358, %v342
    %v487 = vpack.c.b16 %v359, %v343
    %v488 = vpack.c.b16 %v376, %v360
    %v489 = vpack.c.b16 %v377, %v361
    %v490 = vpack.c.b16 %v378, %v362
    %v491 = vpack.c.b16 %v379, %v363
    %v492 = vpack.c.b16 %v380, %v364
    %v493 = vpack.c.b16 %v381, %v365
    %v494 = vpack.c.b16 %v382, %v366
    %v495 = vpack.c.b16 %v383, %v367
    %v496 = vpack.c.b16 %v384, %v368
    %v497 = vpack.c.b16 %v385, %v369
    %v498 = vpack.c.b16 %v386, %v370
    %v499 = vpack.c.b16 %v387, %v371
    %v500 = vpack.c.b16 %v388, %v372
    %v501 = vpack.c.b16 %v389, %v373
    %v502 = vpack.c.b16 %v390, %v374
    %v503 = vpack.c.b16 %v391, %v375
    %v504 = vpack.c.b16 %v408, %v392
    %v505 = vpack.c.b16 %v409, %v393
    %v506 = vpack.c.b16 %v410, %v394
    %v507 = vpack.c.b16 %v411, %v395
    %v508 = vpack.c.b16 %v412, %v396
    %v509 = vpack.c.b16 %v413, %v397
    %v510 = vpack.c.b16 %v414, %v398
    %v511 = vpack.c.b16 %v415, %v399
    %v512 = vpack.c.b16 %v416, %v400
    %v513 = vpack.c.b16 %v417, %v401
    %v514 = vpack.c.b16 %v418, %v402
    %v515 = vpack.c.b16 %v419, %v403
    %v516 = vpack.c.b16 %v420, %v404
    %v517 = vpack.c.b16 %v421, %v405
    %v518 = vpack.c.b16 %v422, %v406
    %v519 = vpack.c.b16 %v423, %v407
    %vm616 = vcmask 785408
    %v618 = vsel %vm616, %v134, 0
    %v621 = vsel %vm616, %v135, 0
    %623 = vmatprep.subr.bf16.mxu0 %v425
    %624 = vmatpush1.bf16.msra.mxu0 %v424
    %625 = vmatprep.subr.bf16.mxu0 %v441
    %626 = vmatpush1.bf16.msra.mxu0 %v440
    %627 = vmatprep.subr.bf16.mxu0 %v457
    %628 = vmatpush1.bf16.msra.mxu0 %v456
    %629 = vmatprep.subr.bf16.mxu0 %v473
    %630 = vmatpush1.bf16.msra.mxu0 %v472
    %631 = vmatprep.subr.bf16.mxu0 %v489
    %632 = vmatpush1.bf16.msra.mxu0 %v488
    %633 = vmatprep.subr.bf16.mxu0 %v505
    %634 = vmatpush1.bf16.msra.mxu0 %v504
    %635 = vmatprep.subr.bf16.mxu0 0
    %636 = vmatpush1.bf16.msra.mxu0 0
    %637 = vmatprep.subr.bf16.mxu0 0
    %638 = vmatpush1.bf16.msra.mxu0 0
    %639 = vmatprep.subr.bf16.mxu0 0
    %640 = vmatpush1.bf16.msra.mxu0 0
    %641 = vmatprep.subr.bf16.mxu0 0
    %642 = vmatpush1.bf16.msra.mxu0 0
    %643 = vmatprep.subr.bf16.mxu0 0
    %644 = vmatpush1.bf16.msra.mxu0 0
    %645 = vmatprep.subr.bf16.mxu0 0
    %646 = vmatpush1.bf16.msra.mxu0 0
    %647 = vmatprep.subr.bf16.mxu0 0
    %648 = vmatpush1.bf16.msra.mxu0 0
    %649 = vmatprep.subr.bf16.mxu0 0
    %650 = vmatpush1.bf16.msra.mxu0 0
    %651 = vmatprep.subr.bf16.mxu0 0
    %652 = vmatpush1.bf16.msra.mxu0 0
    %653 = vmatprep.subr.bf16.mxu0 0
    %654 = vmatpush1.bf16.msra.mxu0 0
    %655 = vmatprep.mubr.bf16.mxu0 0
    %656 = vmatmul.mubr.bf16.gmra.mrb[0].mxu0 %v618
    %v657 = vpop.f32.mrb[0].mxu0
    %v658 = vadd.f32 0.0, %v657
    %v659 = vpop.f32.mrb[0].mxu0
    %v660 = vadd.f32 0.0, %v659
    %v661 = vpop.f32.mrb[0].mxu0
    %v662 = vadd.f32 0.0, %v661
    %v663 = vpop.f32.mrb[0].mxu0
    %v664 = vadd.f32 0.0, %v663
    %665 = vmatprep.mubr.bf16.mxu0 0
    %666 = vmatmul.mubr.bf16.gmra.mrb[0].mxu0 %v621
    %v667 = vpop.f32.mrb[0].mxu0
    %v668 = vadd.f32 0.0, %v667
    %v669 = vpop.f32.mrb[0].mxu0
    %v670 = vadd.f32 0.0, %v669
    %v671 = vpop.f32.mrb[0].mxu0
    %v672 = vadd.f32 0.0, %v671
    %v673 = vpop.f32.mrb[0].mxu0
    %v674 = vadd.f32 0.0, %v673
    %675 = vdwg.mxu0
    %676 = vmatprep.subr.bf16.mxu0 %v427
    %677 = vmatpush1.bf16.msra.mxu0 %v426
    %678 = vmatprep.subr.bf16.mxu0 %v443
    %679 = vmatpush1.bf16.msra.mxu0 %v442
    %680 = vmatprep.subr.bf16.mxu0 %v459
    %681 = vmatpush1.bf16.msra.mxu0 %v458
    %682 = vmatprep.subr.bf16.mxu0 %v475
    %683 = vmatpush1.bf16.msra.mxu0 %v474
    %684 = vmatprep.subr.bf16.mxu0 %v491
    %685 = vmatpush1.bf16.msra.mxu0 %v490
    %686 = vmatprep.subr.bf16.mxu0 %v507
    %687 = vmatpush1.bf16.msra.mxu0 %v506
    %688 = vmatprep.subr.bf16.mxu0 0
    %689 = vmatpush1.bf16.msra.mxu0 0
    %690 = vmatprep.subr.bf16.mxu0 0
    %691 = vmatpush1.bf16.msra.mxu0 0
    %692 = vmatprep.subr.bf16.mxu0 0
    %693 = vmatpush1.bf16.msra.mxu0 0
    %694 = vmatprep.subr.bf16.mxu0 0
    %695 = vmatpush1.bf16.msra.mxu0 0
    %696 = vmatprep.subr.bf16.mxu0 0
    %697 = vmatpush1.bf16.msra.mxu0 0
    %698 = vmatprep.subr.bf16.mxu0 0
    %699 = vmatpush1.bf16.msra.mxu0 0
    %700 = vmatprep.subr.bf16.mxu0 0
    %701 = vmatpush1.bf16.msra.mxu0 0
    %702 = vmatprep.subr.bf16.mxu0 0
    %703 = vmatpush1.bf16.msra.mxu0 0
    %704 = vmatprep.subr.bf16.mxu0 0
    %705 = vmatpush1.bf16.msra.mxu0 0
    %706 = vmatprep.subr.bf16.mxu0 0
    %707 = vmatpush1.bf16.msra.mxu0 0
    %708 = vmatprep.mubr.bf16.mxu0 0
    %709 = vmatmul.mubr.bf16.gmra.mrb[0].mxu0 %v618
    %v710 = vpop.f32.mrb[0].mxu0
    %v711 = vadd.f32 0.0, %v710
    %v712 = vpop.f32.mrb[0].mxu0
    %v713 = vadd.f32 0.0, %v712
    %v714 = vpop.f32.mrb[0].mxu0
    %v715 = vadd.f32 0.0, %v714
    %v716 = vpop.f32.mrb[0].mxu0
    %v717 = vadd.f32 0.0, %v716
    %718 = vmatprep.mubr.bf16.mxu0 0
    %719 = vmatmul.mubr.bf16.gmra.mrb[0].mxu0 %v621
    %v720 = vpop.f32.mrb[0].mxu0
    %v721 = vadd.f32 0.0, %v720
    %v722 = vpop.f32.mrb[0].mxu0
    %v723 = vadd.f32 0.0, %v722
    %v724 = vpop.f32.mrb[0].mxu0
    %v725 = vadd.f32 0.0, %v724
    %v726 = vpop.f32.mrb[0].mxu0
    %v727 = vadd.f32 0.0, %v726
    %728 = vdwg.mxu0
    %729 = vmatprep.subr.bf16.mxu0 %v429
    %730 = vmatpush1.bf16.msra.mxu0 %v428
    %731 = vmatprep.subr.bf16.mxu0 %v445
    %732 = vmatpush1.bf16.msra.mxu0 %v444
    %733 = vmatprep.subr.bf16.mxu0 %v461
    %734 = vmatpush1.bf16.msra.mxu0 %v460
    %735 = vmatprep.subr.bf16.mxu0 %v477
    %736 = vmatpush1.bf16.msra.mxu0 %v476
    %737 = vmatprep.subr.bf16.mxu0 %v493
    %738 = vmatpush1.bf16.msra.mxu0 %v492
    %739 = vmatprep.subr.bf16.mxu0 %v509
    %740 = vmatpush1.bf16.msra.mxu0 %v508
    %741 = vmatprep.subr.bf16.mxu0 0
    %742 = vmatpush1.bf16.msra.mxu0 0
    %743 = vmatprep.subr.bf16.mxu0 0
    %744 = vmatpush1.bf16.msra.mxu0 0
    %745 = vmatprep.subr.bf16.mxu0 0
    %746 = vmatpush1.bf16.msra.mxu0 0
    %747 = vmatprep.subr.bf16.mxu0 0
    %748 = vmatpush1.bf16.msra.mxu0 0
    %749 = vmatprep.subr.bf16.mxu0 0
    %750 = vmatpush1.bf16.msra.mxu0 0
    %751 = vmatprep.subr.bf16.mxu0 0
    %752 = vmatpush1.bf16.msra.mxu0 0
    %753 = vmatprep.subr.bf16.mxu0 0
    %754 = vmatpush1.bf16.msra.mxu0 0
    %755 = vmatprep.subr.bf16.mxu0 0
    %756 = vmatpush1.bf16.msra.mxu0 0
    %757 = vmatprep.subr.bf16.mxu0 0
    %758 = vmatpush1.bf16.msra.mxu0 0
    %759 = vmatprep.subr.bf16.mxu0 0
    %760 = vmatpush1.bf16.msra.mxu0 0
    %761 = vmatprep.mubr.bf16.mxu0 0
    %762 = vmatmul.mubr.bf16.gmra.mrb[0].mxu0 %v618
    %v763 = vpop.f32.mrb[0].mxu0
    %v764 = vadd.f32 0.0, %v763
    %v765 = vpop.f32.mrb[0].mxu0
    %v766 = vadd.f32 0.0, %v765
    %v767 = vpop.f32.mrb[0].mxu0
    %v768 = vadd.f32 0.0, %v767
    %v769 = vpop.f32.mrb[0].mxu0
    %v770 = vadd.f32 0.0, %v769
    %771 = vmatprep.mubr.bf16.mxu0 0
    %772 = vmatmul.mubr.bf16.gmra.mrb[0].mxu0 %v621
    %v773 = vpop.f32.mrb[0].mxu0
    %v774 = vadd.f32 0.0, %v773
    %v775 = vpop.f32.mrb[0].mxu0
    %v776 = vadd.f32 0.0, %v775
    %v777 = vpop.f32.mrb[0].mxu0
    %v778 = vadd.f32 0.0, %v777
    %v779 = vpop.f32.mrb[0].mxu0
    %v780 = vadd.f32 0.0, %v779
    %781 = vdwg.mxu0
    %782 = vmatprep.subr.bf16.mxu0 %v431
    %783 = vmatpush1.bf16.msra.mxu0 %v430
    %784 = vmatprep.subr.bf16.mxu0 %v447
    %785 = vmatpush1.bf16.msra.mxu0 %v446
    %786 = vmatprep.subr.bf16.mxu0 %v463
    %787 = vmatpush1.bf16.msra.mxu0 %v462
    %788 = vmatprep.subr.bf16.mxu0 %v479
    %789 = vmatpush1.bf16.msra.mxu0 %v478
    %790 = vmatprep.subr.bf16.mxu0 %v495
    %791 = vmatpush1.bf16.msra.mxu0 %v494
    %792 = vmatprep.subr.bf16.mxu0 %v511
    %793 = vmatpush1.bf16.msra.mxu0 %v510
    %794 = vmatprep.subr.bf16.mxu0 0
    %795 = vmatpush1.bf16.msra.mxu0 0
    %796 = vmatprep.subr.bf16.mxu0 0
    %797 = vmatpush1.bf16.msra.mxu0 0
    %798 = vmatprep.subr.bf16.mxu0 0
    %799 = vmatpush1.bf16.msra.mxu0 0
    %800 = vmatprep.subr.bf16.mxu0 0
    %801 = vmatpush1.bf16.msra.mxu0 0
    %802 = vmatprep.subr.bf16.mxu0 0
    %803 = vmatpush1.bf16.msra.mxu0 0
    %804 = vmatprep.subr.bf16.mxu0 0
    %805 = vmatpush1.bf16.msra.mxu0 0
    %806 = vmatprep.subr.bf16.mxu0 0
    %807 = vmatpush1.bf16.msra.mxu0 0
    %808 = vmatprep.subr.bf16.mxu0 0
    %809 = vmatpush1.bf16.msra.mxu0 0
    %810 = vmatprep.subr.bf16.mxu0 0
    %811 = vmatpush1.bf16.msra.mxu0 0
    %812 = vmatprep.subr.bf16.mxu0 0
    %813 = vmatpush1.bf16.msra.mxu0 0
    %814 = vmatprep.mubr.bf16.mxu0 0
    %815 = vmatmul.mubr.bf16.gmra.mrb[0].mxu0 %v618
    %v816 = vpop.f32.mrb[0].mxu0
    %v817 = vadd.f32 0.0, %v816
    %v818 = vpop.f32.mrb[0].mxu0
    %v819 = vadd.f32 0.0, %v818
    %v820 = vpop.f32.mrb[0].mxu0
    %v821 = vadd.f32 0.0, %v820
    %v822 = vpop.f32.mrb[0].mxu0
    %v823 = vadd.f32 0.0, %v822
    %824 = vmatprep.mubr.bf16.mxu0 0
    %825 = vmatmul.mubr.bf16.gmra.mrb[0].mxu0 %v621
    %v826 = vpop.f32.mrb[0].mxu0
    %v827 = vadd.f32 0.0, %v826
    %v828 = vpop.f32.mrb[0].mxu0
    %v829 = vadd.f32 0.0, %v828
    %v830 = vpop.f32.mrb[0].mxu0
    %v831 = vadd.f32 0.0, %v830
    %v832 = vpop.f32.mrb[0].mxu0
    %v833 = vadd.f32 0.0, %v832
    %834 = vdwg.mxu0
    %835 = vmatprep.subr.bf16.mxu0 %v433
    %836 = vmatpush1.bf16.msra.mxu0 %v432
    %837 = vmatprep.subr.bf16.mxu0 %v449
    %838 = vmatpush1.bf16.msra.mxu0 %v448
    %839 = vmatprep.subr.bf16.mxu0 %v465
    %840 = vmatpush1.bf16.msra.mxu0 %v464
    %841 = vmatprep.subr.bf16.mxu0 %v481
    %842 = vmatpush1.bf16.msra.mxu0 %v480
    %843 = vmatprep.subr.bf16.mxu0 %v497
    %844 = vmatpush1.bf16.msra.mxu0 %v496
    %845 = vmatprep.subr.bf16.mxu0 %v513
    %846 = vmatpush1.bf16.msra.mxu0 %v512
    %847 = vmatprep.subr.bf16.mxu0 0
    %848 = vmatpush1.bf16.msra.mxu0 0
    %849 = vmatprep.subr.bf16.mxu0 0
    %850 = vmatpush1.bf16.msra.mxu0 0
    %851 = vmatprep.subr.bf16.mxu0 0
    %852 = vmatpush1.bf16.msra.mxu0 0
    %853 = vmatprep.subr.bf16.mxu0 0
    %854 = vmatpush1.bf16.msra.mxu0 0
    %855 = vmatprep.subr.bf16.mxu0 0
    %856 = vmatpush1.bf16.msra.mxu0 0
    %857 = vmatprep.subr.bf16.mxu0 0
    %858 = vmatpush1.bf16.msra.mxu0 0
    %859 = vmatprep.subr.bf16.mxu0 0
    %860 = vmatpush1.bf16.msra.mxu0 0
    %861 = vmatprep.subr.bf16.mxu0 0
    %862 = vmatpush1.bf16.msra.mxu0 0
    %863 = vmatprep.subr.bf16.mxu0 0
    %864 = vmatpush1.bf16.msra.mxu0 0
    %865 = vmatprep.subr.bf16.mxu0 0
    %866 = vmatpush1.bf16.msra.mxu0 0
    %867 = vmatprep.mubr.bf16.mxu0 0
    %868 = vmatmul.mubr.bf16.gmra.mrb[0].mxu0 %v618
    %v869 = vpop.f32.mrb[0].mxu0
    %v870 = vadd.f32 0.0, %v869
    %v871 = vpop.f32.mrb[0].mxu0
    %v872 = vadd.f32 0.0, %v871
    %v873 = vpop.f32.mrb[0].mxu0
    %v874 = vadd.f32 0.0, %v873
    %v875 = vpop.f32.mrb[0].mxu0
    %v876 = vadd.f32 0.0, %v875
    %877 = vmatprep.mubr.bf16.mxu0 0
    %878 = vmatmul.mubr.bf16.gmra.mrb[0].mxu0 %v621
    %v879 = vpop.f32.mrb[0].mxu0
    %v880 = vadd.f32 0.0, %v879
    %v881 = vpop.f32.mrb[0].mxu0
    %v882 = vadd.f32 0.0, %v881
    %v883 = vpop.f32.mrb[0].mxu0
    %v884 = vadd.f32 0.0, %v883
    %v885 = vpop.f32.mrb[0].mxu0
    %v886 = vadd.f32 0.0, %v885
    %887 = vdwg.mxu0
    %888 = vmatprep.subr.bf16.mxu0 %v435
    %889 = vmatpush1.bf16.msra.mxu0 %v434
    %890 = vmatprep.subr.bf16.mxu0 %v451
    %891 = vmatpush1.bf16.msra.mxu0 %v450
    %892 = vmatprep.subr.bf16.mxu0 %v467
    %893 = vmatpush1.bf16.msra.mxu0 %v466
    %894 = vmatprep.subr.bf16.mxu0 %v483
    %895 = vmatpush1.bf16.msra.mxu0 %v482
    %896 = vmatprep.subr.bf16.mxu0 %v499
    %897 = vmatpush1.bf16.msra.mxu0 %v498
    %898 = vmatprep.subr.bf16.mxu0 %v515
    %899 = vmatpush1.bf16.msra.mxu0 %v514
    %900 = vmatprep.subr.bf16.mxu0 0
    %901 = vmatpush1.bf16.msra.mxu0 0
    %902 = vmatprep.subr.bf16.mxu0 0
    %903 = vmatpush1.bf16.msra.mxu0 0
    %904 = vmatprep.subr.bf16.mxu0 0
    %905 = vmatpush1.bf16.msra.mxu0 0
    %906 = vmatprep.subr.bf16.mxu0 0
    %907 = vmatpush1.bf16.msra.mxu0 0
    %908 = vmatprep.subr.bf16.mxu0 0
    %909 = vmatpush1.bf16.msra.mxu0 0
    %910 = vmatprep.subr.bf16.mxu0 0
    %911 = vmatpush1.bf16.msra.mxu0 0
    %912 = vmatprep.subr.bf16.mxu0 0
    %913 = vmatpush1.bf16.msra.mxu0 0
    %914 = vmatprep.subr.bf16.mxu0 0
    %915 = vmatpush1.bf16.msra.mxu0 0
    %916 = vmatprep.subr.bf16.mxu0 0
    %917 = vmatpush1.bf16.msra.mxu0 0
    %918 = vmatprep.subr.bf16.mxu0 0
    %919 = vmatpush1.bf16.msra.mxu0 0
    %920 = vmatprep.mubr.bf16.mxu0 0
    %921 = vmatmul.mubr.bf16.gmra.mrb[0].mxu0 %v618
    %v922 = vpop.f32.mrb[0].mxu0
    %v923 = vadd.f32 0.0, %v922
    %v924 = vpop.f32.mrb[0].mxu0
    %v925 = vadd.f32 0.0, %v924
    %v926 = vpop.f32.mrb[0].mxu0
    %v927 = vadd.f32 0.0, %v926
    %v928 = vpop.f32.mrb[0].mxu0
    %v929 = vadd.f32 0.0, %v928
    %930 = vmatprep.mubr.bf16.mxu0 0
    %931 = vmatmul.mubr.bf16.gmra.mrb[0].mxu0 %v621
    %v932 = vpop.f32.mrb[0].mxu0
    %v933 = vadd.f32 0.0, %v932
    %v934 = vpop.f32.mrb[0].mxu0
    %v935 = vadd.f32 0.0, %v934
    %v936 = vpop.f32.mrb[0].mxu0
    %v937 = vadd.f32 0.0, %v936
    %v938 = vpop.f32.mrb[0].mxu0
    %v939 = vadd.f32 0.0, %v938
    %940 = vdwg.mxu0
    %941 = vmatprep.subr.bf16.mxu0 %v437
    %942 = vmatpush1.bf16.msra.mxu0 %v436
    %943 = vmatprep.subr.bf16.mxu0 %v453
    %944 = vmatpush1.bf16.msra.mxu0 %v452
    %945 = vmatprep.subr.bf16.mxu0 %v469
    %946 = vmatpush1.bf16.msra.mxu0 %v468
    %947 = vmatprep.subr.bf16.mxu0 %v485
    %948 = vmatpush1.bf16.msra.mxu0 %v484
    %949 = vmatprep.subr.bf16.mxu0 %v501
    %950 = vmatpush1.bf16.msra.mxu0 %v500
    %951 = vmatprep.subr.bf16.mxu0 %v517
    %952 = vmatpush1.bf16.msra.mxu0 %v516
    %953 = vmatprep.subr.bf16.mxu0 0
    %954 = vmatpush1.bf16.msra.mxu0 0
    %955 = vmatprep.subr.bf16.mxu0 0
    %956 = vmatpush1.bf16.msra.mxu0 0
    %957 = vmatprep.subr.bf16.mxu0 0
    %958 = vmatpush1.bf16.msra.mxu0 0
    %959 = vmatprep.subr.bf16.mxu0 0
    %960 = vmatpush1.bf16.msra.mxu0 0
    %961 = vmatprep.subr.bf16.mxu0 0
    %962 = vmatpush1.bf16.msra.mxu0 0
    %963 = vmatprep.subr.bf16.mxu0 0
    %964 = vmatpush1.bf16.msra.mxu0 0
    %965 = vmatprep.subr.bf16.mxu0 0
    %966 = vmatpush1.bf16.msra.mxu0 0
    %967 = vmatprep.subr.bf16.mxu0 0
    %968 = vmatpush1.bf16.msra.mxu0 0
    %969 = vmatprep.subr.bf16.mxu0 0
    %970 = vmatpush1.bf16.msra.mxu0 0
    %971 = vmatprep.subr.bf16.mxu0 0
    %972 = vmatpush1.bf16.msra.mxu0 0
    %973 = vmatprep.mubr.bf16.mxu0 0
    %974 = vmatmul.mubr.bf16.gmra.mrb[0].mxu0 %v618
    %v975 = vpop.f32.mrb[0].mxu0
    %v976 = vadd.f32 0.0, %v975
    %v977 = vpop.f32.mrb[0].mxu0
    %v978 = vadd.f32 0.0, %v977
    %v979 = vpop.f32.mrb[0].mxu0
    %v980 = vadd.f32 0.0, %v979
    %v981 = vpop.f32.mrb[0].mxu0
    %v982 = vadd.f32 0.0, %v981
    %983 = vmatprep.mubr.bf16.mxu0 0
    %984 = vmatmul.mubr.bf16.gmra.mrb[0].mxu0 %v621
    %v985 = vpop.f32.mrb[0].mxu0
    %v986 = vadd.f32 0.0, %v985
    %v987 = vpop.f32.mrb[0].mxu0
    %v988 = vadd.f32 0.0, %v987
    %v989 = vpop.f32.mrb[0].mxu0
    %v990 = vadd.f32 0.0, %v989
    %v991 = vpop.f32.mrb[0].mxu0
    %v992 = vadd.f32 0.0, %v991
    %993 = vdwg.mxu0
    %994 = vmatprep.subr.bf16.mxu0 %v439
    %995 = vmatpush1.bf16.msra.mxu0 %v438
    %996 = vmatprep.subr.bf16.mxu0 %v455
    %997 = vmatpush1.bf16.msra.mxu0 %v454
    %998 = vmatprep.subr.bf16.mxu0 %v471
    %999 = vmatpush1.bf16.msra.mxu0 %v470
    %1000 = vmatprep.subr.bf16.mxu0 %v487
    %1001 = vmatpush1.bf16.msra.mxu0 %v486
    %1002 = vmatprep.subr.bf16.mxu0 %v503
    %1003 = vmatpush1.bf16.msra.mxu0 %v502
    %1004 = vmatprep.subr.bf16.mxu0 %v519
    %1005 = vmatpush1.bf16.msra.mxu0 %v518
    %1006 = vmatprep.subr.bf16.mxu0 0
    %1007 = vmatpush1.bf16.msra.mxu0 0
    %1008 = vmatprep.subr.bf16.mxu0 0
    %1009 = vmatpush1.bf16.msra.mxu0 0
    %1010 = vmatprep.subr.bf16.mxu0 0
    %1011 = vmatpush1.bf16.msra.mxu0 0
    %1012 = vmatprep.subr.bf16.mxu0 0
    %1013 = vmatpush1.bf16.msra.mxu0 0
    %1014 = vmatprep.subr.bf16.mxu0 0
    %1015 = vmatpush1.bf16.msra.mxu0 0
    %1016 = vmatprep.subr.bf16.mxu0 0
    %1017 = vmatpush1.bf16.msra.mxu0 0
    %1018 = vmatprep.subr.bf16.mxu0 0
    %1019 = vmatpush1.bf16.msra.mxu0 0
    %1020 = vmatprep.subr.bf16.mxu0 0
    %1021 = vmatpush1.bf16.msra.mxu0 0
    %1022 = vmatprep.subr.bf16.mxu0 0
    %1023 = vmatpush1.bf16.msra.mxu0 0
    %1024 = vmatprep.subr.bf16.mxu0 0
    %1025 = vmatpush1.bf16.msra.mxu0 0
    %1026 = vmatprep.mubr.bf16.mxu0 0
    %1027 = vmatmul.mubr.bf16.gmra.mrb[0].mxu0 %v618
    %v1028 = vpop.f32.mrb[0].mxu0
    %v1029 = vadd.f32 0.0, %v1028
    %v1030 = vpop.f32.mrb[0].mxu0
    %v1031 = vadd.f32 0.0, %v1030
    %v1032 = vpop.f32.mrb[0].mxu0
    %v1033 = vadd.f32 0.0, %v1032
    %v1034 = vpop.f32.mrb[0].mxu0
    %v1035 = vadd.f32 0.0, %v1034
    %1036 = vmatprep.mubr.bf16.mxu0 0
    %1037 = vmatmul.mubr.bf16.gmra.mrb[0].mxu0 %v621
    %v1038 = vpop.f32.mrb[0].mxu0
    %v1039 = vadd.f32 0.0, %v1038
    %v1040 = vpop.f32.mrb[0].mxu0
    %v1041 = vadd.f32 0.0, %v1040
    %v1042 = vpop.f32.mrb[0].mxu0
    %v1043 = vadd.f32 0.0, %v1042
    %v1044 = vpop.f32.mrb[0].mxu0
    %v1045 = vadd.f32 0.0, %v1044
    %1046 = vdwg.mxu0
    %1047 = vst [vmem:[%s2] sm:$0xff] %v658
    %1048 = vst [vmem:[%s2 + $0x8] sm:$0xff] %v660
    %1049 = vst [vmem:[%s2 + $0x10] sm:$0xff] %v711
    %1050 = vst [vmem:[%s2 + $0x18] sm:$0xff] %v713
    %1051 = vst [vmem:[%s2 + $0x20] sm:$0xff] %v764
    %1052 = vst [vmem:[%s2 + $0x28] sm:$0xff] %v766
    %1053 = vst [vmem:[%s2 + $0x30] sm:$0xff] %v817
    %1054 = vst [vmem:[%s2 + $0x38] sm:$0xff] %v819
    %1055 = vst [vmem:[%s2 + $0x40] sm:$0xff] %v870
    %1056 = vst [vmem:[%s2 + $0x48] sm:$0xff] %v872
    %1057 = vst [vmem:[%s2 + $0x50] sm:$0xff] %v923
    %1058 = vst [vmem:[%s2 + $0x58] sm:$0xff] %v925
    %1059 = vst [vmem:[%s2 + $0x60] sm:$0xff] %v976
    %1060 = vst [vmem:[%s2 + $0x68] sm:$0xff] %v978
    %1061 = vst [vmem:[%s2 + $0x70] sm:$0xff] %v1029
    %1062 = vst [vmem:[%s2 + $0x78] sm:$0xff] %v1031
    %1063 = vst [vmem:[%s2 + $0x80] sm:$0xff] %v662
    %1064 = vst [vmem:[%s2 + $0x88] sm:$0xff] %v664
    %1065 = vst [vmem:[%s2 + $0x90] sm:$0xff] %v715
    %1066 = vst [vmem:[%s2 + $0x98] sm:$0xff] %v717
    %1067 = vst [vmem:[%s2 + $0xa0] sm:$0xff] %v768
    %1068 = vst [vmem:[%s2 + $0xa8] sm:$0xff] %v770
    %1069 = vst [vmem:[%s2 + $0xb0] sm:$0xff] %v821
    %1070 = vst [vmem:[%s2 + $0xb8] sm:$0xff] %v823
    %1071 = vst [vmem:[%s2 + $0xc0] sm:$0xff] %v874
    %1072 = vst [vmem:[%s2 + $0xc8] sm:$0xff] %v876
    %1073 = vst [vmem:[%s2 + $0xd0] sm:$0xff] %v927
    %1074 = vst [vmem:[%s2 + $0xd8] sm:$0xff] %v929
    %1075 = vst [vmem:[%s2 + $0xe0] sm:$0xff] %v980
    %1076 = vst [vmem:[%s2 + $0xe8] sm:$0xff] %v982
    %1077 = vst [vmem:[%s2 + $0xf0] sm:$0xff] %v1033
    %1078 = vst [vmem:[%s2 + $0xf8] sm:$0xff] %v1035
    %1079 = vst [vmem:[%s2 + $0x100] sm:$0xff] %v668
    %1080 = vst [vmem:[%s2 + $0x108] sm:$0xff] %v670
    %1081 = vst [vmem:[%s2 + $0x110] sm:$0xff] %v721
    %1082 = vst [vmem:[%s2 + $0x118] sm:$0xff] %v723
    %1083 = vst [vmem:[%s2 + $0x120] sm:$0xff] %v774
    %1084 = vst [vmem:[%s2 + $0x128] sm:$0xff] %v776
    %1085 = vst [vmem:[%s2 + $0x130] sm:$0xff] %v827
    %1086 = vst [vmem:[%s2 + $0x138] sm:$0xff] %v829
    %1087 = vst [vmem:[%s2 + $0x140] sm:$0xff] %v880
    %1088 = vst [vmem:[%s2 + $0x148] sm:$0xff] %v882
    %1089 = vst [vmem:[%s2 + $0x150] sm:$0xff] %v933
    %1090 = vst [vmem:[%s2 + $0x158] sm:$0xff] %v935
    %1091 = vst [vmem:[%s2 + $0x160] sm:$0xff] %v986
    %1092 = vst [vmem:[%s2 + $0x168] sm:$0xff] %v988
    %1093 = vst [vmem:[%s2 + $0x170] sm:$0xff] %v1039
    %1094 = vst [vmem:[%s2 + $0x178] sm:$0xff] %v1041
    %1095 = vst [vmem:[%s2 + $0x180] sm:$0xff] %v672
    %1096 = vst [vmem:[%s2 + $0x188] sm:$0xff] %v674
    %1097 = vst [vmem:[%s2 + $0x190] sm:$0xff] %v725
    %1098 = vst [vmem:[%s2 + $0x198] sm:$0xff] %v727
    %1099 = vst [vmem:[%s2 + $0x1a0] sm:$0xff] %v778
    %1100 = vst [vmem:[%s2 + $0x1a8] sm:$0xff] %v780
    %1101 = vst [vmem:[%s2 + $0x1b0] sm:$0xff] %v831
    %1102 = vst [vmem:[%s2 + $0x1b8] sm:$0xff] %v833
    %1103 = vst [vmem:[%s2 + $0x1c0] sm:$0xff] %v884
    %1104 = vst [vmem:[%s2 + $0x1c8] sm:$0xff] %v886
    %1105 = vst [vmem:[%s2 + $0x1d0] sm:$0xff] %v937
    %1106 = vst [vmem:[%s2 + $0x1d8] sm:$0xff] %v939
    %1107 = vst [vmem:[%s2 + $0x1e0] sm:$0xff] %v990
    %1108 = vst [vmem:[%s2 + $0x1e8] sm:$0xff] %v992
    %1109 = vst [vmem:[%s2 + $0x1f0] sm:$0xff] %v1043
    %1110 = vst [vmem:[%s2 + $0x1f8] sm:$0xff] %v1045
    // Predicated region
    $region14: #{decoder_conv_forward.6} parent=1 // pred_check
      _
    $region15: #{decoder_conv_forward.6} parent=1 // pred_check_branch
      %1112 = sbr.rel (0) target = $region17
    $region16: #{decoder_conv_forward.6} parent=1 // pred_region
      _
    $region17: #{decoder_conv_forward.6} parent=1 // pred_fallthru
      _
    // Predicated region
    $region18: #{decoder_conv_forward.6} parent=1 // pred_check
      _
    $region19: #{decoder_conv_forward.6} parent=1 // pred_check_branch
      %1114 = sbr.rel (0) target = $region21
    $region20: #{decoder_conv_forward.6} parent=1 // pred_region
      _
    $region21: #{decoder_conv_forward.6} parent=1 // pred_fallthru
      _
    %1115 = vsyncpa [#allocation3], 1

// kernel: decoder_conv_forward.7
$region0: #{decoder_conv_forward.7}
  #allocation0 [shape = 'u32[]', space=smem, size = 0x4, offset = 0x4, fixed_abs, tag = 'smem constant byte address 0x4 - core index']
  #allocation1 [shape = 'u32[144,128]{1,0:T(1,128)}', space=vmem, size = 0x12000, scoped, tag = 'internal scratch']
  %s0 = inlined_call_operand.vmem [shape: bf16[128,64], index: 0, kind: input, shape index: {}]
  %s1 = inlined_call_operand.vmem [shape: bf16[64,2048], index: 1, kind: input, shape index: {}]
  %s2 = inlined_call_operand.vmem [shape: f32[128,2048], index: 2, kind: output, shape index: {}]
  %s3 = sld [smem:[#allocation0]]
  $region18: #{decoder_conv_forward.7} parent=0
    _
  %s5 = ssub.s32 1, %s3
  %s6 = scalar_select 0, %s5, %s3
  // Predicated region
  $region2: #{decoder_conv_forward.7} parent=0 // pred_check
    _
  $region3: #{decoder_conv_forward.7} parent=0 // pred_check_branch
    %8 = sbr.rel (0) target = $region5
  $region4: #{decoder_conv_forward.7} parent=0 // pred_region
    _
  $region5: #{decoder_conv_forward.7} parent=0 // pred_fallthru
    _
  // Predicated region
  $region6: #{decoder_conv_forward.7} parent=0 // pred_check
    _
  $region7: #{decoder_conv_forward.7} parent=0 // pred_check_branch
    %10 = sbr.rel (0) target = $region9
  $region8: #{decoder_conv_forward.7} parent=0 // pred_region
    _
  $region9: #{decoder_conv_forward.7} parent=0 // pred_fallthru
    _
  %v12 = vld [vmem:[%s0] sm:$0xf]
  %v13 = vld [vmem:[%s0 + $0x4] sm:$0xf]
  %v14 = vld [vmem:[%s0 + $0x8] sm:$0xf]
  %v15 = vld [vmem:[%s0 + $0xc] sm:$0xf]
  %v16 = vld [vmem:[%s0 + $0x10] sm:$0xf]
  %v17 = vld [vmem:[%s0 + $0x14] sm:$0xf]
  %v18 = vld [vmem:[%s0 + $0x18] sm:$0xf]
  %v19 = vld [vmem:[%s0 + $0x1c] sm:$0xf]
  %v20 = vld [vmem:[%s0 + $0x20] sm:$0xf]
  %v21 = vld [vmem:[%s0 + $0x24] sm:$0xf]
  %v22 = vld [vmem:[%s0 + $0x28] sm:$0xf]
  %v23 = vld [vmem:[%s0 + $0x2c] sm:$0xf]
  %v24 = vld [vmem:[%s0 + $0x30] sm:$0xf]
  %v25 = vld [vmem:[%s0 + $0x34] sm:$0xf]
  %v26 = vld [vmem:[%s0 + $0x38] sm:$0xf]
  %v27 = vld [vmem:[%s0 + $0x3c] sm:$0xf]
  %v28 = vld [vmem:[%s1] sm:$0xff]
  %v29 = vld [vmem:[%s1 + $0x8] sm:$0xff]
  %v30 = vld [vmem:[%s1 + $0x10] sm:$0xff]
  %v31 = vld [vmem:[%s1 + $0x18] sm:$0xff]
  %v32 = vld [vmem:[%s1 + $0x20] sm:$0xff]
  %v33 = vld [vmem:[%s1 + $0x28] sm:$0xff]
  %v34 = vld [vmem:[%s1 + $0x30] sm:$0xff]
  %v35 = vld [vmem:[%s1 + $0x38] sm:$0xff]
  %v36 = vld [vmem:[%s1 + $0x40] sm:$0xff]
  %v37 = vld [vmem:[%s1 + $0x48] sm:$0xff]
  %v38 = vld [vmem:[%s1 + $0x50] sm:$0xff]
  %v39 = vld [vmem:[%s1 + $0x58] sm:$0xff]
  %v40 = vld [vmem:[%s1 + $0x60] sm:$0xff]
  %v41 = vld [vmem:[%s1 + $0x68] sm:$0xff]
  %v42 = vld [vmem:[%s1 + $0x70] sm:$0xff]
  %v43 = vld [vmem:[%s1 + $0x78] sm:$0xff]
  %v44 = vld [vmem:[%s1 + $0x80] sm:$0xff]
  %v45 = vld [vmem:[%s1 + $0x88] sm:$0xff]
  %v46 = vld [vmem:[%s1 + $0x90] sm:$0xff]
  %v47 = vld [vmem:[%s1 + $0x98] sm:$0xff]
  %v48 = vld [vmem:[%s1 + $0xa0] sm:$0xff]
  %v49 = vld [vmem:[%s1 + $0xa8] sm:$0xff]
  %v50 = vld [vmem:[%s1 + $0xb0] sm:$0xff]
  %v51 = vld [vmem:[%s1 + $0xb8] sm:$0xff]
  %v52 = vld [vmem:[%s1 + $0xc0] sm:$0xff]
  %v53 = vld [vmem:[%s1 + $0xc8] sm:$0xff]
  %v54 = vld [vmem:[%s1 + $0xd0] sm:$0xff]
  %v55 = vld [vmem:[%s1 + $0xd8] sm:$0xff]
  %v56 = vld [vmem:[%s1 + $0xe0] sm:$0xff]
  %v57 = vld [vmem:[%s1 + $0xe8] sm:$0xff]
  %v58 = vld [vmem:[%s1 + $0xf0] sm:$0xff]
  %v59 = vld [vmem:[%s1 + $0xf8] sm:$0xff]
  %v60 = vld [vmem:[%s1 + $0x100] sm:$0xff]
  %v61 = vld [vmem:[%s1 + $0x108] sm:$0xff]
  %v62 = vld [vmem:[%s1 + $0x110] sm:$0xff]
  %v63 = vld [vmem:[%s1 + $0x118] sm:$0xff]
  %v64 = vld [vmem:[%s1 + $0x120] sm:$0xff]
  %v65 = vld [vmem:[%s1 + $0x128] sm:$0xff]
  %v66 = vld [vmem:[%s1 + $0x130] sm:$0xff]
  %v67 = vld [vmem:[%s1 + $0x138] sm:$0xff]
  %v68 = vld [vmem:[%s1 + $0x140] sm:$0xff]
  %v69 = vld [vmem:[%s1 + $0x148] sm:$0xff]
  %v70 = vld [vmem:[%s1 + $0x150] sm:$0xff]
  %v71 = vld [vmem:[%s1 + $0x158] sm:$0xff]
  %v72 = vld [vmem:[%s1 + $0x160] sm:$0xff]
  %v73 = vld [vmem:[%s1 + $0x168] sm:$0xff]
  %v74 = vld [vmem:[%s1 + $0x170] sm:$0xff]
  %v75 = vld [vmem:[%s1 + $0x178] sm:$0xff]
  %v76 = vld [vmem:[%s1 + $0x180] sm:$0xff]
  %v77 = vld [vmem:[%s1 + $0x188] sm:$0xff]
  %v78 = vld [vmem:[%s1 + $0x190] sm:$0xff]
  %v79 = vld [vmem:[%s1 + $0x198] sm:$0xff]
  %v80 = vld [vmem:[%s1 + $0x1a0] sm:$0xff]
  %v81 = vld [vmem:[%s1 + $0x1a8] sm:$0xff]
  %v82 = vld [vmem:[%s1 + $0x1b0] sm:$0xff]
  %v83 = vld [vmem:[%s1 + $0x1b8] sm:$0xff]
  %v84 = vld [vmem:[%s1 + $0x1c0] sm:$0xff]
  %v85 = vld [vmem:[%s1 + $0x1c8] sm:$0xff]
  %v86 = vld [vmem:[%s1 + $0x1d0] sm:$0xff]
  %v87 = vld [vmem:[%s1 + $0x1d8] sm:$0xff]
  %v88 = vld [vmem:[%s1 + $0x1e0] sm:$0xff]
  %v89 = vld [vmem:[%s1 + $0x1e8] sm:$0xff]
  %v90 = vld [vmem:[%s1 + $0x1f0] sm:$0xff]
  %v91 = vld [vmem:[%s1 + $0x1f8] sm:$0xff]
  %v108 = vunpack.c.l.b16 %v12
  %v109 = vunpack.c.l.b16 %v13
  %v110 = vunpack.c.l.b16 %v14
  %v111 = vunpack.c.l.b16 %v15
  %v112 = vunpack.c.l.b16 %v16
  %v113 = vunpack.c.l.b16 %v17
  %v114 = vunpack.c.l.b16 %v18
  %v115 = vunpack.c.l.b16 %v19
  %v116 = vunpack.c.l.b16 %v20
  %v117 = vunpack.c.l.b16 %v21
  %v118 = vunpack.c.l.b16 %v22
  %v119 = vunpack.c.l.b16 %v23
  %v120 = vunpack.c.l.b16 %v24
  %v121 = vunpack.c.l.b16 %v25
  %v122 = vunpack.c.l.b16 %v26
  %v123 = vunpack.c.l.b16 %v27
  %v124 = vpack.c.b16 %v109, %v108
  %v125 = vpack.c.b16 %v111, %v110
  %v126 = vpack.c.b16 %v113, %v112
  %v127 = vpack.c.b16 %v115, %v114
  %v128 = vpack.c.b16 %v117, %v116
  %v129 = vpack.c.b16 %v119, %v118
  %v130 = vpack.c.b16 %v121, %v120
  %v131 = vpack.c.b16 %v123, %v122
  %v196 = vunpack.c.l.b16 %v28
  %v197 = vunpack.c.h.b16 %v28
  %v198 = vunpack.c.l.b16 %v29
  %v199 = vunpack.c.h.b16 %v29
  %v200 = vunpack.c.l.b16 %v30
  %v201 = vunpack.c.h.b16 %v30
  %v202 = vunpack.c.l.b16 %v31
  %v203 = vunpack.c.h.b16 %v31
  %v204 = vunpack.c.l.b16 %v32
  %v205 = vunpack.c.h.b16 %v32
  %v206 = vunpack.c.l.b16 %v33
  %v207 = vunpack.c.h.b16 %v33
  %v208 = vunpack.c.l.b16 %v34
  %v209 = vunpack.c.h.b16 %v34
  %v210 = vunpack.c.l.b16 %v35
  %v211 = vunpack.c.h.b16 %v35
  %v212 = vunpack.c.l.b16 %v36
  %v213 = vunpack.c.h.b16 %v36
  %v214 = vunpack.c.l.b16 %v37
  %v215 = vunpack.c.h.b16 %v37
  %v216 = vunpack.c.l.b16 %v38
  %v217 = vunpack.c.h.b16 %v38
  %v218 = vunpack.c.l.b16 %v39
  %v219 = vunpack.c.h.b16 %v39
  %v220 = vunpack.c.l.b16 %v40
  %v221 = vunpack.c.h.b16 %v40
  %v222 = vunpack.c.l.b16 %v41
  %v223 = vunpack.c.h.b16 %v41
  %v224 = vunpack.c.l.b16 %v42
  %v225 = vunpack.c.h.b16 %v42
  %v226 = vunpack.c.l.b16 %v43
  %v227 = vunpack.c.h.b16 %v43
  %v228 = vunpack.c.l.b16 %v44
  %v229 = vunpack.c.h.b16 %v44
  %v230 = vunpack.c.l.b16 %v45
  %v231 = vunpack.c.h.b16 %v45
  %v232 = vunpack.c.l.b16 %v46
  %v233 = vunpack.c.h.b16 %v46
  %v234 = vunpack.c.l.b16 %v47
  %v235 = vunpack.c.h.b16 %v47
  %v236 = vunpack.c.l.b16 %v48
  %v237 = vunpack.c.h.b16 %v48
  %v238 = vunpack.c.l.b16 %v49
  %v239 = vunpack.c.h.b16 %v49
  %v240 = vunpack.c.l.b16 %v50
  %v241 = vunpack.c.h.b16 %v50
  %v242 = vunpack.c.l.b16 %v51
  %v243 = vunpack.c.h.b16 %v51
  %v244 = vunpack.c.l.b16 %v52
  %v245 = vunpack.c.h.b16 %v52
  %v246 = vunpack.c.l.b16 %v53
  %v247 = vunpack.c.h.b16 %v53
  %v248 = vunpack.c.l.b16 %v54
  %v249 = vunpack.c.h.b16 %v54
  %v250 = vunpack.c.l.b16 %v55
  %v251 = vunpack.c.h.b16 %v55
  %v252 = vunpack.c.l.b16 %v56
  %v253 = vunpack.c.h.b16 %v56
  %v254 = vunpack.c.l.b16 %v57
  %v255 = vunpack.c.h.b16 %v57
  %v256 = vunpack.c.l.b16 %v58
  %v257 = vunpack.c.h.b16 %v58
  %v258 = vunpack.c.l.b16 %v59
  %v259 = vunpack.c.h.b16 %v59
  %v260 = vunpack.c.l.b16 %v60
  %v261 = vunpack.c.h.b16 %v60
  %v262 = vunpack.c.l.b16 %v61
  %v263 = vunpack.c.h.b16 %v61
  %v264 = vunpack.c.l.b16 %v62
  %v265 = vunpack.c.h.b16 %v62
  %v266 = vunpack.c.l.b16 %v63
  %v267 = vunpack.c.h.b16 %v63
  %v268 = vunpack.c.l.b16 %v64
  %v269 = vunpack.c.h.b16 %v64
  %v270 = vunpack.c.l.b16 %v65
  %v271 = vunpack.c.h.b16 %v65
  %v272 = vunpack.c.l.b16 %v66
  %v273 = vunpack.c.h.b16 %v66
  %v274 = vunpack.c.l.b16 %v67
  %v275 = vunpack.c.h.b16 %v67
  %v276 = vunpack.c.l.b16 %v68
  %v277 = vunpack.c.h.b16 %v68
  %v278 = vunpack.c.l.b16 %v69
  %v279 = vunpack.c.h.b16 %v69
  %v280 = vunpack.c.l.b16 %v70
  %v281 = vunpack.c.h.b16 %v70
  %v282 = vunpack.c.l.b16 %v71
  %v283 = vunpack.c.h.b16 %v71
  %v284 = vunpack.c.l.b16 %v72
  %v285 = vunpack.c.h.b16 %v72
  %v286 = vunpack.c.l.b16 %v73
  %v287 = vunpack.c.h.b16 %v73
  %v288 = vunpack.c.l.b16 %v74
  %v289 = vunpack.c.h.b16 %v74
  %v290 = vunpack.c.l.b16 %v75
  %v291 = vunpack.c.h.b16 %v75
  %v292 = vunpack.c.l.b16 %v76
  %v293 = vunpack.c.h.b16 %v76
  %v294 = vunpack.c.l.b16 %v77
  %v295 = vunpack.c.h.b16 %v77
  %v296 = vunpack.c.l.b16 %v78
  %v297 = vunpack.c.h.b16 %v78
  %v298 = vunpack.c.l.b16 %v79
  %v299 = vunpack.c.h.b16 %v79
  %v300 = vunpack.c.l.b16 %v80
  %v301 = vunpack.c.h.b16 %v80
  %v302 = vunpack.c.l.b16 %v81
  %v303 = vunpack.c.h.b16 %v81
  %v304 = vunpack.c.l.b16 %v82
  %v305 = vunpack.c.h.b16 %v82
  %v306 = vunpack.c.l.b16 %v83
  %v307 = vunpack.c.h.b16 %v83
  %v308 = vunpack.c.l.b16 %v84
  %v309 = vunpack.c.h.b16 %v84
  %v310 = vunpack.c.l.b16 %v85
  %v311 = vunpack.c.h.b16 %v85
  %v312 = vunpack.c.l.b16 %v86
  %v313 = vunpack.c.h.b16 %v86
  %v314 = vunpack.c.l.b16 %v87
  %v315 = vunpack.c.h.b16 %v87
  %v316 = vunpack.c.l.b16 %v88
  %v317 = vunpack.c.h.b16 %v88
  %v318 = vunpack.c.l.b16 %v89
  %v319 = vunpack.c.h.b16 %v89
  %v320 = vunpack.c.l.b16 %v90
  %v321 = vunpack.c.h.b16 %v90
  %v322 = vunpack.c.l.b16 %v91
  %v323 = vunpack.c.h.b16 %v91
  %v324 = vpack.c.b16 %v212, %v196
  %v325 = vpack.c.b16 %v213, %v197
  %v326 = vpack.c.b16 %v214, %v198
  %v327 = vpack.c.b16 %v215, %v199
  %v328 = vpack.c.b16 %v216, %v200
  %v329 = vpack.c.b16 %v217, %v201
  %v330 = vpack.c.b16 %v218, %v202
  %v331 = vpack.c.b16 %v219, %v203
  %v332 = vpack.c.b16 %v220, %v204
  %v333 = vpack.c.b16 %v221, %v205
  %v334 = vpack.c.b16 %v222, %v206
  %v335 = vpack.c.b16 %v223, %v207
  %v336 = vpack.c.b16 %v224, %v208
  %v337 = vpack.c.b16 %v225, %v209
  %v338 = vpack.c.b16 %v226, %v210
  %v339 = vpack.c.b16 %v227, %v211
  %v340 = vpack.c.b16 %v244, %v228
  %v341 = vpack.c.b16 %v245, %v229
  %v342 = vpack.c.b16 %v246, %v230
  %v343 = vpack.c.b16 %v247, %v231
  %v344 = vpack.c.b16 %v248, %v232
  %v345 = vpack.c.b16 %v249, %v233
  %v346 = vpack.c.b16 %v250, %v234
  %v347 = vpack.c.b16 %v251, %v235
  %v348 = vpack.c.b16 %v252, %v236
  %v349 = vpack.c.b16 %v253, %v237
  %v350 = vpack.c.b16 %v254, %v238
  %v351 = vpack.c.b16 %v255, %v239
  %v352 = vpack.c.b16 %v256, %v240
  %v353 = vpack.c.b16 %v257, %v241
  %v354 = vpack.c.b16 %v258, %v242
  %v355 = vpack.c.b16 %v259, %v243
  %v356 = vpack.c.b16 %v276, %v260
  %v357 = vpack.c.b16 %v277, %v261
  %v358 = vpack.c.b16 %v278, %v262
  %v359 = vpack.c.b16 %v279, %v263
  %v360 = vpack.c.b16 %v280, %v264
  %v361 = vpack.c.b16 %v281, %v265
  %v362 = vpack.c.b16 %v282, %v266
  %v363 = vpack.c.b16 %v283, %v267
  %v364 = vpack.c.b16 %v284, %v268
  %v365 = vpack.c.b16 %v285, %v269
  %v366 = vpack.c.b16 %v286, %v270
  %v367 = vpack.c.b16 %v287, %v271
  %v368 = vpack.c.b16 %v288, %v272
  %v369 = vpack.c.b16 %v289, %v273
  %v370 = vpack.c.b16 %v290, %v274
  %v371 = vpack.c.b16 %v291, %v275
  %v372 = vpack.c.b16 %v308, %v292
  %v373 = vpack.c.b16 %v309, %v293
  %v374 = vpack.c.b16 %v310, %v294
  %v375 = vpack.c.b16 %v311, %v295
  %v376 = vpack.c.b16 %v312, %v296
  %v377 = vpack.c.b16 %v313, %v297
  %v378 = vpack.c.b16 %v314, %v298
  %v379 = vpack.c.b16 %v315, %v299
  %v380 = vpack.c.b16 %v316, %v300
  %v381 = vpack.c.b16 %v317, %v301
  %v382 = vpack.c.b16 %v318, %v302
  %v383 = vpack.c.b16 %v319, %v303
  %v384 = vpack.c.b16 %v320, %v304
  %v385 = vpack.c.b16 %v321, %v305
  %v386 = vpack.c.b16 %v322, %v306
  %v387 = vpack.c.b16 %v323, %v307
  %vm452 = vcmask 523264
  %v454 = vsel %vm452, %v124, 0
  %v457 = vsel %vm452, %v125, 0
  %v460 = vsel %vm452, %v126, 0
  %v463 = vsel %vm452, %v127, 0
  %v466 = vsel %vm452, %v128, 0
  %v469 = vsel %vm452, %v129, 0
  %v472 = vsel %vm452, %v130, 0
  %v475 = vsel %vm452, %v131, 0
  %477 = vmatprep.subr.bf16.mxu0 %v325
  %478 = vmatpush1.bf16.msra.mxu0 %v324
  %479 = vmatprep.subr.bf16.mxu0 %v341
  %480 = vmatpush1.bf16.msra.mxu0 %v340
  %481 = vmatprep.subr.bf16.mxu0 %v357
  %482 = vmatpush1.bf16.msra.mxu0 %v356
  %483 = vmatprep.subr.bf16.mxu0 %v373
  %484 = vmatpush1.bf16.msra.mxu0 %v372
  %485 = vmatprep.subr.bf16.mxu0 0
  %486 = vmatpush1.bf16.msra.mxu0 0
  %487 = vmatprep.subr.bf16.mxu0 0
  %488 = vmatpush1.bf16.msra.mxu0 0
  %489 = vmatprep.subr.bf16.mxu0 0
  %490 = vmatpush1.bf16.msra.mxu0 0
  %491 = vmatprep.subr.bf16.mxu0 0
  %492 = vmatpush1.bf16.msra.mxu0 0
  %493 = vmatprep.subr.bf16.mxu0 0
  %494 = vmatpush1.bf16.msra.mxu0 0
  %495 = vmatprep.subr.bf16.mxu0 0
  %496 = vmatpush1.bf16.msra.mxu0 0
  %497 = vmatprep.subr.bf16.mxu0 0
  %498 = vmatpush1.bf16.msra.mxu0 0
  %499 = vmatprep.subr.bf16.mxu0 0
  %500 = vmatpush1.bf16.msra.mxu0 0
  %501 = vmatprep.subr.bf16.mxu0 0
  %502 = vmatpush1.bf16.msra.mxu0 0
  %503 = vmatprep.subr.bf16.mxu0 0
  %504 = vmatpush1.bf16.msra.mxu0 0
  %505 = vmatprep.subr.bf16.mxu0 0
  %506 = vmatpush1.bf16.msra.mxu0 0
  %507 = vmatprep.subr.bf16.mxu0 0
  %508 = vmatpush1.bf16.msra.mxu0 0
  %509 = vmatprep.mubr.bf16.mxu0 0
  %510 = vmatmul.mubr.bf16.gmra.mrb[0].mxu0 %v454
  %v511 = vpop.f32.mrb[0].mxu0
  %v512 = vadd.f32 0.0, %v511
  %v513 = vpop.f32.mrb[0].mxu0
  %v514 = vadd.f32 0.0, %v513
  %v515 = vpop.f32.mrb[0].mxu0
  %v516 = vadd.f32 0.0, %v515
  %v517 = vpop.f32.mrb[0].mxu0
  %v518 = vadd.f32 0.0, %v517
  %519 = vmatprep.mubr.bf16.mxu0 0
  %520 = vmatmul.mubr.bf16.gmra.mrb[0].mxu0 %v457
  %v521 = vpop.f32.mrb[0].mxu0
  %v522 = vadd.f32 0.0, %v521
  %v523 = vpop.f32.mrb[0].mxu0
  %v524 = vadd.f32 0.0, %v523
  %v525 = vpop.f32.mrb[0].mxu0
  %v526 = vadd.f32 0.0, %v525
  %v527 = vpop.f32.mrb[0].mxu0
  %v528 = vadd.f32 0.0, %v527
  %529 = vmatprep.mubr.bf16.mxu0 0
  %530 = vmatmul.mubr.bf16.gmra.mrb[0].mxu0 %v460
  %v531 = vpop.f32.mrb[0].mxu0
  %v532 = vadd.f32 0.0, %v531
  %v533 = vpop.f32.mrb[0].mxu0
  %v534 = vadd.f32 0.0, %v533
  %v535 = vpop.f32.mrb[0].mxu0
  %v536 = vadd.f32 0.0, %v535
  %v537 = vpop.f32.mrb[0].mxu0
  %v538 = vadd.f32 0.0, %v537
  %539 = vmatprep.mubr.bf16.mxu0 0
  %540 = vmatmul.mubr.bf16.gmra.mrb[0].mxu0 %v463
  %v541 = vpop.f32.mrb[0].mxu0
  %v542 = vadd.f32 0.0, %v541
  %v543 = vpop.f32.mrb[0].mxu0
  %v544 = vadd.f32 0.0, %v543
  %v545 = vpop.f32.mrb[0].mxu0
  %v546 = vadd.f32 0.0, %v545
  %v547 = vpop.f32.mrb[0].mxu0
  %v548 = vadd.f32 0.0, %v547
  %549 = vmatprep.mubr.bf16.mxu0 0
  %550 = vmatmul.mubr.bf16.gmra.mrb[0].mxu0 %v466
  %v551 = vpop.f32.mrb[0].mxu0
  %v552 = vadd.f32 0.0, %v551
  %v553 = vpop.f32.mrb[0].mxu0
  %v554 = vadd.f32 0.0, %v553
  %v555 = vpop.f32.mrb[0].mxu0
  %v556 = vadd.f32 0.0, %v555
  %v557 = vpop.f32.mrb[0].mxu0
  %v558 = vadd.f32 0.0, %v557
  %559 = vmatprep.mubr.bf16.mxu0 0
  %560 = vmatmul.mubr.bf16.gmra.mrb[0].mxu0 %v469
  %v561 = vpop.f32.mrb[0].mxu0
  %v562 = vadd.f32 0.0, %v561
  %v563 = vpop.f32.mrb[0].mxu0
  %v564 = vadd.f32 0.0, %v563
  %v565 = vpop.f32.mrb[0].mxu0
  %v566 = vadd.f32 0.0, %v565
  %v567 = vpop.f32.mrb[0].mxu0
  %v568 = vadd.f32 0.0, %v567
  %569 = vmatprep.mubr.bf16.mxu0 0
  %570 = vmatmul.mubr.bf16.gmra.mrb[0].mxu0 %v472
  %v571 = vpop.f32.mrb[0].mxu0
  %v572 = vadd.f32 0.0, %v571
  %v573 = vpop.f32.mrb[0].mxu0
  %v574 = vadd.f32 0.0, %v573
  %v575 = vpop.f32.mrb[0].mxu0
  %v576 = vadd.f32 0.0, %v575
  %v577 = vpop.f32.mrb[0].mxu0
  %v578 = vadd.f32 0.0, %v577
  %579 = vmatprep.mubr.bf16.mxu0 0
  %580 = vmatmul.mubr.bf16.gmra.mrb[0].mxu0 %v475
  %v581 = vpop.f32.mrb[0].mxu0
  %v582 = vadd.f32 0.0, %v581
  %v583 = vpop.f32.mrb[0].mxu0
  %v584 = vadd.f32 0.0, %v583
  %v585 = vpop.f32.mrb[0].mxu0
  %v586 = vadd.f32 0.0, %v585
  %v587 = vpop.f32.mrb[0].mxu0
  %v588 = vadd.f32 0.0, %v587
  %589 = vdwg.mxu0
  %590 = vmatprep.subr.bf16.mxu0 %v327
  %591 = vmatpush1.bf16.msra.mxu0 %v326
  %592 = vmatprep.subr.bf16.mxu0 %v343
  %593 = vmatpush1.bf16.msra.mxu0 %v342
  %594 = vmatprep.subr.bf16.mxu0 %v359
  %595 = vmatpush1.bf16.msra.mxu0 %v358
  %596 = vmatprep.subr.bf16.mxu0 %v375
  %597 = vmatpush1.bf16.msra.mxu0 %v374
  %598 = vmatprep.subr.bf16.mxu0 0
  %599 = vmatpush1.bf16.msra.mxu0 0
  %600 = vmatprep.subr.bf16.mxu0 0
  %601 = vmatpush1.bf16.msra.mxu0 0
  %602 = vmatprep.subr.bf16.mxu0 0
  %603 = vmatpush1.bf16.msra.mxu0 0
  %604 = vmatprep.subr.bf16.mxu0 0
  %605 = vmatpush1.bf16.msra.mxu0 0
  %606 = vmatprep.subr.bf16.mxu0 0
  %607 = vmatpush1.bf16.msra.mxu0 0
  %608 = vmatprep.subr.bf16.mxu0 0
  %609 = vmatpush1.bf16.msra.mxu0 0
  %610 = vmatprep.subr.bf16.mxu0 0
  %611 = vmatpush1.bf16.msra.mxu0 0
  %612 = vmatprep.subr.bf16.mxu0 0
  %613 = vmatpush1.bf16.msra.mxu0 0
  %614 = vmatprep.subr.bf16.mxu0 0
  %615 = vmatpush1.bf16.msra.mxu0 0
  %616 = vmatprep.subr.bf16.mxu0 0
  %617 = vmatpush1.bf16.msra.mxu0 0
  %618 = vmatprep.subr.bf16.mxu0 0
  %619 = vmatpush1.bf16.msra.mxu0 0
  %620 = vmatprep.subr.bf16.mxu0 0
  %621 = vmatpush1.bf16.msra.mxu0 0
  %622 = vmatprep.mubr.bf16.mxu0 0
  %623 = vmatmul.mubr.bf16.gmra.mrb[0].mxu0 %v454
  %v624 = vpop.f32.mrb[0].mxu0
  %v625 = vadd.f32 0.0, %v624
  %v626 = vpop.f32.mrb[0].mxu0
  %v627 = vadd.f32 0.0, %v626
  %v628 = vpop.f32.mrb[0].mxu0
  %v629 = vadd.f32 0.0, %v628
  %v630 = vpop.f32.mrb[0].mxu0
  %v631 = vadd.f32 0.0, %v630
  %632 = vmatprep.mubr.bf16.mxu0 0
  %633 = vmatmul.mubr.bf16.gmra.mrb[0].mxu0 %v457
  %v634 = vpop.f32.mrb[0].mxu0
  %v635 = vadd.f32 0.0, %v634
  %v636 = vpop.f32.mrb[0].mxu0
  %v637 = vadd.f32 0.0, %v636
  %v638 = vpop.f32.mrb[0].mxu0
  %v639 = vadd.f32 0.0, %v638
  %v640 = vpop.f32.mrb[0].mxu0
  %v641 = vadd.f32 0.0, %v640
  %642 = vmatprep.mubr.bf16.mxu0 0
  %643 = vmatmul.mubr.bf16.gmra.mrb[0].mxu0 %v460
  %v644 = vpop.f32.mrb[0].mxu0
  %v645 = vadd.f32 0.0, %v644
  %v646 = vpop.f32.mrb[0].mxu0
  %v647 = vadd.f32 0.0, %v646
  %v648 = vpop.f32.mrb[0].mxu0
  %v649 = vadd.f32 0.0, %v648
  %v650 = vpop.f32.mrb[0].mxu0
  %v651 = vadd.f32 0.0, %v650
  %652 = vmatprep.mubr.bf16.mxu0 0
  %653 = vmatmul.mubr.bf16.gmra.mrb[0].mxu0 %v463
  %v654 = vpop.f32.mrb[0].mxu0
  %v655 = vadd.f32 0.0, %v654
  %v656 = vpop.f32.mrb[0].mxu0
  %v657 = vadd.f32 0.0, %v656
  %v658 = vpop.f32.mrb[0].mxu0
  %v659 = vadd.f32 0.0, %v658
  %v660 = vpop.f32.mrb[0].mxu0
  %v661 = vadd.f32 0.0, %v660
  %662 = vmatprep.mubr.bf16.mxu0 0
  %663 = vmatmul.mubr.bf16.gmra.mrb[0].mxu0 %v466
  %v664 = vpop.f32.mrb[0].mxu0
  %v665 = vadd.f32 0.0, %v664
  %v666 = vpop.f32.mrb[0].mxu0
  %v667 = vadd.f32 0.0, %v666
  %v668 = vpop.f32.mrb[0].mxu0
  %v669 = vadd.f32 0.0, %v668
  %v670 = vpop.f32.mrb[0].mxu0
  %v671 = vadd.f32 0.0, %v670
  %672 = vmatprep.mubr.bf16.mxu0 0
  %673 = vmatmul.mubr.bf16.gmra.mrb[0].mxu0 %v469
  %v674 = vpop.f32.mrb[0].mxu0
  %v675 = vadd.f32 0.0, %v674
  %v676 = vpop.f32.mrb[0].mxu0
  %v677 = vadd.f32 0.0, %v676
  %v678 = vpop.f32.mrb[0].mxu0
  %v679 = vadd.f32 0.0, %v678
  %v680 = vpop.f32.mrb[0].mxu0
  %v681 = vadd.f32 0.0, %v680
  %682 = vmatprep.mubr.bf16.mxu0 0
  %683 = vmatmul.mubr.bf16.gmra.mrb[0].mxu0 %v472
  %v684 = vpop.f32.mrb[0].mxu0
  %v685 = vadd.f32 0.0, %v684
  %v686 = vpop.f32.mrb[0].mxu0
  %v687 = vadd.f32 0.0, %v686
  %v688 = vpop.f32.mrb[0].mxu0
  %v689 = vadd.f32 0.0, %v688
  %v690 = vpop.f32.mrb[0].mxu0
  %v691 = vadd.f32 0.0, %v690
  %692 = vmatprep.mubr.bf16.mxu0 0
  %693 = vmatmul.mubr.bf16.gmra.mrb[0].mxu0 %v475
  %v694 = vpop.f32.mrb[0].mxu0
  %v695 = vadd.f32 0.0, %v694
  %v696 = vpop.f32.mrb[0].mxu0
  %v697 = vadd.f32 0.0, %v696
  %v698 = vpop.f32.mrb[0].mxu0
  %v699 = vadd.f32 0.0, %v698
  %v700 = vpop.f32.mrb[0].mxu0
  %v701 = vadd.f32 0.0, %v700
  %702 = vdwg.mxu0
  %703 = vmatprep.subr.bf16.mxu0 %v329
  %704 = vmatpush1.bf16.msra.mxu0 %v328
  %705 = vmatprep.subr.bf16.mxu0 %v345
  %706 = vmatpush1.bf16.msra.mxu0 %v344
  %707 = vmatprep.subr.bf16.mxu0 %v361
  %708 = vmatpush1.bf16.msra.mxu0 %v360
  %709 = vmatprep.subr.bf16.mxu0 %v377
  %710 = vmatpush1.bf16.msra.mxu0 %v376
  %711 = vmatprep.subr.bf16.mxu0 0
  %712 = vmatpush1.bf16.msra.mxu0 0
  %713 = vmatprep.subr.bf16.mxu0 0
  %714 = vmatpush1.bf16.msra.mxu0 0
  %715 = vmatprep.subr.bf16.mxu0 0
  %716 = vmatpush1.bf16.msra.mxu0 0
  %717 = vmatprep.subr.bf16.mxu0 0
  %718 = vmatpush1.bf16.msra.mxu0 0
  %719 = vmatprep.subr.bf16.mxu0 0
  %720 = vmatpush1.bf16.msra.mxu0 0
  %721 = vmatprep.subr.bf16.mxu0 0
  %722 = vmatpush1.bf16.msra.mxu0 0
  %723 = vmatprep.subr.bf16.mxu0 0
  %724 = vmatpush1.bf16.msra.mxu0 0
  %725 = vmatprep.subr.bf16.mxu0 0
  %726 = vmatpush1.bf16.msra.mxu0 0
  %727 = vmatprep.subr.bf16.mxu0 0
  %728 = vmatpush1.bf16.msra.mxu0 0
  %729 = vmatprep.subr.bf16.mxu0 0
  %730 = vmatpush1.bf16.msra.mxu0 0
  %731 = vmatprep.subr.bf16.mxu0 0
  %732 = vmatpush1.bf16.msra.mxu0 0
  %733 = vmatprep.subr.bf16.mxu0 0
  %734 = vmatpush1.bf16.msra.mxu0 0
  %735 = vmatprep.mubr.bf16.mxu0 0
  %736 = vmatmul.mubr.bf16.gmra.mrb[0].mxu0 %v454
  %v737 = vpop.f32.mrb[0].mxu0
  %v738 = vadd.f32 0.0, %v737
  %v739 = vpop.f32.mrb[0].mxu0
  %v740 = vadd.f32 0.0, %v739
  %v741 = vpop.f32.mrb[0].mxu0
  %v742 = vadd.f32 0.0, %v741
  %v743 = vpop.f32.mrb[0].mxu0
  %v744 = vadd.f32 0.0, %v743
  %745 = vmatprep.mubr.bf16.mxu0 0
  %746 = vmatmul.mubr.bf16.gmra.mrb[0].mxu0 %v457
  %v747 = vpop.f32.mrb[0].mxu0
  %v748 = vadd.f32 0.0, %v747
  %v749 = vpop.f32.mrb[0].mxu0
  %v750 = vadd.f32 0.0, %v749
  %v751 = vpop.f32.mrb[0].mxu0
  %v752 = vadd.f32 0.0, %v751
  %v753 = vpop.f32.mrb[0].mxu0
  %v754 = vadd.f32 0.0, %v753
  %755 = vmatprep.mubr.bf16.mxu0 0
  %756 = vmatmul.mubr.bf16.gmra.mrb[0].mxu0 %v460
  %v757 = vpop.f32.mrb[0].mxu0
  %v758 = vadd.f32 0.0, %v757
  %v759 = vpop.f32.mrb[0].mxu0
  %v760 = vadd.f32 0.0, %v759
  %v761 = vpop.f32.mrb[0].mxu0
  %v762 = vadd.f32 0.0, %v761
  %v763 = vpop.f32.mrb[0].mxu0
  %v764 = vadd.f32 0.0, %v763
  %765 = vmatprep.mubr.bf16.mxu0 0
  %766 = vmatmul.mubr.bf16.gmra.mrb[0].mxu0 %v463
  %v767 = vpop.f32.mrb[0].mxu0
  %v768 = vadd.f32 0.0, %v767
  %v769 = vpop.f32.mrb[0].mxu0
  %v770 = vadd.f32 0.0, %v769
  %v771 = vpop.f32.mrb[0].mxu0
  %v772 = vadd.f32 0.0, %v771
  %v773 = vpop.f32.mrb[0].mxu0
  %v774 = vadd.f32 0.0, %v773
  %775 = vmatprep.mubr.bf16.mxu0 0
  %776 = vmatmul.mubr.bf16.gmra.mrb[0].mxu0 %v466
  %v777 = vpop.f32.mrb[0].mxu0
  %v778 = vadd.f32 0.0, %v777
  %v779 = vpop.f32.mrb[0].mxu0
  %v780 = vadd.f32 0.0, %v779
  %v781 = vpop.f32.mrb[0].mxu0
  %v782 = vadd.f32 0.0, %v781
  %v783 = vpop.f32.mrb[0].mxu0
  %v784 = vadd.f32 0.0, %v783
  %785 = vmatprep.mubr.bf16.mxu0 0
  %786 = vmatmul.mubr.bf16.gmra.mrb[0].mxu0 %v469
  %v787 = vpop.f32.mrb[0].mxu0
  %v788 = vadd.f32 0.0, %v787
  %v789 = vpop.f32.mrb[0].mxu0
  %v790 = vadd.f32 0.0, %v789
  %v791 = vpop.f32.mrb[0].mxu0
  %v792 = vadd.f32 0.0, %v791
  %v793 = vpop.f32.mrb[0].mxu0
  %v794 = vadd.f32 0.0, %v793
  %795 = vmatprep.mubr.bf16.mxu0 0
  %796 = vmatmul.mubr.bf16.gmra.mrb[0].mxu0 %v472
  %v797 = vpop.f32.mrb[0].mxu0
  %v798 = vadd.f32 0.0, %v797
  %v799 = vpop.f32.mrb[0].mxu0
  %v800 = vadd.f32 0.0, %v799
  %v801 = vpop.f32.mrb[0].mxu0
  %v802 = vadd.f32 0.0, %v801
  %v803 = vpop.f32.mrb[0].mxu0
  %v804 = vadd.f32 0.0, %v803
  %805 = vmatprep.mubr.bf16.mxu0 0
  %806 = vmatmul.mubr.bf16.gmra.mrb[0].mxu0 %v475
  %v807 = vpop.f32.mrb[0].mxu0
  %v808 = vadd.f32 0.0, %v807
  %v809 = vpop.f32.mrb[0].mxu0
  %v810 = vadd.f32 0.0, %v809
  %v811 = vpop.f32.mrb[0].mxu0
  %v812 = vadd.f32 0.0, %v811
  %v813 = vpop.f32.mrb[0].mxu0
  %v814 = vadd.f32 0.0, %v813
  %815 = vdwg.mxu0
  %816 = vmatprep.subr.bf16.mxu0 %v331
  %817 = vmatpush1.bf16.msra.mxu0 %v330
  %818 = vmatprep.subr.bf16.mxu0 %v347
  %819 = vmatpush1.bf16.msra.mxu0 %v346
  %820 = vmatprep.subr.bf16.mxu0 %v363
  %821 = vmatpush1.bf16.msra.mxu0 %v362
  %822 = vmatprep.subr.bf16.mxu0 %v379
  %823 = vmatpush1.bf16.msra.mxu0 %v378
  %824 = vmatprep.subr.bf16.mxu0 0
  %825 = vmatpush1.bf16.msra.mxu0 0
  %826 = vmatprep.subr.bf16.mxu0 0
  %827 = vmatpush1.bf16.msra.mxu0 0
  %828 = vmatprep.subr.bf16.mxu0 0
  %829 = vmatpush1.bf16.msra.mxu0 0
  %830 = vmatprep.subr.bf16.mxu0 0
  %831 = vmatpush1.bf16.msra.mxu0 0
  %832 = vmatprep.subr.bf16.mxu0 0
  %833 = vmatpush1.bf16.msra.mxu0 0
  %834 = vmatprep.subr.bf16.mxu0 0
  %835 = vmatpush1.bf16.msra.mxu0 0
  %836 = vmatprep.subr.bf16.mxu0 0
  %837 = vmatpush1.bf16.msra.mxu0 0
  %838 = vmatprep.subr.bf16.mxu0 0
  %839 = vmatpush1.bf16.msra.mxu0 0
  %840 = vmatprep.subr.bf16.mxu0 0
  %841 = vmatpush1.bf16.msra.mxu0 0
  %842 = vmatprep.subr.bf16.mxu0 0
  %843 = vmatpush1.bf16.msra.mxu0 0
  %844 = vmatprep.subr.bf16.mxu0 0
  %845 = vmatpush1.bf16.msra.mxu0 0
  %846 = vmatprep.subr.bf16.mxu0 0
  %847 = vmatpush1.bf16.msra.mxu0 0
  %848 = vmatprep.mubr.bf16.mxu0 0
  %849 = vmatmul.mubr.bf16.gmra.mrb[0].mxu0 %v454
  %v850 = vpop.f32.mrb[0].mxu0
  %v851 = vadd.f32 0.0, %v850
  %v852 = vpop.f32.mrb[0].mxu0
  %v853 = vadd.f32 0.0, %v852
  %v854 = vpop.f32.mrb[0].mxu0
  %v855 = vadd.f32 0.0, %v854
  %v856 = vpop.f32.mrb[0].mxu0
  %v857 = vadd.f32 0.0, %v856
  %858 = vmatprep.mubr.bf16.mxu0 0
  %859 = vmatmul.mubr.bf16.gmra.mrb[0].mxu0 %v457
  %v860 = vpop.f32.mrb[0].mxu0
  %v861 = vadd.f32 0.0, %v860
  %v862 = vpop.f32.mrb[0].mxu0
  %v863 = vadd.f32 0.0, %v862
  %v864 = vpop.f32.mrb[0].mxu0
  %v865 = vadd.f32 0.0, %v864
  %v866 = vpop.f32.mrb[0].mxu0
  %v867 = vadd.f32 0.0, %v866
  %868 = vmatprep.mubr.bf16.mxu0 0
  %869 = vmatmul.mubr.bf16.gmra.mrb[0].mxu0 %v460
  %v870 = vpop.f32.mrb[0].mxu0
  %v871 = vadd.f32 0.0, %v870
  %v872 = vpop.f32.mrb[0].mxu0
  %v873 = vadd.f32 0.0, %v872
  %v874 = vpop.f32.mrb[0].mxu0
  %v875 = vadd.f32 0.0, %v874
  %v876 = vpop.f32.mrb[0].mxu0
  %v877 = vadd.f32 0.0, %v876
  %878 = vmatprep.mubr.bf16.mxu0 0
  %879 = vmatmul.mubr.bf16.gmra.mrb[0].mxu0 %v463
  %v880 = vpop.f32.mrb[0].mxu0
  %v881 = vadd.f32 0.0, %v880
  %v882 = vpop.f32.mrb[0].mxu0
  %v883 = vadd.f32 0.0, %v882
  %v884 = vpop.f32.mrb[0].mxu0
  %v885 = vadd.f32 0.0, %v884
  %v886 = vpop.f32.mrb[0].mxu0
  %v887 = vadd.f32 0.0, %v886
  %888 = vmatprep.mubr.bf16.mxu0 0
  %889 = vmatmul.mubr.bf16.gmra.mrb[0].mxu0 %v466
  %v890 = vpop.f32.mrb[0].mxu0
  %v891 = vadd.f32 0.0, %v890
  %v892 = vpop.f32.mrb[0].mxu0
  %v893 = vadd.f32 0.0, %v892
  %v894 = vpop.f32.mrb[0].mxu0
  %v895 = vadd.f32 0.0, %v894
  %v896 = vpop.f32.mrb[0].mxu0
  %v897 = vadd.f32 0.0, %v896
  %898 = vmatprep.mubr.bf16.mxu0 0
  %899 = vmatmul.mubr.bf16.gmra.mrb[0].mxu0 %v469
  %v900 = vpop.f32.mrb[0].mxu0
  %v901 = vadd.f32 0.0, %v900
  %v902 = vpop.f32.mrb[0].mxu0
  %v903 = vadd.f32 0.0, %v902
  %v904 = vpop.f32.mrb[0].mxu0
  %v905 = vadd.f32 0.0, %v904
  %v906 = vpop.f32.mrb[0].mxu0
  %v907 = vadd.f32 0.0, %v906
  %908 = vmatprep.mubr.bf16.mxu0 0
  %909 = vmatmul.mubr.bf16.gmra.mrb[0].mxu0 %v472
  %v910 = vpop.f32.mrb[0].mxu0
  %v911 = vadd.f32 0.0, %v910
  %v912 = vpop.f32.mrb[0].mxu0
  %v913 = vadd.f32 0.0, %v912
  %v914 = vpop.f32.mrb[0].mxu0
  %v915 = vadd.f32 0.0, %v914
  %v916 = vpop.f32.mrb[0].mxu0
  %v917 = vadd.f32 0.0, %v916
  %918 = vmatprep.mubr.bf16.mxu0 0
  %919 = vmatmul.mubr.bf16.gmra.mrb[0].mxu0 %v475
  %v920 = vpop.f32.mrb[0].mxu0
  %v921 = vadd.f32 0.0, %v920
  %v922 = vpop.f32.mrb[0].mxu0
  %v923 = vadd.f32 0.0, %v922
  %v924 = vpop.f32.mrb[0].mxu0
  %v925 = vadd.f32 0.0, %v924
  %v926 = vpop.f32.mrb[0].mxu0
  %v927 = vadd.f32 0.0, %v926
  %928 = vdwg.mxu0
  %929 = vmatprep.subr.bf16.mxu0 %v333
  %930 = vmatpush1.bf16.msra.mxu0 %v332
  %931 = vmatprep.subr.bf16.mxu0 %v349
  %932 = vmatpush1.bf16.msra.mxu0 %v348
  %933 = vmatprep.subr.bf16.mxu0 %v365
  %934 = vmatpush1.bf16.msra.mxu0 %v364
  %935 = vmatprep.subr.bf16.mxu0 %v381
  %936 = vmatpush1.bf16.msra.mxu0 %v380
  %937 = vmatprep.subr.bf16.mxu0 0
  %938 = vmatpush1.bf16.msra.mxu0 0
  %939 = vmatprep.subr.bf16.mxu0 0
  %940 = vmatpush1.bf16.msra.mxu0 0
  %941 = vmatprep.subr.bf16.mxu0 0
  %942 = vmatpush1.bf16.msra.mxu0 0
  %943 = vmatprep.subr.bf16.mxu0 0
  %944 = vmatpush1.bf16.msra.mxu0 0
  %945 = vmatprep.subr.bf16.mxu0 0
  %946 = vmatpush1.bf16.msra.mxu0 0
  %947 = vmatprep.subr.bf16.mxu0 0
  %948 = vmatpush1.bf16.msra.mxu0 0
  %949 = vmatprep.subr.bf16.mxu0 0
  %950 = vmatpush1.bf16.msra.mxu0 0
  %951 = vmatprep.subr.bf16.mxu0 0
  %952 = vmatpush1.bf16.msra.mxu0 0
  %953 = vmatprep.subr.bf16.mxu0 0
  %954 = vmatpush1.bf16.msra.mxu0 0
  %955 = vmatprep.subr.bf16.mxu0 0
  %956 = vmatpush1.bf16.msra.mxu0 0
  %957 = vmatprep.subr.bf16.mxu0 0
  %958 = vmatpush1.bf16.msra.mxu0 0
  %959 = vmatprep.subr.bf16.mxu0 0
  %960 = vmatpush1.bf16.msra.mxu0 0
  %961 = vmatprep.mubr.bf16.mxu0 0
  %962 = vmatmul.mubr.bf16.gmra.mrb[0].mxu0 %v454
  %v963 = vpop.f32.mrb[0].mxu0
  %v964 = vadd.f32 0.0, %v963
  %v965 = vpop.f32.mrb[0].mxu0
  %v966 = vadd.f32 0.0, %v965
  %v967 = vpop.f32.mrb[0].mxu0
  %v968 = vadd.f32 0.0, %v967
  %v969 = vpop.f32.mrb[0].mxu0
  %v970 = vadd.f32 0.0, %v969
  %971 = vmatprep.mubr.bf16.mxu0 0
  %972 = vmatmul.mubr.bf16.gmra.mrb[0].mxu0 %v457
  %v973 = vpop.f32.mrb[0].mxu0
  %v974 = vadd.f32 0.0, %v973
  %v975 = vpop.f32.mrb[0].mxu0
  %v976 = vadd.f32 0.0, %v975
  %v977 = vpop.f32.mrb[0].mxu0
  %v978 = vadd.f32 0.0, %v977
  %v979 = vpop.f32.mrb[0].mxu0
  %v980 = vadd.f32 0.0, %v979
  %981 = vmatprep.mubr.bf16.mxu0 0
  %982 = vmatmul.mubr.bf16.gmra.mrb[0].mxu0 %v460
  %v983 = vpop.f32.mrb[0].mxu0
  %v984 = vadd.f32 0.0, %v983
  %v985 = vpop.f32.mrb[0].mxu0
  %v986 = vadd.f32 0.0, %v985
  %v987 = vpop.f32.mrb[0].mxu0
  %v988 = vadd.f32 0.0, %v987
  %v989 = vpop.f32.mrb[0].mxu0
  %v990 = vadd.f32 0.0, %v989
  %991 = vmatprep.mubr.bf16.mxu0 0
  %992 = vmatmul.mubr.bf16.gmra.mrb[0].mxu0 %v463
  %v993 = vpop.f32.mrb[0].mxu0
  %v994 = vadd.f32 0.0, %v993
  %v995 = vpop.f32.mrb[0].mxu0
  %v996 = vadd.f32 0.0, %v995
  %v997 = vpop.f32.mrb[0].mxu0
  %v998 = vadd.f32 0.0, %v997
  %v999 = vpop.f32.mrb[0].mxu0
  %v1000 = vadd.f32 0.0, %v999
  %1001 = vmatprep.mubr.bf16.mxu0 0
  %1002 = vmatmul.mubr.bf16.gmra.mrb[0].mxu0 %v466
  %v1003 = vpop.f32.mrb[0].mxu0
  %v1004 = vadd.f32 0.0, %v1003
  %v1005 = vpop.f32.mrb[0].mxu0
  %v1006 = vadd.f32 0.0, %v1005
  %v1007 = vpop.f32.mrb[0].mxu0
  %v1008 = vadd.f32 0.0, %v1007
  %v1009 = vpop.f32.mrb[0].mxu0
  %v1010 = vadd.f32 0.0, %v1009
  %1011 = vmatprep.mubr.bf16.mxu0 0
  %1012 = vmatmul.mubr.bf16.gmra.mrb[0].mxu0 %v469
  %v1013 = vpop.f32.mrb[0].mxu0
  %v1014 = vadd.f32 0.0, %v1013
  %v1015 = vpop.f32.mrb[0].mxu0
  %v1016 = vadd.f32 0.0, %v1015
  %v1017 = vpop.f32.mrb[0].mxu0
  %v1018 = vadd.f32 0.0, %v1017
  %v1019 = vpop.f32.mrb[0].mxu0
  %v1020 = vadd.f32 0.0, %v1019
  %1021 = vmatprep.mubr.bf16.mxu0 0
  %1022 = vmatmul.mubr.bf16.gmra.mrb[0].mxu0 %v472
  %v1023 = vpop.f32.mrb[0].mxu0
  %v1024 = vadd.f32 0.0, %v1023
  %v1025 = vpop.f32.mrb[0].mxu0
  %v1026 = vadd.f32 0.0, %v1025
  %v1027 = vpop.f32.mrb[0].mxu0
  %v1028 = vadd.f32 0.0, %v1027
  %v1029 = vpop.f32.mrb[0].mxu0
  %v1030 = vadd.f32 0.0, %v1029
  %1031 = vmatprep.mubr.bf16.mxu0 0
  %1032 = vmatmul.mubr.bf16.gmra.mrb[0].mxu0 %v475
  %v1033 = vpop.f32.mrb[0].mxu0
  %v1034 = vadd.f32 0.0, %v1033
  %v1035 = vpop.f32.mrb[0].mxu0
  %v1036 = vadd.f32 0.0, %v1035
  %v1037 = vpop.f32.mrb[0].mxu0
  %v1038 = vadd.f32 0.0, %v1037
  %v1039 = vpop.f32.mrb[0].mxu0
  %v1040 = vadd.f32 0.0, %v1039
  %1041 = vdwg.mxu0
  %1042 = vmatprep.subr.bf16.mxu0 %v335
  %1043 = vmatpush1.bf16.msra.mxu0 %v334
  %1044 = vmatprep.subr.bf16.mxu0 %v351
  %1045 = vmatpush1.bf16.msra.mxu0 %v350
  %1046 = vmatprep.subr.bf16.mxu0 %v367
  %1047 = vmatpush1.bf16.msra.mxu0 %v366
  %1048 = vmatprep.subr.bf16.mxu0 %v383
  %1049 = vmatpush1.bf16.msra.mxu0 %v382
  %1050 = vmatprep.subr.bf16.mxu0 0
  %1051 = vmatpush1.bf16.msra.mxu0 0
  %1052 = vmatprep.subr.bf16.mxu0 0
  %1053 = vmatpush1.bf16.msra.mxu0 0
  %1054 = vmatprep.subr.bf16.mxu0 0
  %1055 = vmatpush1.bf16.msra.mxu0 0
  %1056 = vmatprep.subr.bf16.mxu0 0
  %1057 = vmatpush1.bf16.msra.mxu0 0
  %1058 = vmatprep.subr.bf16.mxu0 0
  %1059 = vmatpush1.bf16.msra.mxu0 0
  %1060 = vmatprep.subr.bf16.mxu0 0
  %1061 = vmatpush1.bf16.msra.mxu0 0
  %1062 = vmatprep.subr.bf16.mxu0 0
  %1063 = vmatpush1.bf16.msra.mxu0 0
  %1064 = vmatprep.subr.bf16.mxu0 0
  %1065 = vmatpush1.bf16.msra.mxu0 0
  %1066 = vmatprep.subr.bf16.mxu0 0
  %1067 = vmatpush1.bf16.msra.mxu0 0
  %1068 = vmatprep.subr.bf16.mxu0 0
  %1069 = vmatpush1.bf16.msra.mxu0 0
  %1070 = vmatprep.subr.bf16.mxu0 0
  %1071 = vmatpush1.bf16.msra.mxu0 0
  %1072 = vmatprep.subr.bf16.mxu0 0
  %1073 = vmatpush1.bf16.msra.mxu0 0
  %1074 = vmatprep.mubr.bf16.mxu0 0
  %1075 = vmatmul.mubr.bf16.gmra.mrb[0].mxu0 %v454
  %v1076 = vpop.f32.mrb[0].mxu0
  %v1077 = vadd.f32 0.0, %v1076
  %v1078 = vpop.f32.mrb[0].mxu0
  %v1079 = vadd.f32 0.0, %v1078
  %v1080 = vpop.f32.mrb[0].mxu0
  %v1081 = vadd.f32 0.0, %v1080
  %v1082 = vpop.f32.mrb[0].mxu0
  %v1083 = vadd.f32 0.0, %v1082
  %1084 = vmatprep.mubr.bf16.mxu0 0
  %1085 = vmatmul.mubr.bf16.gmra.mrb[0].mxu0 %v457
  %v1086 = vpop.f32.mrb[0].mxu0
  %v1087 = vadd.f32 0.0, %v1086
  %v1088 = vpop.f32.mrb[0].mxu0
  %v1089 = vadd.f32 0.0, %v1088
  %v1090 = vpop.f32.mrb[0].mxu0
  %v1091 = vadd.f32 0.0, %v1090
  %v1092 = vpop.f32.mrb[0].mxu0
  %v1093 = vadd.f32 0.0, %v1092
  %1094 = vmatprep.mubr.bf16.mxu0 0
  %1095 = vmatmul.mubr.bf16.gmra.mrb[0].mxu0 %v460
  %v1096 = vpop.f32.mrb[0].mxu0
  %v1097 = vadd.f32 0.0, %v1096
  %v1098 = vpop.f32.mrb[0].mxu0
  %v1099 = vadd.f32 0.0, %v1098
  %v1100 = vpop.f32.mrb[0].mxu0
  %v1101 = vadd.f32 0.0, %v1100
  %v1102 = vpop.f32.mrb[0].mxu0
  %v1103 = vadd.f32 0.0, %v1102
  %1104 = vmatprep.mubr.bf16.mxu0 0
  %1105 = vmatmul.mubr.bf16.gmra.mrb[0].mxu0 %v463
  %v1106 = vpop.f32.mrb[0].mxu0
  %v1107 = vadd.f32 0.0, %v1106
  %v1108 = vpop.f32.mrb[0].mxu0
  %v1109 = vadd.f32 0.0, %v1108
  %v1110 = vpop.f32.mrb[0].mxu0
  %v1111 = vadd.f32 0.0, %v1110
  %v1112 = vpop.f32.mrb[0].mxu0
  %v1113 = vadd.f32 0.0, %v1112
  %1114 = vmatprep.mubr.bf16.mxu0 0
  %1115 = vmatmul.mubr.bf16.gmra.mrb[0].mxu0 %v466
  %v1116 = vpop.f32.mrb[0].mxu0
  %v1117 = vadd.f32 0.0, %v1116
  %v1118 = vpop.f32.mrb[0].mxu0
  %v1119 = vadd.f32 0.0, %v1118
  %v1120 = vpop.f32.mrb[0].mxu0
  %v1121 = vadd.f32 0.0, %v1120
  %v1122 = vpop.f32.mrb[0].mxu0
  %v1123 = vadd.f32 0.0, %v1122
  %1124 = vmatprep.mubr.bf16.mxu0 0
  %1125 = vmatmul.mubr.bf16.gmra.mrb[0].mxu0 %v469
  %v1126 = vpop.f32.mrb[0].mxu0
  %v1127 = vadd.f32 0.0, %v1126
  %v1128 = vpop.f32.mrb[0].mxu0
  %v1129 = vadd.f32 0.0, %v1128
  %v1130 = vpop.f32.mrb[0].mxu0
  %v1131 = vadd.f32 0.0, %v1130
  %v1132 = vpop.f32.mrb[0].mxu0
  %v1133 = vadd.f32 0.0, %v1132
  %1134 = vmatprep.mubr.bf16.mxu0 0
  %1135 = vmatmul.mubr.bf16.gmra.mrb[0].mxu0 %v472
  %v1136 = vpop.f32.mrb[0].mxu0
  %v1137 = vadd.f32 0.0, %v1136
  %v1138 = vpop.f32.mrb[0].mxu0
  %v1139 = vadd.f32 0.0, %v1138
  %v1140 = vpop.f32.mrb[0].mxu0
  %v1141 = vadd.f32 0.0, %v1140
  %v1142 = vpop.f32.mrb[0].mxu0
  %v1143 = vadd.f32 0.0, %v1142
  %1144 = vmatprep.mubr.bf16.mxu0 0
  %1145 = vmatmul.mubr.bf16.gmra.mrb[0].mxu0 %v475
  %v1146 = vpop.f32.mrb[0].mxu0
  %v1147 = vadd.f32 0.0, %v1146
  %v1148 = vpop.f32.mrb[0].mxu0
  %v1149 = vadd.f32 0.0, %v1148
  %v1150 = vpop.f32.mrb[0].mxu0
  %v1151 = vadd.f32 0.0, %v1150
  %v1152 = vpop.f32.mrb[0].mxu0
  %v1153 = vadd.f32 0.0, %v1152
  %1154 = vdwg.mxu0
  %1155 = vmatprep.subr.bf16.mxu0 %v337
  %1156 = vmatpush1.bf16.msra.mxu0 %v336
  %1157 = vmatprep.subr.bf16.mxu0 %v353
  %1158 = vmatpush1.bf16.msra.mxu0 %v352
  %1159 = vmatprep.subr.bf16.mxu0 %v369
  %1160 = vmatpush1.bf16.msra.mxu0 %v368
  %1161 = vmatprep.subr.bf16.mxu0 %v385
  %1162 = vmatpush1.bf16.msra.mxu0 %v384
  %1163 = vmatprep.subr.bf16.mxu0 0
  %1164 = vmatpush1.bf16.msra.mxu0 0
  %1165 = vmatprep.subr.bf16.mxu0 0
  %1166 = vmatpush1.bf16.msra.mxu0 0
  %1167 = vmatprep.subr.bf16.mxu0 0
  %1168 = vmatpush1.bf16.msra.mxu0 0
  %1169 = vmatprep.subr.bf16.mxu0 0
  %1170 = vmatpush1.bf16.msra.mxu0 0
  %1171 = vmatprep.subr.bf16.mxu0 0
  %1172 = vmatpush1.bf16.msra.mxu0 0
  %1173 = vmatprep.subr.bf16.mxu0 0
  %1174 = vmatpush1.bf16.msra.mxu0 0
  %1175 = vmatprep.subr.bf16.mxu0 0
  %1176 = vmatpush1.bf16.msra.mxu0 0
  %1177 = vmatprep.subr.bf16.mxu0 0
  %1178 = vmatpush1.bf16.msra.mxu0 0
  %1179 = vmatprep.subr.bf16.mxu0 0
  %1180 = vmatpush1.bf16.msra.mxu0 0
  %1181 = vmatprep.subr.bf16.mxu0 0
  %1182 = vmatpush1.bf16.msra.mxu0 0
  %1183 = vmatprep.subr.bf16.mxu0 0
  %1184 = vmatpush1.bf16.msra.mxu0 0
  %1185 = vmatprep.subr.bf16.mxu0 0
  %1186 = vmatpush1.bf16.msra.mxu0 0
  %1187 = vmatprep.mubr.bf16.mxu0 0
  %1188 = vmatmul.mubr.bf16.gmra.mrb[0].mxu0 %v454
  %v1189 = vpop.f32.mrb[0].mxu0
  %v1190 = vadd.f32 0.0, %v1189
  %v1191 = vpop.f32.mrb[0].mxu0
  %v1192 = vadd.f32 0.0, %v1191
  %v1193 = vpop.f32.mrb[0].mxu0
  %v1194 = vadd.f32 0.0, %v1193
  %v1195 = vpop.f32.mrb[0].mxu0
  %v1196 = vadd.f32 0.0, %v1195
  %1197 = vmatprep.mubr.bf16.mxu0 0
  %1198 = vmatmul.mubr.bf16.gmra.mrb[0].mxu0 %v457
  %v1199 = vpop.f32.mrb[0].mxu0
  %v1200 = vadd.f32 0.0, %v1199
  %v1201 = vpop.f32.mrb[0].mxu0
  %v1202 = vadd.f32 0.0, %v1201
  %v1203 = vpop.f32.mrb[0].mxu0
  %v1204 = vadd.f32 0.0, %v1203
  %v1205 = vpop.f32.mrb[0].mxu0
  %v1206 = vadd.f32 0.0, %v1205
  %1207 = vmatprep.mubr.bf16.mxu0 0
  %1208 = vmatmul.mubr.bf16.gmra.mrb[0].mxu0 %v460
  %v1209 = vpop.f32.mrb[0].mxu0
  %v1210 = vadd.f32 0.0, %v1209
  %v1211 = vpop.f32.mrb[0].mxu0
  %v1212 = vadd.f32 0.0, %v1211
  %v1213 = vpop.f32.mrb[0].mxu0
  %v1214 = vadd.f32 0.0, %v1213
  %v1215 = vpop.f32.mrb[0].mxu0
  %v1216 = vadd.f32 0.0, %v1215
  %1217 = vmatprep.mubr.bf16.mxu0 0
  %1218 = vmatmul.mubr.bf16.gmra.mrb[0].mxu0 %v463
  %v1219 = vpop.f32.mrb[0].mxu0
  %v1220 = vadd.f32 0.0, %v1219
  %v1221 = vpop.f32.mrb[0].mxu0
  %v1222 = vadd.f32 0.0, %v1221
  %v1223 = vpop.f32.mrb[0].mxu0
  %v1224 = vadd.f32 0.0, %v1223
  %v1225 = vpop.f32.mrb[0].mxu0
  %v1226 = vadd.f32 0.0, %v1225
  %1227 = vmatprep.mubr.bf16.mxu0 0
  %1228 = vmatmul.mubr.bf16.gmra.mrb[0].mxu0 %v466
  %v1229 = vpop.f32.mrb[0].mxu0
  %v1230 = vadd.f32 0.0, %v1229
  %v1231 = vpop.f32.mrb[0].mxu0
  %v1232 = vadd.f32 0.0, %v1231
  %v1233 = vpop.f32.mrb[0].mxu0
  %v1234 = vadd.f32 0.0, %v1233
  %v1235 = vpop.f32.mrb[0].mxu0
  %v1236 = vadd.f32 0.0, %v1235
  %1237 = vmatprep.mubr.bf16.mxu0 0
  %1238 = vmatmul.mubr.bf16.gmra.mrb[0].mxu0 %v469
  %v1239 = vpop.f32.mrb[0].mxu0
  %v1240 = vadd.f32 0.0, %v1239
  %v1241 = vpop.f32.mrb[0].mxu0
  %v1242 = vadd.f32 0.0, %v1241
  %v1243 = vpop.f32.mrb[0].mxu0
  %v1244 = vadd.f32 0.0, %v1243
  %v1245 = vpop.f32.mrb[0].mxu0
  %v1246 = vadd.f32 0.0, %v1245
  %1247 = vmatprep.mubr.bf16.mxu0 0
  %1248 = vmatmul.mubr.bf16.gmra.mrb[0].mxu0 %v472
  %v1249 = vpop.f32.mrb[0].mxu0
  %v1250 = vadd.f32 0.0, %v1249
  %v1251 = vpop.f32.mrb[0].mxu0
  %v1252 = vadd.f32 0.0, %v1251
  %v1253 = vpop.f32.mrb[0].mxu0
  %v1254 = vadd.f32 0.0, %v1253
  %v1255 = vpop.f32.mrb[0].mxu0
  %v1256 = vadd.f32 0.0, %v1255
  %1257 = vmatprep.mubr.bf16.mxu0 0
  %1258 = vmatmul.mubr.bf16.gmra.mrb[0].mxu0 %v475
  %v1259 = vpop.f32.mrb[0].mxu0
  %v1260 = vadd.f32 0.0, %v1259
  %v1261 = vpop.f32.mrb[0].mxu0
  %v1262 = vadd.f32 0.0, %v1261
  %v1263 = vpop.f32.mrb[0].mxu0
  %v1264 = vadd.f32 0.0, %v1263
  %v1265 = vpop.f32.mrb[0].mxu0
  %v1266 = vadd.f32 0.0, %v1265
  %1267 = vdwg.mxu0
  %1268 = vmatprep.subr.bf16.mxu0 %v339
  %1269 = vmatpush1.bf16.msra.mxu0 %v338
  %1270 = vmatprep.subr.bf16.mxu0 %v355
  %1271 = vmatpush1.bf16.msra.mxu0 %v354
  %1272 = vmatprep.subr.bf16.mxu0 %v371
  %1273 = vmatpush1.bf16.msra.mxu0 %v370
  %1274 = vmatprep.subr.bf16.mxu0 %v387
  %1275 = vmatpush1.bf16.msra.mxu0 %v386
  %1276 = vmatprep.subr.bf16.mxu0 0
  %1277 = vmatpush1.bf16.msra.mxu0 0
  %1278 = vmatprep.subr.bf16.mxu0 0
  %1279 = vmatpush1.bf16.msra.mxu0 0
  %1280 = vmatprep.subr.bf16.mxu0 0
  %1281 = vmatpush1.bf16.msra.mxu0 0
  %1282 = vmatprep.subr.bf16.mxu0 0
  %1283 = vmatpush1.bf16.msra.mxu0 0
  %1284 = vmatprep.subr.bf16.mxu0 0
  %1285 = vmatpush1.bf16.msra.mxu0 0
  %1286 = vmatprep.subr.bf16.mxu0 0
  %1287 = vmatpush1.bf16.msra.mxu0 0
  %1288 = vmatprep.subr.bf16.mxu0 0
  %1289 = vmatpush1.bf16.msra.mxu0 0
  %1290 = vmatprep.subr.bf16.mxu0 0
  %1291 = vmatpush1.bf16.msra.mxu0 0
  %1292 = vmatprep.subr.bf16.mxu0 0
  %1293 = vmatpush1.bf16.msra.mxu0 0
  %1294 = vmatprep.subr.bf16.mxu0 0
  %1295 = vmatpush1.bf16.msra.mxu0 0
  %1296 = vmatprep.subr.bf16.mxu0 0
  %1297 = vmatpush1.bf16.msra.mxu0 0
  %1298 = vmatprep.subr.bf16.mxu0 0
  %1299 = vmatpush1.bf16.msra.mxu0 0
  %1300 = vmatprep.mubr.bf16.mxu0 0
  %1301 = vmatmul.mubr.bf16.gmra.mrb[0].mxu0 %v454
  %v1302 = vpop.f32.mrb[0].mxu0
  %v1303 = vadd.f32 0.0, %v1302
  %v1304 = vpop.f32.mrb[0].mxu0
  %v1305 = vadd.f32 0.0, %v1304
  %v1306 = vpop.f32.mrb[0].mxu0
  %v1307 = vadd.f32 0.0, %v1306
  %v1308 = vpop.f32.mrb[0].mxu0
  %v1309 = vadd.f32 0.0, %v1308
  %1310 = vmatprep.mubr.bf16.mxu0 0
  %1311 = vmatmul.mubr.bf16.gmra.mrb[0].mxu0 %v457
  %v1312 = vpop.f32.mrb[0].mxu0
  %v1313 = vadd.f32 0.0, %v1312
  %v1314 = vpop.f32.mrb[0].mxu0
  %v1315 = vadd.f32 0.0, %v1314
  %v1316 = vpop.f32.mrb[0].mxu0
  %v1317 = vadd.f32 0.0, %v1316
  %v1318 = vpop.f32.mrb[0].mxu0
  %v1319 = vadd.f32 0.0, %v1318
  %1320 = vmatprep.mubr.bf16.mxu0 0
  %1321 = vmatmul.mubr.bf16.gmra.mrb[0].mxu0 %v460
  %v1322 = vpop.f32.mrb[0].mxu0
  %v1323 = vadd.f32 0.0, %v1322
  %v1324 = vpop.f32.mrb[0].mxu0
  %v1325 = vadd.f32 0.0, %v1324
  %v1326 = vpop.f32.mrb[0].mxu0
  %v1327 = vadd.f32 0.0, %v1326
  %v1328 = vpop.f32.mrb[0].mxu0
  %v1329 = vadd.f32 0.0, %v1328
  %1330 = vmatprep.mubr.bf16.mxu0 0
  %1331 = vmatmul.mubr.bf16.gmra.mrb[0].mxu0 %v463
  %v1332 = vpop.f32.mrb[0].mxu0
  %v1333 = vadd.f32 0.0, %v1332
  %v1334 = vpop.f32.mrb[0].mxu0
  %v1335 = vadd.f32 0.0, %v1334
  %v1336 = vpop.f32.mrb[0].mxu0
  %v1337 = vadd.f32 0.0, %v1336
  %v1338 = vpop.f32.mrb[0].mxu0
  %v1339 = vadd.f32 0.0, %v1338
  %1340 = vmatprep.mubr.bf16.mxu0 0
  %1341 = vmatmul.mubr.bf16.gmra.mrb[0].mxu0 %v466
  %v1342 = vpop.f32.mrb[0].mxu0
  %v1343 = vadd.f32 0.0, %v1342
  %v1344 = vpop.f32.mrb[0].mxu0
  %v1345 = vadd.f32 0.0, %v1344
  %v1346 = vpop.f32.mrb[0].mxu0
  %v1347 = vadd.f32 0.0, %v1346
  %v1348 = vpop.f32.mrb[0].mxu0
  %v1349 = vadd.f32 0.0, %v1348
  %1350 = vmatprep.mubr.bf16.mxu0 0
  %1351 = vmatmul.mubr.bf16.gmra.mrb[0].mxu0 %v469
  %v1352 = vpop.f32.mrb[0].mxu0
  %v1353 = vadd.f32 0.0, %v1352
  %v1354 = vpop.f32.mrb[0].mxu0
  %v1355 = vadd.f32 0.0, %v1354
  %v1356 = vpop.f32.mrb[0].mxu0
  %v1357 = vadd.f32 0.0, %v1356
  %v1358 = vpop.f32.mrb[0].mxu0
  %v1359 = vadd.f32 0.0, %v1358
  %1360 = vmatprep.mubr.bf16.mxu0 0
  %1361 = vmatmul.mubr.bf16.gmra.mrb[0].mxu0 %v472
  %v1362 = vpop.f32.mrb[0].mxu0
  %v1363 = vadd.f32 0.0, %v1362
  %v1364 = vpop.f32.mrb[0].mxu0
  %v1365 = vadd.f32 0.0, %v1364
  %v1366 = vpop.f32.mrb[0].mxu0
  %v1367 = vadd.f32 0.0, %v1366
  %v1368 = vpop.f32.mrb[0].mxu0
  %v1369 = vadd.f32 0.0, %v1368
  %1370 = vmatprep.mubr.bf16.mxu0 0
  %1371 = vmatmul.mubr.bf16.gmra.mrb[0].mxu0 %v475
  %v1372 = vpop.f32.mrb[0].mxu0
  %v1373 = vadd.f32 0.0, %v1372
  %v1374 = vpop.f32.mrb[0].mxu0
  %v1375 = vadd.f32 0.0, %v1374
  %v1376 = vpop.f32.mrb[0].mxu0
  %v1377 = vadd.f32 0.0, %v1376
  %v1378 = vpop.f32.mrb[0].mxu0
  %v1379 = vadd.f32 0.0, %v1378
  %1380 = vdwg.mxu0
  %1381 = vst [vmem:[%s2] sm:$0xff] %v512
  %1382 = vst [vmem:[%s2 + $0x8] sm:$0xff] %v514
  %1383 = vst [vmem:[%s2 + $0x10] sm:$0xff] %v625
  %1384 = vst [vmem:[%s2 + $0x18] sm:$0xff] %v627
  %1385 = vst [vmem:[%s2 + $0x20] sm:$0xff] %v738
  %1386 = vst [vmem:[%s2 + $0x28] sm:$0xff] %v740
  %1387 = vst [vmem:[%s2 + $0x30] sm:$0xff] %v851
  %1388 = vst [vmem:[%s2 + $0x38] sm:$0xff] %v853
  %1389 = vst [vmem:[%s2 + $0x40] sm:$0xff] %v964
  %1390 = vst [vmem:[%s2 + $0x48] sm:$0xff] %v966
  %1391 = vst [vmem:[%s2 + $0x50] sm:$0xff] %v1077
  %1392 = vst [vmem:[%s2 + $0x58] sm:$0xff] %v1079
  %1393 = vst [vmem:[%s2 + $0x60] sm:$0xff] %v1190
  %1394 = vst [vmem:[%s2 + $0x68] sm:$0xff] %v1192
  %1395 = vst [vmem:[%s2 + $0x70] sm:$0xff] %v1303
  %1396 = vst [vmem:[%s2 + $0x78] sm:$0xff] %v1305
  %1397 = vst [vmem:[%s2 + $0x80] sm:$0xff] %v516
  %1398 = vst [vmem:[%s2 + $0x88] sm:$0xff] %v518
  %1399 = vst [vmem:[%s2 + $0x90] sm:$0xff] %v629
  %1400 = vst [vmem:[%s2 + $0x98] sm:$0xff] %v631
  %1401 = vst [vmem:[%s2 + $0xa0] sm:$0xff] %v742
  %1402 = vst [vmem:[%s2 + $0xa8] sm:$0xff] %v744
  %1403 = vst [vmem:[%s2 + $0xb0] sm:$0xff] %v855
  %1404 = vst [vmem:[%s2 + $0xb8] sm:$0xff] %v857
  %1405 = vst [vmem:[%s2 + $0xc0] sm:$0xff] %v968
  %1406 = vst [vmem:[%s2 + $0xc8] sm:$0xff] %v970
  %1407 = vst [vmem:[%s2 + $0xd0] sm:$0xff] %v1081
  %1408 = vst [vmem:[%s2 + $0xd8] sm:$0xff] %v1083
  %1409 = vst [vmem:[%s2 + $0xe0] sm:$0xff] %v1194
  %1410 = vst [vmem:[%s2 + $0xe8] sm:$0xff] %v1196
  %1411 = vst [vmem:[%s2 + $0xf0] sm:$0xff] %v1307
  %1412 = vst [vmem:[%s2 + $0xf8] sm:$0xff] %v1309
  %1413 = vst [vmem:[%s2 + $0x100] sm:$0xff] %v522
  %1414 = vst [vmem:[%s2 + $0x108] sm:$0xff] %v524
  %1415 = vst [vmem:[%s2 + $0x110] sm:$0xff] %v635
  %1416 = vst [vmem:[%s2 + $0x118] sm:$0xff] %v637
  %1417 = vst [vmem:[%s2 + $0x120] sm:$0xff] %v748
  %1418 = vst [vmem:[%s2 + $0x128] sm:$0xff] %v750
  %1419 = vst [vmem:[%s2 + $0x130] sm:$0xff] %v861
  %1420 = vst [vmem:[%s2 + $0x138] sm:$0xff] %v863
  %1421 = vst [vmem:[%s2 + $0x140] sm:$0xff] %v974
  %1422 = vst [vmem:[%s2 + $0x148] sm:$0xff] %v976
  %1423 = vst [vmem:[%s2 + $0x150] sm:$0xff] %v1087
  %1424 = vst [vmem:[%s2 + $0x158] sm:$0xff] %v1089
  %1425 = vst [vmem:[%s2 + $0x160] sm:$0xff] %v1200
  %1426 = vst [vmem:[%s2 + $0x168] sm:$0xff] %v1202
  %1427 = vst [vmem:[%s2 + $0x170] sm:$0xff] %v1313
  %1428 = vst [vmem:[%s2 + $0x178] sm:$0xff] %v1315
  %1429 = vst [vmem:[%s2 + $0x180] sm:$0xff] %v526
  %1430 = vst [vmem:[%s2 + $0x188] sm:$0xff] %v528
  %1431 = vst [vmem:[%s2 + $0x190] sm:$0xff] %v639
  %1432 = vst [vmem:[%s2 + $0x198] sm:$0xff] %v641
  %1433 = vst [vmem:[%s2 + $0x1a0] sm:$0xff] %v752
  %1434 = vst [vmem:[%s2 + $0x1a8] sm:$0xff] %v754
  %1435 = vst [vmem:[%s2 + $0x1b0] sm:$0xff] %v865
  %1436 = vst [vmem:[%s2 + $0x1b8] sm:$0xff] %v867
  %1437 = vst [vmem:[%s2 + $0x1c0] sm:$0xff] %v978
  %1438 = vst [vmem:[%s2 + $0x1c8] sm:$0xff] %v980
  %1439 = vst [vmem:[%s2 + $0x1d0] sm:$0xff] %v1091
  %1440 = vst [vmem:[%s2 + $0x1d8] sm:$0xff] %v1093
  %1441 = vst [vmem:[%s2 + $0x1e0] sm:$0xff] %v1204
  %1442 = vst [vmem:[%s2 + $0x1e8] sm:$0xff] %v1206
  %1443 = vst [vmem:[%s2 + $0x1f0] sm:$0xff] %v1317
  %1444 = vst [vmem:[%s2 + $0x1f8] sm:$0xff] %v1319
  %1445 = vst [vmem:[%s2 + $0x200] sm:$0xff] %v532
  %1446 = vst [vmem:[%s2 + $0x208] sm:$0xff] %v534
  %1447 = vst [vmem:[%s2 + $0x210] sm:$0xff] %v645
  %1448 = vst [vmem:[%s2 + $0x218] sm:$0xff] %v647
  %1449 = vst [vmem:[%s2 + $0x220] sm:$0xff] %v758
  %1450 = vst [vmem:[%s2 + $0x228] sm:$0xff] %v760
  %1451 = vst [vmem:[%s2 + $0x230] sm:$0xff] %v871
  %1452 = vst [vmem:[%s2 + $0x238] sm:$0xff] %v873
  %1453 = vst [vmem:[%s2 + $0x240] sm:$0xff] %v984
  %1454 = vst [vmem:[%s2 + $0x248] sm:$0xff] %v986
  %1455 = vst [vmem:[%s2 + $0x250] sm:$0xff] %v1097
  %1456 = vst [vmem:[%s2 + $0x258] sm:$0xff] %v1099
  %1457 = vst [vmem:[%s2 + $0x260] sm:$0xff] %v1210
  %1458 = vst [vmem:[%s2 + $0x268] sm:$0xff] %v1212
  %1459 = vst [vmem:[%s2 + $0x270] sm:$0xff] %v1323
  %1460 = vst [vmem:[%s2 + $0x278] sm:$0xff] %v1325
  %1461 = vst [vmem:[%s2 + $0x280] sm:$0xff] %v536
  %1462 = vst [vmem:[%s2 + $0x288] sm:$0xff] %v538
  %1463 = vst [vmem:[%s2 + $0x290] sm:$0xff] %v649
  %1464 = vst [vmem:[%s2 + $0x298] sm:$0xff] %v651
  %1465 = vst [vmem:[%s2 + $0x2a0] sm:$0xff] %v762
  %1466 = vst [vmem:[%s2 + $0x2a8] sm:$0xff] %v764
  %1467 = vst [vmem:[%s2 + $0x2b0] sm:$0xff] %v875
  %1468 = vst [vmem:[%s2 + $0x2b8] sm:$0xff] %v877
  %1469 = vst [vmem:[%s2 + $0x2c0] sm:$0xff] %v988
  %1470 = vst [vmem:[%s2 + $0x2c8] sm:$0xff] %v990
  %1471 = vst [vmem:[%s2 + $0x2d0] sm:$0xff] %v1101
  %1472 = vst [vmem:[%s2 + $0x2d8] sm:$0xff] %v1103
  %1473 = vst [vmem:[%s2 + $0x2e0] sm:$0xff] %v1214
  %1474 = vst [vmem:[%s2 + $0x2e8] sm:$0xff] %v1216
  %1475 = vst [vmem:[%s2 + $0x2f0] sm:$0xff] %v1327
  %1476 = vst [vmem:[%s2 + $0x2f8] sm:$0xff] %v1329
  %1477 = vst [vmem:[%s2 + $0x300] sm:$0xff] %v542
  %1478 = vst [vmem:[%s2 + $0x308] sm:$0xff] %v544
  %1479 = vst [vmem:[%s2 + $0x310] sm:$0xff] %v655
  %1480 = vst [vmem:[%s2 + $0x318] sm:$0xff] %v657
  %1481 = vst [vmem:[%s2 + $0x320] sm:$0xff] %v768
  %1482 = vst [vmem:[%s2 + $0x328] sm:$0xff] %v770
  %1483 = vst [vmem:[%s2 + $0x330] sm:$0xff] %v881
  %1484 = vst [vmem:[%s2 + $0x338] sm:$0xff] %v883
  %1485 = vst [vmem:[%s2 + $0x340] sm:$0xff] %v994
  %1486 = vst [vmem:[%s2 + $0x348] sm:$0xff] %v996
  %1487 = vst [vmem:[%s2 + $0x350] sm:$0xff] %v1107
  %1488 = vst [vmem:[%s2 + $0x358] sm:$0xff] %v1109
  %1489 = vst [vmem:[%s2 + $0x360] sm:$0xff] %v1220
  %1490 = vst [vmem:[%s2 + $0x368] sm:$0xff] %v1222
  %1491 = vst [vmem:[%s2 + $0x370] sm:$0xff] %v1333
  %1492 = vst [vmem:[%s2 + $0x378] sm:$0xff] %v1335
  %1493 = vst [vmem:[%s2 + $0x380] sm:$0xff] %v546
  %1494 = vst [vmem:[%s2 + $0x388] sm:$0xff] %v548
  %1495 = vst [vmem:[%s2 + $0x390] sm:$0xff] %v659
  %1496 = vst [vmem:[%s2 + $0x398] sm:$0xff] %v661
  %1497 = vst [vmem:[%s2 + $0x3a0] sm:$0xff] %v772
  %1498 = vst [vmem:[%s2 + $0x3a8] sm:$0xff] %v774
  %1499 = vst [vmem:[%s2 + $0x3b0] sm:$0xff] %v885
  %1500 = vst [vmem:[%s2 + $0x3b8] sm:$0xff] %v887
  %1501 = vst [vmem:[%s2 + $0x3c0] sm:$0xff] %v998
  %1502 = vst [vmem:[%s2 + $0x3c8] sm:$0xff] %v1000
  %1503 = vst [vmem:[%s2 + $0x3d0] sm:$0xff] %v1111
  %1504 = vst [vmem:[%s2 + $0x3d8] sm:$0xff] %v1113
  %1505 = vst [vmem:[%s2 + $0x3e0] sm:$0xff] %v1224
  %1506 = vst [vmem:[%s2 + $0x3e8] sm:$0xff] %v1226
  %1507 = vst [vmem:[%s2 + $0x3f0] sm:$0xff] %v1337
  %1508 = vst [vmem:[%s2 + $0x3f8] sm:$0xff] %v1339
  %1509 = vst [vmem:[%s2 + $0x400] sm:$0xff] %v552
  %1510 = vst [vmem:[%s2 + $0x408] sm:$0xff] %v554
  %1511 = vst [vmem:[%s2 + $0x410] sm:$0xff] %v665
  %1512 = vst [vmem:[%s2 + $0x418] sm:$0xff] %v667
  %1513 = vst [vmem:[%s2 + $0x420] sm:$0xff] %v778
  %1514 = vst [vmem:[%s2 + $0x428] sm:$0xff] %v780
  %1515 = vst [vmem:[%s2 + $0x430] sm:$0xff] %v891
  %1516 = vst [vmem:[%s2 + $0x438] sm:$0xff] %v893
  %1517 = vst [vmem:[%s2 + $0x440] sm:$0xff] %v1004
  %1518 = vst [vmem:[%s2 + $0x448] sm:$0xff] %v1006
  %1519 = vst [vmem:[%s2 + $0x450] sm:$0xff] %v1117
  %1520 = vst [vmem:[%s2 + $0x458] sm:$0xff] %v1119
  %1521 = vst [vmem:[%s2 + $0x460] sm:$0xff] %v1230
  %1522 = vst [vmem:[%s2 + $0x468] sm:$0xff] %v1232
  %1523 = vst [vmem:[%s2 + $0x470] sm:$0xff] %v1343
  %1524 = vst [vmem:[%s2 + $0x478] sm:$0xff] %v1345
  %1525 = vst [vmem:[%s2 + $0x480] sm:$0xff] %v556
  %1526 = vst [vmem:[%s2 + $0x488] sm:$0xff] %v558
  %1527 = vst [vmem:[%s2 + $0x490] sm:$0xff] %v669
  %1528 = vst [vmem:[%s2 + $0x498] sm:$0xff] %v671
  %1529 = vst [vmem:[%s2 + $0x4a0] sm:$0xff] %v782
  %1530 = vst [vmem:[%s2 + $0x4a8] sm:$0xff] %v784
  %1531 = vst [vmem:[%s2 + $0x4b0] sm:$0xff] %v895
  %1532 = vst [vmem:[%s2 + $0x4b8] sm:$0xff] %v897
  %1533 = vst [vmem:[%s2 + $0x4c0] sm:$0xff] %v1008
  %1534 = vst [vmem:[%s2 + $0x4c8] sm:$0xff] %v1010
  %1535 = vst [vmem:[%s2 + $0x4d0] sm:$0xff] %v1121
  %1536 = vst [vmem:[%s2 + $0x4d8] sm:$0xff] %v1123
  %1537 = vst [vmem:[%s2 + $0x4e0] sm:$0xff] %v1234
  %1538 = vst [vmem:[%s2 + $0x4e8] sm:$0xff] %v1236
  %1539 = vst [vmem:[%s2 + $0x4f0] sm:$0xff] %v1347
  %1540 = vst [vmem:[%s2 + $0x4f8] sm:$0xff] %v1349
  %1541 = vst [vmem:[%s2 + $0x500] sm:$0xff] %v562
  %1542 = vst [vmem:[%s2 + $0x508] sm:$0xff] %v564
  %1543 = vst [vmem:[%s2 + $0x510] sm:$0xff] %v675
  %1544 = vst [vmem:[%s2 + $0x518] sm:$0xff] %v677
  %1545 = vst [vmem:[%s2 + $0x520] sm:$0xff] %v788
  %1546 = vst [vmem:[%s2 + $0x528] sm:$0xff] %v790
  %1547 = vst [vmem:[%s2 + $0x530] sm:$0xff] %v901
  %1548 = vst [vmem:[%s2 + $0x538] sm:$0xff] %v903
  %1549 = vst [vmem:[%s2 + $0x540] sm:$0xff] %v1014
  %1550 = vst [vmem:[%s2 + $0x548] sm:$0xff] %v1016
  %1551 = vst [vmem:[%s2 + $0x550] sm:$0xff] %v1127
  %1552 = vst [vmem:[%s2 + $0x558] sm:$0xff] %v1129
  %1553 = vst [vmem:[%s2 + $0x560] sm:$0xff] %v1240
  %1554 = vst [vmem:[%s2 + $0x568] sm:$0xff] %v1242
  %1555 = vst [vmem:[%s2 + $0x570] sm:$0xff] %v1353
  %1556 = vst [vmem:[%s2 + $0x578] sm:$0xff] %v1355
  %1557 = vst [vmem:[%s2 + $0x580] sm:$0xff] %v566
  %1558 = vst [vmem:[%s2 + $0x588] sm:$0xff] %v568
  %1559 = vst [vmem:[%s2 + $0x590] sm:$0xff] %v679
  %1560 = vst [vmem:[%s2 + $0x598] sm:$0xff] %v681
  %1561 = vst [vmem:[%s2 + $0x5a0] sm:$0xff] %v792
  %1562 = vst [vmem:[%s2 + $0x5a8] sm:$0xff] %v794
  %1563 = vst [vmem:[%s2 + $0x5b0] sm:$0xff] %v905
  %1564 = vst [vmem:[%s2 + $0x5b8] sm:$0xff] %v907
  %1565 = vst [vmem:[%s2 + $0x5c0] sm:$0xff] %v1018
  %1566 = vst [vmem:[%s2 + $0x5c8] sm:$0xff] %v1020
  %1567 = vst [vmem:[%s2 + $0x5d0] sm:$0xff] %v1131
  %1568 = vst [vmem:[%s2 + $0x5d8] sm:$0xff] %v1133
  %1569 = vst [vmem:[%s2 + $0x5e0] sm:$0xff] %v1244
  %1570 = vst [vmem:[%s2 + $0x5e8] sm:$0xff] %v1246
  %1571 = vst [vmem:[%s2 + $0x5f0] sm:$0xff] %v1357
  %1572 = vst [vmem:[%s2 + $0x5f8] sm:$0xff] %v1359
  %1573 = vst [vmem:[%s2 + $0x600] sm:$0xff] %v572
  %1574 = vst [vmem:[%s2 + $0x608] sm:$0xff] %v574
  %1575 = vst [vmem:[%s2 + $0x610] sm:$0xff] %v685
  %1576 = vst [vmem:[%s2 + $0x618] sm:$0xff] %v687
  %1577 = vst [vmem:[%s2 + $0x620] sm:$0xff] %v798
  %1578 = vst [vmem:[%s2 + $0x628] sm:$0xff] %v800
  %1579 = vst [vmem:[%s2 + $0x630] sm:$0xff] %v911
  %1580 = vst [vmem:[%s2 + $0x638] sm:$0xff] %v913
  %1581 = vst [vmem:[%s2 + $0x640] sm:$0xff] %v1024
  %1582 = vst [vmem:[%s2 + $0x648] sm:$0xff] %v1026
  %1583 = vst [vmem:[%s2 + $0x650] sm:$0xff] %v1137
  %1584 = vst [vmem:[%s2 + $0x658] sm:$0xff] %v1139
  %1585 = vst [vmem:[%s2 + $0x660] sm:$0xff] %v1250
  %1586 = vst [vmem:[%s2 + $0x668] sm:$0xff] %v1252
  %1587 = vst [vmem:[%s2 + $0x670] sm:$0xff] %v1363
  %1588 = vst [vmem:[%s2 + $0x678] sm:$0xff] %v1365
  %1589 = vst [vmem:[%s2 + $0x680] sm:$0xff] %v576
  %1590 = vst [vmem:[%s2 + $0x688] sm:$0xff] %v578
  %1591 = vst [vmem:[%s2 + $0x690] sm:$0xff] %v689
  %1592 = vst [vmem:[%s2 + $0x698] sm:$0xff] %v691
  %1593 = vst [vmem:[%s2 + $0x6a0] sm:$0xff] %v802
  %1594 = vst [vmem:[%s2 + $0x6a8] sm:$0xff] %v804
  %1595 = vst [vmem:[%s2 + $0x6b0] sm:$0xff] %v915
  %1596 = vst [vmem:[%s2 + $0x6b8] sm:$0xff] %v917
  %1597 = vst [vmem:[%s2 + $0x6c0] sm:$0xff] %v1028
  %1598 = vst [vmem:[%s2 + $0x6c8] sm:$0xff] %v1030
  %1599 = vst [vmem:[%s2 + $0x6d0] sm:$0xff] %v1141
  %1600 = vst [vmem:[%s2 + $0x6d8] sm:$0xff] %v1143
  %1601 = vst [vmem:[%s2 + $0x6e0] sm:$0xff] %v1254
  %1602 = vst [vmem:[%s2 + $0x6e8] sm:$0xff] %v1256
  %1603 = vst [vmem:[%s2 + $0x6f0] sm:$0xff] %v1367
  %1604 = vst [vmem:[%s2 + $0x6f8] sm:$0xff] %v1369
  %1605 = vst [vmem:[%s2 + $0x700] sm:$0xff] %v582
  %1606 = vst [vmem:[%s2 + $0x708] sm:$0xff] %v584
  %1607 = vst [vmem:[%s2 + $0x710] sm:$0xff] %v695
  %1608 = vst [vmem:[%s2 + $0x718] sm:$0xff] %v697
  %1609 = vst [vmem:[%s2 + $0x720] sm:$0xff] %v808
  %1610 = vst [vmem:[%s2 + $0x728] sm:$0xff] %v810
  %1611 = vst [vmem:[%s2 + $0x730] sm:$0xff] %v921
  %1612 = vst [vmem:[%s2 + $0x738] sm:$0xff] %v923
  %1613 = vst [vmem:[%s2 + $0x740] sm:$0xff] %v1034
  %1614 = vst [vmem:[%s2 + $0x748] sm:$0xff] %v1036
  %1615 = vst [vmem:[%s2 + $0x750] sm:$0xff] %v1147
  %1616 = vst [vmem:[%s2 + $0x758] sm:$0xff] %v1149
  %1617 = vst [vmem:[%s2 + $0x760] sm:$0xff] %v1260
  %1618 = vst [vmem:[%s2 + $0x768] sm:$0xff] %v1262
  %1619 = vst [vmem:[%s2 + $0x770] sm:$0xff] %v1373
  %1620 = vst [vmem:[%s2 + $0x778] sm:$0xff] %v1375
  %1621 = vst [vmem:[%s2 + $0x780] sm:$0xff] %v586
  %1622 = vst [vmem:[%s2 + $0x788] sm:$0xff] %v588
  %1623 = vst [vmem:[%s2 + $0x790] sm:$0xff] %v699
  %1624 = vst [vmem:[%s2 + $0x798] sm:$0xff] %v701
  %1625 = vst [vmem:[%s2 + $0x7a0] sm:$0xff] %v812
  %1626 = vst [vmem:[%s2 + $0x7a8] sm:$0xff] %v814
  %1627 = vst [vmem:[%s2 + $0x7b0] sm:$0xff] %v925
  %1628 = vst [vmem:[%s2 + $0x7b8] sm:$0xff] %v927
  %1629 = vst [vmem:[%s2 + $0x7c0] sm:$0xff] %v1038
  %1630 = vst [vmem:[%s2 + $0x7c8] sm:$0xff] %v1040
  %1631 = vst [vmem:[%s2 + $0x7d0] sm:$0xff] %v1151
  %1632 = vst [vmem:[%s2 + $0x7d8] sm:$0xff] %v1153
  %1633 = vst [vmem:[%s2 + $0x7e0] sm:$0xff] %v1264
  %1634 = vst [vmem:[%s2 + $0x7e8] sm:$0xff] %v1266
  %1635 = vst [vmem:[%s2 + $0x7f0] sm:$0xff] %v1377
  %1636 = vst [vmem:[%s2 + $0x7f8] sm:$0xff] %v1379
  // Predicated region
  $region10: #{decoder_conv_forward.7} parent=0 // pred_check
    _
  $region11: #{decoder_conv_forward.7} parent=0 // pred_check_branch
    %1638 = sbr.rel (0) target = $region13
  $region12: #{decoder_conv_forward.7} parent=0 // pred_region
    _
  $region13: #{decoder_conv_forward.7} parent=0 // pred_fallthru
    _
  // Predicated region
  $region14: #{decoder_conv_forward.7} parent=0 // pred_check
    _
  $region15: #{decoder_conv_forward.7} parent=0 // pred_check_branch
    %1640 = sbr.rel (0) target = $region17
  $region16: #{decoder_conv_forward.7} parent=0 // pred_region
    _
  $region17: #{decoder_conv_forward.7} parent=0 // pred_fallthru
    _

// kernel: decoder_conv_forward.8
$region0: #{decoder_conv_forward.8}
  #allocation0 [shape = 'u32[]', space=smem, size = 0x4, offset = 0x4, fixed_abs, tag = 'smem constant byte address 0x4 - core index']
  #allocation1 [shape = 'u32[144,128]{1,0:T(1,128)}', space=vmem, size = 0x12000, scoped, tag = 'internal scratch']
  %s0 = inlined_call_operand.vmem [shape: bf16[512,32], index: 0, kind: input, shape index: {}]
  %s1 = inlined_call_operand.vmem [shape: bf16[32,512], index: 1, kind: input, shape index: {}]
  %s2 = inlined_call_operand.vmem [shape: f32[512,512], index: 2, kind: output, shape index: {}]
  %s3 = sld [smem:[#allocation0]]
  $region18: #{decoder_conv_forward.8} parent=0
    _
  %s5 = ssub.s32 1, %s3
  %s6 = scalar_select 0, %s5, %s3
  // Predicated region
  $region2: #{decoder_conv_forward.8} parent=0 // pred_check
    _
  $region3: #{decoder_conv_forward.8} parent=0 // pred_check_branch
    %8 = sbr.rel (0) target = $region5
  $region4: #{decoder_conv_forward.8} parent=0 // pred_region
    _
  $region5: #{decoder_conv_forward.8} parent=0 // pred_fallthru
    _
  // Predicated region
  $region6: #{decoder_conv_forward.8} parent=0 // pred_check
    _
  $region7: #{decoder_conv_forward.8} parent=0 // pred_check_branch
    %10 = sbr.rel (0) target = $region9
  $region8: #{decoder_conv_forward.8} parent=0 // pred_region
    _
  $region9: #{decoder_conv_forward.8} parent=0 // pred_fallthru
    _
  %v12 = vld [vmem:[%s0] sm:$0xf]
  %v13 = vld [vmem:[%s0 + $0x4] sm:$0xf]
  %v14 = vld [vmem:[%s0 + $0x8] sm:$0xf]
  %v15 = vld [vmem:[%s0 + $0xc] sm:$0xf]
  %v16 = vld [vmem:[%s0 + $0x10] sm:$0xf]
  %v17 = vld [vmem:[%s0 + $0x14] sm:$0xf]
  %v18 = vld [vmem:[%s0 + $0x18] sm:$0xf]
  %v19 = vld [vmem:[%s0 + $0x1c] sm:$0xf]
  %v20 = vld [vmem:[%s0 + $0x20] sm:$0xf]
  %v21 = vld [vmem:[%s0 + $0x24] sm:$0xf]
  %v22 = vld [vmem:[%s0 + $0x28] sm:$0xf]
  %v23 = vld [vmem:[%s0 + $0x2c] sm:$0xf]
  %v24 = vld [vmem:[%s0 + $0x30] sm:$0xf]
  %v25 = vld [vmem:[%s0 + $0x34] sm:$0xf]
  %v26 = vld [vmem:[%s0 + $0x38] sm:$0xf]
  %v27 = vld [vmem:[%s0 + $0x3c] sm:$0xf]
  %v28 = vld [vmem:[%s0 + $0x40] sm:$0xf]
  %v29 = vld [vmem:[%s0 + $0x44] sm:$0xf]
  %v30 = vld [vmem:[%s0 + $0x48] sm:$0xf]
  %v31 = vld [vmem:[%s0 + $0x4c] sm:$0xf]
  %v32 = vld [vmem:[%s0 + $0x50] sm:$0xf]
  %v33 = vld [vmem:[%s0 + $0x54] sm:$0xf]
  %v34 = vld [vmem:[%s0 + $0x58] sm:$0xf]
  %v35 = vld [vmem:[%s0 + $0x5c] sm:$0xf]
  %v36 = vld [vmem:[%s0 + $0x60] sm:$0xf]
  %v37 = vld [vmem:[%s0 + $0x64] sm:$0xf]
  %v38 = vld [vmem:[%s0 + $0x68] sm:$0xf]
  %v39 = vld [vmem:[%s0 + $0x6c] sm:$0xf]
  %v40 = vld [vmem:[%s0 + $0x70] sm:$0xf]
  %v41 = vld [vmem:[%s0 + $0x74] sm:$0xf]
  %v42 = vld [vmem:[%s0 + $0x78] sm:$0xf]
  %v43 = vld [vmem:[%s0 + $0x7c] sm:$0xf]
  %v44 = vld [vmem:[%s0 + $0x80] sm:$0xf]
  %v45 = vld [vmem:[%s0 + $0x84] sm:$0xf]
  %v46 = vld [vmem:[%s0 + $0x88] sm:$0xf]
  %v47 = vld [vmem:[%s0 + $0x8c] sm:$0xf]
  %v48 = vld [vmem:[%s0 + $0x90] sm:$0xf]
  %v49 = vld [vmem:[%s0 + $0x94] sm:$0xf]
  %v50 = vld [vmem:[%s0 + $0x98] sm:$0xf]
  %v51 = vld [vmem:[%s0 + $0x9c] sm:$0xf]
  %v52 = vld [vmem:[%s0 + $0xa0] sm:$0xf]
  %v53 = vld [vmem:[%s0 + $0xa4] sm:$0xf]
  %v54 = vld [vmem:[%s0 + $0xa8] sm:$0xf]
  %v55 = vld [vmem:[%s0 + $0xac] sm:$0xf]
  %v56 = vld [vmem:[%s0 + $0xb0] sm:$0xf]
  %v57 = vld [vmem:[%s0 + $0xb4] sm:$0xf]
  %v58 = vld [vmem:[%s0 + $0xb8] sm:$0xf]
  %v59 = vld [vmem:[%s0 + $0xbc] sm:$0xf]
  %v60 = vld [vmem:[%s0 + $0xc0] sm:$0xf]
  %v61 = vld [vmem:[%s0 + $0xc4] sm:$0xf]
  %v62 = vld [vmem:[%s0 + $0xc8] sm:$0xf]
  %v63 = vld [vmem:[%s0 + $0xcc] sm:$0xf]
  %v64 = vld [vmem:[%s0 + $0xd0] sm:$0xf]
  %v65 = vld [vmem:[%s0 + $0xd4] sm:$0xf]
  %v66 = vld [vmem:[%s0 + $0xd8] sm:$0xf]
  %v67 = vld [vmem:[%s0 + $0xdc] sm:$0xf]
  %v68 = vld [vmem:[%s0 + $0xe0] sm:$0xf]
  %v69 = vld [vmem:[%s0 + $0xe4] sm:$0xf]
  %v70 = vld [vmem:[%s0 + $0xe8] sm:$0xf]
  %v71 = vld [vmem:[%s0 + $0xec] sm:$0xf]
  %v72 = vld [vmem:[%s0 + $0xf0] sm:$0xf]
  %v73 = vld [vmem:[%s0 + $0xf4] sm:$0xf]
  %v74 = vld [vmem:[%s0 + $0xf8] sm:$0xf]
  %v75 = vld [vmem:[%s0 + $0xfc] sm:$0xf]
  %v76 = vld [vmem:[%s1] sm:$0xff]
  %v77 = vld [vmem:[%s1 + $0x8] sm:$0xff]
  %v78 = vld [vmem:[%s1 + $0x10] sm:$0xff]
  %v79 = vld [vmem:[%s1 + $0x18] sm:$0xff]
  %v80 = vld [vmem:[%s1 + $0x20] sm:$0xff]
  %v81 = vld [vmem:[%s1 + $0x28] sm:$0xff]
  %v82 = vld [vmem:[%s1 + $0x30] sm:$0xff]
  %v83 = vld [vmem:[%s1 + $0x38] sm:$0xff]
  %v148 = vunpack.c.l.b16 %v12
  %v149 = vunpack.c.l.b16 %v13
  %v150 = vunpack.c.l.b16 %v14
  %v151 = vunpack.c.l.b16 %v15
  %v152 = vunpack.c.l.b16 %v16
  %v153 = vunpack.c.l.b16 %v17
  %v154 = vunpack.c.l.b16 %v18
  %v155 = vunpack.c.l.b16 %v19
  %v156 = vunpack.c.l.b16 %v20
  %v157 = vunpack.c.l.b16 %v21
  %v158 = vunpack.c.l.b16 %v22
  %v159 = vunpack.c.l.b16 %v23
  %v160 = vunpack.c.l.b16 %v24
  %v161 = vunpack.c.l.b16 %v25
  %v162 = vunpack.c.l.b16 %v26
  %v163 = vunpack.c.l.b16 %v27
  %v164 = vunpack.c.l.b16 %v28
  %v165 = vunpack.c.l.b16 %v29
  %v166 = vunpack.c.l.b16 %v30
  %v167 = vunpack.c.l.b16 %v31
  %v168 = vunpack.c.l.b16 %v32
  %v169 = vunpack.c.l.b16 %v33
  %v170 = vunpack.c.l.b16 %v34
  %v171 = vunpack.c.l.b16 %v35
  %v172 = vunpack.c.l.b16 %v36
  %v173 = vunpack.c.l.b16 %v37
  %v174 = vunpack.c.l.b16 %v38
  %v175 = vunpack.c.l.b16 %v39
  %v176 = vunpack.c.l.b16 %v40
  %v177 = vunpack.c.l.b16 %v41
  %v178 = vunpack.c.l.b16 %v42
  %v179 = vunpack.c.l.b16 %v43
  %v180 = vunpack.c.l.b16 %v44
  %v181 = vunpack.c.l.b16 %v45
  %v182 = vunpack.c.l.b16 %v46
  %v183 = vunpack.c.l.b16 %v47
  %v184 = vunpack.c.l.b16 %v48
  %v185 = vunpack.c.l.b16 %v49
  %v186 = vunpack.c.l.b16 %v50
  %v187 = vunpack.c.l.b16 %v51
  %v188 = vunpack.c.l.b16 %v52
  %v189 = vunpack.c.l.b16 %v53
  %v190 = vunpack.c.l.b16 %v54
  %v191 = vunpack.c.l.b16 %v55
  %v192 = vunpack.c.l.b16 %v56
  %v193 = vunpack.c.l.b16 %v57
  %v194 = vunpack.c.l.b16 %v58
  %v195 = vunpack.c.l.b16 %v59
  %v196 = vunpack.c.l.b16 %v60
  %v197 = vunpack.c.l.b16 %v61
  %v198 = vunpack.c.l.b16 %v62
  %v199 = vunpack.c.l.b16 %v63
  %v200 = vunpack.c.l.b16 %v64
  %v201 = vunpack.c.l.b16 %v65
  %v202 = vunpack.c.l.b16 %v66
  %v203 = vunpack.c.l.b16 %v67
  %v204 = vunpack.c.l.b16 %v68
  %v205 = vunpack.c.l.b16 %v69
  %v206 = vunpack.c.l.b16 %v70
  %v207 = vunpack.c.l.b16 %v71
  %v208 = vunpack.c.l.b16 %v72
  %v209 = vunpack.c.l.b16 %v73
  %v210 = vunpack.c.l.b16 %v74
  %v211 = vunpack.c.l.b16 %v75
  %v212 = vpack.c.b16 %v149, %v148
  %v213 = vpack.c.b16 %v151, %v150
  %v214 = vpack.c.b16 %v153, %v152
  %v215 = vpack.c.b16 %v155, %v154
  %v216 = vpack.c.b16 %v157, %v156
  %v217 = vpack.c.b16 %v159, %v158
  %v218 = vpack.c.b16 %v161, %v160
  %v219 = vpack.c.b16 %v163, %v162
  %v220 = vpack.c.b16 %v165, %v164
  %v221 = vpack.c.b16 %v167, %v166
  %v222 = vpack.c.b16 %v169, %v168
  %v223 = vpack.c.b16 %v171, %v170
  %v224 = vpack.c.b16 %v173, %v172
  %v225 = vpack.c.b16 %v175, %v174
  %v226 = vpack.c.b16 %v177, %v176
  %v227 = vpack.c.b16 %v179, %v178
  %v228 = vpack.c.b16 %v181, %v180
  %v229 = vpack.c.b16 %v183, %v182
  %v230 = vpack.c.b16 %v185, %v184
  %v231 = vpack.c.b16 %v187, %v186
  %v232 = vpack.c.b16 %v189, %v188
  %v233 = vpack.c.b16 %v191, %v190
  %v234 = vpack.c.b16 %v193, %v192
  %v235 = vpack.c.b16 %v195, %v194
  %v236 = vpack.c.b16 %v197, %v196
  %v237 = vpack.c.b16 %v199, %v198
  %v238 = vpack.c.b16 %v201, %v200
  %v239 = vpack.c.b16 %v203, %v202
  %v240 = vpack.c.b16 %v205, %v204
  %v241 = vpack.c.b16 %v207, %v206
  %v242 = vpack.c.b16 %v209, %v208
  %v243 = vpack.c.b16 %v211, %v210
  %v252 = vunpack.c.l.b16 %v76
  %v253 = vunpack.c.h.b16 %v76
  %v254 = vunpack.c.l.b16 %v77
  %v255 = vunpack.c.h.b16 %v77
  %v256 = vunpack.c.l.b16 %v78
  %v257 = vunpack.c.h.b16 %v78
  %v258 = vunpack.c.l.b16 %v79
  %v259 = vunpack.c.h.b16 %v79
  %v260 = vunpack.c.l.b16 %v80
  %v261 = vunpack.c.h.b16 %v80
  %v262 = vunpack.c.l.b16 %v81
  %v263 = vunpack.c.h.b16 %v81
  %v264 = vunpack.c.l.b16 %v82
  %v265 = vunpack.c.h.b16 %v82
  %v266 = vunpack.c.l.b16 %v83
  %v267 = vunpack.c.h.b16 %v83
  %v268 = vpack.c.b16 %v256, %v252
  %v269 = vpack.c.b16 %v257, %v253
  %v270 = vpack.c.b16 %v258, %v254
  %v271 = vpack.c.b16 %v259, %v255
  %v272 = vpack.c.b16 %v264, %v260
  %v273 = vpack.c.b16 %v265, %v261
  %v274 = vpack.c.b16 %v266, %v262
  %v275 = vpack.c.b16 %v267, %v263
  %vm284 = vcmask 261120
  %v286 = vsel %vm284, %v212, 0
  %v289 = vsel %vm284, %v213, 0
  %v292 = vsel %vm284, %v214, 0
  %v295 = vsel %vm284, %v215, 0
  %v298 = vsel %vm284, %v216, 0
  %v301 = vsel %vm284, %v217, 0
  %v304 = vsel %vm284, %v218, 0
  %v307 = vsel %vm284, %v219, 0
  %v310 = vsel %vm284, %v220, 0
  %v313 = vsel %vm284, %v221, 0
  %v316 = vsel %vm284, %v222, 0
  %v319 = vsel %vm284, %v223, 0
  %v322 = vsel %vm284, %v224, 0
  %v325 = vsel %vm284, %v225, 0
  %v328 = vsel %vm284, %v226, 0
  %v331 = vsel %vm284, %v227, 0
  %v334 = vsel %vm284, %v228, 0
  %v337 = vsel %vm284, %v229, 0
  %v340 = vsel %vm284, %v230, 0
  %v343 = vsel %vm284, %v231, 0
  %v346 = vsel %vm284, %v232, 0
  %v349 = vsel %vm284, %v233, 0
  %v352 = vsel %vm284, %v234, 0
  %v355 = vsel %vm284, %v235, 0
  %v358 = vsel %vm284, %v236, 0
  %v361 = vsel %vm284, %v237, 0
  %v364 = vsel %vm284, %v238, 0
  %v367 = vsel %vm284, %v239, 0
  %v370 = vsel %vm284, %v240, 0
  %v373 = vsel %vm284, %v241, 0
  %v376 = vsel %vm284, %v242, 0
  %v379 = vsel %vm284, %v243, 0
  %381 = vmatprep.subr.bf16.mxu0 %v269
  %382 = vmatpush1.bf16.msra.mxu0 %v268
  %383 = vmatprep.subr.bf16.mxu0 %v273
  %384 = vmatpush1.bf16.msra.mxu0 %v272
  %385 = vmatprep.subr.bf16.mxu0 0
  %386 = vmatpush1.bf16.msra.mxu0 0
  %387 = vmatprep.subr.bf16.mxu0 0
  %388 = vmatpush1.bf16.msra.mxu0 0
  %389 = vmatprep.subr.bf16.mxu0 0
  %390 = vmatpush1.bf16.msra.mxu0 0
  %391 = vmatprep.subr.bf16.mxu0 0
  %392 = vmatpush1.bf16.msra.mxu0 0
  %393 = vmatprep.subr.bf16.mxu0 0
  %394 = vmatpush1.bf16.msra.mxu0 0
  %395 = vmatprep.subr.bf16.mxu0 0
  %396 = vmatpush1.bf16.msra.mxu0 0
  %397 = vmatprep.subr.bf16.mxu0 0
  %398 = vmatpush1.bf16.msra.mxu0 0
  %399 = vmatprep.subr.bf16.mxu0 0
  %400 = vmatpush1.bf16.msra.mxu0 0
  %401 = vmatprep.subr.bf16.mxu0 0
  %402 = vmatpush1.bf16.msra.mxu0 0
  %403 = vmatprep.subr.bf16.mxu0 0
  %404 = vmatpush1.bf16.msra.mxu0 0
  %405 = vmatprep.subr.bf16.mxu0 0
  %406 = vmatpush1.bf16.msra.mxu0 0
  %407 = vmatprep.subr.bf16.mxu0 0
  %408 = vmatpush1.bf16.msra.mxu0 0
  %409 = vmatprep.subr.bf16.mxu0 0
  %410 = vmatpush1.bf16.msra.mxu0 0
  %411 = vmatprep.subr.bf16.mxu0 0
  %412 = vmatpush1.bf16.msra.mxu0 0
  %413 = vmatprep.mubr.bf16.mxu0 0
  %414 = vmatmul.mubr.bf16.gmra.mrb[0].mxu0 %v286
  %v415 = vpop.f32.mrb[0].mxu0
  %v416 = vadd.f32 0.0, %v415
  %v417 = vpop.f32.mrb[0].mxu0
  %v418 = vadd.f32 0.0, %v417
  %v419 = vpop.f32.mrb[0].mxu0
  %v420 = vadd.f32 0.0, %v419
  %v421 = vpop.f32.mrb[0].mxu0
  %v422 = vadd.f32 0.0, %v421
  %423 = vmatprep.mubr.bf16.mxu0 0
  %424 = vmatmul.mubr.bf16.gmra.mrb[0].mxu0 %v289
  %v425 = vpop.f32.mrb[0].mxu0
  %v426 = vadd.f32 0.0, %v425
  %v427 = vpop.f32.mrb[0].mxu0
  %v428 = vadd.f32 0.0, %v427
  %v429 = vpop.f32.mrb[0].mxu0
  %v430 = vadd.f32 0.0, %v429
  %v431 = vpop.f32.mrb[0].mxu0
  %v432 = vadd.f32 0.0, %v431
  %433 = vmatprep.mubr.bf16.mxu0 0
  %434 = vmatmul.mubr.bf16.gmra.mrb[0].mxu0 %v292
  %v435 = vpop.f32.mrb[0].mxu0
  %v436 = vadd.f32 0.0, %v435
  %v437 = vpop.f32.mrb[0].mxu0
  %v438 = vadd.f32 0.0, %v437
  %v439 = vpop.f32.mrb[0].mxu0
  %v440 = vadd.f32 0.0, %v439
  %v441 = vpop.f32.mrb[0].mxu0
  %v442 = vadd.f32 0.0, %v441
  %443 = vmatprep.mubr.bf16.mxu0 0
  %444 = vmatmul.mubr.bf16.gmra.mrb[0].mxu0 %v295
  %v445 = vpop.f32.mrb[0].mxu0
  %v446 = vadd.f32 0.0, %v445
  %v447 = vpop.f32.mrb[0].mxu0
  %v448 = vadd.f32 0.0, %v447
  %v449 = vpop.f32.mrb[0].mxu0
  %v450 = vadd.f32 0.0, %v449
  %v451 = vpop.f32.mrb[0].mxu0
  %v452 = vadd.f32 0.0, %v451
  %453 = vmatprep.mubr.bf16.mxu0 0
  %454 = vmatmul.mubr.bf16.gmra.mrb[0].mxu0 %v298
  %v455 = vpop.f32.mrb[0].mxu0
  %v456 = vadd.f32 0.0, %v455
  %v457 = vpop.f32.mrb[0].mxu0
  %v458 = vadd.f32 0.0, %v457
  %v459 = vpop.f32.mrb[0].mxu0
  %v460 = vadd.f32 0.0, %v459
  %v461 = vpop.f32.mrb[0].mxu0
  %v462 = vadd.f32 0.0, %v461
  %463 = vmatprep.mubr.bf16.mxu0 0
  %464 = vmatmul.mubr.bf16.gmra.mrb[0].mxu0 %v301
  %v465 = vpop.f32.mrb[0].mxu0
  %v466 = vadd.f32 0.0, %v465
  %v467 = vpop.f32.mrb[0].mxu0
  %v468 = vadd.f32 0.0, %v467
  %v469 = vpop.f32.mrb[0].mxu0
  %v470 = vadd.f32 0.0, %v469
  %v471 = vpop.f32.mrb[0].mxu0
  %v472 = vadd.f32 0.0, %v471
  %473 = vmatprep.mubr.bf16.mxu0 0
  %474 = vmatmul.mubr.bf16.gmra.mrb[0].mxu0 %v304
  %v475 = vpop.f32.mrb[0].mxu0
  %v476 = vadd.f32 0.0, %v475
  %v477 = vpop.f32.mrb[0].mxu0
  %v478 = vadd.f32 0.0, %v477
  %v479 = vpop.f32.mrb[0].mxu0
  %v480 = vadd.f32 0.0, %v479
  %v481 = vpop.f32.mrb[0].mxu0
  %v482 = vadd.f32 0.0, %v481
  %483 = vmatprep.mubr.bf16.mxu0 0
  %484 = vmatmul.mubr.bf16.gmra.mrb[0].mxu0 %v307
  %v485 = vpop.f32.mrb[0].mxu0
  %v486 = vadd.f32 0.0, %v485
  %v487 = vpop.f32.mrb[0].mxu0
  %v488 = vadd.f32 0.0, %v487
  %v489 = vpop.f32.mrb[0].mxu0
  %v490 = vadd.f32 0.0, %v489
  %v491 = vpop.f32.mrb[0].mxu0
  %v492 = vadd.f32 0.0, %v491
  %493 = vmatprep.mubr.bf16.mxu0 0
  %494 = vmatmul.mubr.bf16.gmra.mrb[0].mxu0 %v310
  %v495 = vpop.f32.mrb[0].mxu0
  %v496 = vadd.f32 0.0, %v495
  %v497 = vpop.f32.mrb[0].mxu0
  %v498 = vadd.f32 0.0, %v497
  %v499 = vpop.f32.mrb[0].mxu0
  %v500 = vadd.f32 0.0, %v499
  %v501 = vpop.f32.mrb[0].mxu0
  %v502 = vadd.f32 0.0, %v501
  %503 = vmatprep.mubr.bf16.mxu0 0
  %504 = vmatmul.mubr.bf16.gmra.mrb[0].mxu0 %v313
  %v505 = vpop.f32.mrb[0].mxu0
  %v506 = vadd.f32 0.0, %v505
  %v507 = vpop.f32.mrb[0].mxu0
  %v508 = vadd.f32 0.0, %v507
  %v509 = vpop.f32.mrb[0].mxu0
  %v510 = vadd.f32 0.0, %v509
  %v511 = vpop.f32.mrb[0].mxu0
  %v512 = vadd.f32 0.0, %v511
  %513 = vmatprep.mubr.bf16.mxu0 0
  %514 = vmatmul.mubr.bf16.gmra.mrb[0].mxu0 %v316
  %v515 = vpop.f32.mrb[0].mxu0
  %v516 = vadd.f32 0.0, %v515
  %v517 = vpop.f32.mrb[0].mxu0
  %v518 = vadd.f32 0.0, %v517
  %v519 = vpop.f32.mrb[0].mxu0
  %v520 = vadd.f32 0.0, %v519
  %v521 = vpop.f32.mrb[0].mxu0
  %v522 = vadd.f32 0.0, %v521
  %523 = vmatprep.mubr.bf16.mxu0 0
  %524 = vmatmul.mubr.bf16.gmra.mrb[0].mxu0 %v319
  %v525 = vpop.f32.mrb[0].mxu0
  %v526 = vadd.f32 0.0, %v525
  %v527 = vpop.f32.mrb[0].mxu0
  %v528 = vadd.f32 0.0, %v527
  %v529 = vpop.f32.mrb[0].mxu0
  %v530 = vadd.f32 0.0, %v529
  %v531 = vpop.f32.mrb[0].mxu0
  %v532 = vadd.f32 0.0, %v531
  %533 = vmatprep.mubr.bf16.mxu0 0
  %534 = vmatmul.mubr.bf16.gmra.mrb[0].mxu0 %v322
  %v535 = vpop.f32.mrb[0].mxu0
  %v536 = vadd.f32 0.0, %v535
  %v537 = vpop.f32.mrb[0].mxu0
  %v538 = vadd.f32 0.0, %v537
  %v539 = vpop.f32.mrb[0].mxu0
  %v540 = vadd.f32 0.0, %v539
  %v541 = vpop.f32.mrb[0].mxu0
  %v542 = vadd.f32 0.0, %v541
  %543 = vmatprep.mubr.bf16.mxu0 0
  %544 = vmatmul.mubr.bf16.gmra.mrb[0].mxu0 %v325
  %v545 = vpop.f32.mrb[0].mxu0
  %v546 = vadd.f32 0.0, %v545
  %v547 = vpop.f32.mrb[0].mxu0
  %v548 = vadd.f32 0.0, %v547
  %v549 = vpop.f32.mrb[0].mxu0
  %v550 = vadd.f32 0.0, %v549
  %v551 = vpop.f32.mrb[0].mxu0
  %v552 = vadd.f32 0.0, %v551
  %553 = vmatprep.mubr.bf16.mxu0 0
  %554 = vmatmul.mubr.bf16.gmra.mrb[0].mxu0 %v328
  %v555 = vpop.f32.mrb[0].mxu0
  %v556 = vadd.f32 0.0, %v555
  %v557 = vpop.f32.mrb[0].mxu0
  %v558 = vadd.f32 0.0, %v557
  %v559 = vpop.f32.mrb[0].mxu0
  %v560 = vadd.f32 0.0, %v559
  %v561 = vpop.f32.mrb[0].mxu0
  %v562 = vadd.f32 0.0, %v561
  %563 = vmatprep.mubr.bf16.mxu0 0
  %564 = vmatmul.mubr.bf16.gmra.mrb[0].mxu0 %v331
  %v565 = vpop.f32.mrb[0].mxu0
  %v566 = vadd.f32 0.0, %v565
  %v567 = vpop.f32.mrb[0].mxu0
  %v568 = vadd.f32 0.0, %v567
  %v569 = vpop.f32.mrb[0].mxu0
  %v570 = vadd.f32 0.0, %v569
  %v571 = vpop.f32.mrb[0].mxu0
  %v572 = vadd.f32 0.0, %v571
  %573 = vmatprep.mubr.bf16.mxu0 0
  %574 = vmatmul.mubr.bf16.gmra.mrb[0].mxu0 %v334
  %v575 = vpop.f32.mrb[0].mxu0
  %v576 = vadd.f32 0.0, %v575
  %v577 = vpop.f32.mrb[0].mxu0
  %v578 = vadd.f32 0.0, %v577
  %v579 = vpop.f32.mrb[0].mxu0
  %v580 = vadd.f32 0.0, %v579
  %v581 = vpop.f32.mrb[0].mxu0
  %v582 = vadd.f32 0.0, %v581
  %583 = vmatprep.mubr.bf16.mxu0 0
  %584 = vmatmul.mubr.bf16.gmra.mrb[0].mxu0 %v337
  %v585 = vpop.f32.mrb[0].mxu0
  %v586 = vadd.f32 0.0, %v585
  %v587 = vpop.f32.mrb[0].mxu0
  %v588 = vadd.f32 0.0, %v587
  %v589 = vpop.f32.mrb[0].mxu0
  %v590 = vadd.f32 0.0, %v589
  %v591 = vpop.f32.mrb[0].mxu0
  %v592 = vadd.f32 0.0, %v591
  %593 = vmatprep.mubr.bf16.mxu0 0
  %594 = vmatmul.mubr.bf16.gmra.mrb[0].mxu0 %v340
  %v595 = vpop.f32.mrb[0].mxu0
  %v596 = vadd.f32 0.0, %v595
  %v597 = vpop.f32.mrb[0].mxu0
  %v598 = vadd.f32 0.0, %v597
  %v599 = vpop.f32.mrb[0].mxu0
  %v600 = vadd.f32 0.0, %v599
  %v601 = vpop.f32.mrb[0].mxu0
  %v602 = vadd.f32 0.0, %v601
  %603 = vmatprep.mubr.bf16.mxu0 0
  %604 = vmatmul.mubr.bf16.gmra.mrb[0].mxu0 %v343
  %v605 = vpop.f32.mrb[0].mxu0
  %v606 = vadd.f32 0.0, %v605
  %v607 = vpop.f32.mrb[0].mxu0
  %v608 = vadd.f32 0.0, %v607
  %v609 = vpop.f32.mrb[0].mxu0
  %v610 = vadd.f32 0.0, %v609
  %v611 = vpop.f32.mrb[0].mxu0
  %v612 = vadd.f32 0.0, %v611
  %613 = vmatprep.mubr.bf16.mxu0 0
  %614 = vmatmul.mubr.bf16.gmra.mrb[0].mxu0 %v346
  %v615 = vpop.f32.mrb[0].mxu0
  %v616 = vadd.f32 0.0, %v615
  %v617 = vpop.f32.mrb[0].mxu0
  %v618 = vadd.f32 0.0, %v617
  %v619 = vpop.f32.mrb[0].mxu0
  %v620 = vadd.f32 0.0, %v619
  %v621 = vpop.f32.mrb[0].mxu0
  %v622 = vadd.f32 0.0, %v621
  %623 = vmatprep.mubr.bf16.mxu0 0
  %624 = vmatmul.mubr.bf16.gmra.mrb[0].mxu0 %v349
  %v625 = vpop.f32.mrb[0].mxu0
  %v626 = vadd.f32 0.0, %v625
  %v627 = vpop.f32.mrb[0].mxu0
  %v628 = vadd.f32 0.0, %v627
  %v629 = vpop.f32.mrb[0].mxu0
  %v630 = vadd.f32 0.0, %v629
  %v631 = vpop.f32.mrb[0].mxu0
  %v632 = vadd.f32 0.0, %v631
  %633 = vmatprep.mubr.bf16.mxu0 0
  %634 = vmatmul.mubr.bf16.gmra.mrb[0].mxu0 %v352
  %v635 = vpop.f32.mrb[0].mxu0
  %v636 = vadd.f32 0.0, %v635
  %v637 = vpop.f32.mrb[0].mxu0
  %v638 = vadd.f32 0.0, %v637
  %v639 = vpop.f32.mrb[0].mxu0
  %v640 = vadd.f32 0.0, %v639
  %v641 = vpop.f32.mrb[0].mxu0
  %v642 = vadd.f32 0.0, %v641
  %643 = vmatprep.mubr.bf16.mxu0 0
  %644 = vmatmul.mubr.bf16.gmra.mrb[0].mxu0 %v355
  %v645 = vpop.f32.mrb[0].mxu0
  %v646 = vadd.f32 0.0, %v645
  %v647 = vpop.f32.mrb[0].mxu0
  %v648 = vadd.f32 0.0, %v647
  %v649 = vpop.f32.mrb[0].mxu0
  %v650 = vadd.f32 0.0, %v649
  %v651 = vpop.f32.mrb[0].mxu0
  %v652 = vadd.f32 0.0, %v651
  %653 = vmatprep.mubr.bf16.mxu0 0
  %654 = vmatmul.mubr.bf16.gmra.mrb[0].mxu0 %v358
  %v655 = vpop.f32.mrb[0].mxu0
  %v656 = vadd.f32 0.0, %v655
  %v657 = vpop.f32.mrb[0].mxu0
  %v658 = vadd.f32 0.0, %v657
  %v659 = vpop.f32.mrb[0].mxu0
  %v660 = vadd.f32 0.0, %v659
  %v661 = vpop.f32.mrb[0].mxu0
  %v662 = vadd.f32 0.0, %v661
  %663 = vmatprep.mubr.bf16.mxu0 0
  %664 = vmatmul.mubr.bf16.gmra.mrb[0].mxu0 %v361
  %v665 = vpop.f32.mrb[0].mxu0
  %v666 = vadd.f32 0.0, %v665
  %v667 = vpop.f32.mrb[0].mxu0
  %v668 = vadd.f32 0.0, %v667
  %v669 = vpop.f32.mrb[0].mxu0
  %v670 = vadd.f32 0.0, %v669
  %v671 = vpop.f32.mrb[0].mxu0
  %v672 = vadd.f32 0.0, %v671
  %673 = vmatprep.mubr.bf16.mxu0 0
  %674 = vmatmul.mubr.bf16.gmra.mrb[0].mxu0 %v364
  %v675 = vpop.f32.mrb[0].mxu0
  %v676 = vadd.f32 0.0, %v675
  %v677 = vpop.f32.mrb[0].mxu0
  %v678 = vadd.f32 0.0, %v677
  %v679 = vpop.f32.mrb[0].mxu0
  %v680 = vadd.f32 0.0, %v679
  %v681 = vpop.f32.mrb[0].mxu0
  %v682 = vadd.f32 0.0, %v681
  %683 = vmatprep.mubr.bf16.mxu0 0
  %684 = vmatmul.mubr.bf16.gmra.mrb[0].mxu0 %v367
  %v685 = vpop.f32.mrb[0].mxu0
  %v686 = vadd.f32 0.0, %v685
  %v687 = vpop.f32.mrb[0].mxu0
  %v688 = vadd.f32 0.0, %v687
  %v689 = vpop.f32.mrb[0].mxu0
  %v690 = vadd.f32 0.0, %v689
  %v691 = vpop.f32.mrb[0].mxu0
  %v692 = vadd.f32 0.0, %v691
  %693 = vmatprep.mubr.bf16.mxu0 0
  %694 = vmatmul.mubr.bf16.gmra.mrb[0].mxu0 %v370
  %v695 = vpop.f32.mrb[0].mxu0
  %v696 = vadd.f32 0.0, %v695
  %v697 = vpop.f32.mrb[0].mxu0
  %v698 = vadd.f32 0.0, %v697
  %v699 = vpop.f32.mrb[0].mxu0
  %v700 = vadd.f32 0.0, %v699
  %v701 = vpop.f32.mrb[0].mxu0
  %v702 = vadd.f32 0.0, %v701
  %703 = vmatprep.mubr.bf16.mxu0 0
  %704 = vmatmul.mubr.bf16.gmra.mrb[0].mxu0 %v373
  %v705 = vpop.f32.mrb[0].mxu0
  %v706 = vadd.f32 0.0, %v705
  %v707 = vpop.f32.mrb[0].mxu0
  %v708 = vadd.f32 0.0, %v707
  %v709 = vpop.f32.mrb[0].mxu0
  %v710 = vadd.f32 0.0, %v709
  %v711 = vpop.f32.mrb[0].mxu0
  %v712 = vadd.f32 0.0, %v711
  %713 = vmatprep.mubr.bf16.mxu0 0
  %714 = vmatmul.mubr.bf16.gmra.mrb[0].mxu0 %v376
  %v715 = vpop.f32.mrb[0].mxu0
  %v716 = vadd.f32 0.0, %v715
  %v717 = vpop.f32.mrb[0].mxu0
  %v718 = vadd.f32 0.0, %v717
  %v719 = vpop.f32.mrb[0].mxu0
  %v720 = vadd.f32 0.0, %v719
  %v721 = vpop.f32.mrb[0].mxu0
  %v722 = vadd.f32 0.0, %v721
  %723 = vmatprep.mubr.bf16.mxu0 0
  %724 = vmatmul.mubr.bf16.gmra.mrb[0].mxu0 %v379
  %v725 = vpop.f32.mrb[0].mxu0
  %v726 = vadd.f32 0.0, %v725
  %v727 = vpop.f32.mrb[0].mxu0
  %v728 = vadd.f32 0.0, %v727
  %v729 = vpop.f32.mrb[0].mxu0
  %v730 = vadd.f32 0.0, %v729
  %v731 = vpop.f32.mrb[0].mxu0
  %v732 = vadd.f32 0.0, %v731
  %733 = vdwg.mxu0
  %734 = vmatprep.subr.bf16.mxu0 %v271
  %735 = vmatpush1.bf16.msra.mxu0 %v270
  %736 = vmatprep.subr.bf16.mxu0 %v275
  %737 = vmatpush1.bf16.msra.mxu0 %v274
  %738 = vmatprep.subr.bf16.mxu0 0
  %739 = vmatpush1.bf16.msra.mxu0 0
  %740 = vmatprep.subr.bf16.mxu0 0
  %741 = vmatpush1.bf16.msra.mxu0 0
  %742 = vmatprep.subr.bf16.mxu0 0
  %743 = vmatpush1.bf16.msra.mxu0 0
  %744 = vmatprep.subr.bf16.mxu0 0
  %745 = vmatpush1.bf16.msra.mxu0 0
  %746 = vmatprep.subr.bf16.mxu0 0
  %747 = vmatpush1.bf16.msra.mxu0 0
  %748 = vmatprep.subr.bf16.mxu0 0
  %749 = vmatpush1.bf16.msra.mxu0 0
  %750 = vmatprep.subr.bf16.mxu0 0
  %751 = vmatpush1.bf16.msra.mxu0 0
  %752 = vmatprep.subr.bf16.mxu0 0
  %753 = vmatpush1.bf16.msra.mxu0 0
  %754 = vmatprep.subr.bf16.mxu0 0
  %755 = vmatpush1.bf16.msra.mxu0 0
  %756 = vmatprep.subr.bf16.mxu0 0
  %757 = vmatpush1.bf16.msra.mxu0 0
  %758 = vmatprep.subr.bf16.mxu0 0
  %759 = vmatpush1.bf16.msra.mxu0 0
  %760 = vmatprep.subr.bf16.mxu0 0
  %761 = vmatpush1.bf16.msra.mxu0 0
  %762 = vmatprep.subr.bf16.mxu0 0
  %763 = vmatpush1.bf16.msra.mxu0 0
  %764 = vmatprep.subr.bf16.mxu0 0
  %765 = vmatpush1.bf16.msra.mxu0 0
  %766 = vmatprep.mubr.bf16.mxu0 0
  %767 = vmatmul.mubr.bf16.gmra.mrb[0].mxu0 %v286
  %v768 = vpop.f32.mrb[0].mxu0
  %v769 = vadd.f32 0.0, %v768
  %v770 = vpop.f32.mrb[0].mxu0
  %v771 = vadd.f32 0.0, %v770
  %v772 = vpop.f32.mrb[0].mxu0
  %v773 = vadd.f32 0.0, %v772
  %v774 = vpop.f32.mrb[0].mxu0
  %v775 = vadd.f32 0.0, %v774
  %776 = vmatprep.mubr.bf16.mxu0 0
  %777 = vmatmul.mubr.bf16.gmra.mrb[0].mxu0 %v289
  %v778 = vpop.f32.mrb[0].mxu0
  %v779 = vadd.f32 0.0, %v778
  %v780 = vpop.f32.mrb[0].mxu0
  %v781 = vadd.f32 0.0, %v780
  %v782 = vpop.f32.mrb[0].mxu0
  %v783 = vadd.f32 0.0, %v782
  %v784 = vpop.f32.mrb[0].mxu0
  %v785 = vadd.f32 0.0, %v784
  %786 = vmatprep.mubr.bf16.mxu0 0
  %787 = vmatmul.mubr.bf16.gmra.mrb[0].mxu0 %v292
  %v788 = vpop.f32.mrb[0].mxu0
  %v789 = vadd.f32 0.0, %v788
  %v790 = vpop.f32.mrb[0].mxu0
  %v791 = vadd.f32 0.0, %v790
  %v792 = vpop.f32.mrb[0].mxu0
  %v793 = vadd.f32 0.0, %v792
  %v794 = vpop.f32.mrb[0].mxu0
  %v795 = vadd.f32 0.0, %v794
  %796 = vmatprep.mubr.bf16.mxu0 0
  %797 = vmatmul.mubr.bf16.gmra.mrb[0].mxu0 %v295
  %v798 = vpop.f32.mrb[0].mxu0
  %v799 = vadd.f32 0.0, %v798
  %v800 = vpop.f32.mrb[0].mxu0
  %v801 = vadd.f32 0.0, %v800
  %v802 = vpop.f32.mrb[0].mxu0
  %v803 = vadd.f32 0.0, %v802
  %v804 = vpop.f32.mrb[0].mxu0
  %v805 = vadd.f32 0.0, %v804
  %806 = vmatprep.mubr.bf16.mxu0 0
  %807 = vmatmul.mubr.bf16.gmra.mrb[0].mxu0 %v298
  %v808 = vpop.f32.mrb[0].mxu0
  %v809 = vadd.f32 0.0, %v808
  %v810 = vpop.f32.mrb[0].mxu0
  %v811 = vadd.f32 0.0, %v810
  %v812 = vpop.f32.mrb[0].mxu0
  %v813 = vadd.f32 0.0, %v812
  %v814 = vpop.f32.mrb[0].mxu0
  %v815 = vadd.f32 0.0, %v814
  %816 = vmatprep.mubr.bf16.mxu0 0
  %817 = vmatmul.mubr.bf16.gmra.mrb[0].mxu0 %v301
  %v818 = vpop.f32.mrb[0].mxu0
  %v819 = vadd.f32 0.0, %v818
  %v820 = vpop.f32.mrb[0].mxu0
  %v821 = vadd.f32 0.0, %v820
  %v822 = vpop.f32.mrb[0].mxu0
  %v823 = vadd.f32 0.0, %v822
  %v824 = vpop.f32.mrb[0].mxu0
  %v825 = vadd.f32 0.0, %v824
  %826 = vmatprep.mubr.bf16.mxu0 0
  %827 = vmatmul.mubr.bf16.gmra.mrb[0].mxu0 %v304
  %v828 = vpop.f32.mrb[0].mxu0
  %v829 = vadd.f32 0.0, %v828
  %v830 = vpop.f32.mrb[0].mxu0
  %v831 = vadd.f32 0.0, %v830
  %v832 = vpop.f32.mrb[0].mxu0
  %v833 = vadd.f32 0.0, %v832
  %v834 = vpop.f32.mrb[0].mxu0
  %v835 = vadd.f32 0.0, %v834
  %836 = vmatprep.mubr.bf16.mxu0 0
  %837 = vmatmul.mubr.bf16.gmra.mrb[0].mxu0 %v307
  %v838 = vpop.f32.mrb[0].mxu0
  %v839 = vadd.f32 0.0, %v838
  %v840 = vpop.f32.mrb[0].mxu0
  %v841 = vadd.f32 0.0, %v840
  %v842 = vpop.f32.mrb[0].mxu0
  %v843 = vadd.f32 0.0, %v842
  %v844 = vpop.f32.mrb[0].mxu0
  %v845 = vadd.f32 0.0, %v844
  %846 = vmatprep.mubr.bf16.mxu0 0
  %847 = vmatmul.mubr.bf16.gmra.mrb[0].mxu0 %v310
  %v848 = vpop.f32.mrb[0].mxu0
  %v849 = vadd.f32 0.0, %v848
  %v850 = vpop.f32.mrb[0].mxu0
  %v851 = vadd.f32 0.0, %v850
  %v852 = vpop.f32.mrb[0].mxu0
  %v853 = vadd.f32 0.0, %v852
  %v854 = vpop.f32.mrb[0].mxu0
  %v855 = vadd.f32 0.0, %v854
  %856 = vmatprep.mubr.bf16.mxu0 0
  %857 = vmatmul.mubr.bf16.gmra.mrb[0].mxu0 %v313
  %v858 = vpop.f32.mrb[0].mxu0
  %v859 = vadd.f32 0.0, %v858
  %v860 = vpop.f32.mrb[0].mxu0
  %v861 = vadd.f32 0.0, %v860
  %v862 = vpop.f32.mrb[0].mxu0
  %v863 = vadd.f32 0.0, %v862
  %v864 = vpop.f32.mrb[0].mxu0
  %v865 = vadd.f32 0.0, %v864
  %866 = vmatprep.mubr.bf16.mxu0 0
  %867 = vmatmul.mubr.bf16.gmra.mrb[0].mxu0 %v316
  %v868 = vpop.f32.mrb[0].mxu0
  %v869 = vadd.f32 0.0, %v868
  %v870 = vpop.f32.mrb[0].mxu0
  %v871 = vadd.f32 0.0, %v870
  %v872 = vpop.f32.mrb[0].mxu0
  %v873 = vadd.f32 0.0, %v872
  %v874 = vpop.f32.mrb[0].mxu0
  %v875 = vadd.f32 0.0, %v874
  %876 = vmatprep.mubr.bf16.mxu0 0
  %877 = vmatmul.mubr.bf16.gmra.mrb[0].mxu0 %v319
  %v878 = vpop.f32.mrb[0].mxu0
  %v879 = vadd.f32 0.0, %v878
  %v880 = vpop.f32.mrb[0].mxu0
  %v881 = vadd.f32 0.0, %v880
  %v882 = vpop.f32.mrb[0].mxu0
  %v883 = vadd.f32 0.0, %v882
  %v884 = vpop.f32.mrb[0].mxu0
  %v885 = vadd.f32 0.0, %v884
  %886 = vmatprep.mubr.bf16.mxu0 0
  %887 = vmatmul.mubr.bf16.gmra.mrb[0].mxu0 %v322
  %v888 = vpop.f32.mrb[0].mxu0
  %v889 = vadd.f32 0.0, %v888
  %v890 = vpop.f32.mrb[0].mxu0
  %v891 = vadd.f32 0.0, %v890
  %v892 = vpop.f32.mrb[0].mxu0
  %v893 = vadd.f32 0.0, %v892
  %v894 = vpop.f32.mrb[0].mxu0
  %v895 = vadd.f32 0.0, %v894
  %896 = vmatprep.mubr.bf16.mxu0 0
  %897 = vmatmul.mubr.bf16.gmra.mrb[0].mxu0 %v325
  %v898 = vpop.f32.mrb[0].mxu0
  %v899 = vadd.f32 0.0, %v898
  %v900 = vpop.f32.mrb[0].mxu0
  %v901 = vadd.f32 0.0, %v900
  %v902 = vpop.f32.mrb[0].mxu0
  %v903 = vadd.f32 0.0, %v902
  %v904 = vpop.f32.mrb[0].mxu0
  %v905 = vadd.f32 0.0, %v904
  %906 = vmatprep.mubr.bf16.mxu0 0
  %907 = vmatmul.mubr.bf16.gmra.mrb[0].mxu0 %v328
  %v908 = vpop.f32.mrb[0].mxu0
  %v909 = vadd.f32 0.0, %v908
  %v910 = vpop.f32.mrb[0].mxu0
  %v911 = vadd.f32 0.0, %v910
  %v912 = vpop.f32.mrb[0].mxu0
  %v913 = vadd.f32 0.0, %v912
  %v914 = vpop.f32.mrb[0].mxu0
  %v915 = vadd.f32 0.0, %v914
  %916 = vmatprep.mubr.bf16.mxu0 0
  %917 = vmatmul.mubr.bf16.gmra.mrb[0].mxu0 %v331
  %v918 = vpop.f32.mrb[0].mxu0
  %v919 = vadd.f32 0.0, %v918
  %v920 = vpop.f32.mrb[0].mxu0
  %v921 = vadd.f32 0.0, %v920
  %v922 = vpop.f32.mrb[0].mxu0
  %v923 = vadd.f32 0.0, %v922
  %v924 = vpop.f32.mrb[0].mxu0
  %v925 = vadd.f32 0.0, %v924
  %926 = vmatprep.mubr.bf16.mxu0 0
  %927 = vmatmul.mubr.bf16.gmra.mrb[0].mxu0 %v334
  %v928 = vpop.f32.mrb[0].mxu0
  %v929 = vadd.f32 0.0, %v928
  %v930 = vpop.f32.mrb[0].mxu0
  %v931 = vadd.f32 0.0, %v930
  %v932 = vpop.f32.mrb[0].mxu0
  %v933 = vadd.f32 0.0, %v932
  %v934 = vpop.f32.mrb[0].mxu0
  %v935 = vadd.f32 0.0, %v934
  %936 = vmatprep.mubr.bf16.mxu0 0
  %937 = vmatmul.mubr.bf16.gmra.mrb[0].mxu0 %v337
  %v938 = vpop.f32.mrb[0].mxu0
  %v939 = vadd.f32 0.0, %v938
  %v940 = vpop.f32.mrb[0].mxu0
  %v941 = vadd.f32 0.0, %v940
  %v942 = vpop.f32.mrb[0].mxu0
  %v943 = vadd.f32 0.0, %v942
  %v944 = vpop.f32.mrb[0].mxu0
  %v945 = vadd.f32 0.0, %v944
  %946 = vmatprep.mubr.bf16.mxu0 0
  %947 = vmatmul.mubr.bf16.gmra.mrb[0].mxu0 %v340
  %v948 = vpop.f32.mrb[0].mxu0
  %v949 = vadd.f32 0.0, %v948
  %v950 = vpop.f32.mrb[0].mxu0
  %v951 = vadd.f32 0.0, %v950
  %v952 = vpop.f32.mrb[0].mxu0
  %v953 = vadd.f32 0.0, %v952
  %v954 = vpop.f32.mrb[0].mxu0
  %v955 = vadd.f32 0.0, %v954
  %956 = vmatprep.mubr.bf16.mxu0 0
  %957 = vmatmul.mubr.bf16.gmra.mrb[0].mxu0 %v343
  %v958 = vpop.f32.mrb[0].mxu0
  %v959 = vadd.f32 0.0, %v958
  %v960 = vpop.f32.mrb[0].mxu0
  %v961 = vadd.f32 0.0, %v960
  %v962 = vpop.f32.mrb[0].mxu0
  %v963 = vadd.f32 0.0, %v962
  %v964 = vpop.f32.mrb[0].mxu0
  %v965 = vadd.f32 0.0, %v964
  %966 = vmatprep.mubr.bf16.mxu0 0
  %967 = vmatmul.mubr.bf16.gmra.mrb[0].mxu0 %v346
  %v968 = vpop.f32.mrb[0].mxu0
  %v969 = vadd.f32 0.0, %v968
  %v970 = vpop.f32.mrb[0].mxu0
  %v971 = vadd.f32 0.0, %v970
  %v972 = vpop.f32.mrb[0].mxu0
  %v973 = vadd.f32 0.0, %v972
  %v974 = vpop.f32.mrb[0].mxu0
  %v975 = vadd.f32 0.0, %v974
  %976 = vmatprep.mubr.bf16.mxu0 0
  %977 = vmatmul.mubr.bf16.gmra.mrb[0].mxu0 %v349
  %v978 = vpop.f32.mrb[0].mxu0
  %v979 = vadd.f32 0.0, %v978
  %v980 = vpop.f32.mrb[0].mxu0
  %v981 = vadd.f32 0.0, %v980
  %v982 = vpop.f32.mrb[0].mxu0
  %v983 = vadd.f32 0.0, %v982
  %v984 = vpop.f32.mrb[0].mxu0
  %v985 = vadd.f32 0.0, %v984
  %986 = vmatprep.mubr.bf16.mxu0 0
  %987 = vmatmul.mubr.bf16.gmra.mrb[0].mxu0 %v352
  %v988 = vpop.f32.mrb[0].mxu0
  %v989 = vadd.f32 0.0, %v988
  %v990 = vpop.f32.mrb[0].mxu0
  %v991 = vadd.f32 0.0, %v990
  %v992 = vpop.f32.mrb[0].mxu0
  %v993 = vadd.f32 0.0, %v992
  %v994 = vpop.f32.mrb[0].mxu0
  %v995 = vadd.f32 0.0, %v994
  %996 = vmatprep.mubr.bf16.mxu0 0
  %997 = vmatmul.mubr.bf16.gmra.mrb[0].mxu0 %v355
  %v998 = vpop.f32.mrb[0].mxu0
  %v999 = vadd.f32 0.0, %v998
  %v1000 = vpop.f32.mrb[0].mxu0
  %v1001 = vadd.f32 0.0, %v1000
  %v1002 = vpop.f32.mrb[0].mxu0
  %v1003 = vadd.f32 0.0, %v1002
  %v1004 = vpop.f32.mrb[0].mxu0
  %v1005 = vadd.f32 0.0, %v1004
  %1006 = vmatprep.mubr.bf16.mxu0 0
  %1007 = vmatmul.mubr.bf16.gmra.mrb[0].mxu0 %v358
  %v1008 = vpop.f32.mrb[0].mxu0
  %v1009 = vadd.f32 0.0, %v1008
  %v1010 = vpop.f32.mrb[0].mxu0
  %v1011 = vadd.f32 0.0, %v1010
  %v1012 = vpop.f32.mrb[0].mxu0
  %v1013 = vadd.f32 0.0, %v1012
  %v1014 = vpop.f32.mrb[0].mxu0
  %v1015 = vadd.f32 0.0, %v1014
  %1016 = vmatprep.mubr.bf16.mxu0 0
  %1017 = vmatmul.mubr.bf16.gmra.mrb[0].mxu0 %v361
  %v1018 = vpop.f32.mrb[0].mxu0
  %v1019 = vadd.f32 0.0, %v1018
  %v1020 = vpop.f32.mrb[0].mxu0
  %v1021 = vadd.f32 0.0, %v1020
  %v1022 = vpop.f32.mrb[0].mxu0
  %v1023 = vadd.f32 0.0, %v1022
  %v1024 = vpop.f32.mrb[0].mxu0
  %v1025 = vadd.f32 0.0, %v1024
  %1026 = vmatprep.mubr.bf16.mxu0 0
  %1027 = vmatmul.mubr.bf16.gmra.mrb[0].mxu0 %v364
  %v1028 = vpop.f32.mrb[0].mxu0
  %v1029 = vadd.f32 0.0, %v1028
  %v1030 = vpop.f32.mrb[0].mxu0
  %v1031 = vadd.f32 0.0, %v1030
  %v1032 = vpop.f32.mrb[0].mxu0
  %v1033 = vadd.f32 0.0, %v1032
  %v1034 = vpop.f32.mrb[0].mxu0
  %v1035 = vadd.f32 0.0, %v1034
  %1036 = vmatprep.mubr.bf16.mxu0 0
  %1037 = vmatmul.mubr.bf16.gmra.mrb[0].mxu0 %v367
  %v1038 = vpop.f32.mrb[0].mxu0
  %v1039 = vadd.f32 0.0, %v1038
  %v1040 = vpop.f32.mrb[0].mxu0
  %v1041 = vadd.f32 0.0, %v1040
  %v1042 = vpop.f32.mrb[0].mxu0
  %v1043 = vadd.f32 0.0, %v1042
  %v1044 = vpop.f32.mrb[0].mxu0
  %v1045 = vadd.f32 0.0, %v1044
  %1046 = vmatprep.mubr.bf16.mxu0 0
  %1047 = vmatmul.mubr.bf16.gmra.mrb[0].mxu0 %v370
  %v1048 = vpop.f32.mrb[0].mxu0
  %v1049 = vadd.f32 0.0, %v1048
  %v1050 = vpop.f32.mrb[0].mxu0
  %v1051 = vadd.f32 0.0, %v1050
  %v1052 = vpop.f32.mrb[0].mxu0
  %v1053 = vadd.f32 0.0, %v1052
  %v1054 = vpop.f32.mrb[0].mxu0
  %v1055 = vadd.f32 0.0, %v1054
  %1056 = vmatprep.mubr.bf16.mxu0 0
  %1057 = vmatmul.mubr.bf16.gmra.mrb[0].mxu0 %v373
  %v1058 = vpop.f32.mrb[0].mxu0
  %v1059 = vadd.f32 0.0, %v1058
  %v1060 = vpop.f32.mrb[0].mxu0
  %v1061 = vadd.f32 0.0, %v1060
  %v1062 = vpop.f32.mrb[0].mxu0
  %v1063 = vadd.f32 0.0, %v1062
  %v1064 = vpop.f32.mrb[0].mxu0
  %v1065 = vadd.f32 0.0, %v1064
  %1066 = vmatprep.mubr.bf16.mxu0 0
  %1067 = vmatmul.mubr.bf16.gmra.mrb[0].mxu0 %v376
  %v1068 = vpop.f32.mrb[0].mxu0
  %v1069 = vadd.f32 0.0, %v1068
  %v1070 = vpop.f32.mrb[0].mxu0
  %v1071 = vadd.f32 0.0, %v1070
  %v1072 = vpop.f32.mrb[0].mxu0
  %v1073 = vadd.f32 0.0, %v1072
  %v1074 = vpop.f32.mrb[0].mxu0
  %v1075 = vadd.f32 0.0, %v1074
  %1076 = vmatprep.mubr.bf16.mxu0 0
  %1077 = vmatmul.mubr.bf16.gmra.mrb[0].mxu0 %v379
  %v1078 = vpop.f32.mrb[0].mxu0
  %v1079 = vadd.f32 0.0, %v1078
  %v1080 = vpop.f32.mrb[0].mxu0
  %v1081 = vadd.f32 0.0, %v1080
  %v1082 = vpop.f32.mrb[0].mxu0
  %v1083 = vadd.f32 0.0, %v1082
  %v1084 = vpop.f32.mrb[0].mxu0
  %v1085 = vadd.f32 0.0, %v1084
  %1086 = vdwg.mxu0
  %1087 = vst [vmem:[%s2] sm:$0xff] %v416
  %1088 = vst [vmem:[%s2 + $0x8] sm:$0xff] %v418
  %1089 = vst [vmem:[%s2 + $0x10] sm:$0xff] %v769
  %1090 = vst [vmem:[%s2 + $0x18] sm:$0xff] %v771
  %1091 = vst [vmem:[%s2 + $0x20] sm:$0xff] %v420
  %1092 = vst [vmem:[%s2 + $0x28] sm:$0xff] %v422
  %1093 = vst [vmem:[%s2 + $0x30] sm:$0xff] %v773
  %1094 = vst [vmem:[%s2 + $0x38] sm:$0xff] %v775
  %1095 = vst [vmem:[%s2 + $0x40] sm:$0xff] %v426
  %1096 = vst [vmem:[%s2 + $0x48] sm:$0xff] %v428
  %1097 = vst [vmem:[%s2 + $0x50] sm:$0xff] %v779
  %1098 = vst [vmem:[%s2 + $0x58] sm:$0xff] %v781
  %1099 = vst [vmem:[%s2 + $0x60] sm:$0xff] %v430
  %1100 = vst [vmem:[%s2 + $0x68] sm:$0xff] %v432
  %1101 = vst [vmem:[%s2 + $0x70] sm:$0xff] %v783
  %1102 = vst [vmem:[%s2 + $0x78] sm:$0xff] %v785
  %1103 = vst [vmem:[%s2 + $0x80] sm:$0xff] %v436
  %1104 = vst [vmem:[%s2 + $0x88] sm:$0xff] %v438
  %1105 = vst [vmem:[%s2 + $0x90] sm:$0xff] %v789
  %1106 = vst [vmem:[%s2 + $0x98] sm:$0xff] %v791
  %1107 = vst [vmem:[%s2 + $0xa0] sm:$0xff] %v440
  %1108 = vst [vmem:[%s2 + $0xa8] sm:$0xff] %v442
  %1109 = vst [vmem:[%s2 + $0xb0] sm:$0xff] %v793
  %1110 = vst [vmem:[%s2 + $0xb8] sm:$0xff] %v795
  %1111 = vst [vmem:[%s2 + $0xc0] sm:$0xff] %v446
  %1112 = vst [vmem:[%s2 + $0xc8] sm:$0xff] %v448
  %1113 = vst [vmem:[%s2 + $0xd0] sm:$0xff] %v799
  %1114 = vst [vmem:[%s2 + $0xd8] sm:$0xff] %v801
  %1115 = vst [vmem:[%s2 + $0xe0] sm:$0xff] %v450
  %1116 = vst [vmem:[%s2 + $0xe8] sm:$0xff] %v452
  %1117 = vst [vmem:[%s2 + $0xf0] sm:$0xff] %v803
  %1118 = vst [vmem:[%s2 + $0xf8] sm:$0xff] %v805
  %1119 = vst [vmem:[%s2 + $0x100] sm:$0xff] %v456
  %1120 = vst [vmem:[%s2 + $0x108] sm:$0xff] %v458
  %1121 = vst [vmem:[%s2 + $0x110] sm:$0xff] %v809
  %1122 = vst [vmem:[%s2 + $0x118] sm:$0xff] %v811
  %1123 = vst [vmem:[%s2 + $0x120] sm:$0xff] %v460
  %1124 = vst [vmem:[%s2 + $0x128] sm:$0xff] %v462
  %1125 = vst [vmem:[%s2 + $0x130] sm:$0xff] %v813
  %1126 = vst [vmem:[%s2 + $0x138] sm:$0xff] %v815
  %1127 = vst [vmem:[%s2 + $0x140] sm:$0xff] %v466
  %1128 = vst [vmem:[%s2 + $0x148] sm:$0xff] %v468
  %1129 = vst [vmem:[%s2 + $0x150] sm:$0xff] %v819
  %1130 = vst [vmem:[%s2 + $0x158] sm:$0xff] %v821
  %1131 = vst [vmem:[%s2 + $0x160] sm:$0xff] %v470
  %1132 = vst [vmem:[%s2 + $0x168] sm:$0xff] %v472
  %1133 = vst [vmem:[%s2 + $0x170] sm:$0xff] %v823
  %1134 = vst [vmem:[%s2 + $0x178] sm:$0xff] %v825
  %1135 = vst [vmem:[%s2 + $0x180] sm:$0xff] %v476
  %1136 = vst [vmem:[%s2 + $0x188] sm:$0xff] %v478
  %1137 = vst [vmem:[%s2 + $0x190] sm:$0xff] %v829
  %1138 = vst [vmem:[%s2 + $0x198] sm:$0xff] %v831
  %1139 = vst [vmem:[%s2 + $0x1a0] sm:$0xff] %v480
  %1140 = vst [vmem:[%s2 + $0x1a8] sm:$0xff] %v482
  %1141 = vst [vmem:[%s2 + $0x1b0] sm:$0xff] %v833
  %1142 = vst [vmem:[%s2 + $0x1b8] sm:$0xff] %v835
  %1143 = vst [vmem:[%s2 + $0x1c0] sm:$0xff] %v486
  %1144 = vst [vmem:[%s2 + $0x1c8] sm:$0xff] %v488
  %1145 = vst [vmem:[%s2 + $0x1d0] sm:$0xff] %v839
  %1146 = vst [vmem:[%s2 + $0x1d8] sm:$0xff] %v841
  %1147 = vst [vmem:[%s2 + $0x1e0] sm:$0xff] %v490
  %1148 = vst [vmem:[%s2 + $0x1e8] sm:$0xff] %v492
  %1149 = vst [vmem:[%s2 + $0x1f0] sm:$0xff] %v843
  %1150 = vst [vmem:[%s2 + $0x1f8] sm:$0xff] %v845
  %1151 = vst [vmem:[%s2 + $0x200] sm:$0xff] %v496
  %1152 = vst [vmem:[%s2 + $0x208] sm:$0xff] %v498
  %1153 = vst [vmem:[%s2 + $0x210] sm:$0xff] %v849
  %1154 = vst [vmem:[%s2 + $0x218] sm:$0xff] %v851
  %1155 = vst [vmem:[%s2 + $0x220] sm:$0xff] %v500
  %1156 = vst [vmem:[%s2 + $0x228] sm:$0xff] %v502
  %1157 = vst [vmem:[%s2 + $0x230] sm:$0xff] %v853
  %1158 = vst [vmem:[%s2 + $0x238] sm:$0xff] %v855
  %1159 = vst [vmem:[%s2 + $0x240] sm:$0xff] %v506
  %1160 = vst [vmem:[%s2 + $0x248] sm:$0xff] %v508
  %1161 = vst [vmem:[%s2 + $0x250] sm:$0xff] %v859
  %1162 = vst [vmem:[%s2 + $0x258] sm:$0xff] %v861
  %1163 = vst [vmem:[%s2 + $0x260] sm:$0xff] %v510
  %1164 = vst [vmem:[%s2 + $0x268] sm:$0xff] %v512
  %1165 = vst [vmem:[%s2 + $0x270] sm:$0xff] %v863
  %1166 = vst [vmem:[%s2 + $0x278] sm:$0xff] %v865
  %1167 = vst [vmem:[%s2 + $0x280] sm:$0xff] %v516
  %1168 = vst [vmem:[%s2 + $0x288] sm:$0xff] %v518
  %1169 = vst [vmem:[%s2 + $0x290] sm:$0xff] %v869
  %1170 = vst [vmem:[%s2 + $0x298] sm:$0xff] %v871
  %1171 = vst [vmem:[%s2 + $0x2a0] sm:$0xff] %v520
  %1172 = vst [vmem:[%s2 + $0x2a8] sm:$0xff] %v522
  %1173 = vst [vmem:[%s2 + $0x2b0] sm:$0xff] %v873
  %1174 = vst [vmem:[%s2 + $0x2b8] sm:$0xff] %v875
  %1175 = vst [vmem:[%s2 + $0x2c0] sm:$0xff] %v526
  %1176 = vst [vmem:[%s2 + $0x2c8] sm:$0xff] %v528
  %1177 = vst [vmem:[%s2 + $0x2d0] sm:$0xff] %v879
  %1178 = vst [vmem:[%s2 + $0x2d8] sm:$0xff] %v881
  %1179 = vst [vmem:[%s2 + $0x2e0] sm:$0xff] %v530
  %1180 = vst [vmem:[%s2 + $0x2e8] sm:$0xff] %v532
  %1181 = vst [vmem:[%s2 + $0x2f0] sm:$0xff] %v883
  %1182 = vst [vmem:[%s2 + $0x2f8] sm:$0xff] %v885
  %1183 = vst [vmem:[%s2 + $0x300] sm:$0xff] %v536
  %1184 = vst [vmem:[%s2 + $0x308] sm:$0xff] %v538
  %1185 = vst [vmem:[%s2 + $0x310] sm:$0xff] %v889
  %1186 = vst [vmem:[%s2 + $0x318] sm:$0xff] %v891
  %1187 = vst [vmem:[%s2 + $0x320] sm:$0xff] %v540
  %1188 = vst [vmem:[%s2 + $0x328] sm:$0xff] %v542
  %1189 = vst [vmem:[%s2 + $0x330] sm:$0xff] %v893
  %1190 = vst [vmem:[%s2 + $0x338] sm:$0xff] %v895
  %1191 = vst [vmem:[%s2 + $0x340] sm:$0xff] %v546
  %1192 = vst [vmem:[%s2 + $0x348] sm:$0xff] %v548
  %1193 = vst [vmem:[%s2 + $0x350] sm:$0xff] %v899
  %1194 = vst [vmem:[%s2 + $0x358] sm:$0xff] %v901
  %1195 = vst [vmem:[%s2 + $0x360] sm:$0xff] %v550
  %1196 = vst [vmem:[%s2 + $0x368] sm:$0xff] %v552
  %1197 = vst [vmem:[%s2 + $0x370] sm:$0xff] %v903
  %1198 = vst [vmem:[%s2 + $0x378] sm:$0xff] %v905
  %1199 = vst [vmem:[%s2 + $0x380] sm:$0xff] %v556
  %1200 = vst [vmem:[%s2 + $0x388] sm:$0xff] %v558
  %1201 = vst [vmem:[%s2 + $0x390] sm:$0xff] %v909
  %1202 = vst [vmem:[%s2 + $0x398] sm:$0xff] %v911
  %1203 = vst [vmem:[%s2 + $0x3a0] sm:$0xff] %v560
  %1204 = vst [vmem:[%s2 + $0x3a8] sm:$0xff] %v562
  %1205 = vst [vmem:[%s2 + $0x3b0] sm:$0xff] %v913
  %1206 = vst [vmem:[%s2 + $0x3b8] sm:$0xff] %v915
  %1207 = vst [vmem:[%s2 + $0x3c0] sm:$0xff] %v566
  %1208 = vst [vmem:[%s2 + $0x3c8] sm:$0xff] %v568
  %1209 = vst [vmem:[%s2 + $0x3d0] sm:$0xff] %v919
  %1210 = vst [vmem:[%s2 + $0x3d8] sm:$0xff] %v921
  %1211 = vst [vmem:[%s2 + $0x3e0] sm:$0xff] %v570
  %1212 = vst [vmem:[%s2 + $0x3e8] sm:$0xff] %v572
  %1213 = vst [vmem:[%s2 + $0x3f0] sm:$0xff] %v923
  %1214 = vst [vmem:[%s2 + $0x3f8] sm:$0xff] %v925
  %1215 = vst [vmem:[%s2 + $0x400] sm:$0xff] %v576
  %1216 = vst [vmem:[%s2 + $0x408] sm:$0xff] %v578
  %1217 = vst [vmem:[%s2 + $0x410] sm:$0xff] %v929
  %1218 = vst [vmem:[%s2 + $0x418] sm:$0xff] %v931
  %1219 = vst [vmem:[%s2 + $0x420] sm:$0xff] %v580
  %1220 = vst [vmem:[%s2 + $0x428] sm:$0xff] %v582
  %1221 = vst [vmem:[%s2 + $0x430] sm:$0xff] %v933
  %1222 = vst [vmem:[%s2 + $0x438] sm:$0xff] %v935
  %1223 = vst [vmem:[%s2 + $0x440] sm:$0xff] %v586
  %1224 = vst [vmem:[%s2 + $0x448] sm:$0xff] %v588
  %1225 = vst [vmem:[%s2 + $0x450] sm:$0xff] %v939
  %1226 = vst [vmem:[%s2 + $0x458] sm:$0xff] %v941
  %1227 = vst [vmem:[%s2 + $0x460] sm:$0xff] %v590
  %1228 = vst [vmem:[%s2 + $0x468] sm:$0xff] %v592
  %1229 = vst [vmem:[%s2 + $0x470] sm:$0xff] %v943
  %1230 = vst [vmem:[%s2 + $0x478] sm:$0xff] %v945
  %1231 = vst [vmem:[%s2 + $0x480] sm:$0xff] %v596
  %1232 = vst [vmem:[%s2 + $0x488] sm:$0xff] %v598
  %1233 = vst [vmem:[%s2 + $0x490] sm:$0xff] %v949
  %1234 = vst [vmem:[%s2 + $0x498] sm:$0xff] %v951
  %1235 = vst [vmem:[%s2 + $0x4a0] sm:$0xff] %v600
  %1236 = vst [vmem:[%s2 + $0x4a8] sm:$0xff] %v602
  %1237 = vst [vmem:[%s2 + $0x4b0] sm:$0xff] %v953
  %1238 = vst [vmem:[%s2 + $0x4b8] sm:$0xff] %v955
  %1239 = vst [vmem:[%s2 + $0x4c0] sm:$0xff] %v606
  %1240 = vst [vmem:[%s2 + $0x4c8] sm:$0xff] %v608
  %1241 = vst [vmem:[%s2 + $0x4d0] sm:$0xff] %v959
  %1242 = vst [vmem:[%s2 + $0x4d8] sm:$0xff] %v961
  %1243 = vst [vmem:[%s2 + $0x4e0] sm:$0xff] %v610
  %1244 = vst [vmem:[%s2 + $0x4e8] sm:$0xff] %v612
  %1245 = vst [vmem:[%s2 + $0x4f0] sm:$0xff] %v963
  %1246 = vst [vmem:[%s2 + $0x4f8] sm:$0xff] %v965
  %1247 = vst [vmem:[%s2 + $0x500] sm:$0xff] %v616
  %1248 = vst [vmem:[%s2 + $0x508] sm:$0xff] %v618
  %1249 = vst [vmem:[%s2 + $0x510] sm:$0xff] %v969
  %1250 = vst [vmem:[%s2 + $0x518] sm:$0xff] %v971
  %1251 = vst [vmem:[%s2 + $0x520] sm:$0xff] %v620
  %1252 = vst [vmem:[%s2 + $0x528] sm:$0xff] %v622
  %1253 = vst [vmem:[%s2 + $0x530] sm:$0xff] %v973
  %1254 = vst [vmem:[%s2 + $0x538] sm:$0xff] %v975
  %1255 = vst [vmem:[%s2 + $0x540] sm:$0xff] %v626
  %1256 = vst [vmem:[%s2 + $0x548] sm:$0xff] %v628
  %1257 = vst [vmem:[%s2 + $0x550] sm:$0xff] %v979
  %1258 = vst [vmem:[%s2 + $0x558] sm:$0xff] %v981
  %1259 = vst [vmem:[%s2 + $0x560] sm:$0xff] %v630
  %1260 = vst [vmem:[%s2 + $0x568] sm:$0xff] %v632
  %1261 = vst [vmem:[%s2 + $0x570] sm:$0xff] %v983
  %1262 = vst [vmem:[%s2 + $0x578] sm:$0xff] %v985
  %1263 = vst [vmem:[%s2 + $0x580] sm:$0xff] %v636
  %1264 = vst [vmem:[%s2 + $0x588] sm:$0xff] %v638
  %1265 = vst [vmem:[%s2 + $0x590] sm:$0xff] %v989
  %1266 = vst [vmem:[%s2 + $0x598] sm:$0xff] %v991
  %1267 = vst [vmem:[%s2 + $0x5a0] sm:$0xff] %v640
  %1268 = vst [vmem:[%s2 + $0x5a8] sm:$0xff] %v642
  %1269 = vst [vmem:[%s2 + $0x5b0] sm:$0xff] %v993
  %1270 = vst [vmem:[%s2 + $0x5b8] sm:$0xff] %v995
  %1271 = vst [vmem:[%s2 + $0x5c0] sm:$0xff] %v646
  %1272 = vst [vmem:[%s2 + $0x5c8] sm:$0xff] %v648
  %1273 = vst [vmem:[%s2 + $0x5d0] sm:$0xff] %v999
  %1274 = vst [vmem:[%s2 + $0x5d8] sm:$0xff] %v1001
  %1275 = vst [vmem:[%s2 + $0x5e0] sm:$0xff] %v650
  %1276 = vst [vmem:[%s2 + $0x5e8] sm:$0xff] %v652
  %1277 = vst [vmem:[%s2 + $0x5f0] sm:$0xff] %v1003
  %1278 = vst [vmem:[%s2 + $0x5f8] sm:$0xff] %v1005
  %1279 = vst [vmem:[%s2 + $0x600] sm:$0xff] %v656
  %1280 = vst [vmem:[%s2 + $0x608] sm:$0xff] %v658
  %1281 = vst [vmem:[%s2 + $0x610] sm:$0xff] %v1009
  %1282 = vst [vmem:[%s2 + $0x618] sm:$0xff] %v1011
  %1283 = vst [vmem:[%s2 + $0x620] sm:$0xff] %v660
  %1284 = vst [vmem:[%s2 + $0x628] sm:$0xff] %v662
  %1285 = vst [vmem:[%s2 + $0x630] sm:$0xff] %v1013
  %1286 = vst [vmem:[%s2 + $0x638] sm:$0xff] %v1015
  %1287 = vst [vmem:[%s2 + $0x640] sm:$0xff] %v666
  %1288 = vst [vmem:[%s2 + $0x648] sm:$0xff] %v668
  %1289 = vst [vmem:[%s2 + $0x650] sm:$0xff] %v1019
  %1290 = vst [vmem:[%s2 + $0x658] sm:$0xff] %v1021
  %1291 = vst [vmem:[%s2 + $0x660] sm:$0xff] %v670
  %1292 = vst [vmem:[%s2 + $0x668] sm:$0xff] %v672
  %1293 = vst [vmem:[%s2 + $0x670] sm:$0xff] %v1023
  %1294 = vst [vmem:[%s2 + $0x678] sm:$0xff] %v1025
  %1295 = vst [vmem:[%s2 + $0x680] sm:$0xff] %v676
  %1296 = vst [vmem:[%s2 + $0x688] sm:$0xff] %v678
  %1297 = vst [vmem:[%s2 + $0x690] sm:$0xff] %v1029
  %1298 = vst [vmem:[%s2 + $0x698] sm:$0xff] %v1031
  %1299 = vst [vmem:[%s2 + $0x6a0] sm:$0xff] %v680
  %1300 = vst [vmem:[%s2 + $0x6a8] sm:$0xff] %v682
  %1301 = vst [vmem:[%s2 + $0x6b0] sm:$0xff] %v1033
  %1302 = vst [vmem:[%s2 + $0x6b8] sm:$0xff] %v1035
  %1303 = vst [vmem:[%s2 + $0x6c0] sm:$0xff] %v686
  %1304 = vst [vmem:[%s2 + $0x6c8] sm:$0xff] %v688
  %1305 = vst [vmem:[%s2 + $0x6d0] sm:$0xff] %v1039
  %1306 = vst [vmem:[%s2 + $0x6d8] sm:$0xff] %v1041
  %1307 = vst [vmem:[%s2 + $0x6e0] sm:$0xff] %v690
  %1308 = vst [vmem:[%s2 + $0x6e8] sm:$0xff] %v692
  %1309 = vst [vmem:[%s2 + $0x6f0] sm:$0xff] %v1043
  %1310 = vst [vmem:[%s2 + $0x6f8] sm:$0xff] %v1045
  %1311 = vst [vmem:[%s2 + $0x700] sm:$0xff] %v696
  %1312 = vst [vmem:[%s2 + $0x708] sm:$0xff] %v698
  %1313 = vst [vmem:[%s2 + $0x710] sm:$0xff] %v1049
  %1314 = vst [vmem:[%s2 + $0x718] sm:$0xff] %v1051
  %1315 = vst [vmem:[%s2 + $0x720] sm:$0xff] %v700
  %1316 = vst [vmem:[%s2 + $0x728] sm:$0xff] %v702
  %1317 = vst [vmem:[%s2 + $0x730] sm:$0xff] %v1053
  %1318 = vst [vmem:[%s2 + $0x738] sm:$0xff] %v1055
  %1319 = vst [vmem:[%s2 + $0x740] sm:$0xff] %v706
  %1320 = vst [vmem:[%s2 + $0x748] sm:$0xff] %v708
  %1321 = vst [vmem:[%s2 + $0x750] sm:$0xff] %v1059
  %1322 = vst [vmem:[%s2 + $0x758] sm:$0xff] %v1061
  %1323 = vst [vmem:[%s2 + $0x760] sm:$0xff] %v710
  %1324 = vst [vmem:[%s2 + $0x768] sm:$0xff] %v712
  %1325 = vst [vmem:[%s2 + $0x770] sm:$0xff] %v1063
  %1326 = vst [vmem:[%s2 + $0x778] sm:$0xff] %v1065
  %1327 = vst [vmem:[%s2 + $0x780] sm:$0xff] %v716
  %1328 = vst [vmem:[%s2 + $0x788] sm:$0xff] %v718
  %1329 = vst [vmem:[%s2 + $0x790] sm:$0xff] %v1069
  %1330 = vst [vmem:[%s2 + $0x798] sm:$0xff] %v1071
  %1331 = vst [vmem:[%s2 + $0x7a0] sm:$0xff] %v720
  %1332 = vst [vmem:[%s2 + $0x7a8] sm:$0xff] %v722
  %1333 = vst [vmem:[%s2 + $0x7b0] sm:$0xff] %v1073
  %1334 = vst [vmem:[%s2 + $0x7b8] sm:$0xff] %v1075
  %1335 = vst [vmem:[%s2 + $0x7c0] sm:$0xff] %v726
  %1336 = vst [vmem:[%s2 + $0x7c8] sm:$0xff] %v728
  %1337 = vst [vmem:[%s2 + $0x7d0] sm:$0xff] %v1079
  %1338 = vst [vmem:[%s2 + $0x7d8] sm:$0xff] %v1081
  %1339 = vst [vmem:[%s2 + $0x7e0] sm:$0xff] %v730
  %1340 = vst [vmem:[%s2 + $0x7e8] sm:$0xff] %v732
  %1341 = vst [vmem:[%s2 + $0x7f0] sm:$0xff] %v1083
  %1342 = vst [vmem:[%s2 + $0x7f8] sm:$0xff] %v1085
  // Predicated region
  $region10: #{decoder_conv_forward.8} parent=0 // pred_check
    _
  $region11: #{decoder_conv_forward.8} parent=0 // pred_check_branch
    %1344 = sbr.rel (0) target = $region13
  $region12: #{decoder_conv_forward.8} parent=0 // pred_region
    _
  $region13: #{decoder_conv_forward.8} parent=0 // pred_fallthru
    _
  // Predicated region
  $region14: #{decoder_conv_forward.8} parent=0 // pred_check
    _
  $region15: #{decoder_conv_forward.8} parent=0 // pred_check_branch
    %1346 = sbr.rel (0) target = $region17
  $region16: #{decoder_conv_forward.8} parent=0 // pred_region
    _
  $region17: #{decoder_conv_forward.8} parent=0 // pred_fallthru
    _

// kernel: decoder_conv_forward.9
$region0: #{decoder_conv_forward.9}
  #allocation0 [shape = 'u32[]', space=smem, size = 0x4, offset = 0x4, fixed_abs, tag = 'smem constant byte address 0x4 - core index']
  #allocation1 [shape = 'u32[144,128]{1,0:T(1,128)}', space=vmem, size = 0x12000, scoped, tag = 'internal scratch']
  %s0 = inlined_call_operand.vmem [shape: bf16[8,1024], index: 0, kind: input, shape index: {}]
  %s1 = inlined_call_operand.vmem [shape: bf16[1024,1024], index: 1, kind: input, shape index: {}]
  %s2 = inlined_call_operand.vmem [shape: f32[1,1024], index: 2, kind: input, shape index: {}]
  %s3 = inlined_call_operand.vmem [shape: f32[8,1024], index: 3, kind: output, shape index: {}]
  %s4 = sld [smem:[#allocation0]]
  $region22: #{decoder_conv_forward.9} parent=0
    _
  %s6 = ssub.s32 1, %s4
  %s7 = scalar_select 0, %s6, %s4
  // Predicated region
  $region2: #{decoder_conv_forward.9} parent=0 // pred_check
    _
  $region3: #{decoder_conv_forward.9} parent=0 // pred_check_branch
    %9 = sbr.rel (0) target = $region5
  $region4: #{decoder_conv_forward.9} parent=0 // pred_region
    _
  $region5: #{decoder_conv_forward.9} parent=0 // pred_fallthru
    _
  // Predicated region
  $region6: #{decoder_conv_forward.9} parent=0 // pred_check
    _
  $region7: #{decoder_conv_forward.9} parent=0 // pred_check_branch
    %11 = sbr.rel (0) target = $region9
  $region8: #{decoder_conv_forward.9} parent=0 // pred_region
    _
  $region9: #{decoder_conv_forward.9} parent=0 // pred_fallthru
    _
  // Predicated region
  $region10: #{decoder_conv_forward.9} parent=0 // pred_check
    _
  $region11: #{decoder_conv_forward.9} parent=0 // pred_check_branch
    %13 = sbr.rel (0) target = $region13
  $region12: #{decoder_conv_forward.9} parent=0 // pred_region
    _
  $region13: #{decoder_conv_forward.9} parent=0 // pred_fallthru
    _
  %v14 = vld [vmem:[%s0] sm:$0xff]
  %v15 = vld [vmem:[%s0 + $0x8] sm:$0xff]
  %v16 = vld [vmem:[%s0 + $0x10] sm:$0xff]
  %v17 = vld [vmem:[%s0 + $0x18] sm:$0xff]
  %v18 = vld [vmem:[%s1] sm:$0xff]
  %v19 = vld [vmem:[%s1 + $0x8] sm:$0xff]
  %v20 = vld [vmem:[%s1 + $0x10] sm:$0xff]
  %v21 = vld [vmem:[%s1 + $0x18] sm:$0xff]
  %v22 = vld [vmem:[%s1 + $0x20] sm:$0xff]
  %v23 = vld [vmem:[%s1 + $0x28] sm:$0xff]
  %v24 = vld [vmem:[%s1 + $0x30] sm:$0xff]
  %v25 = vld [vmem:[%s1 + $0x38] sm:$0xff]
  %v26 = vld [vmem:[%s1 + $0x40] sm:$0xff]
  %v27 = vld [vmem:[%s1 + $0x48] sm:$0xff]
  %v28 = vld [vmem:[%s1 + $0x50] sm:$0xff]
  %v29 = vld [vmem:[%s1 + $0x58] sm:$0xff]
  %v30 = vld [vmem:[%s1 + $0x60] sm:$0xff]
  %v31 = vld [vmem:[%s1 + $0x68] sm:$0xff]
  %v32 = vld [vmem:[%s1 + $0x70] sm:$0xff]
  %v33 = vld [vmem:[%s1 + $0x78] sm:$0xff]
  %v34 = vld [vmem:[%s1 + $0x80] sm:$0xff]
  %v35 = vld [vmem:[%s1 + $0x88] sm:$0xff]
  %v36 = vld [vmem:[%s1 + $0x90] sm:$0xff]
  %v37 = vld [vmem:[%s1 + $0x98] sm:$0xff]
  %v38 = vld [vmem:[%s1 + $0xa0] sm:$0xff]
  %v39 = vld [vmem:[%s1 + $0xa8] sm:$0xff]
  %v40 = vld [vmem:[%s1 + $0xb0] sm:$0xff]
  %v41 = vld [vmem:[%s1 + $0xb8] sm:$0xff]
  %v42 = vld [vmem:[%s1 + $0xc0] sm:$0xff]
  %v43 = vld [vmem:[%s1 + $0xc8] sm:$0xff]
  %v44 = vld [vmem:[%s1 + $0xd0] sm:$0xff]
  %v45 = vld [vmem:[%s1 + $0xd8] sm:$0xff]
  %v46 = vld [vmem:[%s1 + $0xe0] sm:$0xff]
  %v47 = vld [vmem:[%s1 + $0xe8] sm:$0xff]
  %v48 = vld [vmem:[%s1 + $0xf0] sm:$0xff]
  %v49 = vld [vmem:[%s1 + $0xf8] sm:$0xff]
  %v50 = vld [vmem:[%s1 + $0x100] sm:$0xff]
  %v51 = vld [vmem:[%s1 + $0x108] sm:$0xff]
  %v52 = vld [vmem:[%s1 + $0x110] sm:$0xff]
  %v53 = vld [vmem:[%s1 + $0x118] sm:$0xff]
  %v54 = vld [vmem:[%s1 + $0x120] sm:$0xff]
  %v55 = vld [vmem:[%s1 + $0x128] sm:$0xff]
  %v56 = vld [vmem:[%s1 + $0x130] sm:$0xff]
  %v57 = vld [vmem:[%s1 + $0x138] sm:$0xff]
  %v58 = vld [vmem:[%s1 + $0x140] sm:$0xff]
  %v59 = vld [vmem:[%s1 + $0x148] sm:$0xff]
  %v60 = vld [vmem:[%s1 + $0x150] sm:$0xff]
  %v61 = vld [vmem:[%s1 + $0x158] sm:$0xff]
  %v62 = vld [vmem:[%s1 + $0x160] sm:$0xff]
  %v63 = vld [vmem:[%s1 + $0x168] sm:$0xff]
  %v64 = vld [vmem:[%s1 + $0x170] sm:$0xff]
  %v65 = vld [vmem:[%s1 + $0x178] sm:$0xff]
  %v66 = vld [vmem:[%s1 + $0x180] sm:$0xff]
  %v67 = vld [vmem:[%s1 + $0x188] sm:$0xff]
  %v68 = vld [vmem:[%s1 + $0x190] sm:$0xff]
  %v69 = vld [vmem:[%s1 + $0x198] sm:$0xff]
  %v70 = vld [vmem:[%s1 + $0x1a0] sm:$0xff]
  %v71 = vld [vmem:[%s1 + $0x1a8] sm:$0xff]
  %v72 = vld [vmem:[%s1 + $0x1b0] sm:$0xff]
  %v73 = vld [vmem:[%s1 + $0x1b8] sm:$0xff]
  %v74 = vld [vmem:[%s1 + $0x1c0] sm:$0xff]
  %v75 = vld [vmem:[%s1 + $0x1c8] sm:$0xff]
  %v76 = vld [vmem:[%s1 + $0x1d0] sm:$0xff]
  %v77 = vld [vmem:[%s1 + $0x1d8] sm:$0xff]
  %v78 = vld [vmem:[%s1 + $0x1e0] sm:$0xff]
  %v79 = vld [vmem:[%s1 + $0x1e8] sm:$0xff]
  %v80 = vld [vmem:[%s1 + $0x1f0] sm:$0xff]
  %v81 = vld [vmem:[%s1 + $0x1f8] sm:$0xff]
  %v82 = vld [vmem:[%s1 + $0x200] sm:$0xff]
  %v83 = vld [vmem:[%s1 + $0x208] sm:$0xff]
  %v84 = vld [vmem:[%s1 + $0x210] sm:$0xff]
  %v85 = vld [vmem:[%s1 + $0x218] sm:$0xff]
  %v86 = vld [vmem:[%s1 + $0x220] sm:$0xff]
  %v87 = vld [vmem:[%s1 + $0x228] sm:$0xff]
  %v88 = vld [vmem:[%s1 + $0x230] sm:$0xff]
  %v89 = vld [vmem:[%s1 + $0x238] sm:$0xff]
  %v90 = vld [vmem:[%s1 + $0x240] sm:$0xff]
  %v91 = vld [vmem:[%s1 + $0x248] sm:$0xff]
  %v92 = vld [vmem:[%s1 + $0x250] sm:$0xff]
  %v93 = vld [vmem:[%s1 + $0x258] sm:$0xff]
  %v94 = vld [vmem:[%s1 + $0x260] sm:$0xff]
  %v95 = vld [vmem:[%s1 + $0x268] sm:$0xff]
  %v96 = vld [vmem:[%s1 + $0x270] sm:$0xff]
  %v97 = vld [vmem:[%s1 + $0x278] sm:$0xff]
  %v98 = vld [vmem:[%s1 + $0x280] sm:$0xff]
  %v99 = vld [vmem:[%s1 + $0x288] sm:$0xff]
  %v100 = vld [vmem:[%s1 + $0x290] sm:$0xff]
  %v101 = vld [vmem:[%s1 + $0x298] sm:$0xff]
  %v102 = vld [vmem:[%s1 + $0x2a0] sm:$0xff]
  %v103 = vld [vmem:[%s1 + $0x2a8] sm:$0xff]
  %v104 = vld [vmem:[%s1 + $0x2b0] sm:$0xff]
  %v105 = vld [vmem:[%s1 + $0x2b8] sm:$0xff]
  %v106 = vld [vmem:[%s1 + $0x2c0] sm:$0xff]
  %v107 = vld [vmem:[%s1 + $0x2c8] sm:$0xff]
  %v108 = vld [vmem:[%s1 + $0x2d0] sm:$0xff]
  %v109 = vld [vmem:[%s1 + $0x2d8] sm:$0xff]
  %v110 = vld [vmem:[%s1 + $0x2e0] sm:$0xff]
  %v111 = vld [vmem:[%s1 + $0x2e8] sm:$0xff]
  %v112 = vld [vmem:[%s1 + $0x2f0] sm:$0xff]
  %v113 = vld [vmem:[%s1 + $0x2f8] sm:$0xff]
  %v114 = vld [vmem:[%s1 + $0x300] sm:$0xff]
  %v115 = vld [vmem:[%s1 + $0x308] sm:$0xff]
  %v116 = vld [vmem:[%s1 + $0x310] sm:$0xff]
  %v117 = vld [vmem:[%s1 + $0x318] sm:$0xff]
  %v118 = vld [vmem:[%s1 + $0x320] sm:$0xff]
  %v119 = vld [vmem:[%s1 + $0x328] sm:$0xff]
  %v120 = vld [vmem:[%s1 + $0x330] sm:$0xff]
  %v121 = vld [vmem:[%s1 + $0x338] sm:$0xff]
  %v122 = vld [vmem:[%s1 + $0x340] sm:$0xff]
  %v123 = vld [vmem:[%s1 + $0x348] sm:$0xff]
  %v124 = vld [vmem:[%s1 + $0x350] sm:$0xff]
  %v125 = vld [vmem:[%s1 + $0x358] sm:$0xff]
  %v126 = vld [vmem:[%s1 + $0x360] sm:$0xff]
  %v127 = vld [vmem:[%s1 + $0x368] sm:$0xff]
  %v128 = vld [vmem:[%s1 + $0x370] sm:$0xff]
  %v129 = vld [vmem:[%s1 + $0x378] sm:$0xff]
  %v130 = vld [vmem:[%s1 + $0x380] sm:$0xff]
  %v131 = vld [vmem:[%s1 + $0x388] sm:$0xff]
  %v132 = vld [vmem:[%s1 + $0x390] sm:$0xff]
  %v133 = vld [vmem:[%s1 + $0x398] sm:$0xff]
  %v134 = vld [vmem:[%s1 + $0x3a0] sm:$0xff]
  %v135 = vld [vmem:[%s1 + $0x3a8] sm:$0xff]
  %v136 = vld [vmem:[%s1 + $0x3b0] sm:$0xff]
  %v137 = vld [vmem:[%s1 + $0x3b8] sm:$0xff]
  %v138 = vld [vmem:[%s1 + $0x3c0] sm:$0xff]
  %v139 = vld [vmem:[%s1 + $0x3c8] sm:$0xff]
  %v140 = vld [vmem:[%s1 + $0x3d0] sm:$0xff]
  %v141 = vld [vmem:[%s1 + $0x3d8] sm:$0xff]
  %v142 = vld [vmem:[%s1 + $0x3e0] sm:$0xff]
  %v143 = vld [vmem:[%s1 + $0x3e8] sm:$0xff]
  %v144 = vld [vmem:[%s1 + $0x3f0] sm:$0xff]
  %v145 = vld [vmem:[%s1 + $0x3f8] sm:$0xff]
  %v146 = vld [vmem:[%s1 + $0x400] sm:$0xff]
  %v147 = vld [vmem:[%s1 + $0x408] sm:$0xff]
  %v148 = vld [vmem:[%s1 + $0x410] sm:$0xff]
  %v149 = vld [vmem:[%s1 + $0x418] sm:$0xff]
  %v150 = vld [vmem:[%s1 + $0x420] sm:$0xff]
  %v151 = vld [vmem:[%s1 + $0x428] sm:$0xff]
  %v152 = vld [vmem:[%s1 + $0x430] sm:$0xff]
  %v153 = vld [vmem:[%s1 + $0x438] sm:$0xff]
  %v154 = vld [vmem:[%s1 + $0x440] sm:$0xff]
  %v155 = vld [vmem:[%s1 + $0x448] sm:$0xff]
  %v156 = vld [vmem:[%s1 + $0x450] sm:$0xff]
  %v157 = vld [vmem:[%s1 + $0x458] sm:$0xff]
  %v158 = vld [vmem:[%s1 + $0x460] sm:$0xff]
  %v159 = vld [vmem:[%s1 + $0x468] sm:$0xff]
  %v160 = vld [vmem:[%s1 + $0x470] sm:$0xff]
  %v161 = vld [vmem:[%s1 + $0x478] sm:$0xff]
  %v162 = vld [vmem:[%s1 + $0x480] sm:$0xff]
  %v163 = vld [vmem:[%s1 + $0x488] sm:$0xff]
  %v164 = vld [vmem:[%s1 + $0x490] sm:$0xff]
  %v165 = vld [vmem:[%s1 + $0x498] sm:$0xff]
  %v166 = vld [vmem:[%s1 + $0x4a0] sm:$0xff]
  %v167 = vld [vmem:[%s1 + $0x4a8] sm:$0xff]
  %v168 = vld [vmem:[%s1 + $0x4b0] sm:$0xff]
  %v169 = vld [vmem:[%s1 + $0x4b8] sm:$0xff]
  %v170 = vld [vmem:[%s1 + $0x4c0] sm:$0xff]
  %v171 = vld [vmem:[%s1 + $0x4c8] sm:$0xff]
  %v172 = vld [vmem:[%s1 + $0x4d0] sm:$0xff]
  %v173 = vld [vmem:[%s1 + $0x4d8] sm:$0xff]
  %v174 = vld [vmem:[%s1 + $0x4e0] sm:$0xff]
  %v175 = vld [vmem:[%s1 + $0x4e8] sm:$0xff]
  %v176 = vld [vmem:[%s1 + $0x4f0] sm:$0xff]
  %v177 = vld [vmem:[%s1 + $0x4f8] sm:$0xff]
  %v178 = vld [vmem:[%s1 + $0x500] sm:$0xff]
  %v179 = vld [vmem:[%s1 + $0x508] sm:$0xff]
  %v180 = vld [vmem:[%s1 + $0x510] sm:$0xff]
  %v181 = vld [vmem:[%s1 + $0x518] sm:$0xff]
  %v182 = vld [vmem:[%s1 + $0x520] sm:$0xff]
  %v183 = vld [vmem:[%s1 + $0x528] sm:$0xff]
  %v184 = vld [vmem:[%s1 + $0x530] sm:$0xff]
  %v185 = vld [vmem:[%s1 + $0x538] sm:$0xff]
  %v186 = vld [vmem:[%s1 + $0x540] sm:$0xff]
  %v187 = vld [vmem:[%s1 + $0x548] sm:$0xff]
  %v188 = vld [vmem:[%s1 + $0x550] sm:$0xff]
  %v189 = vld [vmem:[%s1 + $0x558] sm:$0xff]
  %v190 = vld [vmem:[%s1 + $0x560] sm:$0xff]
  %v191 = vld [vmem:[%s1 + $0x568] sm:$0xff]
  %v192 = vld [vmem:[%s1 + $0x570] sm:$0xff]
  %v193 = vld [vmem:[%s1 + $0x578] sm:$0xff]
  %v194 = vld [vmem:[%s1 + $0x580] sm:$0xff]
  %v195 = vld [vmem:[%s1 + $0x588] sm:$0xff]
  %v196 = vld [vmem:[%s1 + $0x590] sm:$0xff]
  %v197 = vld [vmem:[%s1 + $0x598] sm:$0xff]
  %v198 = vld [vmem:[%s1 + $0x5a0] sm:$0xff]
  %v199 = vld [vmem:[%s1 + $0x5a8] sm:$0xff]
  %v200 = vld [vmem:[%s1 + $0x5b0] sm:$0xff]
  %v201 = vld [vmem:[%s1 + $0x5b8] sm:$0xff]
  %v202 = vld [vmem:[%s1 + $0x5c0] sm:$0xff]
  %v203 = vld [vmem:[%s1 + $0x5c8] sm:$0xff]
  %v204 = vld [vmem:[%s1 + $0x5d0] sm:$0xff]
  %v205 = vld [vmem:[%s1 + $0x5d8] sm:$0xff]
  %v206 = vld [vmem:[%s1 + $0x5e0] sm:$0xff]
  %v207 = vld [vmem:[%s1 + $0x5e8] sm:$0xff]
  %v208 = vld [vmem:[%s1 + $0x5f0] sm:$0xff]
  %v209 = vld [vmem:[%s1 + $0x5f8] sm:$0xff]
  %v210 = vld [vmem:[%s1 + $0x600] sm:$0xff]
  %v211 = vld [vmem:[%s1 + $0x608] sm:$0xff]
  %v212 = vld [vmem:[%s1 + $0x610] sm:$0xff]
  %v213 = vld [vmem:[%s1 + $0x618] sm:$0xff]
  %v214 = vld [vmem:[%s1 + $0x620] sm:$0xff]
  %v215 = vld [vmem:[%s1 + $0x628] sm:$0xff]
  %v216 = vld [vmem:[%s1 + $0x630] sm:$0xff]
  %v217 = vld [vmem:[%s1 + $0x638] sm:$0xff]
  %v218 = vld [vmem:[%s1 + $0x640] sm:$0xff]
  %v219 = vld [vmem:[%s1 + $0x648] sm:$0xff]
  %v220 = vld [vmem:[%s1 + $0x650] sm:$0xff]
  %v221 = vld [vmem:[%s1 + $0x658] sm:$0xff]
  %v222 = vld [vmem:[%s1 + $0x660] sm:$0xff]
  %v223 = vld [vmem:[%s1 + $0x668] sm:$0xff]
  %v224 = vld [vmem:[%s1 + $0x670] sm:$0xff]
  %v225 = vld [vmem:[%s1 + $0x678] sm:$0xff]
  %v226 = vld [vmem:[%s1 + $0x680] sm:$0xff]
  %v227 = vld [vmem:[%s1 + $0x688] sm:$0xff]
  %v228 = vld [vmem:[%s1 + $0x690] sm:$0xff]
  %v229 = vld [vmem:[%s1 + $0x698] sm:$0xff]
  %v230 = vld [vmem:[%s1 + $0x6a0] sm:$0xff]
  %v231 = vld [vmem:[%s1 + $0x6a8] sm:$0xff]
  %v232 = vld [vmem:[%s1 + $0x6b0] sm:$0xff]
  %v233 = vld [vmem:[%s1 + $0x6b8] sm:$0xff]
  %v234 = vld [vmem:[%s1 + $0x6c0] sm:$0xff]
  %v235 = vld [vmem:[%s1 + $0x6c8] sm:$0xff]
  %v236 = vld [vmem:[%s1 + $0x6d0] sm:$0xff]
  %v237 = vld [vmem:[%s1 + $0x6d8] sm:$0xff]
  %v238 = vld [vmem:[%s1 + $0x6e0] sm:$0xff]
  %v239 = vld [vmem:[%s1 + $0x6e8] sm:$0xff]
  %v240 = vld [vmem:[%s1 + $0x6f0] sm:$0xff]
  %v241 = vld [vmem:[%s1 + $0x6f8] sm:$0xff]
  %v242 = vld [vmem:[%s1 + $0x700] sm:$0xff]
  %v243 = vld [vmem:[%s1 + $0x708] sm:$0xff]
  %v244 = vld [vmem:[%s1 + $0x710] sm:$0xff]
  %v245 = vld [vmem:[%s1 + $0x718] sm:$0xff]
  %v246 = vld [vmem:[%s1 + $0x720] sm:$0xff]
  %v247 = vld [vmem:[%s1 + $0x728] sm:$0xff]
  %v248 = vld [vmem:[%s1 + $0x730] sm:$0xff]
  %v249 = vld [vmem:[%s1 + $0x738] sm:$0xff]
  %v250 = vld [vmem:[%s1 + $0x740] sm:$0xff]
  %v251 = vld [vmem:[%s1 + $0x748] sm:$0xff]
  %v252 = vld [vmem:[%s1 + $0x750] sm:$0xff]
  %v253 = vld [vmem:[%s1 + $0x758] sm:$0xff]
  %v254 = vld [vmem:[%s1 + $0x760] sm:$0xff]
  %v255 = vld [vmem:[%s1 + $0x768] sm:$0xff]
  %v256 = vld [vmem:[%s1 + $0x770] sm:$0xff]
  %v257 = vld [vmem:[%s1 + $0x778] sm:$0xff]
  %v258 = vld [vmem:[%s1 + $0x780] sm:$0xff]
  %v259 = vld [vmem:[%s1 + $0x788] sm:$0xff]
  %v260 = vld [vmem:[%s1 + $0x790] sm:$0xff]
  %v261 = vld [vmem:[%s1 + $0x798] sm:$0xff]
  %v262 = vld [vmem:[%s1 + $0x7a0] sm:$0xff]
  %v263 = vld [vmem:[%s1 + $0x7a8] sm:$0xff]
  %v264 = vld [vmem:[%s1 + $0x7b0] sm:$0xff]
  %v265 = vld [vmem:[%s1 + $0x7b8] sm:$0xff]
  %v266 = vld [vmem:[%s1 + $0x7c0] sm:$0xff]
  %v267 = vld [vmem:[%s1 + $0x7c8] sm:$0xff]
  %v268 = vld [vmem:[%s1 + $0x7d0] sm:$0xff]
  %v269 = vld [vmem:[%s1 + $0x7d8] sm:$0xff]
  %v270 = vld [vmem:[%s1 + $0x7e0] sm:$0xff]
  %v271 = vld [vmem:[%s1 + $0x7e8] sm:$0xff]
  %v272 = vld [vmem:[%s1 + $0x7f0] sm:$0xff]
  %v273 = vld [vmem:[%s1 + $0x7f8] sm:$0xff]
  %v274 = vld [vmem:[%s1 + $0x800] sm:$0xff]
  %v275 = vld [vmem:[%s1 + $0x808] sm:$0xff]
  %v276 = vld [vmem:[%s1 + $0x810] sm:$0xff]
  %v277 = vld [vmem:[%s1 + $0x818] sm:$0xff]
  %v278 = vld [vmem:[%s1 + $0x820] sm:$0xff]
  %v279 = vld [vmem:[%s1 + $0x828] sm:$0xff]
  %v280 = vld [vmem:[%s1 + $0x830] sm:$0xff]
  %v281 = vld [vmem:[%s1 + $0x838] sm:$0xff]
  %v282 = vld [vmem:[%s1 + $0x840] sm:$0xff]
  %v283 = vld [vmem:[%s1 + $0x848] sm:$0xff]
  %v284 = vld [vmem:[%s1 + $0x850] sm:$0xff]
  %v285 = vld [vmem:[%s1 + $0x858] sm:$0xff]
  %v286 = vld [vmem:[%s1 + $0x860] sm:$0xff]
  %v287 = vld [vmem:[%s1 + $0x868] sm:$0xff]
  %v288 = vld [vmem:[%s1 + $0x870] sm:$0xff]
  %v289 = vld [vmem:[%s1 + $0x878] sm:$0xff]
  %v290 = vld [vmem:[%s1 + $0x880] sm:$0xff]
  %v291 = vld [vmem:[%s1 + $0x888] sm:$0xff]
  %v292 = vld [vmem:[%s1 + $0x890] sm:$0xff]
  %v293 = vld [vmem:[%s1 + $0x898] sm:$0xff]
  %v294 = vld [vmem:[%s1 + $0x8a0] sm:$0xff]
  %v295 = vld [vmem:[%s1 + $0x8a8] sm:$0xff]
  %v296 = vld [vmem:[%s1 + $0x8b0] sm:$0xff]
  %v297 = vld [vmem:[%s1 + $0x8b8] sm:$0xff]
  %v298 = vld [vmem:[%s1 + $0x8c0] sm:$0xff]
  %v299 = vld [vmem:[%s1 + $0x8c8] sm:$0xff]
  %v300 = vld [vmem:[%s1 + $0x8d0] sm:$0xff]
  %v301 = vld [vmem:[%s1 + $0x8d8] sm:$0xff]
  %v302 = vld [vmem:[%s1 + $0x8e0] sm:$0xff]
  %v303 = vld [vmem:[%s1 + $0x8e8] sm:$0xff]
  %v304 = vld [vmem:[%s1 + $0x8f0] sm:$0xff]
  %v305 = vld [vmem:[%s1 + $0x8f8] sm:$0xff]
  %v306 = vld [vmem:[%s1 + $0x900] sm:$0xff]
  %v307 = vld [vmem:[%s1 + $0x908] sm:$0xff]
  %v308 = vld [vmem:[%s1 + $0x910] sm:$0xff]
  %v309 = vld [vmem:[%s1 + $0x918] sm:$0xff]
  %v310 = vld [vmem:[%s1 + $0x920] sm:$0xff]
  %v311 = vld [vmem:[%s1 + $0x928] sm:$0xff]
  %v312 = vld [vmem:[%s1 + $0x930] sm:$0xff]
  %v313 = vld [vmem:[%s1 + $0x938] sm:$0xff]
  %v314 = vld [vmem:[%s1 + $0x940] sm:$0xff]
  %v315 = vld [vmem:[%s1 + $0x948] sm:$0xff]
  %v316 = vld [vmem:[%s1 + $0x950] sm:$0xff]
  %v317 = vld [vmem:[%s1 + $0x958] sm:$0xff]
  %v318 = vld [vmem:[%s1 + $0x960] sm:$0xff]
  %v319 = vld [vmem:[%s1 + $0x968] sm:$0xff]
  %v320 = vld [vmem:[%s1 + $0x970] sm:$0xff]
  %v321 = vld [vmem:[%s1 + $0x978] sm:$0xff]
  %v322 = vld [vmem:[%s1 + $0x980] sm:$0xff]
  %v323 = vld [vmem:[%s1 + $0x988] sm:$0xff]
  %v324 = vld [vmem:[%s1 + $0x990] sm:$0xff]
  %v325 = vld [vmem:[%s1 + $0x998] sm:$0xff]
  %v326 = vld [vmem:[%s1 + $0x9a0] sm:$0xff]
  %v327 = vld [vmem:[%s1 + $0x9a8] sm:$0xff]
  %v328 = vld [vmem:[%s1 + $0x9b0] sm:$0xff]
  %v329 = vld [vmem:[%s1 + $0x9b8] sm:$0xff]
  %v330 = vld [vmem:[%s1 + $0x9c0] sm:$0xff]
  %v331 = vld [vmem:[%s1 + $0x9c8] sm:$0xff]
  %v332 = vld [vmem:[%s1 + $0x9d0] sm:$0xff]
  %v333 = vld [vmem:[%s1 + $0x9d8] sm:$0xff]
  %v334 = vld [vmem:[%s1 + $0x9e0] sm:$0xff]
  %v335 = vld [vmem:[%s1 + $0x9e8] sm:$0xff]
  %v336 = vld [vmem:[%s1 + $0x9f0] sm:$0xff]
  %v337 = vld [vmem:[%s1 + $0x9f8] sm:$0xff]
  %v338 = vld [vmem:[%s1 + $0xa00] sm:$0xff]
  %v339 = vld [vmem:[%s1 + $0xa08] sm:$0xff]
  %v340 = vld [vmem:[%s1 + $0xa10] sm:$0xff]
  %v341 = vld [vmem:[%s1 + $0xa18] sm:$0xff]
  %v342 = vld [vmem:[%s1 + $0xa20] sm:$0xff]
  %v343 = vld [vmem:[%s1 + $0xa28] sm:$0xff]
  %v344 = vld [vmem:[%s1 + $0xa30] sm:$0xff]
  %v345 = vld [vmem:[%s1 + $0xa38] sm:$0xff]
  %v346 = vld [vmem:[%s1 + $0xa40] sm:$0xff]
  %v347 = vld [vmem:[%s1 + $0xa48] sm:$0xff]
  %v348 = vld [vmem:[%s1 + $0xa50] sm:$0xff]
  %v349 = vld [vmem:[%s1 + $0xa58] sm:$0xff]
  %v350 = vld [vmem:[%s1 + $0xa60] sm:$0xff]
  %v351 = vld [vmem:[%s1 + $0xa68] sm:$0xff]
  %v352 = vld [vmem:[%s1 + $0xa70] sm:$0xff]
  %v353 = vld [vmem:[%s1 + $0xa78] sm:$0xff]
  %v354 = vld [vmem:[%s1 + $0xa80] sm:$0xff]
  %v355 = vld [vmem:[%s1 + $0xa88] sm:$0xff]
  %v356 = vld [vmem:[%s1 + $0xa90] sm:$0xff]
  %v357 = vld [vmem:[%s1 + $0xa98] sm:$0xff]
  %v358 = vld [vmem:[%s1 + $0xaa0] sm:$0xff]
  %v359 = vld [vmem:[%s1 + $0xaa8] sm:$0xff]
  %v360 = vld [vmem:[%s1 + $0xab0] sm:$0xff]
  %v361 = vld [vmem:[%s1 + $0xab8] sm:$0xff]
  %v362 = vld [vmem:[%s1 + $0xac0] sm:$0xff]
  %v363 = vld [vmem:[%s1 + $0xac8] sm:$0xff]
  %v364 = vld [vmem:[%s1 + $0xad0] sm:$0xff]
  %v365 = vld [vmem:[%s1 + $0xad8] sm:$0xff]
  %v366 = vld [vmem:[%s1 + $0xae0] sm:$0xff]
  %v367 = vld [vmem:[%s1 + $0xae8] sm:$0xff]
  %v368 = vld [vmem:[%s1 + $0xaf0] sm:$0xff]
  %v369 = vld [vmem:[%s1 + $0xaf8] sm:$0xff]
  %v370 = vld [vmem:[%s1 + $0xb00] sm:$0xff]
  %v371 = vld [vmem:[%s1 + $0xb08] sm:$0xff]
  %v372 = vld [vmem:[%s1 + $0xb10] sm:$0xff]
  %v373 = vld [vmem:[%s1 + $0xb18] sm:$0xff]
  %v374 = vld [vmem:[%s1 + $0xb20] sm:$0xff]
  %v375 = vld [vmem:[%s1 + $0xb28] sm:$0xff]
  %v376 = vld [vmem:[%s1 + $0xb30] sm:$0xff]
  %v377 = vld [vmem:[%s1 + $0xb38] sm:$0xff]
  %v378 = vld [vmem:[%s1 + $0xb40] sm:$0xff]
  %v379 = vld [vmem:[%s1 + $0xb48] sm:$0xff]
  %v380 = vld [vmem:[%s1 + $0xb50] sm:$0xff]
  %v381 = vld [vmem:[%s1 + $0xb58] sm:$0xff]
  %v382 = vld [vmem:[%s1 + $0xb60] sm:$0xff]
  %v383 = vld [vmem:[%s1 + $0xb68] sm:$0xff]
  %v384 = vld [vmem:[%s1 + $0xb70] sm:$0xff]
  %v385 = vld [vmem:[%s1 + $0xb78] sm:$0xff]
  %v386 = vld [vmem:[%s1 + $0xb80] sm:$0xff]
  %v387 = vld [vmem:[%s1 + $0xb88] sm:$0xff]
  %v388 = vld [vmem:[%s1 + $0xb90] sm:$0xff]
  %v389 = vld [vmem:[%s1 + $0xb98] sm:$0xff]
  %v390 = vld [vmem:[%s1 + $0xba0] sm:$0xff]
  %v391 = vld [vmem:[%s1 + $0xba8] sm:$0xff]
  %v392 = vld [vmem:[%s1 + $0xbb0] sm:$0xff]
  %v393 = vld [vmem:[%s1 + $0xbb8] sm:$0xff]
  %v394 = vld [vmem:[%s1 + $0xbc0] sm:$0xff]
  %v395 = vld [vmem:[%s1 + $0xbc8] sm:$0xff]
  %v396 = vld [vmem:[%s1 + $0xbd0] sm:$0xff]
  %v397 = vld [vmem:[%s1 + $0xbd8] sm:$0xff]
  %v398 = vld [vmem:[%s1 + $0xbe0] sm:$0xff]
  %v399 = vld [vmem:[%s1 + $0xbe8] sm:$0xff]
  %v400 = vld [vmem:[%s1 + $0xbf0] sm:$0xff]
  %v401 = vld [vmem:[%s1 + $0xbf8] sm:$0xff]
  %v402 = vld [vmem:[%s1 + $0xc00] sm:$0xff]
  %v403 = vld [vmem:[%s1 + $0xc08] sm:$0xff]
  %v404 = vld [vmem:[%s1 + $0xc10] sm:$0xff]
  %v405 = vld [vmem:[%s1 + $0xc18] sm:$0xff]
  %v406 = vld [vmem:[%s1 + $0xc20] sm:$0xff]
  %v407 = vld [vmem:[%s1 + $0xc28] sm:$0xff]
  %v408 = vld [vmem:[%s1 + $0xc30] sm:$0xff]
  %v409 = vld [vmem:[%s1 + $0xc38] sm:$0xff]
  %v410 = vld [vmem:[%s1 + $0xc40] sm:$0xff]
  %v411 = vld [vmem:[%s1 + $0xc48] sm:$0xff]
  %v412 = vld [vmem:[%s1 + $0xc50] sm:$0xff]
  %v413 = vld [vmem:[%s1 + $0xc58] sm:$0xff]
  %v414 = vld [vmem:[%s1 + $0xc60] sm:$0xff]
  %v415 = vld [vmem:[%s1 + $0xc68] sm:$0xff]
  %v416 = vld [vmem:[%s1 + $0xc70] sm:$0xff]
  %v417 = vld [vmem:[%s1 + $0xc78] sm:$0xff]
  %v418 = vld [vmem:[%s1 + $0xc80] sm:$0xff]
  %v419 = vld [vmem:[%s1 + $0xc88] sm:$0xff]
  %v420 = vld [vmem:[%s1 + $0xc90] sm:$0xff]
  %v421 = vld [vmem:[%s1 + $0xc98] sm:$0xff]
  %v422 = vld [vmem:[%s1 + $0xca0] sm:$0xff]
  %v423 = vld [vmem:[%s1 + $0xca8] sm:$0xff]
  %v424 = vld [vmem:[%s1 + $0xcb0] sm:$0xff]
  %v425 = vld [vmem:[%s1 + $0xcb8] sm:$0xff]
  %v426 = vld [vmem:[%s1 + $0xcc0] sm:$0xff]
  %v427 = vld [vmem:[%s1 + $0xcc8] sm:$0xff]
  %v428 = vld [vmem:[%s1 + $0xcd0] sm:$0xff]
  %v429 = vld [vmem:[%s1 + $0xcd8] sm:$0xff]
  %v430 = vld [vmem:[%s1 + $0xce0] sm:$0xff]
  %v431 = vld [vmem:[%s1 + $0xce8] sm:$0xff]
  %v432 = vld [vmem:[%s1 + $0xcf0] sm:$0xff]
  %v433 = vld [vmem:[%s1 + $0xcf8] sm:$0xff]
  %v434 = vld [vmem:[%s1 + $0xd00] sm:$0xff]
  %v435 = vld [vmem:[%s1 + $0xd08] sm:$0xff]
  %v436 = vld [vmem:[%s1 + $0xd10] sm:$0xff]
  %v437 = vld [vmem:[%s1 + $0xd18] sm:$0xff]
  %v438 = vld [vmem:[%s1 + $0xd20] sm:$0xff]
  %v439 = vld [vmem:[%s1 + $0xd28] sm:$0xff]
  %v440 = vld [vmem:[%s1 + $0xd30] sm:$0xff]
  %v441 = vld [vmem:[%s1 + $0xd38] sm:$0xff]
  %v442 = vld [vmem:[%s1 + $0xd40] sm:$0xff]
  %v443 = vld [vmem:[%s1 + $0xd48] sm:$0xff]
  %v444 = vld [vmem:[%s1 + $0xd50] sm:$0xff]
  %v445 = vld [vmem:[%s1 + $0xd58] sm:$0xff]
  %v446 = vld [vmem:[%s1 + $0xd60] sm:$0xff]
  %v447 = vld [vmem:[%s1 + $0xd68] sm:$0xff]
  %v448 = vld [vmem:[%s1 + $0xd70] sm:$0xff]
  %v449 = vld [vmem:[%s1 + $0xd78] sm:$0xff]
  %v450 = vld [vmem:[%s1 + $0xd80] sm:$0xff]
  %v451 = vld [vmem:[%s1 + $0xd88] sm:$0xff]
  %v452 = vld [vmem:[%s1 + $0xd90] sm:$0xff]
  %v453 = vld [vmem:[%s1 + $0xd98] sm:$0xff]
  %v454 = vld [vmem:[%s1 + $0xda0] sm:$0xff]
  %v455 = vld [vmem:[%s1 + $0xda8] sm:$0xff]
  %v456 = vld [vmem:[%s1 + $0xdb0] sm:$0xff]
  %v457 = vld [vmem:[%s1 + $0xdb8] sm:$0xff]
  %v458 = vld [vmem:[%s1 + $0xdc0] sm:$0xff]
  %v459 = vld [vmem:[%s1 + $0xdc8] sm:$0xff]
  %v460 = vld [vmem:[%s1 + $0xdd0] sm:$0xff]
  %v461 = vld [vmem:[%s1 + $0xdd8] sm:$0xff]
  %v462 = vld [vmem:[%s1 + $0xde0] sm:$0xff]
  %v463 = vld [vmem:[%s1 + $0xde8] sm:$0xff]
  %v464 = vld [vmem:[%s1 + $0xdf0] sm:$0xff]
  %v465 = vld [vmem:[%s1 + $0xdf8] sm:$0xff]
  %v466 = vld [vmem:[%s1 + $0xe00] sm:$0xff]
  %v467 = vld [vmem:[%s1 + $0xe08] sm:$0xff]
  %v468 = vld [vmem:[%s1 + $0xe10] sm:$0xff]
  %v469 = vld [vmem:[%s1 + $0xe18] sm:$0xff]
  %v470 = vld [vmem:[%s1 + $0xe20] sm:$0xff]
  %v471 = vld [vmem:[%s1 + $0xe28] sm:$0xff]
  %v472 = vld [vmem:[%s1 + $0xe30] sm:$0xff]
  %v473 = vld [vmem:[%s1 + $0xe38] sm:$0xff]
  %v474 = vld [vmem:[%s1 + $0xe40] sm:$0xff]
  %v475 = vld [vmem:[%s1 + $0xe48] sm:$0xff]
  %v476 = vld [vmem:[%s1 + $0xe50] sm:$0xff]
  %v477 = vld [vmem:[%s1 + $0xe58] sm:$0xff]
  %v478 = vld [vmem:[%s1 + $0xe60] sm:$0xff]
  %v479 = vld [vmem:[%s1 + $0xe68] sm:$0xff]
  %v480 = vld [vmem:[%s1 + $0xe70] sm:$0xff]
  %v481 = vld [vmem:[%s1 + $0xe78] sm:$0xff]
  %v482 = vld [vmem:[%s1 + $0xe80] sm:$0xff]
  %v483 = vld [vmem:[%s1 + $0xe88] sm:$0xff]
  %v484 = vld [vmem:[%s1 + $0xe90] sm:$0xff]
  %v485 = vld [vmem:[%s1 + $0xe98] sm:$0xff]
  %v486 = vld [vmem:[%s1 + $0xea0] sm:$0xff]
  %v487 = vld [vmem:[%s1 + $0xea8] sm:$0xff]
  %v488 = vld [vmem:[%s1 + $0xeb0] sm:$0xff]
  %v489 = vld [vmem:[%s1 + $0xeb8] sm:$0xff]
  %v490 = vld [vmem:[%s1 + $0xec0] sm:$0xff]
  %v491 = vld [vmem:[%s1 + $0xec8] sm:$0xff]
  %v492 = vld [vmem:[%s1 + $0xed0] sm:$0xff]
  %v493 = vld [vmem:[%s1 + $0xed8] sm:$0xff]
  %v494 = vld [vmem:[%s1 + $0xee0] sm:$0xff]
  %v495 = vld [vmem:[%s1 + $0xee8] sm:$0xff]
  %v496 = vld [vmem:[%s1 + $0xef0] sm:$0xff]
  %v497 = vld [vmem:[%s1 + $0xef8] sm:$0xff]
  %v498 = vld [vmem:[%s1 + $0xf00] sm:$0xff]
  %v499 = vld [vmem:[%s1 + $0xf08] sm:$0xff]
  %v500 = vld [vmem:[%s1 + $0xf10] sm:$0xff]
  %v501 = vld [vmem:[%s1 + $0xf18] sm:$0xff]
  %v502 = vld [vmem:[%s1 + $0xf20] sm:$0xff]
  %v503 = vld [vmem:[%s1 + $0xf28] sm:$0xff]
  %v504 = vld [vmem:[%s1 + $0xf30] sm:$0xff]
  %v505 = vld [vmem:[%s1 + $0xf38] sm:$0xff]
  %v506 = vld [vmem:[%s1 + $0xf40] sm:$0xff]
  %v507 = vld [vmem:[%s1 + $0xf48] sm:$0xff]
  %v508 = vld [vmem:[%s1 + $0xf50] sm:$0xff]
  %v509 = vld [vmem:[%s1 + $0xf58] sm:$0xff]
  %v510 = vld [vmem:[%s1 + $0xf60] sm:$0xff]
  %v511 = vld [vmem:[%s1 + $0xf68] sm:$0xff]
  %v512 = vld [vmem:[%s1 + $0xf70] sm:$0xff]
  %v513 = vld [vmem:[%s1 + $0xf78] sm:$0xff]
  %v514 = vld [vmem:[%s1 + $0xf80] sm:$0xff]
  %v515 = vld [vmem:[%s1 + $0xf88] sm:$0xff]
  %v516 = vld [vmem:[%s1 + $0xf90] sm:$0xff]
  %v517 = vld [vmem:[%s1 + $0xf98] sm:$0xff]
  %v518 = vld [vmem:[%s1 + $0xfa0] sm:$0xff]
  %v519 = vld [vmem:[%s1 + $0xfa8] sm:$0xff]
  %v520 = vld [vmem:[%s1 + $0xfb0] sm:$0xff]
  %v521 = vld [vmem:[%s1 + $0xfb8] sm:$0xff]
  %v522 = vld [vmem:[%s1 + $0xfc0] sm:$0xff]
  %v523 = vld [vmem:[%s1 + $0xfc8] sm:$0xff]
  %v524 = vld [vmem:[%s1 + $0xfd0] sm:$0xff]
  %v525 = vld [vmem:[%s1 + $0xfd8] sm:$0xff]
  %v526 = vld [vmem:[%s1 + $0xfe0] sm:$0xff]
  %v527 = vld [vmem:[%s1 + $0xfe8] sm:$0xff]
  %v528 = vld [vmem:[%s1 + $0xff0] sm:$0xff]
  %v529 = vld [vmem:[%s1 + $0xff8] sm:$0xff]
  %v530 = vld [vmem:[%s2] sm:$0xff]
  %v532 = vlaneseq
  %v533 = vshrl.u32 %v532, 7
  %v534 = vsub.s32 0, %v533
  %v535 = vrot.slane %v530, %v534
  %v536 = vlaneseq
  %v537 = vshrl.u32 %v536, 7
  %v538 = vsub.s32 1, %v537
  %v539 = vrot.slane %v530, %v538
  %v540 = vlaneseq
  %v541 = vshrl.u32 %v540, 7
  %v542 = vsub.s32 2, %v541
  %v543 = vrot.slane %v530, %v542
  %v544 = vlaneseq
  %v545 = vshrl.u32 %v544, 7
  %v546 = vsub.s32 3, %v545
  %v547 = vrot.slane %v530, %v546
  %v548 = vlaneseq
  %v549 = vshrl.u32 %v548, 7
  %v550 = vsub.s32 4, %v549
  %v551 = vrot.slane %v530, %v550
  %v552 = vlaneseq
  %v553 = vshrl.u32 %v552, 7
  %v554 = vsub.s32 5, %v553
  %v555 = vrot.slane %v530, %v554
  %v556 = vlaneseq
  %v557 = vshrl.u32 %v556, 7
  %v558 = vsub.s32 6, %v557
  %v559 = vrot.slane %v530, %v558
  %v560 = vlaneseq
  %v561 = vshrl.u32 %v560, 7
  %v562 = vsub.s32 7, %v561
  %v563 = vrot.slane %v530, %v562
  %v576 = vunpack.c.l.b16 %v14
  %v577 = vunpack.c.h.b16 %v14
  %v578 = vunpack.c.l.b16 %v15
  %v579 = vunpack.c.h.b16 %v15
  %v580 = vunpack.c.l.b16 %v16
  %v581 = vunpack.c.h.b16 %v16
  %v582 = vunpack.c.l.b16 %v17
  %v583 = vunpack.c.h.b16 %v17
  %v584 = vpack.c.b16 %v576, %v576
  %v585 = vpack.c.b16 %v577, %v577
  %v586 = vpack.c.b16 %v578, %v578
  %v587 = vpack.c.b16 %v579, %v579
  %v588 = vpack.c.b16 %v580, %v580
  %v589 = vpack.c.b16 %v581, %v581
  %v590 = vpack.c.b16 %v582, %v582
  %v591 = vpack.c.b16 %v583, %v583
  %v1112 = vunpack.c.l.b16 %v18
  %v1113 = vunpack.c.h.b16 %v18
  %v1114 = vunpack.c.l.b16 %v19
  %v1115 = vunpack.c.h.b16 %v19
  %v1116 = vunpack.c.l.b16 %v20
  %v1117 = vunpack.c.h.b16 %v20
  %v1118 = vunpack.c.l.b16 %v21
  %v1119 = vunpack.c.h.b16 %v21
  %v1120 = vunpack.c.l.b16 %v22
  %v1121 = vunpack.c.h.b16 %v22
  %v1122 = vunpack.c.l.b16 %v23
  %v1123 = vunpack.c.h.b16 %v23
  %v1124 = vunpack.c.l.b16 %v24
  %v1125 = vunpack.c.h.b16 %v24
  %v1126 = vunpack.c.l.b16 %v25
  %v1127 = vunpack.c.h.b16 %v25
  %v1128 = vunpack.c.l.b16 %v26
  %v1129 = vunpack.c.h.b16 %v26
  %v1130 = vunpack.c.l.b16 %v27
  %v1131 = vunpack.c.h.b16 %v27
  %v1132 = vunpack.c.l.b16 %v28
  %v1133 = vunpack.c.h.b16 %v28
  %v1134 = vunpack.c.l.b16 %v29
  %v1135 = vunpack.c.h.b16 %v29
  %v1136 = vunpack.c.l.b16 %v30
  %v1137 = vunpack.c.h.b16 %v30
  %v1138 = vunpack.c.l.b16 %v31
  %v1139 = vunpack.c.h.b16 %v31
  %v1140 = vunpack.c.l.b16 %v32
  %v1141 = vunpack.c.h.b16 %v32
  %v1142 = vunpack.c.l.b16 %v33
  %v1143 = vunpack.c.h.b16 %v33
  %v1144 = vunpack.c.l.b16 %v34
  %v1145 = vunpack.c.h.b16 %v34
  %v1146 = vunpack.c.l.b16 %v35
  %v1147 = vunpack.c.h.b16 %v35
  %v1148 = vunpack.c.l.b16 %v36
  %v1149 = vunpack.c.h.b16 %v36
  %v1150 = vunpack.c.l.b16 %v37
  %v1151 = vunpack.c.h.b16 %v37
  %v1152 = vunpack.c.l.b16 %v38
  %v1153 = vunpack.c.h.b16 %v38
  %v1154 = vunpack.c.l.b16 %v39
  %v1155 = vunpack.c.h.b16 %v39
  %v1156 = vunpack.c.l.b16 %v40
  %v1157 = vunpack.c.h.b16 %v40
  %v1158 = vunpack.c.l.b16 %v41
  %v1159 = vunpack.c.h.b16 %v41
  %v1160 = vunpack.c.l.b16 %v42
  %v1161 = vunpack.c.h.b16 %v42
  %v1162 = vunpack.c.l.b16 %v43
  %v1163 = vunpack.c.h.b16 %v43
  %v1164 = vunpack.c.l.b16 %v44
  %v1165 = vunpack.c.h.b16 %v44
  %v1166 = vunpack.c.l.b16 %v45
  %v1167 = vunpack.c.h.b16 %v45
  %v1168 = vunpack.c.l.b16 %v46
  %v1169 = vunpack.c.h.b16 %v46
  %v1170 = vunpack.c.l.b16 %v47
  %v1171 = vunpack.c.h.b16 %v47
  %v1172 = vunpack.c.l.b16 %v48
  %v1173 = vunpack.c.h.b16 %v48
  %v1174 = vunpack.c.l.b16 %v49
  %v1175 = vunpack.c.h.b16 %v49
  %v1176 = vunpack.c.l.b16 %v50
  %v1177 = vunpack.c.h.b16 %v50
  %v1178 = vunpack.c.l.b16 %v51
  %v1179 = vunpack.c.h.b16 %v51
  %v1180 = vunpack.c.l.b16 %v52
  %v1181 = vunpack.c.h.b16 %v52
  %v1182 = vunpack.c.l.b16 %v53
  %v1183 = vunpack.c.h.b16 %v53
  %v1184 = vunpack.c.l.b16 %v54
  %v1185 = vunpack.c.h.b16 %v54
  %v1186 = vunpack.c.l.b16 %v55
  %v1187 = vunpack.c.h.b16 %v55
  %v1188 = vunpack.c.l.b16 %v56
  %v1189 = vunpack.c.h.b16 %v56
  %v1190 = vunpack.c.l.b16 %v57
  %v1191 = vunpack.c.h.b16 %v57
  %v1192 = vunpack.c.l.b16 %v58
  %v1193 = vunpack.c.h.b16 %v58
  %v1194 = vunpack.c.l.b16 %v59
  %v1195 = vunpack.c.h.b16 %v59
  %v1196 = vunpack.c.l.b16 %v60
  %v1197 = vunpack.c.h.b16 %v60
  %v1198 = vunpack.c.l.b16 %v61
  %v1199 = vunpack.c.h.b16 %v61
  %v1200 = vunpack.c.l.b16 %v62
  %v1201 = vunpack.c.h.b16 %v62
  %v1202 = vunpack.c.l.b16 %v63
  %v1203 = vunpack.c.h.b16 %v63
  %v1204 = vunpack.c.l.b16 %v64
  %v1205 = vunpack.c.h.b16 %v64
  %v1206 = vunpack.c.l.b16 %v65
  %v1207 = vunpack.c.h.b16 %v65
  %v1208 = vunpack.c.l.b16 %v66
  %v1209 = vunpack.c.h.b16 %v66
  %v1210 = vunpack.c.l.b16 %v67
  %v1211 = vunpack.c.h.b16 %v67
  %v1212 = vunpack.c.l.b16 %v68
  %v1213 = vunpack.c.h.b16 %v68
  %v1214 = vunpack.c.l.b16 %v69
  %v1215 = vunpack.c.h.b16 %v69
  %v1216 = vunpack.c.l.b16 %v70
  %v1217 = vunpack.c.h.b16 %v70
  %v1218 = vunpack.c.l.b16 %v71
  %v1219 = vunpack.c.h.b16 %v71
  %v1220 = vunpack.c.l.b16 %v72
  %v1221 = vunpack.c.h.b16 %v72
  %v1222 = vunpack.c.l.b16 %v73
  %v1223 = vunpack.c.h.b16 %v73
  %v1224 = vunpack.c.l.b16 %v74
  %v1225 = vunpack.c.h.b16 %v74
  %v1226 = vunpack.c.l.b16 %v75
  %v1227 = vunpack.c.h.b16 %v75
  %v1228 = vunpack.c.l.b16 %v76
  %v1229 = vunpack.c.h.b16 %v76
  %v1230 = vunpack.c.l.b16 %v77
  %v1231 = vunpack.c.h.b16 %v77
  %v1232 = vunpack.c.l.b16 %v78
  %v1233 = vunpack.c.h.b16 %v78
  %v1234 = vunpack.c.l.b16 %v79
  %v1235 = vunpack.c.h.b16 %v79
  %v1236 = vunpack.c.l.b16 %v80
  %v1237 = vunpack.c.h.b16 %v80
  %v1238 = vunpack.c.l.b16 %v81
  %v1239 = vunpack.c.h.b16 %v81
  %v1240 = vunpack.c.l.b16 %v82
  %v1241 = vunpack.c.h.b16 %v82
  %v1242 = vunpack.c.l.b16 %v83
  %v1243 = vunpack.c.h.b16 %v83
  %v1244 = vunpack.c.l.b16 %v84
  %v1245 = vunpack.c.h.b16 %v84
  %v1246 = vunpack.c.l.b16 %v85
  %v1247 = vunpack.c.h.b16 %v85
  %v1248 = vunpack.c.l.b16 %v86
  %v1249 = vunpack.c.h.b16 %v86
  %v1250 = vunpack.c.l.b16 %v87
  %v1251 = vunpack.c.h.b16 %v87
  %v1252 = vunpack.c.l.b16 %v88
  %v1253 = vunpack.c.h.b16 %v88
  %v1254 = vunpack.c.l.b16 %v89
  %v1255 = vunpack.c.h.b16 %v89
  %v1256 = vunpack.c.l.b16 %v90
  %v1257 = vunpack.c.h.b16 %v90
  %v1258 = vunpack.c.l.b16 %v91
  %v1259 = vunpack.c.h.b16 %v91
  %v1260 = vunpack.c.l.b16 %v92
  %v1261 = vunpack.c.h.b16 %v92
  %v1262 = vunpack.c.l.b16 %v93
  %v1263 = vunpack.c.h.b16 %v93
  %v1264 = vunpack.c.l.b16 %v94
  %v1265 = vunpack.c.h.b16 %v94
  %v1266 = vunpack.c.l.b16 %v95
  %v1267 = vunpack.c.h.b16 %v95
  %v1268 = vunpack.c.l.b16 %v96
  %v1269 = vunpack.c.h.b16 %v96
  %v1270 = vunpack.c.l.b16 %v97
  %v1271 = vunpack.c.h.b16 %v97
  %v1272 = vunpack.c.l.b16 %v98
  %v1273 = vunpack.c.h.b16 %v98
  %v1274 = vunpack.c.l.b16 %v99
  %v1275 = vunpack.c.h.b16 %v99
  %v1276 = vunpack.c.l.b16 %v100
  %v1277 = vunpack.c.h.b16 %v100
  %v1278 = vunpack.c.l.b16 %v101
  %v1279 = vunpack.c.h.b16 %v101
  %v1280 = vunpack.c.l.b16 %v102
  %v1281 = vunpack.c.h.b16 %v102
  %v1282 = vunpack.c.l.b16 %v103
  %v1283 = vunpack.c.h.b16 %v103
  %v1284 = vunpack.c.l.b16 %v104
  %v1285 = vunpack.c.h.b16 %v104
  %v1286 = vunpack.c.l.b16 %v105
  %v1287 = vunpack.c.h.b16 %v105
  %v1288 = vunpack.c.l.b16 %v106
  %v1289 = vunpack.c.h.b16 %v106
  %v1290 = vunpack.c.l.b16 %v107
  %v1291 = vunpack.c.h.b16 %v107
  %v1292 = vunpack.c.l.b16 %v108
  %v1293 = vunpack.c.h.b16 %v108
  %v1294 = vunpack.c.l.b16 %v109
  %v1295 = vunpack.c.h.b16 %v109
  %v1296 = vunpack.c.l.b16 %v110
  %v1297 = vunpack.c.h.b16 %v110
  %v1298 = vunpack.c.l.b16 %v111
  %v1299 = vunpack.c.h.b16 %v111
  %v1300 = vunpack.c.l.b16 %v112
  %v1301 = vunpack.c.h.b16 %v112
  %v1302 = vunpack.c.l.b16 %v113
  %v1303 = vunpack.c.h.b16 %v113
  %v1304 = vunpack.c.l.b16 %v114
  %v1305 = vunpack.c.h.b16 %v114
  %v1306 = vunpack.c.l.b16 %v115
  %v1307 = vunpack.c.h.b16 %v115
  %v1308 = vunpack.c.l.b16 %v116
  %v1309 = vunpack.c.h.b16 %v116
  %v1310 = vunpack.c.l.b16 %v117
  %v1311 = vunpack.c.h.b16 %v117
  %v1312 = vunpack.c.l.b16 %v118
  %v1313 = vunpack.c.h.b16 %v118
  %v1314 = vunpack.c.l.b16 %v119
  %v1315 = vunpack.c.h.b16 %v119
  %v1316 = vunpack.c.l.b16 %v120
  %v1317 = vunpack.c.h.b16 %v120
  %v1318 = vunpack.c.l.b16 %v121
  %v1319 = vunpack.c.h.b16 %v121
  %v1320 = vunpack.c.l.b16 %v122
  %v1321 = vunpack.c.h.b16 %v122
  %v1322 = vunpack.c.l.b16 %v123
  %v1323 = vunpack.c.h.b16 %v123
  %v1324 = vunpack.c.l.b16 %v124
  %v1325 = vunpack.c.h.b16 %v124
  %v1326 = vunpack.c.l.b16 %v125
  %v1327 = vunpack.c.h.b16 %v125
  %v1328 = vunpack.c.l.b16 %v126
  %v1329 = vunpack.c.h.b16 %v126
  %v1330 = vunpack.c.l.b16 %v127
  %v1331 = vunpack.c.h.b16 %v127
  %v1332 = vunpack.c.l.b16 %v128
  %v1333 = vunpack.c.h.b16 %v128
  %v1334 = vunpack.c.l.b16 %v129
  %v1335 = vunpack.c.h.b16 %v129
  %v1336 = vunpack.c.l.b16 %v130
  %v1337 = vunpack.c.h.b16 %v130
  %v1338 = vunpack.c.l.b16 %v131
  %v1339 = vunpack.c.h.b16 %v131
  %v1340 = vunpack.c.l.b16 %v132
  %v1341 = vunpack.c.h.b16 %v132
  %v1342 = vunpack.c.l.b16 %v133
  %v1343 = vunpack.c.h.b16 %v133
  %v1344 = vunpack.c.l.b16 %v134
  %v1345 = vunpack.c.h.b16 %v134
  %v1346 = vunpack.c.l.b16 %v135
  %v1347 = vunpack.c.h.b16 %v135
  %v1348 = vunpack.c.l.b16 %v136
  %v1349 = vunpack.c.h.b16 %v136
  %v1350 = vunpack.c.l.b16 %v137
  %v1351 = vunpack.c.h.b16 %v137
  %v1352 = vunpack.c.l.b16 %v138
  %v1353 = vunpack.c.h.b16 %v138
  %v1354 = vunpack.c.l.b16 %v139
  %v1355 = vunpack.c.h.b16 %v139
  %v1356 = vunpack.c.l.b16 %v140
  %v1357 = vunpack.c.h.b16 %v140
  %v1358 = vunpack.c.l.b16 %v141
  %v1359 = vunpack.c.h.b16 %v141
  %v1360 = vunpack.c.l.b16 %v142
  %v1361 = vunpack.c.h.b16 %v142
  %v1362 = vunpack.c.l.b16 %v143
  %v1363 = vunpack.c.h.b16 %v143
  %v1364 = vunpack.c.l.b16 %v144
  %v1365 = vunpack.c.h.b16 %v144
  %v1366 = vunpack.c.l.b16 %v145
  %v1367 = vunpack.c.h.b16 %v145
  %v1368 = vunpack.c.l.b16 %v146
  %v1369 = vunpack.c.h.b16 %v146
  %v1370 = vunpack.c.l.b16 %v147
  %v1371 = vunpack.c.h.b16 %v147
  %v1372 = vunpack.c.l.b16 %v148
  %v1373 = vunpack.c.h.b16 %v148
  %v1374 = vunpack.c.l.b16 %v149
  %v1375 = vunpack.c.h.b16 %v149
  %v1376 = vunpack.c.l.b16 %v150
  %v1377 = vunpack.c.h.b16 %v150
  %v1378 = vunpack.c.l.b16 %v151
  %v1379 = vunpack.c.h.b16 %v151
  %v1380 = vunpack.c.l.b16 %v152
  %v1381 = vunpack.c.h.b16 %v152
  %v1382 = vunpack.c.l.b16 %v153
  %v1383 = vunpack.c.h.b16 %v153
  %v1384 = vunpack.c.l.b16 %v154
  %v1385 = vunpack.c.h.b16 %v154
  %v1386 = vunpack.c.l.b16 %v155
  %v1387 = vunpack.c.h.b16 %v155
  %v1388 = vunpack.c.l.b16 %v156
  %v1389 = vunpack.c.h.b16 %v156
  %v1390 = vunpack.c.l.b16 %v157
  %v1391 = vunpack.c.h.b16 %v157
  %v1392 = vunpack.c.l.b16 %v158
  %v1393 = vunpack.c.h.b16 %v158
  %v1394 = vunpack.c.l.b16 %v159
  %v1395 = vunpack.c.h.b16 %v159
  %v1396 = vunpack.c.l.b16 %v160
  %v1397 = vunpack.c.h.b16 %v160
  %v1398 = vunpack.c.l.b16 %v161
  %v1399 = vunpack.c.h.b16 %v161
  %v1400 = vunpack.c.l.b16 %v162
  %v1401 = vunpack.c.h.b16 %v162
  %v1402 = vunpack.c.l.b16 %v163
  %v1403 = vunpack.c.h.b16 %v163
  %v1404 = vunpack.c.l.b16 %v164
  %v1405 = vunpack.c.h.b16 %v164
  %v1406 = vunpack.c.l.b16 %v165
  %v1407 = vunpack.c.h.b16 %v165
  %v1408 = vunpack.c.l.b16 %v166
  %v1409 = vunpack.c.h.b16 %v166
  %v1410 = vunpack.c.l.b16 %v167
  %v1411 = vunpack.c.h.b16 %v167
  %v1412 = vunpack.c.l.b16 %v168
  %v1413 = vunpack.c.h.b16 %v168
  %v1414 = vunpack.c.l.b16 %v169
  %v1415 = vunpack.c.h.b16 %v169
  %v1416 = vunpack.c.l.b16 %v170
  %v1417 = vunpack.c.h.b16 %v170
  %v1418 = vunpack.c.l.b16 %v171
  %v1419 = vunpack.c.h.b16 %v171
  %v1420 = vunpack.c.l.b16 %v172
  %v1421 = vunpack.c.h.b16 %v172
  %v1422 = vunpack.c.l.b16 %v173
  %v1423 = vunpack.c.h.b16 %v173
  %v1424 = vunpack.c.l.b16 %v174
  %v1425 = vunpack.c.h.b16 %v174
  %v1426 = vunpack.c.l.b16 %v175
  %v1427 = vunpack.c.h.b16 %v175
  %v1428 = vunpack.c.l.b16 %v176
  %v1429 = vunpack.c.h.b16 %v176
  %v1430 = vunpack.c.l.b16 %v177
  %v1431 = vunpack.c.h.b16 %v177
  %v1432 = vunpack.c.l.b16 %v178
  %v1433 = vunpack.c.h.b16 %v178
  %v1434 = vunpack.c.l.b16 %v179
  %v1435 = vunpack.c.h.b16 %v179
  %v1436 = vunpack.c.l.b16 %v180
  %v1437 = vunpack.c.h.b16 %v180
  %v1438 = vunpack.c.l.b16 %v181
  %v1439 = vunpack.c.h.b16 %v181
  %v1440 = vunpack.c.l.b16 %v182
  %v1441 = vunpack.c.h.b16 %v182
  %v1442 = vunpack.c.l.b16 %v183
  %v1443 = vunpack.c.h.b16 %v183
  %v1444 = vunpack.c.l.b16 %v184
  %v1445 = vunpack.c.h.b16 %v184
  %v1446 = vunpack.c.l.b16 %v185
  %v1447 = vunpack.c.h.b16 %v185
  %v1448 = vunpack.c.l.b16 %v186
  %v1449 = vunpack.c.h.b16 %v186
  %v1450 = vunpack.c.l.b16 %v187
  %v1451 = vunpack.c.h.b16 %v187
  %v1452 = vunpack.c.l.b16 %v188
  %v1453 = vunpack.c.h.b16 %v188
  %v1454 = vunpack.c.l.b16 %v189
  %v1455 = vunpack.c.h.b16 %v189
  %v1456 = vunpack.c.l.b16 %v190
  %v1457 = vunpack.c.h.b16 %v190
  %v1458 = vunpack.c.l.b16 %v191
  %v1459 = vunpack.c.h.b16 %v191
  %v1460 = vunpack.c.l.b16 %v192
  %v1461 = vunpack.c.h.b16 %v192
  %v1462 = vunpack.c.l.b16 %v193
  %v1463 = vunpack.c.h.b16 %v193
  %v1464 = vunpack.c.l.b16 %v194
  %v1465 = vunpack.c.h.b16 %v194
  %v1466 = vunpack.c.l.b16 %v195
  %v1467 = vunpack.c.h.b16 %v195
  %v1468 = vunpack.c.l.b16 %v196
  %v1469 = vunpack.c.h.b16 %v196
  %v1470 = vunpack.c.l.b16 %v197
  %v1471 = vunpack.c.h.b16 %v197
  %v1472 = vunpack.c.l.b16 %v198
  %v1473 = vunpack.c.h.b16 %v198
  %v1474 = vunpack.c.l.b16 %v199
  %v1475 = vunpack.c.h.b16 %v199
  %v1476 = vunpack.c.l.b16 %v200
  %v1477 = vunpack.c.h.b16 %v200
  %v1478 = vunpack.c.l.b16 %v201
  %v1479 = vunpack.c.h.b16 %v201
  %v1480 = vunpack.c.l.b16 %v202
  %v1481 = vunpack.c.h.b16 %v202
  %v1482 = vunpack.c.l.b16 %v203
  %v1483 = vunpack.c.h.b16 %v203
  %v1484 = vunpack.c.l.b16 %v204
  %v1485 = vunpack.c.h.b16 %v204
  %v1486 = vunpack.c.l.b16 %v205
  %v1487 = vunpack.c.h.b16 %v205
  %v1488 = vunpack.c.l.b16 %v206
  %v1489 = vunpack.c.h.b16 %v206
  %v1490 = vunpack.c.l.b16 %v207
  %v1491 = vunpack.c.h.b16 %v207
  %v1492 = vunpack.c.l.b16 %v208
  %v1493 = vunpack.c.h.b16 %v208
  %v1494 = vunpack.c.l.b16 %v209
  %v1495 = vunpack.c.h.b16 %v209
  %v1496 = vunpack.c.l.b16 %v210
  %v1497 = vunpack.c.h.b16 %v210
  %v1498 = vunpack.c.l.b16 %v211
  %v1499 = vunpack.c.h.b16 %v211
  %v1500 = vunpack.c.l.b16 %v212
  %v1501 = vunpack.c.h.b16 %v212
  %v1502 = vunpack.c.l.b16 %v213
  %v1503 = vunpack.c.h.b16 %v213
  %v1504 = vunpack.c.l.b16 %v214
  %v1505 = vunpack.c.h.b16 %v214
  %v1506 = vunpack.c.l.b16 %v215
  %v1507 = vunpack.c.h.b16 %v215
  %v1508 = vunpack.c.l.b16 %v216
  %v1509 = vunpack.c.h.b16 %v216
  %v1510 = vunpack.c.l.b16 %v217
  %v1511 = vunpack.c.h.b16 %v217
  %v1512 = vunpack.c.l.b16 %v218
  %v1513 = vunpack.c.h.b16 %v218
  %v1514 = vunpack.c.l.b16 %v219
  %v1515 = vunpack.c.h.b16 %v219
  %v1516 = vunpack.c.l.b16 %v220
  %v1517 = vunpack.c.h.b16 %v220
  %v1518 = vunpack.c.l.b16 %v221
  %v1519 = vunpack.c.h.b16 %v221
  %v1520 = vunpack.c.l.b16 %v222
  %v1521 = vunpack.c.h.b16 %v222
  %v1522 = vunpack.c.l.b16 %v223
  %v1523 = vunpack.c.h.b16 %v223
  %v1524 = vunpack.c.l.b16 %v224
  %v1525 = vunpack.c.h.b16 %v224
  %v1526 = vunpack.c.l.b16 %v225
  %v1527 = vunpack.c.h.b16 %v225
  %v1528 = vunpack.c.l.b16 %v226
  %v1529 = vunpack.c.h.b16 %v226
  %v1530 = vunpack.c.l.b16 %v227
  %v1531 = vunpack.c.h.b16 %v227
  %v1532 = vunpack.c.l.b16 %v228
  %v1533 = vunpack.c.h.b16 %v228
  %v1534 = vunpack.c.l.b16 %v229
  %v1535 = vunpack.c.h.b16 %v229
  %v1536 = vunpack.c.l.b16 %v230
  %v1537 = vunpack.c.h.b16 %v230
  %v1538 = vunpack.c.l.b16 %v231
  %v1539 = vunpack.c.h.b16 %v231
  %v1540 = vunpack.c.l.b16 %v232
  %v1541 = vunpack.c.h.b16 %v232
  %v1542 = vunpack.c.l.b16 %v233
  %v1543 = vunpack.c.h.b16 %v233
  %v1544 = vunpack.c.l.b16 %v234
  %v1545 = vunpack.c.h.b16 %v234
  %v1546 = vunpack.c.l.b16 %v235
  %v1547 = vunpack.c.h.b16 %v235
  %v1548 = vunpack.c.l.b16 %v236
  %v1549 = vunpack.c.h.b16 %v236
  %v1550 = vunpack.c.l.b16 %v237
  %v1551 = vunpack.c.h.b16 %v237
  %v1552 = vunpack.c.l.b16 %v238
  %v1553 = vunpack.c.h.b16 %v238
  %v1554 = vunpack.c.l.b16 %v239
  %v1555 = vunpack.c.h.b16 %v239
  %v1556 = vunpack.c.l.b16 %v240
  %v1557 = vunpack.c.h.b16 %v240
  %v1558 = vunpack.c.l.b16 %v241
  %v1559 = vunpack.c.h.b16 %v241
  %v1560 = vunpack.c.l.b16 %v242
  %v1561 = vunpack.c.h.b16 %v242
  %v1562 = vunpack.c.l.b16 %v243
  %v1563 = vunpack.c.h.b16 %v243
  %v1564 = vunpack.c.l.b16 %v244
  %v1565 = vunpack.c.h.b16 %v244
  %v1566 = vunpack.c.l.b16 %v245
  %v1567 = vunpack.c.h.b16 %v245
  %v1568 = vunpack.c.l.b16 %v246
  %v1569 = vunpack.c.h.b16 %v246
  %v1570 = vunpack.c.l.b16 %v247
  %v1571 = vunpack.c.h.b16 %v247
  %v1572 = vunpack.c.l.b16 %v248
  %v1573 = vunpack.c.h.b16 %v248
  %v1574 = vunpack.c.l.b16 %v249
  %v1575 = vunpack.c.h.b16 %v249
  %v1576 = vunpack.c.l.b16 %v250
  %v1577 = vunpack.c.h.b16 %v250
  %v1578 = vunpack.c.l.b16 %v251
  %v1579 = vunpack.c.h.b16 %v251
  %v1580 = vunpack.c.l.b16 %v252
  %v1581 = vunpack.c.h.b16 %v252
  %v1582 = vunpack.c.l.b16 %v253
  %v1583 = vunpack.c.h.b16 %v253
  %v1584 = vunpack.c.l.b16 %v254
  %v1585 = vunpack.c.h.b16 %v254
  %v1586 = vunpack.c.l.b16 %v255
  %v1587 = vunpack.c.h.b16 %v255
  %v1588 = vunpack.c.l.b16 %v256
  %v1589 = vunpack.c.h.b16 %v256
  %v1590 = vunpack.c.l.b16 %v257
  %v1591 = vunpack.c.h.b16 %v257
  %v1592 = vunpack.c.l.b16 %v258
  %v1593 = vunpack.c.h.b16 %v258
  %v1594 = vunpack.c.l.b16 %v259
  %v1595 = vunpack.c.h.b16 %v259
  %v1596 = vunpack.c.l.b16 %v260
  %v1597 = vunpack.c.h.b16 %v260
  %v1598 = vunpack.c.l.b16 %v261
  %v1599 = vunpack.c.h.b16 %v261
  %v1600 = vunpack.c.l.b16 %v262
  %v1601 = vunpack.c.h.b16 %v262
  %v1602 = vunpack.c.l.b16 %v263
  %v1603 = vunpack.c.h.b16 %v263
  %v1604 = vunpack.c.l.b16 %v264
  %v1605 = vunpack.c.h.b16 %v264
  %v1606 = vunpack.c.l.b16 %v265
  %v1607 = vunpack.c.h.b16 %v265
  %v1608 = vunpack.c.l.b16 %v266
  %v1609 = vunpack.c.h.b16 %v266
  %v1610 = vunpack.c.l.b16 %v267
  %v1611 = vunpack.c.h.b16 %v267
  %v1612 = vunpack.c.l.b16 %v268
  %v1613 = vunpack.c.h.b16 %v268
  %v1614 = vunpack.c.l.b16 %v269
  %v1615 = vunpack.c.h.b16 %v269
  %v1616 = vunpack.c.l.b16 %v270
  %v1617 = vunpack.c.h.b16 %v270
  %v1618 = vunpack.c.l.b16 %v271
  %v1619 = vunpack.c.h.b16 %v271
  %v1620 = vunpack.c.l.b16 %v272
  %v1621 = vunpack.c.h.b16 %v272
  %v1622 = vunpack.c.l.b16 %v273
  %v1623 = vunpack.c.h.b16 %v273
  %v1624 = vunpack.c.l.b16 %v274
  %v1625 = vunpack.c.h.b16 %v274
  %v1626 = vunpack.c.l.b16 %v275
  %v1627 = vunpack.c.h.b16 %v275
  %v1628 = vunpack.c.l.b16 %v276
  %v1629 = vunpack.c.h.b16 %v276
  %v1630 = vunpack.c.l.b16 %v277
  %v1631 = vunpack.c.h.b16 %v277
  %v1632 = vunpack.c.l.b16 %v278
  %v1633 = vunpack.c.h.b16 %v278
  %v1634 = vunpack.c.l.b16 %v279
  %v1635 = vunpack.c.h.b16 %v279
  %v1636 = vunpack.c.l.b16 %v280
  %v1637 = vunpack.c.h.b16 %v280
  %v1638 = vunpack.c.l.b16 %v281
  %v1639 = vunpack.c.h.b16 %v281
  %v1640 = vunpack.c.l.b16 %v282
  %v1641 = vunpack.c.h.b16 %v282
  %v1642 = vunpack.c.l.b16 %v283
  %v1643 = vunpack.c.h.b16 %v283
  %v1644 = vunpack.c.l.b16 %v284
  %v1645 = vunpack.c.h.b16 %v284
  %v1646 = vunpack.c.l.b16 %v285
  %v1647 = vunpack.c.h.b16 %v285
  %v1648 = vunpack.c.l.b16 %v286
  %v1649 = vunpack.c.h.b16 %v286
  %v1650 = vunpack.c.l.b16 %v287
  %v1651 = vunpack.c.h.b16 %v287
  %v1652 = vunpack.c.l.b16 %v288
  %v1653 = vunpack.c.h.b16 %v288
  %v1654 = vunpack.c.l.b16 %v289
  %v1655 = vunpack.c.h.b16 %v289
  %v1656 = vunpack.c.l.b16 %v290
  %v1657 = vunpack.c.h.b16 %v290
  %v1658 = vunpack.c.l.b16 %v291
  %v1659 = vunpack.c.h.b16 %v291
  %v1660 = vunpack.c.l.b16 %v292
  %v1661 = vunpack.c.h.b16 %v292
  %v1662 = vunpack.c.l.b16 %v293
  %v1663 = vunpack.c.h.b16 %v293
  %v1664 = vunpack.c.l.b16 %v294
  %v1665 = vunpack.c.h.b16 %v294
  %v1666 = vunpack.c.l.b16 %v295
  %v1667 = vunpack.c.h.b16 %v295
  %v1668 = vunpack.c.l.b16 %v296
  %v1669 = vunpack.c.h.b16 %v296
  %v1670 = vunpack.c.l.b16 %v297
  %v1671 = vunpack.c.h.b16 %v297
  %v1672 = vunpack.c.l.b16 %v298
  %v1673 = vunpack.c.h.b16 %v298
  %v1674 = vunpack.c.l.b16 %v299
  %v1675 = vunpack.c.h.b16 %v299
  %v1676 = vunpack.c.l.b16 %v300
  %v1677 = vunpack.c.h.b16 %v300
  %v1678 = vunpack.c.l.b16 %v301
  %v1679 = vunpack.c.h.b16 %v301
  %v1680 = vunpack.c.l.b16 %v302
  %v1681 = vunpack.c.h.b16 %v302
  %v1682 = vunpack.c.l.b16 %v303
  %v1683 = vunpack.c.h.b16 %v303
  %v1684 = vunpack.c.l.b16 %v304
  %v1685 = vunpack.c.h.b16 %v304
  %v1686 = vunpack.c.l.b16 %v305
  %v1687 = vunpack.c.h.b16 %v305
  %v1688 = vunpack.c.l.b16 %v306
  %v1689 = vunpack.c.h.b16 %v306
  %v1690 = vunpack.c.l.b16 %v307
  %v1691 = vunpack.c.h.b16 %v307
  %v1692 = vunpack.c.l.b16 %v308
  %v1693 = vunpack.c.h.b16 %v308
  %v1694 = vunpack.c.l.b16 %v309
  %v1695 = vunpack.c.h.b16 %v309
  %v1696 = vunpack.c.l.b16 %v310
  %v1697 = vunpack.c.h.b16 %v310
  %v1698 = vunpack.c.l.b16 %v311
  %v1699 = vunpack.c.h.b16 %v311
  %v1700 = vunpack.c.l.b16 %v312
  %v1701 = vunpack.c.h.b16 %v312
  %v1702 = vunpack.c.l.b16 %v313
  %v1703 = vunpack.c.h.b16 %v313
  %v1704 = vunpack.c.l.b16 %v314
  %v1705 = vunpack.c.h.b16 %v314
  %v1706 = vunpack.c.l.b16 %v315
  %v1707 = vunpack.c.h.b16 %v315
  %v1708 = vunpack.c.l.b16 %v316
  %v1709 = vunpack.c.h.b16 %v316
  %v1710 = vunpack.c.l.b16 %v317
  %v1711 = vunpack.c.h.b16 %v317
  %v1712 = vunpack.c.l.b16 %v318
  %v1713 = vunpack.c.h.b16 %v318
  %v1714 = vunpack.c.l.b16 %v319
  %v1715 = vunpack.c.h.b16 %v319
  %v1716 = vunpack.c.l.b16 %v320
  %v1717 = vunpack.c.h.b16 %v320
  %v1718 = vunpack.c.l.b16 %v321
  %v1719 = vunpack.c.h.b16 %v321
  %v1720 = vunpack.c.l.b16 %v322
  %v1721 = vunpack.c.h.b16 %v322
  %v1722 = vunpack.c.l.b16 %v323
  %v1723 = vunpack.c.h.b16 %v323
  %v1724 = vunpack.c.l.b16 %v324
  %v1725 = vunpack.c.h.b16 %v324
  %v1726 = vunpack.c.l.b16 %v325
  %v1727 = vunpack.c.h.b16 %v325
  %v1728 = vunpack.c.l.b16 %v326
  %v1729 = vunpack.c.h.b16 %v326
  %v1730 = vunpack.c.l.b16 %v327
  %v1731 = vunpack.c.h.b16 %v327
  %v1732 = vunpack.c.l.b16 %v328
  %v1733 = vunpack.c.h.b16 %v328
  %v1734 = vunpack.c.l.b16 %v329
  %v1735 = vunpack.c.h.b16 %v329
  %v1736 = vunpack.c.l.b16 %v330
  %v1737 = vunpack.c.h.b16 %v330
  %v1738 = vunpack.c.l.b16 %v331
  %v1739 = vunpack.c.h.b16 %v331
  %v1740 = vunpack.c.l.b16 %v332
  %v1741 = vunpack.c.h.b16 %v332
  %v1742 = vunpack.c.l.b16 %v333
  %v1743 = vunpack.c.h.b16 %v333
  %v1744 = vunpack.c.l.b16 %v334
  %v1745 = vunpack.c.h.b16 %v334
  %v1746 = vunpack.c.l.b16 %v335
  %v1747 = vunpack.c.h.b16 %v335
  %v1748 = vunpack.c.l.b16 %v336
  %v1749 = vunpack.c.h.b16 %v336
  %v1750 = vunpack.c.l.b16 %v337
  %v1751 = vunpack.c.h.b16 %v337
  %v1752 = vunpack.c.l.b16 %v338
  %v1753 = vunpack.c.h.b16 %v338
  %v1754 = vunpack.c.l.b16 %v339
  %v1755 = vunpack.c.h.b16 %v339
  %v1756 = vunpack.c.l.b16 %v340
  %v1757 = vunpack.c.h.b16 %v340
  %v1758 = vunpack.c.l.b16 %v341
  %v1759 = vunpack.c.h.b16 %v341
  %v1760 = vunpack.c.l.b16 %v342
  %v1761 = vunpack.c.h.b16 %v342
  %v1762 = vunpack.c.l.b16 %v343
  %v1763 = vunpack.c.h.b16 %v343
  %v1764 = vunpack.c.l.b16 %v344
  %v1765 = vunpack.c.h.b16 %v344
  %v1766 = vunpack.c.l.b16 %v345
  %v1767 = vunpack.c.h.b16 %v345
  %v1768 = vunpack.c.l.b16 %v346
  %v1769 = vunpack.c.h.b16 %v346
  %v1770 = vunpack.c.l.b16 %v347
  %v1771 = vunpack.c.h.b16 %v347
  %v1772 = vunpack.c.l.b16 %v348
  %v1773 = vunpack.c.h.b16 %v348
  %v1774 = vunpack.c.l.b16 %v349
  %v1775 = vunpack.c.h.b16 %v349
  %v1776 = vunpack.c.l.b16 %v350
  %v1777 = vunpack.c.h.b16 %v350
  %v1778 = vunpack.c.l.b16 %v351
  %v1779 = vunpack.c.h.b16 %v351
  %v1780 = vunpack.c.l.b16 %v352
  %v1781 = vunpack.c.h.b16 %v352
  %v1782 = vunpack.c.l.b16 %v353
  %v1783 = vunpack.c.h.b16 %v353
  %v1784 = vunpack.c.l.b16 %v354
  %v1785 = vunpack.c.h.b16 %v354
  %v1786 = vunpack.c.l.b16 %v355
  %v1787 = vunpack.c.h.b16 %v355
  %v1788 = vunpack.c.l.b16 %v356
  %v1789 = vunpack.c.h.b16 %v356
  %v1790 = vunpack.c.l.b16 %v357
  %v1791 = vunpack.c.h.b16 %v357
  %v1792 = vunpack.c.l.b16 %v358
  %v1793 = vunpack.c.h.b16 %v358
  %v1794 = vunpack.c.l.b16 %v359
  %v1795 = vunpack.c.h.b16 %v359
  %v1796 = vunpack.c.l.b16 %v360
  %v1797 = vunpack.c.h.b16 %v360
  %v1798 = vunpack.c.l.b16 %v361
  %v1799 = vunpack.c.h.b16 %v361
  %v1800 = vunpack.c.l.b16 %v362
  %v1801 = vunpack.c.h.b16 %v362
  %v1802 = vunpack.c.l.b16 %v363
  %v1803 = vunpack.c.h.b16 %v363
  %v1804 = vunpack.c.l.b16 %v364
  %v1805 = vunpack.c.h.b16 %v364
  %v1806 = vunpack.c.l.b16 %v365
  %v1807 = vunpack.c.h.b16 %v365
  %v1808 = vunpack.c.l.b16 %v366
  %v1809 = vunpack.c.h.b16 %v366
  %v1810 = vunpack.c.l.b16 %v367
  %v1811 = vunpack.c.h.b16 %v367
  %v1812 = vunpack.c.l.b16 %v368
  %v1813 = vunpack.c.h.b16 %v368
  %v1814 = vunpack.c.l.b16 %v369
  %v1815 = vunpack.c.h.b16 %v369
  %v1816 = vunpack.c.l.b16 %v370
  %v1817 = vunpack.c.h.b16 %v370
  %v1818 = vunpack.c.l.b16 %v371
  %v1819 = vunpack.c.h.b16 %v371
  %v1820 = vunpack.c.l.b16 %v372
  %v1821 = vunpack.c.h.b16 %v372
  %v1822 = vunpack.c.l.b16 %v373
  %v1823 = vunpack.c.h.b16 %v373
  %v1824 = vunpack.c.l.b16 %v374
  %v1825 = vunpack.c.h.b16 %v374
  %v1826 = vunpack.c.l.b16 %v375
  %v1827 = vunpack.c.h.b16 %v375
  %v1828 = vunpack.c.l.b16 %v376
  %v1829 = vunpack.c.h.b16 %v376
  %v1830 = vunpack.c.l.b16 %v377
  %v1831 = vunpack.c.h.b16 %v377
  %v1832 = vunpack.c.l.b16 %v378
  %v1833 = vunpack.c.h.b16 %v378
  %v1834 = vunpack.c.l.b16 %v379
  %v1835 = vunpack.c.h.b16 %v379
  %v1836 = vunpack.c.l.b16 %v380
  %v1837 = vunpack.c.h.b16 %v380
  %v1838 = vunpack.c.l.b16 %v381
  %v1839 = vunpack.c.h.b16 %v381
  %v1840 = vunpack.c.l.b16 %v382
  %v1841 = vunpack.c.h.b16 %v382
  %v1842 = vunpack.c.l.b16 %v383
  %v1843 = vunpack.c.h.b16 %v383
  %v1844 = vunpack.c.l.b16 %v384
  %v1845 = vunpack.c.h.b16 %v384
  %v1846 = vunpack.c.l.b16 %v385
  %v1847 = vunpack.c.h.b16 %v385
  %v1848 = vunpack.c.l.b16 %v386
  %v1849 = vunpack.c.h.b16 %v386
  %v1850 = vunpack.c.l.b16 %v387
  %v1851 = vunpack.c.h.b16 %v387
  %v1852 = vunpack.c.l.b16 %v388
  %v1853 = vunpack.c.h.b16 %v388
  %v1854 = vunpack.c.l.b16 %v389
  %v1855 = vunpack.c.h.b16 %v389
  %v1856 = vunpack.c.l.b16 %v390
  %v1857 = vunpack.c.h.b16 %v390
  %v1858 = vunpack.c.l.b16 %v391
  %v1859 = vunpack.c.h.b16 %v391
  %v1860 = vunpack.c.l.b16 %v392
  %v1861 = vunpack.c.h.b16 %v392
  %v1862 = vunpack.c.l.b16 %v393
  %v1863 = vunpack.c.h.b16 %v393
  %v1864 = vunpack.c.l.b16 %v394
  %v1865 = vunpack.c.h.b16 %v394
  %v1866 = vunpack.c.l.b16 %v395
  %v1867 = vunpack.c.h.b16 %v395
  %v1868 = vunpack.c.l.b16 %v396
  %v1869 = vunpack.c.h.b16 %v396
  %v1870 = vunpack.c.l.b16 %v397
  %v1871 = vunpack.c.h.b16 %v397
  %v1872 = vunpack.c.l.b16 %v398
  %v1873 = vunpack.c.h.b16 %v398
  %v1874 = vunpack.c.l.b16 %v399
  %v1875 = vunpack.c.h.b16 %v399
  %v1876 = vunpack.c.l.b16 %v400
  %v1877 = vunpack.c.h.b16 %v400
  %v1878 = vunpack.c.l.b16 %v401
  %v1879 = vunpack.c.h.b16 %v401
  %v1880 = vunpack.c.l.b16 %v402
  %v1881 = vunpack.c.h.b16 %v402
  %v1882 = vunpack.c.l.b16 %v403
  %v1883 = vunpack.c.h.b16 %v403
  %v1884 = vunpack.c.l.b16 %v404
  %v1885 = vunpack.c.h.b16 %v404
  %v1886 = vunpack.c.l.b16 %v405
  %v1887 = vunpack.c.h.b16 %v405
  %v1888 = vunpack.c.l.b16 %v406
  %v1889 = vunpack.c.h.b16 %v406
  %v1890 = vunpack.c.l.b16 %v407
  %v1891 = vunpack.c.h.b16 %v407
  %v1892 = vunpack.c.l.b16 %v408
  %v1893 = vunpack.c.h.b16 %v408
  %v1894 = vunpack.c.l.b16 %v409
  %v1895 = vunpack.c.h.b16 %v409
  %v1896 = vunpack.c.l.b16 %v410
  %v1897 = vunpack.c.h.b16 %v410
  %v1898 = vunpack.c.l.b16 %v411
  %v1899 = vunpack.c.h.b16 %v411
  %v1900 = vunpack.c.l.b16 %v412
  %v1901 = vunpack.c.h.b16 %v412
  %v1902 = vunpack.c.l.b16 %v413
  %v1903 = vunpack.c.h.b16 %v413
  %v1904 = vunpack.c.l.b16 %v414
  %v1905 = vunpack.c.h.b16 %v414
  %v1906 = vunpack.c.l.b16 %v415
  %v1907 = vunpack.c.h.b16 %v415
  %v1908 = vunpack.c.l.b16 %v416
  %v1909 = vunpack.c.h.b16 %v416
  %v1910 = vunpack.c.l.b16 %v417
  %v1911 = vunpack.c.h.b16 %v417
  %v1912 = vunpack.c.l.b16 %v418
  %v1913 = vunpack.c.h.b16 %v418
  %v1914 = vunpack.c.l.b16 %v419
  %v1915 = vunpack.c.h.b16 %v419
  %v1916 = vunpack.c.l.b16 %v420
  %v1917 = vunpack.c.h.b16 %v420
  %v1918 = vunpack.c.l.b16 %v421
  %v1919 = vunpack.c.h.b16 %v421
  %v1920 = vunpack.c.l.b16 %v422
  %v1921 = vunpack.c.h.b16 %v422
  %v1922 = vunpack.c.l.b16 %v423
  %v1923 = vunpack.c.h.b16 %v423
  %v1924 = vunpack.c.l.b16 %v424
  %v1925 = vunpack.c.h.b16 %v424
  %v1926 = vunpack.c.l.b16 %v425
  %v1927 = vunpack.c.h.b16 %v425
  %v1928 = vunpack.c.l.b16 %v426
  %v1929 = vunpack.c.h.b16 %v426
  %v1930 = vunpack.c.l.b16 %v427
  %v1931 = vunpack.c.h.b16 %v427
  %v1932 = vunpack.c.l.b16 %v428
  %v1933 = vunpack.c.h.b16 %v428
  %v1934 = vunpack.c.l.b16 %v429
  %v1935 = vunpack.c.h.b16 %v429
  %v1936 = vunpack.c.l.b16 %v430
  %v1937 = vunpack.c.h.b16 %v430
  %v1938 = vunpack.c.l.b16 %v431
  %v1939 = vunpack.c.h.b16 %v431
  %v1940 = vunpack.c.l.b16 %v432
  %v1941 = vunpack.c.h.b16 %v432
  %v1942 = vunpack.c.l.b16 %v433
  %v1943 = vunpack.c.h.b16 %v433
  %v1944 = vunpack.c.l.b16 %v434
  %v1945 = vunpack.c.h.b16 %v434
  %v1946 = vunpack.c.l.b16 %v435
  %v1947 = vunpack.c.h.b16 %v435
  %v1948 = vunpack.c.l.b16 %v436
  %v1949 = vunpack.c.h.b16 %v436
  %v1950 = vunpack.c.l.b16 %v437
  %v1951 = vunpack.c.h.b16 %v437
  %v1952 = vunpack.c.l.b16 %v438
  %v1953 = vunpack.c.h.b16 %v438
  %v1954 = vunpack.c.l.b16 %v439
  %v1955 = vunpack.c.h.b16 %v439
  %v1956 = vunpack.c.l.b16 %v440
  %v1957 = vunpack.c.h.b16 %v440
  %v1958 = vunpack.c.l.b16 %v441
  %v1959 = vunpack.c.h.b16 %v441
  %v1960 = vunpack.c.l.b16 %v442
  %v1961 = vunpack.c.h.b16 %v442
  %v1962 = vunpack.c.l.b16 %v443
  %v1963 = vunpack.c.h.b16 %v443
  %v1964 = vunpack.c.l.b16 %v444
  %v1965 = vunpack.c.h.b16 %v444
  %v1966 = vunpack.c.l.b16 %v445
  %v1967 = vunpack.c.h.b16 %v445
  %v1968 = vunpack.c.l.b16 %v446
  %v1969 = vunpack.c.h.b16 %v446
  %v1970 = vunpack.c.l.b16 %v447
  %v1971 = vunpack.c.h.b16 %v447
  %v1972 = vunpack.c.l.b16 %v448
  %v1973 = vunpack.c.h.b16 %v448
  %v1974 = vunpack.c.l.b16 %v449
  %v1975 = vunpack.c.h.b16 %v449
  %v1976 = vunpack.c.l.b16 %v450
  %v1977 = vunpack.c.h.b16 %v450
  %v1978 = vunpack.c.l.b16 %v451
  %v1979 = vunpack.c.h.b16 %v451
  %v1980 = vunpack.c.l.b16 %v452
  %v1981 = vunpack.c.h.b16 %v452
  %v1982 = vunpack.c.l.b16 %v453
  %v1983 = vunpack.c.h.b16 %v453
  %v1984 = vunpack.c.l.b16 %v454
  %v1985 = vunpack.c.h.b16 %v454
  %v1986 = vunpack.c.l.b16 %v455
  %v1987 = vunpack.c.h.b16 %v455
  %v1988 = vunpack.c.l.b16 %v456
  %v1989 = vunpack.c.h.b16 %v456
  %v1990 = vunpack.c.l.b16 %v457
  %v1991 = vunpack.c.h.b16 %v457
  %v1992 = vunpack.c.l.b16 %v458
  %v1993 = vunpack.c.h.b16 %v458
  %v1994 = vunpack.c.l.b16 %v459
  %v1995 = vunpack.c.h.b16 %v459
  %v1996 = vunpack.c.l.b16 %v460
  %v1997 = vunpack.c.h.b16 %v460
  %v1998 = vunpack.c.l.b16 %v461
  %v1999 = vunpack.c.h.b16 %v461
  %v2000 = vunpack.c.l.b16 %v462
  %v2001 = vunpack.c.h.b16 %v462
  %v2002 = vunpack.c.l.b16 %v463
  %v2003 = vunpack.c.h.b16 %v463
  %v2004 = vunpack.c.l.b16 %v464
  %v2005 = vunpack.c.h.b16 %v464
  %v2006 = vunpack.c.l.b16 %v465
  %v2007 = vunpack.c.h.b16 %v465
  %v2008 = vunpack.c.l.b16 %v466
  %v2009 = vunpack.c.h.b16 %v466
  %v2010 = vunpack.c.l.b16 %v467
  %v2011 = vunpack.c.h.b16 %v467
  %v2012 = vunpack.c.l.b16 %v468
  %v2013 = vunpack.c.h.b16 %v468
  %v2014 = vunpack.c.l.b16 %v469
  %v2015 = vunpack.c.h.b16 %v469
  %v2016 = vunpack.c.l.b16 %v470
  %v2017 = vunpack.c.h.b16 %v470
  %v2018 = vunpack.c.l.b16 %v471
  %v2019 = vunpack.c.h.b16 %v471
  %v2020 = vunpack.c.l.b16 %v472
  %v2021 = vunpack.c.h.b16 %v472
  %v2022 = vunpack.c.l.b16 %v473
  %v2023 = vunpack.c.h.b16 %v473
  %v2024 = vunpack.c.l.b16 %v474
  %v2025 = vunpack.c.h.b16 %v474
  %v2026 = vunpack.c.l.b16 %v475
  %v2027 = vunpack.c.h.b16 %v475
  %v2028 = vunpack.c.l.b16 %v476
  %v2029 = vunpack.c.h.b16 %v476
  %v2030 = vunpack.c.l.b16 %v477
  %v2031 = vunpack.c.h.b16 %v477
  %v2032 = vunpack.c.l.b16 %v478
  %v2033 = vunpack.c.h.b16 %v478
  %v2034 = vunpack.c.l.b16 %v479
  %v2035 = vunpack.c.h.b16 %v479
  %v2036 = vunpack.c.l.b16 %v480
  %v2037 = vunpack.c.h.b16 %v480
  %v2038 = vunpack.c.l.b16 %v481
  %v2039 = vunpack.c.h.b16 %v481
  %v2040 = vunpack.c.l.b16 %v482
  %v2041 = vunpack.c.h.b16 %v482
  %v2042 = vunpack.c.l.b16 %v483
  %v2043 = vunpack.c.h.b16 %v483
  %v2044 = vunpack.c.l.b16 %v484
  %v2045 = vunpack.c.h.b16 %v484
  %v2046 = vunpack.c.l.b16 %v485
  %v2047 = vunpack.c.h.b16 %v485
  %v2048 = vunpack.c.l.b16 %v486
  %v2049 = vunpack.c.h.b16 %v486
  %v2050 = vunpack.c.l.b16 %v487
  %v2051 = vunpack.c.h.b16 %v487
  %v2052 = vunpack.c.l.b16 %v488
  %v2053 = vunpack.c.h.b16 %v488
  %v2054 = vunpack.c.l.b16 %v489
  %v2055 = vunpack.c.h.b16 %v489
  %v2056 = vunpack.c.l.b16 %v490
  %v2057 = vunpack.c.h.b16 %v490
  %v2058 = vunpack.c.l.b16 %v491
  %v2059 = vunpack.c.h.b16 %v491
  %v2060 = vunpack.c.l.b16 %v492
  %v2061 = vunpack.c.h.b16 %v492
  %v2062 = vunpack.c.l.b16 %v493
  %v2063 = vunpack.c.h.b16 %v493
  %v2064 = vunpack.c.l.b16 %v494
  %v2065 = vunpack.c.h.b16 %v494
  %v2066 = vunpack.c.l.b16 %v495
  %v2067 = vunpack.c.h.b16 %v495
  %v2068 = vunpack.c.l.b16 %v496
  %v2069 = vunpack.c.h.b16 %v496
  %v2070 = vunpack.c.l.b16 %v497
  %v2071 = vunpack.c.h.b16 %v497
  %v2072 = vunpack.c.l.b16 %v498
  %v2073 = vunpack.c.h.b16 %v498
  %v2074 = vunpack.c.l.b16 %v499
  %v2075 = vunpack.c.h.b16 %v499
  %v2076 = vunpack.c.l.b16 %v500
  %v2077 = vunpack.c.h.b16 %v500
  %v2078 = vunpack.c.l.b16 %v501
  %v2079 = vunpack.c.h.b16 %v501
  %v2080 = vunpack.c.l.b16 %v502
  %v2081 = vunpack.c.h.b16 %v502
  %v2082 = vunpack.c.l.b16 %v503
  %v2083 = vunpack.c.h.b16 %v503
  %v2084 = vunpack.c.l.b16 %v504
  %v2085 = vunpack.c.h.b16 %v504
  %v2086 = vunpack.c.l.b16 %v505
  %v2087 = vunpack.c.h.b16 %v505
  %v2088 = vunpack.c.l.b16 %v506
  %v2089 = vunpack.c.h.b16 %v506
  %v2090 = vunpack.c.l.b16 %v507
  %v2091 = vunpack.c.h.b16 %v507
  %v2092 = vunpack.c.l.b16 %v508
  %v2093 = vunpack.c.h.b16 %v508
  %v2094 = vunpack.c.l.b16 %v509
  %v2095 = vunpack.c.h.b16 %v509
  %v2096 = vunpack.c.l.b16 %v510
  %v2097 = vunpack.c.h.b16 %v510
  %v2098 = vunpack.c.l.b16 %v511
  %v2099 = vunpack.c.h.b16 %v511
  %v2100 = vunpack.c.l.b16 %v512
  %v2101 = vunpack.c.h.b16 %v512
  %v2102 = vunpack.c.l.b16 %v513
  %v2103 = vunpack.c.h.b16 %v513
  %v2104 = vunpack.c.l.b16 %v514
  %v2105 = vunpack.c.h.b16 %v514
  %v2106 = vunpack.c.l.b16 %v515
  %v2107 = vunpack.c.h.b16 %v515
  %v2108 = vunpack.c.l.b16 %v516
  %v2109 = vunpack.c.h.b16 %v516
  %v2110 = vunpack.c.l.b16 %v517
  %v2111 = vunpack.c.h.b16 %v517
  %v2112 = vunpack.c.l.b16 %v518
  %v2113 = vunpack.c.h.b16 %v518
  %v2114 = vunpack.c.l.b16 %v519
  %v2115 = vunpack.c.h.b16 %v519
  %v2116 = vunpack.c.l.b16 %v520
  %v2117 = vunpack.c.h.b16 %v520
  %v2118 = vunpack.c.l.b16 %v521
  %v2119 = vunpack.c.h.b16 %v521
  %v2120 = vunpack.c.l.b16 %v522
  %v2121 = vunpack.c.h.b16 %v522
  %v2122 = vunpack.c.l.b16 %v523
  %v2123 = vunpack.c.h.b16 %v523
  %v2124 = vunpack.c.l.b16 %v524
  %v2125 = vunpack.c.h.b16 %v524
  %v2126 = vunpack.c.l.b16 %v525
  %v2127 = vunpack.c.h.b16 %v525
  %v2128 = vunpack.c.l.b16 %v526
  %v2129 = vunpack.c.h.b16 %v526
  %v2130 = vunpack.c.l.b16 %v527
  %v2131 = vunpack.c.h.b16 %v527
  %v2132 = vunpack.c.l.b16 %v528
  %v2133 = vunpack.c.h.b16 %v528
  %v2134 = vunpack.c.l.b16 %v529
  %v2135 = vunpack.c.h.b16 %v529
  %v2136 = vpack.c.b16 %v1120, %v1112
  %v2137 = vpack.c.b16 %v1121, %v1113
  %v2138 = vpack.c.b16 %v1122, %v1114
  %v2139 = vpack.c.b16 %v1123, %v1115
  %v2140 = vpack.c.b16 %v1124, %v1116
  %v2141 = vpack.c.b16 %v1125, %v1117
  %v2142 = vpack.c.b16 %v1126, %v1118
  %v2143 = vpack.c.b16 %v1127, %v1119
  %v2144 = vpack.c.b16 %v1136, %v1128
  %v2145 = vpack.c.b16 %v1137, %v1129
  %v2146 = vpack.c.b16 %v1138, %v1130
  %v2147 = vpack.c.b16 %v1139, %v1131
  %v2148 = vpack.c.b16 %v1140, %v1132
  %v2149 = vpack.c.b16 %v1141, %v1133
  %v2150 = vpack.c.b16 %v1142, %v1134
  %v2151 = vpack.c.b16 %v1143, %v1135
  %v2152 = vpack.c.b16 %v1152, %v1144
  %v2153 = vpack.c.b16 %v1153, %v1145
  %v2154 = vpack.c.b16 %v1154, %v1146
  %v2155 = vpack.c.b16 %v1155, %v1147
  %v2156 = vpack.c.b16 %v1156, %v1148
  %v2157 = vpack.c.b16 %v1157, %v1149
  %v2158 = vpack.c.b16 %v1158, %v1150
  %v2159 = vpack.c.b16 %v1159, %v1151
  %v2160 = vpack.c.b16 %v1168, %v1160
  %v2161 = vpack.c.b16 %v1169, %v1161
  %v2162 = vpack.c.b16 %v1170, %v1162
  %v2163 = vpack.c.b16 %v1171, %v1163
  %v2164 = vpack.c.b16 %v1172, %v1164
  %v2165 = vpack.c.b16 %v1173, %v1165
  %v2166 = vpack.c.b16 %v1174, %v1166
  %v2167 = vpack.c.b16 %v1175, %v1167
  %v2168 = vpack.c.b16 %v1184, %v1176
  %v2169 = vpack.c.b16 %v1185, %v1177
  %v2170 = vpack.c.b16 %v1186, %v1178
  %v2171 = vpack.c.b16 %v1187, %v1179
  %v2172 = vpack.c.b16 %v1188, %v1180
  %v2173 = vpack.c.b16 %v1189, %v1181
  %v2174 = vpack.c.b16 %v1190, %v1182
  %v2175 = vpack.c.b16 %v1191, %v1183
  %v2176 = vpack.c.b16 %v1200, %v1192
  %v2177 = vpack.c.b16 %v1201, %v1193
  %v2178 = vpack.c.b16 %v1202, %v1194
  %v2179 = vpack.c.b16 %v1203, %v1195
  %v2180 = vpack.c.b16 %v1204, %v1196
  %v2181 = vpack.c.b16 %v1205, %v1197
  %v2182 = vpack.c.b16 %v1206, %v1198
  %v2183 = vpack.c.b16 %v1207, %v1199
  %v2184 = vpack.c.b16 %v1216, %v1208
  %v2185 = vpack.c.b16 %v1217, %v1209
  %v2186 = vpack.c.b16 %v1218, %v1210
  %v2187 = vpack.c.b16 %v1219, %v1211
  %v2188 = vpack.c.b16 %v1220, %v1212
  %v2189 = vpack.c.b16 %v1221, %v1213
  %v2190 = vpack.c.b16 %v1222, %v1214
  %v2191 = vpack.c.b16 %v1223, %v1215
  %v2192 = vpack.c.b16 %v1232, %v1224
  %v2193 = vpack.c.b16 %v1233, %v1225
  %v2194 = vpack.c.b16 %v1234, %v1226
  %v2195 = vpack.c.b16 %v1235, %v1227
  %v2196 = vpack.c.b16 %v1236, %v1228
  %v2197 = vpack.c.b16 %v1237, %v1229
  %v2198 = vpack.c.b16 %v1238, %v1230
  %v2199 = vpack.c.b16 %v1239, %v1231
  %v2200 = vpack.c.b16 %v1248, %v1240
  %v2201 = vpack.c.b16 %v1249, %v1241
  %v2202 = vpack.c.b16 %v1250, %v1242
  %v2203 = vpack.c.b16 %v1251, %v1243
  %v2204 = vpack.c.b16 %v1252, %v1244
  %v2205 = vpack.c.b16 %v1253, %v1245
  %v2206 = vpack.c.b16 %v1254, %v1246
  %v2207 = vpack.c.b16 %v1255, %v1247
  %v2208 = vpack.c.b16 %v1264, %v1256
  %v2209 = vpack.c.b16 %v1265, %v1257
  %v2210 = vpack.c.b16 %v1266, %v1258
  %v2211 = vpack.c.b16 %v1267, %v1259
  %v2212 = vpack.c.b16 %v1268, %v1260
  %v2213 = vpack.c.b16 %v1269, %v1261
  %v2214 = vpack.c.b16 %v1270, %v1262
  %v2215 = vpack.c.b16 %v1271, %v1263
  %v2216 = vpack.c.b16 %v1280, %v1272
  %v2217 = vpack.c.b16 %v1281, %v1273
  %v2218 = vpack.c.b16 %v1282, %v1274
  %v2219 = vpack.c.b16 %v1283, %v1275
  %v2220 = vpack.c.b16 %v1284, %v1276
  %v2221 = vpack.c.b16 %v1285, %v1277
  %v2222 = vpack.c.b16 %v1286, %v1278
  %v2223 = vpack.c.b16 %v1287, %v1279
  %v2224 = vpack.c.b16 %v1296, %v1288
  %v2225 = vpack.c.b16 %v1297, %v1289
  %v2226 = vpack.c.b16 %v1298, %v1290
  %v2227 = vpack.c.b16 %v1299, %v1291
  %v2228 = vpack.c.b16 %v1300, %v1292
  %v2229 = vpack.c.b16 %v1301, %v1293
  %v2230 = vpack.c.b16 %v1302, %v1294
  %v2231 = vpack.c.b16 %v1303, %v1295
  %v2232 = vpack.c.b16 %v1312, %v1304
  %v2233 = vpack.c.b16 %v1313, %v1305
  %v2234 = vpack.c.b16 %v1314, %v1306
  %v2235 = vpack.c.b16 %v1315, %v1307
  %v2236 = vpack.c.b16 %v1316, %v1308
  %v2237 = vpack.c.b16 %v1317, %v1309
  %v2238 = vpack.c.b16 %v1318, %v1310
  %v2239 = vpack.c.b16 %v1319, %v1311
  %v2240 = vpack.c.b16 %v1328, %v1320
  %v2241 = vpack.c.b16 %v1329, %v1321
  %v2242 = vpack.c.b16 %v1330, %v1322
  %v2243 = vpack.c.b16 %v1331, %v1323
  %v2244 = vpack.c.b16 %v1332, %v1324
  %v2245 = vpack.c.b16 %v1333, %v1325
  %v2246 = vpack.c.b16 %v1334, %v1326
  %v2247 = vpack.c.b16 %v1335, %v1327
  %v2248 = vpack.c.b16 %v1344, %v1336
  %v2249 = vpack.c.b16 %v1345, %v1337
  %v2250 = vpack.c.b16 %v1346, %v1338
  %v2251 = vpack.c.b16 %v1347, %v1339
  %v2252 = vpack.c.b16 %v1348, %v1340
  %v2253 = vpack.c.b16 %v1349, %v1341
  %v2254 = vpack.c.b16 %v1350, %v1342
  %v2255 = vpack.c.b16 %v1351, %v1343
  %v2256 = vpack.c.b16 %v1360, %v1352
  %v2257 = vpack.c.b16 %v1361, %v1353
  %v2258 = vpack.c.b16 %v1362, %v1354
  %v2259 = vpack.c.b16 %v1363, %v1355
  %v2260 = vpack.c.b16 %v1364, %v1356
  %v2261 = vpack.c.b16 %v1365, %v1357
  %v2262 = vpack.c.b16 %v1366, %v1358
  %v2263 = vpack.c.b16 %v1367, %v1359
  %v2264 = vpack.c.b16 %v1376, %v1368
  %v2265 = vpack.c.b16 %v1377, %v1369
  %v2266 = vpack.c.b16 %v1378, %v1370
  %v2267 = vpack.c.b16 %v1379, %v1371
  %v2268 = vpack.c.b16 %v1380, %v1372
  %v2269 = vpack.c.b16 %v1381, %v1373
  %v2270 = vpack.c.b16 %v1382, %v1374
  %v2271 = vpack.c.b16 %v1383, %v1375
  %v2272 = vpack.c.b16 %v1392, %v1384
  %v2273 = vpack.c.b16 %v1393, %v1385
  %v2274 = vpack.c.b16 %v1394, %v1386
  %v2275 = vpack.c.b16 %v1395, %v1387
  %v2276 = vpack.c.b16 %v1396, %v1388
  %v2277 = vpack.c.b16 %v1397, %v1389
  %v2278 = vpack.c.b16 %v1398, %v1390
  %v2279 = vpack.c.b16 %v1399, %v1391
  %v2280 = vpack.c.b16 %v1408, %v1400
  %v2281 = vpack.c.b16 %v1409, %v1401
  %v2282 = vpack.c.b16 %v1410, %v1402
  %v2283 = vpack.c.b16 %v1411, %v1403
  %v2284 = vpack.c.b16 %v1412, %v1404
  %v2285 = vpack.c.b16 %v1413, %v1405
  %v2286 = vpack.c.b16 %v1414, %v1406
  %v2287 = vpack.c.b16 %v1415, %v1407
  %v2288 = vpack.c.b16 %v1424, %v1416
  %v2289 = vpack.c.b16 %v1425, %v1417
  %v2290 = vpack.c.b16 %v1426, %v1418
  %v2291 = vpack.c.b16 %v1427, %v1419
  %v2292 = vpack.c.b16 %v1428, %v1420
  %v2293 = vpack.c.b16 %v1429, %v1421
  %v2294 = vpack.c.b16 %v1430, %v1422
  %v2295 = vpack.c.b16 %v1431, %v1423
  %v2296 = vpack.c.b16 %v1440, %v1432
  %v2297 = vpack.c.b16 %v1441, %v1433
  %v2298 = vpack.c.b16 %v1442, %v1434
  %v2299 = vpack.c.b16 %v1443, %v1435
  %v2300 = vpack.c.b16 %v1444, %v1436
  %v2301 = vpack.c.b16 %v1445, %v1437
  %v2302 = vpack.c.b16 %v1446, %v1438
  %v2303 = vpack.c.b16 %v1447, %v1439
  %v2304 = vpack.c.b16 %v1456, %v1448
  %v2305 = vpack.c.b16 %v1457, %v1449
  %v2306 = vpack.c.b16 %v1458, %v1450
  %v2307 = vpack.c.b16 %v1459, %v1451
  %v2308 = vpack.c.b16 %v1460, %v1452
  %v2309 = vpack.c.b16 %v1461, %v1453
  %v2310 = vpack.c.b16 %v1462, %v1454
  %v2311 = vpack.c.b16 %v1463, %v1455
  %v2312 = vpack.c.b16 %v1472, %v1464
  %v2313 = vpack.c.b16 %v1473, %v1465
  %v2314 = vpack.c.b16 %v1474, %v1466
  %v2315 = vpack.c.b16 %v1475, %v1467
  %v2316 = vpack.c.b16 %v1476, %v1468
  %v2317 = vpack.c.b16 %v1477, %v1469
  %v2318 = vpack.c.b16 %v1478, %v1470
  %v2319 = vpack.c.b16 %v1479, %v1471
  %v2320 = vpack.c.b16 %v1488, %v1480
  %v2321 = vpack.c.b16 %v1489, %v1481
  %v2322 = vpack.c.b16 %v1490, %v1482
  %v2323 = vpack.c.b16 %v1491, %v1483
  %v2324 = vpack.c.b16 %v1492, %v1484
  %v2325 = vpack.c.b16 %v1493, %v1485
  %v2326 = vpack.c.b16 %v1494, %v1486
  %v2327 = vpack.c.b16 %v1495, %v1487
  %v2328 = vpack.c.b16 %v1504, %v1496
  %v2329 = vpack.c.b16 %v1505, %v1497
  %v2330 = vpack.c.b16 %v1506, %v1498
  %v2331 = vpack.c.b16 %v1507, %v1499
  %v2332 = vpack.c.b16 %v1508, %v1500
  %v2333 = vpack.c.b16 %v1509, %v1501
  %v2334 = vpack.c.b16 %v1510, %v1502
  %v2335 = vpack.c.b16 %v1511, %v1503
  %v2336 = vpack.c.b16 %v1520, %v1512
  %v2337 = vpack.c.b16 %v1521, %v1513
  %v2338 = vpack.c.b16 %v1522, %v1514
  %v2339 = vpack.c.b16 %v1523, %v1515
  %v2340 = vpack.c.b16 %v1524, %v1516
  %v2341 = vpack.c.b16 %v1525, %v1517
  %v2342 = vpack.c.b16 %v1526, %v1518
  %v2343 = vpack.c.b16 %v1527, %v1519
  %v2344 = vpack.c.b16 %v1536, %v1528
  %v2345 = vpack.c.b16 %v1537, %v1529
  %v2346 = vpack.c.b16 %v1538, %v1530
  %v2347 = vpack.c.b16 %v1539, %v1531
  %v2348 = vpack.c.b16 %v1540, %v1532
  %v2349 = vpack.c.b16 %v1541, %v1533
  %v2350 = vpack.c.b16 %v1542, %v1534
  %v2351 = vpack.c.b16 %v1543, %v1535
  %v2352 = vpack.c.b16 %v1552, %v1544
  %v2353 = vpack.c.b16 %v1553, %v1545
  %v2354 = vpack.c.b16 %v1554, %v1546
  %v2355 = vpack.c.b16 %v1555, %v1547
  %v2356 = vpack.c.b16 %v1556, %v1548
  %v2357 = vpack.c.b16 %v1557, %v1549
  %v2358 = vpack.c.b16 %v1558, %v1550
  %v2359 = vpack.c.b16 %v1559, %v1551
  %v2360 = vpack.c.b16 %v1568, %v1560
  %v2361 = vpack.c.b16 %v1569, %v1561
  %v2362 = vpack.c.b16 %v1570, %v1562
  %v2363 = vpack.c.b16 %v1571, %v1563
  %v2364 = vpack.c.b16 %v1572, %v1564
  %v2365 = vpack.c.b16 %v1573, %v1565
  %v2366 = vpack.c.b16 %v1574, %v1566
  %v2367 = vpack.c.b16 %v1575, %v1567
  %v2368 = vpack.c.b16 %v1584, %v1576
  %v2369 = vpack.c.b16 %v1585, %v1577
  %v2370 = vpack.c.b16 %v1586, %v1578
  %v2371 = vpack.c.b16 %v1587, %v1579
  %v2372 = vpack.c.b16 %v1588, %v1580
  %v2373 = vpack.c.b16 %v1589, %v1581
  %v2374 = vpack.c.b16 %v1590, %v1582
  %v2375 = vpack.c.b16 %v1591, %v1583
  %v2376 = vpack.c.b16 %v1600, %v1592
  %v2377 = vpack.c.b16 %v1601, %v1593
  %v2378 = vpack.c.b16 %v1602, %v1594
  %v2379 = vpack.c.b16 %v1603, %v1595
  %v2380 = vpack.c.b16 %v1604, %v1596
  %v2381 = vpack.c.b16 %v1605, %v1597
  %v2382 = vpack.c.b16 %v1606, %v1598
  %v2383 = vpack.c.b16 %v1607, %v1599
  %v2384 = vpack.c.b16 %v1616, %v1608
  %v2385 = vpack.c.b16 %v1617, %v1609
  %v2386 = vpack.c.b16 %v1618, %v1610
  %v2387 = vpack.c.b16 %v1619, %v1611
  %v2388 = vpack.c.b16 %v1620, %v1612
  %v2389 = vpack.c.b16 %v1621, %v1613
  %v2390 = vpack.c.b16 %v1622, %v1614
  %v2391 = vpack.c.b16 %v1623, %v1615
  %v2392 = vpack.c.b16 %v1632, %v1624
  %v2393 = vpack.c.b16 %v1633, %v1625
  %v2394 = vpack.c.b16 %v1634, %v1626
  %v2395 = vpack.c.b16 %v1635, %v1627
  %v2396 = vpack.c.b16 %v1636, %v1628
  %v2397 = vpack.c.b16 %v1637, %v1629
  %v2398 = vpack.c.b16 %v1638, %v1630
  %v2399 = vpack.c.b16 %v1639, %v1631
  %v2400 = vpack.c.b16 %v1648, %v1640
  %v2401 = vpack.c.b16 %v1649, %v1641
  %v2402 = vpack.c.b16 %v1650, %v1642
  %v2403 = vpack.c.b16 %v1651, %v1643
  %v2404 = vpack.c.b16 %v1652, %v1644
  %v2405 = vpack.c.b16 %v1653, %v1645
  %v2406 = vpack.c.b16 %v1654, %v1646
  %v2407 = vpack.c.b16 %v1655, %v1647
  %v2408 = vpack.c.b16 %v1664, %v1656
  %v2409 = vpack.c.b16 %v1665, %v1657
  %v2410 = vpack.c.b16 %v1666, %v1658
  %v2411 = vpack.c.b16 %v1667, %v1659
  %v2412 = vpack.c.b16 %v1668, %v1660
  %v2413 = vpack.c.b16 %v1669, %v1661
  %v2414 = vpack.c.b16 %v1670, %v1662
  %v2415 = vpack.c.b16 %v1671, %v1663
  %v2416 = vpack.c.b16 %v1680, %v1672
  %v2417 = vpack.c.b16 %v1681, %v1673
  %v2418 = vpack.c.b16 %v1682, %v1674
  %v2419 = vpack.c.b16 %v1683, %v1675
  %v2420 = vpack.c.b16 %v1684, %v1676
  %v2421 = vpack.c.b16 %v1685, %v1677
  %v2422 = vpack.c.b16 %v1686, %v1678
  %v2423 = vpack.c.b16 %v1687, %v1679
  %v2424 = vpack.c.b16 %v1696, %v1688
  %v2425 = vpack.c.b16 %v1697, %v1689
  %v2426 = vpack.c.b16 %v1698, %v1690
  %v2427 = vpack.c.b16 %v1699, %v1691
  %v2428 = vpack.c.b16 %v1700, %v1692
  %v2429 = vpack.c.b16 %v1701, %v1693
  %v2430 = vpack.c.b16 %v1702, %v1694
  %v2431 = vpack.c.b16 %v1703, %v1695
  %v2432 = vpack.c.b16 %v1712, %v1704
  %v2433 = vpack.c.b16 %v1713, %v1705
  %v2434 = vpack.c.b16 %v1714, %v1706
  %v2435 = vpack.c.b16 %v1715, %v1707
  %v2436 = vpack.c.b16 %v1716, %v1708
  %v2437 = vpack.c.b16 %v1717, %v1709
  %v2438 = vpack.c.b16 %v1718, %v1710
  %v2439 = vpack.c.b16 %v1719, %v1711
  %v2440 = vpack.c.b16 %v1728, %v1720
  %v2441 = vpack.c.b16 %v1729, %v1721
  %v2442 = vpack.c.b16 %v1730, %v1722
  %v2443 = vpack.c.b16 %v1731, %v1723
  %v2444 = vpack.c.b16 %v1732, %v1724
  %v2445 = vpack.c.b16 %v1733, %v1725
  %v2446 = vpack.c.b16 %v1734, %v1726
  %v2447 = vpack.c.b16 %v1735, %v1727
  %v2448 = vpack.c.b16 %v1744, %v1736
  %v2449 = vpack.c.b16 %v1745, %v1737
  %v2450 = vpack.c.b16 %v1746, %v1738
  %v2451 = vpack.c.b16 %v1747, %v1739
  %v2452 = vpack.c.b16 %v1748, %v1740
  %v2453 = vpack.c.b16 %v1749, %v1741
  %v2454 = vpack.c.b16 %v1750, %v1742
  %v2455 = vpack.c.b16 %v1751, %v1743
  %v2456 = vpack.c.b16 %v1760, %v1752
  %v2457 = vpack.c.b16 %v1761, %v1753
  %v2458 = vpack.c.b16 %v1762, %v1754
  %v2459 = vpack.c.b16 %v1763, %v1755
  %v2460 = vpack.c.b16 %v1764, %v1756
  %v2461 = vpack.c.b16 %v1765, %v1757
  %v2462 = vpack.c.b16 %v1766, %v1758
  %v2463 = vpack.c.b16 %v1767, %v1759
  %v2464 = vpack.c.b16 %v1776, %v1768
  %v2465 = vpack.c.b16 %v1777, %v1769
  %v2466 = vpack.c.b16 %v1778, %v1770
  %v2467 = vpack.c.b16 %v1779, %v1771
  %v2468 = vpack.c.b16 %v1780, %v1772
  %v2469 = vpack.c.b16 %v1781, %v1773
  %v2470 = vpack.c.b16 %v1782, %v1774
  %v2471 = vpack.c.b16 %v1783, %v1775
  %v2472 = vpack.c.b16 %v1792, %v1784
  %v2473 = vpack.c.b16 %v1793, %v1785
  %v2474 = vpack.c.b16 %v1794, %v1786
  %v2475 = vpack.c.b16 %v1795, %v1787
  %v2476 = vpack.c.b16 %v1796, %v1788
  %v2477 = vpack.c.b16 %v1797, %v1789
  %v2478 = vpack.c.b16 %v1798, %v1790
  %v2479 = vpack.c.b16 %v1799, %v1791
  %v2480 = vpack.c.b16 %v1808, %v1800
  %v2481 = vpack.c.b16 %v1809, %v1801
  %v2482 = vpack.c.b16 %v1810, %v1802
  %v2483 = vpack.c.b16 %v1811, %v1803
  %v2484 = vpack.c.b16 %v1812, %v1804
  %v2485 = vpack.c.b16 %v1813, %v1805
  %v2486 = vpack.c.b16 %v1814, %v1806
  %v2487 = vpack.c.b16 %v1815, %v1807
  %v2488 = vpack.c.b16 %v1824, %v1816
  %v2489 = vpack.c.b16 %v1825, %v1817
  %v2490 = vpack.c.b16 %v1826, %v1818
  %v2491 = vpack.c.b16 %v1827, %v1819
  %v2492 = vpack.c.b16 %v1828, %v1820
  %v2493 = vpack.c.b16 %v1829, %v1821
  %v2494 = vpack.c.b16 %v1830, %v1822
  %v2495 = vpack.c.b16 %v1831, %v1823
  %v2496 = vpack.c.b16 %v1840, %v1832
  %v2497 = vpack.c.b16 %v1841, %v1833
  %v2498 = vpack.c.b16 %v1842, %v1834
  %v2499 = vpack.c.b16 %v1843, %v1835
  %v2500 = vpack.c.b16 %v1844, %v1836
  %v2501 = vpack.c.b16 %v1845, %v1837
  %v2502 = vpack.c.b16 %v1846, %v1838
  %v2503 = vpack.c.b16 %v1847, %v1839
  %v2504 = vpack.c.b16 %v1856, %v1848
  %v2505 = vpack.c.b16 %v1857, %v1849
  %v2506 = vpack.c.b16 %v1858, %v1850
  %v2507 = vpack.c.b16 %v1859, %v1851
  %v2508 = vpack.c.b16 %v1860, %v1852
  %v2509 = vpack.c.b16 %v1861, %v1853
  %v2510 = vpack.c.b16 %v1862, %v1854
  %v2511 = vpack.c.b16 %v1863, %v1855
  %v2512 = vpack.c.b16 %v1872, %v1864
  %v2513 = vpack.c.b16 %v1873, %v1865
  %v2514 = vpack.c.b16 %v1874, %v1866
  %v2515 = vpack.c.b16 %v1875, %v1867
  %v2516 = vpack.c.b16 %v1876, %v1868
  %v2517 = vpack.c.b16 %v1877, %v1869
  %v2518 = vpack.c.b16 %v1878, %v1870
  %v2519 = vpack.c.b16 %v1879, %v1871
  %v2520 = vpack.c.b16 %v1888, %v1880
  %v2521 = vpack.c.b16 %v1889, %v1881
  %v2522 = vpack.c.b16 %v1890, %v1882
  %v2523 = vpack.c.b16 %v1891, %v1883
  %v2524 = vpack.c.b16 %v1892, %v1884
  %v2525 = vpack.c.b16 %v1893, %v1885
  %v2526 = vpack.c.b16 %v1894, %v1886
  %v2527 = vpack.c.b16 %v1895, %v1887
  %v2528 = vpack.c.b16 %v1904, %v1896
  %v2529 = vpack.c.b16 %v1905, %v1897
  %v2530 = vpack.c.b16 %v1906, %v1898
  %v2531 = vpack.c.b16 %v1907, %v1899
  %v2532 = vpack.c.b16 %v1908, %v1900
  %v2533 = vpack.c.b16 %v1909, %v1901
  %v2534 = vpack.c.b16 %v1910, %v1902
  %v2535 = vpack.c.b16 %v1911, %v1903
  %v2536 = vpack.c.b16 %v1920, %v1912
  %v2537 = vpack.c.b16 %v1921, %v1913
  %v2538 = vpack.c.b16 %v1922, %v1914
  %v2539 = vpack.c.b16 %v1923, %v1915
  %v2540 = vpack.c.b16 %v1924, %v1916
  %v2541 = vpack.c.b16 %v1925, %v1917
  %v2542 = vpack.c.b16 %v1926, %v1918
  %v2543 = vpack.c.b16 %v1927, %v1919
  %v2544 = vpack.c.b16 %v1936, %v1928
  %v2545 = vpack.c.b16 %v1937, %v1929
  %v2546 = vpack.c.b16 %v1938, %v1930
  %v2547 = vpack.c.b16 %v1939, %v1931
  %v2548 = vpack.c.b16 %v1940, %v1932
  %v2549 = vpack.c.b16 %v1941, %v1933
  %v2550 = vpack.c.b16 %v1942, %v1934
  %v2551 = vpack.c.b16 %v1943, %v1935
  %v2552 = vpack.c.b16 %v1952, %v1944
  %v2553 = vpack.c.b16 %v1953, %v1945
  %v2554 = vpack.c.b16 %v1954, %v1946
  %v2555 = vpack.c.b16 %v1955, %v1947
  %v2556 = vpack.c.b16 %v1956, %v1948
  %v2557 = vpack.c.b16 %v1957, %v1949
  %v2558 = vpack.c.b16 %v1958, %v1950
  %v2559 = vpack.c.b16 %v1959, %v1951
  %v2560 = vpack.c.b16 %v1968, %v1960
  %v2561 = vpack.c.b16 %v1969, %v1961
  %v2562 = vpack.c.b16 %v1970, %v1962
  %v2563 = vpack.c.b16 %v1971, %v1963
  %v2564 = vpack.c.b16 %v1972, %v1964
  %v2565 = vpack.c.b16 %v1973, %v1965
  %v2566 = vpack.c.b16 %v1974, %v1966
  %v2567 = vpack.c.b16 %v1975, %v1967
  %v2568 = vpack.c.b16 %v1984, %v1976
  %v2569 = vpack.c.b16 %v1985, %v1977
  %v2570 = vpack.c.b16 %v1986, %v1978
  %v2571 = vpack.c.b16 %v1987, %v1979
  %v2572 = vpack.c.b16 %v1988, %v1980
  %v2573 = vpack.c.b16 %v1989, %v1981
  %v2574 = vpack.c.b16 %v1990, %v1982
  %v2575 = vpack.c.b16 %v1991, %v1983
  %v2576 = vpack.c.b16 %v2000, %v1992
  %v2577 = vpack.c.b16 %v2001, %v1993
  %v2578 = vpack.c.b16 %v2002, %v1994
  %v2579 = vpack.c.b16 %v2003, %v1995
  %v2580 = vpack.c.b16 %v2004, %v1996
  %v2581 = vpack.c.b16 %v2005, %v1997
  %v2582 = vpack.c.b16 %v2006, %v1998
  %v2583 = vpack.c.b16 %v2007, %v1999
  %v2584 = vpack.c.b16 %v2016, %v2008
  %v2585 = vpack.c.b16 %v2017, %v2009
  %v2586 = vpack.c.b16 %v2018, %v2010
  %v2587 = vpack.c.b16 %v2019, %v2011
  %v2588 = vpack.c.b16 %v2020, %v2012
  %v2589 = vpack.c.b16 %v2021, %v2013
  %v2590 = vpack.c.b16 %v2022, %v2014
  %v2591 = vpack.c.b16 %v2023, %v2015
  %v2592 = vpack.c.b16 %v2032, %v2024
  %v2593 = vpack.c.b16 %v2033, %v2025
  %v2594 = vpack.c.b16 %v2034, %v2026
  %v2595 = vpack.c.b16 %v2035, %v2027
  %v2596 = vpack.c.b16 %v2036, %v2028
  %v2597 = vpack.c.b16 %v2037, %v2029
  %v2598 = vpack.c.b16 %v2038, %v2030
  %v2599 = vpack.c.b16 %v2039, %v2031
  %v2600 = vpack.c.b16 %v2048, %v2040
  %v2601 = vpack.c.b16 %v2049, %v2041
  %v2602 = vpack.c.b16 %v2050, %v2042
  %v2603 = vpack.c.b16 %v2051, %v2043
  %v2604 = vpack.c.b16 %v2052, %v2044
  %v2605 = vpack.c.b16 %v2053, %v2045
  %v2606 = vpack.c.b16 %v2054, %v2046
  %v2607 = vpack.c.b16 %v2055, %v2047
  %v2608 = vpack.c.b16 %v2064, %v2056
  %v2609 = vpack.c.b16 %v2065, %v2057
  %v2610 = vpack.c.b16 %v2066, %v2058
  %v2611 = vpack.c.b16 %v2067, %v2059
  %v2612 = vpack.c.b16 %v2068, %v2060
  %v2613 = vpack.c.b16 %v2069, %v2061
  %v2614 = vpack.c.b16 %v2070, %v2062
  %v2615 = vpack.c.b16 %v2071, %v2063
  %v2616 = vpack.c.b16 %v2080, %v2072
  %v2617 = vpack.c.b16 %v2081, %v2073
  %v2618 = vpack.c.b16 %v2082, %v2074
  %v2619 = vpack.c.b16 %v2083, %v2075
  %v2620 = vpack.c.b16 %v2084, %v2076
  %v2621 = vpack.c.b16 %v2085, %v2077
  %v2622 = vpack.c.b16 %v2086, %v2078
  %v2623 = vpack.c.b16 %v2087, %v2079
  %v2624 = vpack.c.b16 %v2096, %v2088
  %v2625 = vpack.c.b16 %v2097, %v2089
  %v2626 = vpack.c.b16 %v2098, %v2090
  %v2627 = vpack.c.b16 %v2099, %v2091
  %v2628 = vpack.c.b16 %v2100, %v2092
  %v2629 = vpack.c.b16 %v2101, %v2093
  %v2630 = vpack.c.b16 %v2102, %v2094
  %v2631 = vpack.c.b16 %v2103, %v2095
  %v2632 = vpack.c.b16 %v2112, %v2104
  %v2633 = vpack.c.b16 %v2113, %v2105
  %v2634 = vpack.c.b16 %v2114, %v2106
  %v2635 = vpack.c.b16 %v2115, %v2107
  %v2636 = vpack.c.b16 %v2116, %v2108
  %v2637 = vpack.c.b16 %v2117, %v2109
  %v2638 = vpack.c.b16 %v2118, %v2110
  %v2639 = vpack.c.b16 %v2119, %v2111
  %v2640 = vpack.c.b16 %v2128, %v2120
  %v2641 = vpack.c.b16 %v2129, %v2121
  %v2642 = vpack.c.b16 %v2130, %v2122
  %v2643 = vpack.c.b16 %v2131, %v2123
  %v2644 = vpack.c.b16 %v2132, %v2124
  %v2645 = vpack.c.b16 %v2133, %v2125
  %v2646 = vpack.c.b16 %v2134, %v2126
  %v2647 = vpack.c.b16 %v2135, %v2127
  %3160 = vmatprep.subr.bf16.mxu0 %v2137
  %3161 = vmatpush1.bf16.msra.mxu0 %v2136
  %3162 = vmatprep.subr.bf16.mxu0 %v2145
  %3163 = vmatpush1.bf16.msra.mxu0 %v2144
  %3164 = vmatprep.subr.bf16.mxu0 %v2153
  %3165 = vmatpush1.bf16.msra.mxu0 %v2152
  %3166 = vmatprep.subr.bf16.mxu0 %v2161
  %3167 = vmatpush1.bf16.msra.mxu0 %v2160
  %3168 = vmatprep.subr.bf16.mxu0 %v2169
  %3169 = vmatpush1.bf16.msra.mxu0 %v2168
  %3170 = vmatprep.subr.bf16.mxu0 %v2177
  %3171 = vmatpush1.bf16.msra.mxu0 %v2176
  %3172 = vmatprep.subr.bf16.mxu0 %v2185
  %3173 = vmatpush1.bf16.msra.mxu0 %v2184
  %3174 = vmatprep.subr.bf16.mxu0 %v2193
  %3175 = vmatpush1.bf16.msra.mxu0 %v2192
  %3176 = vmatprep.subr.bf16.mxu0 %v2201
  %3177 = vmatpush1.bf16.msra.mxu0 %v2200
  %3178 = vmatprep.subr.bf16.mxu0 %v2209
  %3179 = vmatpush1.bf16.msra.mxu0 %v2208
  %3180 = vmatprep.subr.bf16.mxu0 %v2217
  %3181 = vmatpush1.bf16.msra.mxu0 %v2216
  %3182 = vmatprep.subr.bf16.mxu0 %v2225
  %3183 = vmatpush1.bf16.msra.mxu0 %v2224
  %3184 = vmatprep.subr.bf16.mxu0 %v2233
  %3185 = vmatpush1.bf16.msra.mxu0 %v2232
  %3186 = vmatprep.subr.bf16.mxu0 %v2241
  %3187 = vmatpush1.bf16.msra.mxu0 %v2240
  %3188 = vmatprep.subr.bf16.mxu0 %v2249
  %3189 = vmatpush1.bf16.msra.mxu0 %v2248
  %3190 = vmatprep.subr.bf16.mxu0 %v2257
  %3191 = vmatpush1.bf16.msra.mxu0 %v2256
  %3192 = vmatprep.mubr.bf16.mxu0 %v585
  %3193 = vmatmul.mubr.bf16.gmra.mrb[0].mxu0 %v584
  %v3194 = vpop.f32.mrb[0].mxu0
  %v3195 = vadd.f32 %v535, %v3194
  %v3196 = vpop.f32.mrb[0].mxu0
  %v3197 = vadd.f32 %v539, %v3196
  %v3198 = vpop.f32.mrb[0].mxu0
  %v3199 = vpop.f32.mrb[0].mxu0
  %3200 = vdwg.mxu0
  %3201 = vmatprep.subr.bf16.mxu0 %v2265
  %3202 = vmatpush1.bf16.msra.mxu0 %v2264
  %3203 = vmatprep.subr.bf16.mxu0 %v2273
  %3204 = vmatpush1.bf16.msra.mxu0 %v2272
  %3205 = vmatprep.subr.bf16.mxu0 %v2281
  %3206 = vmatpush1.bf16.msra.mxu0 %v2280
  %3207 = vmatprep.subr.bf16.mxu0 %v2289
  %3208 = vmatpush1.bf16.msra.mxu0 %v2288
  %3209 = vmatprep.subr.bf16.mxu0 %v2297
  %3210 = vmatpush1.bf16.msra.mxu0 %v2296
  %3211 = vmatprep.subr.bf16.mxu0 %v2305
  %3212 = vmatpush1.bf16.msra.mxu0 %v2304
  %3213 = vmatprep.subr.bf16.mxu0 %v2313
  %3214 = vmatpush1.bf16.msra.mxu0 %v2312
  %3215 = vmatprep.subr.bf16.mxu0 %v2321
  %3216 = vmatpush1.bf16.msra.mxu0 %v2320
  %3217 = vmatprep.subr.bf16.mxu0 %v2329
  %3218 = vmatpush1.bf16.msra.mxu0 %v2328
  %3219 = vmatprep.subr.bf16.mxu0 %v2337
  %3220 = vmatpush1.bf16.msra.mxu0 %v2336
  %3221 = vmatprep.subr.bf16.mxu0 %v2345
  %3222 = vmatpush1.bf16.msra.mxu0 %v2344
  %3223 = vmatprep.subr.bf16.mxu0 %v2353
  %3224 = vmatpush1.bf16.msra.mxu0 %v2352
  %3225 = vmatprep.subr.bf16.mxu0 %v2361
  %3226 = vmatpush1.bf16.msra.mxu0 %v2360
  %3227 = vmatprep.subr.bf16.mxu0 %v2369
  %3228 = vmatpush1.bf16.msra.mxu0 %v2368
  %3229 = vmatprep.subr.bf16.mxu0 %v2377
  %3230 = vmatpush1.bf16.msra.mxu0 %v2376
  %3231 = vmatprep.subr.bf16.mxu0 %v2385
  %3232 = vmatpush1.bf16.msra.mxu0 %v2384
  %3233 = vmatprep.mubr.bf16.mxu0 %v587
  %3234 = vmatmul.mubr.bf16.gmra.mrb[0].mxu0 %v586
  %v3235 = vpop.f32.mrb[0].mxu0
  %v3236 = vadd.f32 %v3195, %v3235
  %v3237 = vpop.f32.mrb[0].mxu0
  %v3238 = vadd.f32 %v3197, %v3237
  %v3239 = vpop.f32.mrb[0].mxu0
  %v3240 = vpop.f32.mrb[0].mxu0
  %3241 = vdwg.mxu0
  %3242 = vmatprep.subr.bf16.mxu0 %v2393
  %3243 = vmatpush1.bf16.msra.mxu0 %v2392
  %3244 = vmatprep.subr.bf16.mxu0 %v2401
  %3245 = vmatpush1.bf16.msra.mxu0 %v2400
  %3246 = vmatprep.subr.bf16.mxu0 %v2409
  %3247 = vmatpush1.bf16.msra.mxu0 %v2408
  %3248 = vmatprep.subr.bf16.mxu0 %v2417
  %3249 = vmatpush1.bf16.msra.mxu0 %v2416
  %3250 = vmatprep.subr.bf16.mxu0 %v2425
  %3251 = vmatpush1.bf16.msra.mxu0 %v2424
  %3252 = vmatprep.subr.bf16.mxu0 %v2433
  %3253 = vmatpush1.bf16.msra.mxu0 %v2432
  %3254 = vmatprep.subr.bf16.mxu0 %v2441
  %3255 = vmatpush1.bf16.msra.mxu0 %v2440
  %3256 = vmatprep.subr.bf16.mxu0 %v2449
  %3257 = vmatpush1.bf16.msra.mxu0 %v2448
  %3258 = vmatprep.subr.bf16.mxu0 %v2457
  %3259 = vmatpush1.bf16.msra.mxu0 %v2456
  %3260 = vmatprep.subr.bf16.mxu0 %v2465
  %3261 = vmatpush1.bf16.msra.mxu0 %v2464
  %3262 = vmatprep.subr.bf16.mxu0 %v2473
  %3263 = vmatpush1.bf16.msra.mxu0 %v2472
  %3264 = vmatprep.subr.bf16.mxu0 %v2481
  %3265 = vmatpush1.bf16.msra.mxu0 %v2480
  %3266 = vmatprep.subr.bf16.mxu0 %v2489
  %3267 = vmatpush1.bf16.msra.mxu0 %v2488
  %3268 = vmatprep.subr.bf16.mxu0 %v2497
  %3269 = vmatpush1.bf16.msra.mxu0 %v2496
  %3270 = vmatprep.subr.bf16.mxu0 %v2505
  %3271 = vmatpush1.bf16.msra.mxu0 %v2504
  %3272 = vmatprep.subr.bf16.mxu0 %v2513
  %3273 = vmatpush1.bf16.msra.mxu0 %v2512
  %3274 = vmatprep.mubr.bf16.mxu0 %v589
  %3275 = vmatmul.mubr.bf16.gmra.mrb[0].mxu0 %v588
  %v3276 = vpop.f32.mrb[0].mxu0
  %v3277 = vadd.f32 %v3236, %v3276
  %v3278 = vpop.f32.mrb[0].mxu0
  %v3279 = vadd.f32 %v3238, %v3278
  %v3280 = vpop.f32.mrb[0].mxu0
  %v3281 = vpop.f32.mrb[0].mxu0
  %3282 = vdwg.mxu0
  %3283 = vmatprep.subr.bf16.mxu0 %v2521
  %3284 = vmatpush1.bf16.msra.mxu0 %v2520
  %3285 = vmatprep.subr.bf16.mxu0 %v2529
  %3286 = vmatpush1.bf16.msra.mxu0 %v2528
  %3287 = vmatprep.subr.bf16.mxu0 %v2537
  %3288 = vmatpush1.bf16.msra.mxu0 %v2536
  %3289 = vmatprep.subr.bf16.mxu0 %v2545
  %3290 = vmatpush1.bf16.msra.mxu0 %v2544
  %3291 = vmatprep.subr.bf16.mxu0 %v2553
  %3292 = vmatpush1.bf16.msra.mxu0 %v2552
  %3293 = vmatprep.subr.bf16.mxu0 %v2561
  %3294 = vmatpush1.bf16.msra.mxu0 %v2560
  %3295 = vmatprep.subr.bf16.mxu0 %v2569
  %3296 = vmatpush1.bf16.msra.mxu0 %v2568
  %3297 = vmatprep.subr.bf16.mxu0 %v2577
  %3298 = vmatpush1.bf16.msra.mxu0 %v2576
  %3299 = vmatprep.subr.bf16.mxu0 %v2585
  %3300 = vmatpush1.bf16.msra.mxu0 %v2584
  %3301 = vmatprep.subr.bf16.mxu0 %v2593
  %3302 = vmatpush1.bf16.msra.mxu0 %v2592
  %3303 = vmatprep.subr.bf16.mxu0 %v2601
  %3304 = vmatpush1.bf16.msra.mxu0 %v2600
  %3305 = vmatprep.subr.bf16.mxu0 %v2609
  %3306 = vmatpush1.bf16.msra.mxu0 %v2608
  %3307 = vmatprep.subr.bf16.mxu0 %v2617
  %3308 = vmatpush1.bf16.msra.mxu0 %v2616
  %3309 = vmatprep.subr.bf16.mxu0 %v2625
  %3310 = vmatpush1.bf16.msra.mxu0 %v2624
  %3311 = vmatprep.subr.bf16.mxu0 %v2633
  %3312 = vmatpush1.bf16.msra.mxu0 %v2632
  %3313 = vmatprep.subr.bf16.mxu0 %v2641
  %3314 = vmatpush1.bf16.msra.mxu0 %v2640
  %3315 = vmatprep.mubr.bf16.mxu0 %v591
  %3316 = vmatmul.mubr.bf16.gmra.mrb[0].mxu0 %v590
  %v3317 = vpop.f32.mrb[0].mxu0
  %v3318 = vadd.f32 %v3277, %v3317
  %v3319 = vpop.f32.mrb[0].mxu0
  %v3320 = vadd.f32 %v3279, %v3319
  %v3321 = vpop.f32.mrb[0].mxu0
  %v3322 = vpop.f32.mrb[0].mxu0
  %3323 = vdwg.mxu0
  %3324 = vmatprep.subr.bf16.mxu0 %v2139
  %3325 = vmatpush1.bf16.msra.mxu0 %v2138
  %3326 = vmatprep.subr.bf16.mxu0 %v2147
  %3327 = vmatpush1.bf16.msra.mxu0 %v2146
  %3328 = vmatprep.subr.bf16.mxu0 %v2155
  %3329 = vmatpush1.bf16.msra.mxu0 %v2154
  %3330 = vmatprep.subr.bf16.mxu0 %v2163
  %3331 = vmatpush1.bf16.msra.mxu0 %v2162
  %3332 = vmatprep.subr.bf16.mxu0 %v2171
  %3333 = vmatpush1.bf16.msra.mxu0 %v2170
  %3334 = vmatprep.subr.bf16.mxu0 %v2179
  %3335 = vmatpush1.bf16.msra.mxu0 %v2178
  %3336 = vmatprep.subr.bf16.mxu0 %v2187
  %3337 = vmatpush1.bf16.msra.mxu0 %v2186
  %3338 = vmatprep.subr.bf16.mxu0 %v2195
  %3339 = vmatpush1.bf16.msra.mxu0 %v2194
  %3340 = vmatprep.subr.bf16.mxu0 %v2203
  %3341 = vmatpush1.bf16.msra.mxu0 %v2202
  %3342 = vmatprep.subr.bf16.mxu0 %v2211
  %3343 = vmatpush1.bf16.msra.mxu0 %v2210
  %3344 = vmatprep.subr.bf16.mxu0 %v2219
  %3345 = vmatpush1.bf16.msra.mxu0 %v2218
  %3346 = vmatprep.subr.bf16.mxu0 %v2227
  %3347 = vmatpush1.bf16.msra.mxu0 %v2226
  %3348 = vmatprep.subr.bf16.mxu0 %v2235
  %3349 = vmatpush1.bf16.msra.mxu0 %v2234
  %3350 = vmatprep.subr.bf16.mxu0 %v2243
  %3351 = vmatpush1.bf16.msra.mxu0 %v2242
  %3352 = vmatprep.subr.bf16.mxu0 %v2251
  %3353 = vmatpush1.bf16.msra.mxu0 %v2250
  %3354 = vmatprep.subr.bf16.mxu0 %v2259
  %3355 = vmatpush1.bf16.msra.mxu0 %v2258
  %3356 = vmatprep.mubr.bf16.mxu0 %v585
  %3357 = vmatmul.mubr.bf16.gmra.mrb[0].mxu0 %v584
  %v3358 = vpop.f32.mrb[0].mxu0
  %v3359 = vadd.f32 %v543, %v3358
  %v3360 = vpop.f32.mrb[0].mxu0
  %v3361 = vadd.f32 %v547, %v3360
  %v3362 = vpop.f32.mrb[0].mxu0
  %v3363 = vpop.f32.mrb[0].mxu0
  %3364 = vdwg.mxu0
  %3365 = vmatprep.subr.bf16.mxu0 %v2267
  %3366 = vmatpush1.bf16.msra.mxu0 %v2266
  %3367 = vmatprep.subr.bf16.mxu0 %v2275
  %3368 = vmatpush1.bf16.msra.mxu0 %v2274
  %3369 = vmatprep.subr.bf16.mxu0 %v2283
  %3370 = vmatpush1.bf16.msra.mxu0 %v2282
  %3371 = vmatprep.subr.bf16.mxu0 %v2291
  %3372 = vmatpush1.bf16.msra.mxu0 %v2290
  %3373 = vmatprep.subr.bf16.mxu0 %v2299
  %3374 = vmatpush1.bf16.msra.mxu0 %v2298
  %3375 = vmatprep.subr.bf16.mxu0 %v2307
  %3376 = vmatpush1.bf16.msra.mxu0 %v2306
  %3377 = vmatprep.subr.bf16.mxu0 %v2315
  %3378 = vmatpush1.bf16.msra.mxu0 %v2314
  %3379 = vmatprep.subr.bf16.mxu0 %v2323
  %3380 = vmatpush1.bf16.msra.mxu0 %v2322
  %3381 = vmatprep.subr.bf16.mxu0 %v2331
  %3382 = vmatpush1.bf16.msra.mxu0 %v2330
  %3383 = vmatprep.subr.bf16.mxu0 %v2339
  %3384 = vmatpush1.bf16.msra.mxu0 %v2338
  %3385 = vmatprep.subr.bf16.mxu0 %v2347
  %3386 = vmatpush1.bf16.msra.mxu0 %v2346
  %3387 = vmatprep.subr.bf16.mxu0 %v2355
  %3388 = vmatpush1.bf16.msra.mxu0 %v2354
  %3389 = vmatprep.subr.bf16.mxu0 %v2363
  %3390 = vmatpush1.bf16.msra.mxu0 %v2362
  %3391 = vmatprep.subr.bf16.mxu0 %v2371
  %3392 = vmatpush1.bf16.msra.mxu0 %v2370
  %3393 = vmatprep.subr.bf16.mxu0 %v2379
  %3394 = vmatpush1.bf16.msra.mxu0 %v2378
  %3395 = vmatprep.subr.bf16.mxu0 %v2387
  %3396 = vmatpush1.bf16.msra.mxu0 %v2386
  %3397 = vmatprep.mubr.bf16.mxu0 %v587
  %3398 = vmatmul.mubr.bf16.gmra.mrb[0].mxu0 %v586
  %v3399 = vpop.f32.mrb[0].mxu0
  %v3400 = vadd.f32 %v3359, %v3399
  %v3401 = vpop.f32.mrb[0].mxu0
  %v3402 = vadd.f32 %v3361, %v3401
  %v3403 = vpop.f32.mrb[0].mxu0
  %v3404 = vpop.f32.mrb[0].mxu0
  %3405 = vdwg.mxu0
  %3406 = vmatprep.subr.bf16.mxu0 %v2395
  %3407 = vmatpush1.bf16.msra.mxu0 %v2394
  %3408 = vmatprep.subr.bf16.mxu0 %v2403
  %3409 = vmatpush1.bf16.msra.mxu0 %v2402
  %3410 = vmatprep.subr.bf16.mxu0 %v2411
  %3411 = vmatpush1.bf16.msra.mxu0 %v2410
  %3412 = vmatprep.subr.bf16.mxu0 %v2419
  %3413 = vmatpush1.bf16.msra.mxu0 %v2418
  %3414 = vmatprep.subr.bf16.mxu0 %v2427
  %3415 = vmatpush1.bf16.msra.mxu0 %v2426
  %3416 = vmatprep.subr.bf16.mxu0 %v2435
  %3417 = vmatpush1.bf16.msra.mxu0 %v2434
  %3418 = vmatprep.subr.bf16.mxu0 %v2443
  %3419 = vmatpush1.bf16.msra.mxu0 %v2442
  %3420 = vmatprep.subr.bf16.mxu0 %v2451
  %3421 = vmatpush1.bf16.msra.mxu0 %v2450
  %3422 = vmatprep.subr.bf16.mxu0 %v2459
  %3423 = vmatpush1.bf16.msra.mxu0 %v2458
  %3424 = vmatprep.subr.bf16.mxu0 %v2467
  %3425 = vmatpush1.bf16.msra.mxu0 %v2466
  %3426 = vmatprep.subr.bf16.mxu0 %v2475
  %3427 = vmatpush1.bf16.msra.mxu0 %v2474
  %3428 = vmatprep.subr.bf16.mxu0 %v2483
  %3429 = vmatpush1.bf16.msra.mxu0 %v2482
  %3430 = vmatprep.subr.bf16.mxu0 %v2491
  %3431 = vmatpush1.bf16.msra.mxu0 %v2490
  %3432 = vmatprep.subr.bf16.mxu0 %v2499
  %3433 = vmatpush1.bf16.msra.mxu0 %v2498
  %3434 = vmatprep.subr.bf16.mxu0 %v2507
  %3435 = vmatpush1.bf16.msra.mxu0 %v2506
  %3436 = vmatprep.subr.bf16.mxu0 %v2515
  %3437 = vmatpush1.bf16.msra.mxu0 %v2514
  %3438 = vmatprep.mubr.bf16.mxu0 %v589
  %3439 = vmatmul.mubr.bf16.gmra.mrb[0].mxu0 %v588
  %v3440 = vpop.f32.mrb[0].mxu0
  %v3441 = vadd.f32 %v3400, %v3440
  %v3442 = vpop.f32.mrb[0].mxu0
  %v3443 = vadd.f32 %v3402, %v3442
  %v3444 = vpop.f32.mrb[0].mxu0
  %v3445 = vpop.f32.mrb[0].mxu0
  %3446 = vdwg.mxu0
  %3447 = vmatprep.subr.bf16.mxu0 %v2523
  %3448 = vmatpush1.bf16.msra.mxu0 %v2522
  %3449 = vmatprep.subr.bf16.mxu0 %v2531
  %3450 = vmatpush1.bf16.msra.mxu0 %v2530
  %3451 = vmatprep.subr.bf16.mxu0 %v2539
  %3452 = vmatpush1.bf16.msra.mxu0 %v2538
  %3453 = vmatprep.subr.bf16.mxu0 %v2547
  %3454 = vmatpush1.bf16.msra.mxu0 %v2546
  %3455 = vmatprep.subr.bf16.mxu0 %v2555
  %3456 = vmatpush1.bf16.msra.mxu0 %v2554
  %3457 = vmatprep.subr.bf16.mxu0 %v2563
  %3458 = vmatpush1.bf16.msra.mxu0 %v2562
  %3459 = vmatprep.subr.bf16.mxu0 %v2571
  %3460 = vmatpush1.bf16.msra.mxu0 %v2570
  %3461 = vmatprep.subr.bf16.mxu0 %v2579
  %3462 = vmatpush1.bf16.msra.mxu0 %v2578
  %3463 = vmatprep.subr.bf16.mxu0 %v2587
  %3464 = vmatpush1.bf16.msra.mxu0 %v2586
  %3465 = vmatprep.subr.bf16.mxu0 %v2595
  %3466 = vmatpush1.bf16.msra.mxu0 %v2594
  %3467 = vmatprep.subr.bf16.mxu0 %v2603
  %3468 = vmatpush1.bf16.msra.mxu0 %v2602
  %3469 = vmatprep.subr.bf16.mxu0 %v2611
  %3470 = vmatpush1.bf16.msra.mxu0 %v2610
  %3471 = vmatprep.subr.bf16.mxu0 %v2619
  %3472 = vmatpush1.bf16.msra.mxu0 %v2618
  %3473 = vmatprep.subr.bf16.mxu0 %v2627
  %3474 = vmatpush1.bf16.msra.mxu0 %v2626
  %3475 = vmatprep.subr.bf16.mxu0 %v2635
  %3476 = vmatpush1.bf16.msra.mxu0 %v2634
  %3477 = vmatprep.subr.bf16.mxu0 %v2643
  %3478 = vmatpush1.bf16.msra.mxu0 %v2642
  %3479 = vmatprep.mubr.bf16.mxu0 %v591
  %3480 = vmatmul.mubr.bf16.gmra.mrb[0].mxu0 %v590
  %v3481 = vpop.f32.mrb[0].mxu0
  %v3482 = vadd.f32 %v3441, %v3481
  %v3483 = vpop.f32.mrb[0].mxu0
  %v3484 = vadd.f32 %v3443, %v3483
  %v3485 = vpop.f32.mrb[0].mxu0
  %v3486 = vpop.f32.mrb[0].mxu0
  %3487 = vdwg.mxu0
  %3488 = vmatprep.subr.bf16.mxu0 %v2141
  %3489 = vmatpush1.bf16.msra.mxu0 %v2140
  %3490 = vmatprep.subr.bf16.mxu0 %v2149
  %3491 = vmatpush1.bf16.msra.mxu0 %v2148
  %3492 = vmatprep.subr.bf16.mxu0 %v2157
  %3493 = vmatpush1.bf16.msra.mxu0 %v2156
  %3494 = vmatprep.subr.bf16.mxu0 %v2165
  %3495 = vmatpush1.bf16.msra.mxu0 %v2164
  %3496 = vmatprep.subr.bf16.mxu0 %v2173
  %3497 = vmatpush1.bf16.msra.mxu0 %v2172
  %3498 = vmatprep.subr.bf16.mxu0 %v2181
  %3499 = vmatpush1.bf16.msra.mxu0 %v2180
  %3500 = vmatprep.subr.bf16.mxu0 %v2189
  %3501 = vmatpush1.bf16.msra.mxu0 %v2188
  %3502 = vmatprep.subr.bf16.mxu0 %v2197
  %3503 = vmatpush1.bf16.msra.mxu0 %v2196
  %3504 = vmatprep.subr.bf16.mxu0 %v2205
  %3505 = vmatpush1.bf16.msra.mxu0 %v2204
  %3506 = vmatprep.subr.bf16.mxu0 %v2213
  %3507 = vmatpush1.bf16.msra.mxu0 %v2212
  %3508 = vmatprep.subr.bf16.mxu0 %v2221
  %3509 = vmatpush1.bf16.msra.mxu0 %v2220
  %3510 = vmatprep.subr.bf16.mxu0 %v2229
  %3511 = vmatpush1.bf16.msra.mxu0 %v2228
  %3512 = vmatprep.subr.bf16.mxu0 %v2237
  %3513 = vmatpush1.bf16.msra.mxu0 %v2236
  %3514 = vmatprep.subr.bf16.mxu0 %v2245
  %3515 = vmatpush1.bf16.msra.mxu0 %v2244
  %3516 = vmatprep.subr.bf16.mxu0 %v2253
  %3517 = vmatpush1.bf16.msra.mxu0 %v2252
  %3518 = vmatprep.subr.bf16.mxu0 %v2261
  %3519 = vmatpush1.bf16.msra.mxu0 %v2260
  %3520 = vmatprep.mubr.bf16.mxu0 %v585
  %3521 = vmatmul.mubr.bf16.gmra.mrb[0].mxu0 %v584
  %v3522 = vpop.f32.mrb[0].mxu0
  %v3523 = vadd.f32 %v551, %v3522
  %v3524 = vpop.f32.mrb[0].mxu0
  %v3525 = vadd.f32 %v555, %v3524
  %v3526 = vpop.f32.mrb[0].mxu0
  %v3527 = vpop.f32.mrb[0].mxu0
  %3528 = vdwg.mxu0
  %3529 = vmatprep.subr.bf16.mxu0 %v2269
  %3530 = vmatpush1.bf16.msra.mxu0 %v2268
  %3531 = vmatprep.subr.bf16.mxu0 %v2277
  %3532 = vmatpush1.bf16.msra.mxu0 %v2276
  %3533 = vmatprep.subr.bf16.mxu0 %v2285
  %3534 = vmatpush1.bf16.msra.mxu0 %v2284
  %3535 = vmatprep.subr.bf16.mxu0 %v2293
  %3536 = vmatpush1.bf16.msra.mxu0 %v2292
  %3537 = vmatprep.subr.bf16.mxu0 %v2301
  %3538 = vmatpush1.bf16.msra.mxu0 %v2300
  %3539 = vmatprep.subr.bf16.mxu0 %v2309
  %3540 = vmatpush1.bf16.msra.mxu0 %v2308
  %3541 = vmatprep.subr.bf16.mxu0 %v2317
  %3542 = vmatpush1.bf16.msra.mxu0 %v2316
  %3543 = vmatprep.subr.bf16.mxu0 %v2325
  %3544 = vmatpush1.bf16.msra.mxu0 %v2324
  %3545 = vmatprep.subr.bf16.mxu0 %v2333
  %3546 = vmatpush1.bf16.msra.mxu0 %v2332
  %3547 = vmatprep.subr.bf16.mxu0 %v2341
  %3548 = vmatpush1.bf16.msra.mxu0 %v2340
  %3549 = vmatprep.subr.bf16.mxu0 %v2349
  %3550 = vmatpush1.bf16.msra.mxu0 %v2348
  %3551 = vmatprep.subr.bf16.mxu0 %v2357
  %3552 = vmatpush1.bf16.msra.mxu0 %v2356
  %3553 = vmatprep.subr.bf16.mxu0 %v2365
  %3554 = vmatpush1.bf16.msra.mxu0 %v2364
  %3555 = vmatprep.subr.bf16.mxu0 %v2373
  %3556 = vmatpush1.bf16.msra.mxu0 %v2372
  %3557 = vmatprep.subr.bf16.mxu0 %v2381
  %3558 = vmatpush1.bf16.msra.mxu0 %v2380
  %3559 = vmatprep.subr.bf16.mxu0 %v2389
  %3560 = vmatpush1.bf16.msra.mxu0 %v2388
  %3561 = vmatprep.mubr.bf16.mxu0 %v587
  %3562 = vmatmul.mubr.bf16.gmra.mrb[0].mxu0 %v586
  %v3563 = vpop.f32.mrb[0].mxu0
  %v3564 = vadd.f32 %v3523, %v3563
  %v3565 = vpop.f32.mrb[0].mxu0
  %v3566 = vadd.f32 %v3525, %v3565
  %v3567 = vpop.f32.mrb[0].mxu0
  %v3568 = vpop.f32.mrb[0].mxu0
  %3569 = vdwg.mxu0
  %3570 = vmatprep.subr.bf16.mxu0 %v2397
  %3571 = vmatpush1.bf16.msra.mxu0 %v2396
  %3572 = vmatprep.subr.bf16.mxu0 %v2405
  %3573 = vmatpush1.bf16.msra.mxu0 %v2404
  %3574 = vmatprep.subr.bf16.mxu0 %v2413
  %3575 = vmatpush1.bf16.msra.mxu0 %v2412
  %3576 = vmatprep.subr.bf16.mxu0 %v2421
  %3577 = vmatpush1.bf16.msra.mxu0 %v2420
  %3578 = vmatprep.subr.bf16.mxu0 %v2429
  %3579 = vmatpush1.bf16.msra.mxu0 %v2428
  %3580 = vmatprep.subr.bf16.mxu0 %v2437
  %3581 = vmatpush1.bf16.msra.mxu0 %v2436
  %3582 = vmatprep.subr.bf16.mxu0 %v2445
  %3583 = vmatpush1.bf16.msra.mxu0 %v2444
  %3584 = vmatprep.subr.bf16.mxu0 %v2453
  %3585 = vmatpush1.bf16.msra.mxu0 %v2452
  %3586 = vmatprep.subr.bf16.mxu0 %v2461
  %3587 = vmatpush1.bf16.msra.mxu0 %v2460
  %3588 = vmatprep.subr.bf16.mxu0 %v2469
  %3589 = vmatpush1.bf16.msra.mxu0 %v2468
  %3590 = vmatprep.subr.bf16.mxu0 %v2477
  %3591 = vmatpush1.bf16.msra.mxu0 %v2476
  %3592 = vmatprep.subr.bf16.mxu0 %v2485
  %3593 = vmatpush1.bf16.msra.mxu0 %v2484
  %3594 = vmatprep.subr.bf16.mxu0 %v2493
  %3595 = vmatpush1.bf16.msra.mxu0 %v2492
  %3596 = vmatprep.subr.bf16.mxu0 %v2501
  %3597 = vmatpush1.bf16.msra.mxu0 %v2500
  %3598 = vmatprep.subr.bf16.mxu0 %v2509
  %3599 = vmatpush1.bf16.msra.mxu0 %v2508
  %3600 = vmatprep.subr.bf16.mxu0 %v2517
  %3601 = vmatpush1.bf16.msra.mxu0 %v2516
  %3602 = vmatprep.mubr.bf16.mxu0 %v589
  %3603 = vmatmul.mubr.bf16.gmra.mrb[0].mxu0 %v588
  %v3604 = vpop.f32.mrb[0].mxu0
  %v3605 = vadd.f32 %v3564, %v3604
  %v3606 = vpop.f32.mrb[0].mxu0
  %v3607 = vadd.f32 %v3566, %v3606
  %v3608 = vpop.f32.mrb[0].mxu0
  %v3609 = vpop.f32.mrb[0].mxu0
  %3610 = vdwg.mxu0
  %3611 = vmatprep.subr.bf16.mxu0 %v2525
  %3612 = vmatpush1.bf16.msra.mxu0 %v2524
  %3613 = vmatprep.subr.bf16.mxu0 %v2533
  %3614 = vmatpush1.bf16.msra.mxu0 %v2532
  %3615 = vmatprep.subr.bf16.mxu0 %v2541
  %3616 = vmatpush1.bf16.msra.mxu0 %v2540
  %3617 = vmatprep.subr.bf16.mxu0 %v2549
  %3618 = vmatpush1.bf16.msra.mxu0 %v2548
  %3619 = vmatprep.subr.bf16.mxu0 %v2557
  %3620 = vmatpush1.bf16.msra.mxu0 %v2556
  %3621 = vmatprep.subr.bf16.mxu0 %v2565
  %3622 = vmatpush1.bf16.msra.mxu0 %v2564
  %3623 = vmatprep.subr.bf16.mxu0 %v2573
  %3624 = vmatpush1.bf16.msra.mxu0 %v2572
  %3625 = vmatprep.subr.bf16.mxu0 %v2581
  %3626 = vmatpush1.bf16.msra.mxu0 %v2580
  %3627 = vmatprep.subr.bf16.mxu0 %v2589
  %3628 = vmatpush1.bf16.msra.mxu0 %v2588
  %3629 = vmatprep.subr.bf16.mxu0 %v2597
  %3630 = vmatpush1.bf16.msra.mxu0 %v2596
  %3631 = vmatprep.subr.bf16.mxu0 %v2605
  %3632 = vmatpush1.bf16.msra.mxu0 %v2604
  %3633 = vmatprep.subr.bf16.mxu0 %v2613
  %3634 = vmatpush1.bf16.msra.mxu0 %v2612
  %3635 = vmatprep.subr.bf16.mxu0 %v2621
  %3636 = vmatpush1.bf16.msra.mxu0 %v2620
  %3637 = vmatprep.subr.bf16.mxu0 %v2629
  %3638 = vmatpush1.bf16.msra.mxu0 %v2628
  %3639 = vmatprep.subr.bf16.mxu0 %v2637
  %3640 = vmatpush1.bf16.msra.mxu0 %v2636
  %3641 = vmatprep.subr.bf16.mxu0 %v2645
  %3642 = vmatpush1.bf16.msra.mxu0 %v2644
  %3643 = vmatprep.mubr.bf16.mxu0 %v591
  %3644 = vmatmul.mubr.bf16.gmra.mrb[0].mxu0 %v590
  %v3645 = vpop.f32.mrb[0].mxu0
  %v3646 = vadd.f32 %v3605, %v3645
  %v3647 = vpop.f32.mrb[0].mxu0
  %v3648 = vadd.f32 %v3607, %v3647
  %v3649 = vpop.f32.mrb[0].mxu0
  %v3650 = vpop.f32.mrb[0].mxu0
  %3651 = vdwg.mxu0
  %3652 = vmatprep.subr.bf16.mxu0 %v2143
  %3653 = vmatpush1.bf16.msra.mxu0 %v2142
  %3654 = vmatprep.subr.bf16.mxu0 %v2151
  %3655 = vmatpush1.bf16.msra.mxu0 %v2150
  %3656 = vmatprep.subr.bf16.mxu0 %v2159
  %3657 = vmatpush1.bf16.msra.mxu0 %v2158
  %3658 = vmatprep.subr.bf16.mxu0 %v2167
  %3659 = vmatpush1.bf16.msra.mxu0 %v2166
  %3660 = vmatprep.subr.bf16.mxu0 %v2175
  %3661 = vmatpush1.bf16.msra.mxu0 %v2174
  %3662 = vmatprep.subr.bf16.mxu0 %v2183
  %3663 = vmatpush1.bf16.msra.mxu0 %v2182
  %3664 = vmatprep.subr.bf16.mxu0 %v2191
  %3665 = vmatpush1.bf16.msra.mxu0 %v2190
  %3666 = vmatprep.subr.bf16.mxu0 %v2199
  %3667 = vmatpush1.bf16.msra.mxu0 %v2198
  %3668 = vmatprep.subr.bf16.mxu0 %v2207
  %3669 = vmatpush1.bf16.msra.mxu0 %v2206
  %3670 = vmatprep.subr.bf16.mxu0 %v2215
  %3671 = vmatpush1.bf16.msra.mxu0 %v2214
  %3672 = vmatprep.subr.bf16.mxu0 %v2223
  %3673 = vmatpush1.bf16.msra.mxu0 %v2222
  %3674 = vmatprep.subr.bf16.mxu0 %v2231
  %3675 = vmatpush1.bf16.msra.mxu0 %v2230
  %3676 = vmatprep.subr.bf16.mxu0 %v2239
  %3677 = vmatpush1.bf16.msra.mxu0 %v2238
  %3678 = vmatprep.subr.bf16.mxu0 %v2247
  %3679 = vmatpush1.bf16.msra.mxu0 %v2246
  %3680 = vmatprep.subr.bf16.mxu0 %v2255
  %3681 = vmatpush1.bf16.msra.mxu0 %v2254
  %3682 = vmatprep.subr.bf16.mxu0 %v2263
  %3683 = vmatpush1.bf16.msra.mxu0 %v2262
  %3684 = vmatprep.mubr.bf16.mxu0 %v585
  %3685 = vmatmul.mubr.bf16.gmra.mrb[0].mxu0 %v584
  %v3686 = vpop.f32.mrb[0].mxu0
  %v3687 = vadd.f32 %v559, %v3686
  %v3688 = vpop.f32.mrb[0].mxu0
  %v3689 = vadd.f32 %v563, %v3688
  %v3690 = vpop.f32.mrb[0].mxu0
  %v3691 = vpop.f32.mrb[0].mxu0
  %3692 = vdwg.mxu0
  %3693 = vmatprep.subr.bf16.mxu0 %v2271
  %3694 = vmatpush1.bf16.msra.mxu0 %v2270
  %3695 = vmatprep.subr.bf16.mxu0 %v2279
  %3696 = vmatpush1.bf16.msra.mxu0 %v2278
  %3697 = vmatprep.subr.bf16.mxu0 %v2287
  %3698 = vmatpush1.bf16.msra.mxu0 %v2286
  %3699 = vmatprep.subr.bf16.mxu0 %v2295
  %3700 = vmatpush1.bf16.msra.mxu0 %v2294
  %3701 = vmatprep.subr.bf16.mxu0 %v2303
  %3702 = vmatpush1.bf16.msra.mxu0 %v2302
  %3703 = vmatprep.subr.bf16.mxu0 %v2311
  %3704 = vmatpush1.bf16.msra.mxu0 %v2310
  %3705 = vmatprep.subr.bf16.mxu0 %v2319
  %3706 = vmatpush1.bf16.msra.mxu0 %v2318
  %3707 = vmatprep.subr.bf16.mxu0 %v2327
  %3708 = vmatpush1.bf16.msra.mxu0 %v2326
  %3709 = vmatprep.subr.bf16.mxu0 %v2335
  %3710 = vmatpush1.bf16.msra.mxu0 %v2334
  %3711 = vmatprep.subr.bf16.mxu0 %v2343
  %3712 = vmatpush1.bf16.msra.mxu0 %v2342
  %3713 = vmatprep.subr.bf16.mxu0 %v2351
  %3714 = vmatpush1.bf16.msra.mxu0 %v2350
  %3715 = vmatprep.subr.bf16.mxu0 %v2359
  %3716 = vmatpush1.bf16.msra.mxu0 %v2358
  %3717 = vmatprep.subr.bf16.mxu0 %v2367
  %3718 = vmatpush1.bf16.msra.mxu0 %v2366
  %3719 = vmatprep.subr.bf16.mxu0 %v2375
  %3720 = vmatpush1.bf16.msra.mxu0 %v2374
  %3721 = vmatprep.subr.bf16.mxu0 %v2383
  %3722 = vmatpush1.bf16.msra.mxu0 %v2382
  %3723 = vmatprep.subr.bf16.mxu0 %v2391
  %3724 = vmatpush1.bf16.msra.mxu0 %v2390
  %3725 = vmatprep.mubr.bf16.mxu0 %v587
  %3726 = vmatmul.mubr.bf16.gmra.mrb[0].mxu0 %v586
  %v3727 = vpop.f32.mrb[0].mxu0
  %v3728 = vadd.f32 %v3687, %v3727
  %v3729 = vpop.f32.mrb[0].mxu0
  %v3730 = vadd.f32 %v3689, %v3729
  %v3731 = vpop.f32.mrb[0].mxu0
  %v3732 = vpop.f32.mrb[0].mxu0
  %3733 = vdwg.mxu0
  %3734 = vmatprep.subr.bf16.mxu0 %v2399
  %3735 = vmatpush1.bf16.msra.mxu0 %v2398
  %3736 = vmatprep.subr.bf16.mxu0 %v2407
  %3737 = vmatpush1.bf16.msra.mxu0 %v2406
  %3738 = vmatprep.subr.bf16.mxu0 %v2415
  %3739 = vmatpush1.bf16.msra.mxu0 %v2414
  %3740 = vmatprep.subr.bf16.mxu0 %v2423
  %3741 = vmatpush1.bf16.msra.mxu0 %v2422
  %3742 = vmatprep.subr.bf16.mxu0 %v2431
  %3743 = vmatpush1.bf16.msra.mxu0 %v2430
  %3744 = vmatprep.subr.bf16.mxu0 %v2439
  %3745 = vmatpush1.bf16.msra.mxu0 %v2438
  %3746 = vmatprep.subr.bf16.mxu0 %v2447
  %3747 = vmatpush1.bf16.msra.mxu0 %v2446
  %3748 = vmatprep.subr.bf16.mxu0 %v2455
  %3749 = vmatpush1.bf16.msra.mxu0 %v2454
  %3750 = vmatprep.subr.bf16.mxu0 %v2463
  %3751 = vmatpush1.bf16.msra.mxu0 %v2462
  %3752 = vmatprep.subr.bf16.mxu0 %v2471
  %3753 = vmatpush1.bf16.msra.mxu0 %v2470
  %3754 = vmatprep.subr.bf16.mxu0 %v2479
  %3755 = vmatpush1.bf16.msra.mxu0 %v2478
  %3756 = vmatprep.subr.bf16.mxu0 %v2487
  %3757 = vmatpush1.bf16.msra.mxu0 %v2486
  %3758 = vmatprep.subr.bf16.mxu0 %v2495
  %3759 = vmatpush1.bf16.msra.mxu0 %v2494
  %3760 = vmatprep.subr.bf16.mxu0 %v2503
  %3761 = vmatpush1.bf16.msra.mxu0 %v2502
  %3762 = vmatprep.subr.bf16.mxu0 %v2511
  %3763 = vmatpush1.bf16.msra.mxu0 %v2510
  %3764 = vmatprep.subr.bf16.mxu0 %v2519
  %3765 = vmatpush1.bf16.msra.mxu0 %v2518
  %3766 = vmatprep.mubr.bf16.mxu0 %v589
  %3767 = vmatmul.mubr.bf16.gmra.mrb[0].mxu0 %v588
  %v3768 = vpop.f32.mrb[0].mxu0
  %v3769 = vadd.f32 %v3728, %v3768
  %v3770 = vpop.f32.mrb[0].mxu0
  %v3771 = vadd.f32 %v3730, %v3770
  %v3772 = vpop.f32.mrb[0].mxu0
  %v3773 = vpop.f32.mrb[0].mxu0
  %3774 = vdwg.mxu0
  %3775 = vmatprep.subr.bf16.mxu0 %v2527
  %3776 = vmatpush1.bf16.msra.mxu0 %v2526
  %3777 = vmatprep.subr.bf16.mxu0 %v2535
  %3778 = vmatpush1.bf16.msra.mxu0 %v2534
  %3779 = vmatprep.subr.bf16.mxu0 %v2543
  %3780 = vmatpush1.bf16.msra.mxu0 %v2542
  %3781 = vmatprep.subr.bf16.mxu0 %v2551
  %3782 = vmatpush1.bf16.msra.mxu0 %v2550
  %3783 = vmatprep.subr.bf16.mxu0 %v2559
  %3784 = vmatpush1.bf16.msra.mxu0 %v2558
  %3785 = vmatprep.subr.bf16.mxu0 %v2567
  %3786 = vmatpush1.bf16.msra.mxu0 %v2566
  %3787 = vmatprep.subr.bf16.mxu0 %v2575
  %3788 = vmatpush1.bf16.msra.mxu0 %v2574
  %3789 = vmatprep.subr.bf16.mxu0 %v2583
  %3790 = vmatpush1.bf16.msra.mxu0 %v2582
  %3791 = vmatprep.subr.bf16.mxu0 %v2591
  %3792 = vmatpush1.bf16.msra.mxu0 %v2590
  %3793 = vmatprep.subr.bf16.mxu0 %v2599
  %3794 = vmatpush1.bf16.msra.mxu0 %v2598
  %3795 = vmatprep.subr.bf16.mxu0 %v2607
  %3796 = vmatpush1.bf16.msra.mxu0 %v2606
  %3797 = vmatprep.subr.bf16.mxu0 %v2615
  %3798 = vmatpush1.bf16.msra.mxu0 %v2614
  %3799 = vmatprep.subr.bf16.mxu0 %v2623
  %3800 = vmatpush1.bf16.msra.mxu0 %v2622
  %3801 = vmatprep.subr.bf16.mxu0 %v2631
  %3802 = vmatpush1.bf16.msra.mxu0 %v2630
  %3803 = vmatprep.subr.bf16.mxu0 %v2639
  %3804 = vmatpush1.bf16.msra.mxu0 %v2638
  %3805 = vmatprep.subr.bf16.mxu0 %v2647
  %3806 = vmatpush1.bf16.msra.mxu0 %v2646
  %3807 = vmatprep.mubr.bf16.mxu0 %v591
  %3808 = vmatmul.mubr.bf16.gmra.mrb[0].mxu0 %v590
  %v3809 = vpop.f32.mrb[0].mxu0
  %v3810 = vadd.f32 %v3769, %v3809
  %v3811 = vpop.f32.mrb[0].mxu0
  %v3812 = vadd.f32 %v3771, %v3811
  %v3813 = vpop.f32.mrb[0].mxu0
  %v3814 = vpop.f32.mrb[0].mxu0
  %3815 = vdwg.mxu0
  %v3816 = vxor.u32 %v3318, 2147483648
  %v3817 = vxor.u32 %v3320, 2147483648
  %v3818 = vxor.u32 %v3482, 2147483648
  %v3819 = vxor.u32 %v3484, 2147483648
  %v3820 = vxor.u32 %v3646, 2147483648
  %v3821 = vxor.u32 %v3648, 2147483648
  %v3822 = vxor.u32 %v3810, 2147483648
  %v3823 = vxor.u32 %v3812, 2147483648
  %v3824 = vmul.f32 %v3816, 1.442695
  %v3825 = vpow.pop %v3824
  %v3826 = vmul.f32 %v3817, 1.442695
  %v3827 = vpow.pop %v3826
  %v3828 = vmul.f32 %v3818, 1.442695
  %v3829 = vpow.pop %v3828
  %v3830 = vmul.f32 %v3819, 1.442695
  %v3831 = vpow.pop %v3830
  %v3832 = vmul.f32 %v3820, 1.442695
  %v3833 = vpow.pop %v3832
  %v3834 = vmul.f32 %v3821, 1.442695
  %v3835 = vpow.pop %v3834
  %v3836 = vmul.f32 %v3822, 1.442695
  %v3837 = vpow.pop %v3836
  %v3838 = vmul.f32 %v3823, 1.442695
  %v3839 = vpow.pop %v3838
  %v3840 = vadd.f32 %v3825, 1.0
  %v3841 = vadd.f32 %v3827, 1.0
  %v3842 = vadd.f32 %v3829, 1.0
  %v3843 = vadd.f32 %v3831, 1.0
  %v3844 = vadd.f32 %v3833, 1.0
  %v3845 = vadd.f32 %v3835, 1.0
  %v3846 = vadd.f32 %v3837, 1.0
  %v3847 = vadd.f32 %v3839, 1.0
  %v3848 = vrcp.pop %v3840
  %v3849 = vmul.f32 1.0, %v3848
  %v3850 = vrcp.pop %v3841
  %v3851 = vmul.f32 1.0, %v3850
  %v3852 = vrcp.pop %v3842
  %v3853 = vmul.f32 1.0, %v3852
  %v3854 = vrcp.pop %v3843
  %v3855 = vmul.f32 1.0, %v3854
  %v3856 = vrcp.pop %v3844
  %v3857 = vmul.f32 1.0, %v3856
  %v3858 = vrcp.pop %v3845
  %v3859 = vmul.f32 1.0, %v3858
  %v3860 = vrcp.pop %v3846
  %v3861 = vmul.f32 1.0, %v3860
  %v3862 = vrcp.pop %v3847
  %v3863 = vmul.f32 1.0, %v3862
  %3864 = vst [vmem:[%s3] sm:$0xff] %v3849
  %3865 = vst [vmem:[%s3 + $0x8] sm:$0xff] %v3851
  %3866 = vst [vmem:[%s3 + $0x10] sm:$0xff] %v3853
  %3867 = vst [vmem:[%s3 + $0x18] sm:$0xff] %v3855
  %3868 = vst [vmem:[%s3 + $0x20] sm:$0xff] %v3857
  %3869 = vst [vmem:[%s3 + $0x28] sm:$0xff] %v3859
  %3870 = vst [vmem:[%s3 + $0x30] sm:$0xff] %v3861
  %3871 = vst [vmem:[%s3 + $0x38] sm:$0xff] %v3863
  // Predicated region
  $region14: #{decoder_conv_forward.9} parent=0 // pred_check
    _
  $region15: #{decoder_conv_forward.9} parent=0 // pred_check_branch
    %3873 = sbr.rel (0) target = $region17
  $region16: #{decoder_conv_forward.9} parent=0 // pred_region
    _
  $region17: #{decoder_conv_forward.9} parent=0 // pred_fallthru
    _
  // Predicated region
  $region18: #{decoder_conv_forward.9} parent=0 // pred_check
    _
  $region19: #{decoder_conv_forward.9} parent=0 // pred_check_branch
    %3875 = sbr.rel (0) target = $region21
  $region20: #{decoder_conv_forward.9} parent=0 // pred_region
    _
  $region21: #{decoder_conv_forward.9} parent=0 // pred_fallthru
    _

</llo_original>
